<compile_context>
chip_gen: v5e
topology: v5e:2x2
jax: 0.10.0
libtpu: 0.0.40
codegen_flags: <defaults>
</compile_context>

<pallas_src>
import jax
import jax.numpy as jnp
from jax.experimental import pallas as pl
from jax.experimental.pallas import tpu as pltpu

EPS = 1e-5      # nn.BatchNorm2d default eps
SLOPE = 0.2     # LeakyReLU negative slope
LANE = 128

_COMPILER_PARAMS = pltpu.CompilerParams(
    dimension_semantics=("parallel",),       # batch / M axis -> both v7x TCs
    vmem_limit_bytes=32 * 1024 * 1024,
)


# ---------------------------------------------------------------------------
# JAX-side layout helpers (pure permutations, no duplication)
# ---------------------------------------------------------------------------
def space_to_depth_pad(x):
    """[N,H,W,C] -> zero-pad 1 -> space-to-depth(2) -> [N, H/2+1, W/2+1, 4*C].

    Last dim ordering is (row-parity, col-parity, channel), matching
    `group_conv_weight` below.
    """
    n, h, w, c = x.shape
    assert h % 2 == 0 and w % 2 == 0
    xp = jnp.pad(x, ((0, 0), (1, 1), (1, 1), (0, 0)))
    hs, ws = (h + 2) // 2, (w + 2) // 2
    xs = xp.reshape(n, hs, 2, ws, 2, c)
    xs = xs.transpose(0, 1, 3, 2, 4, 5)                # [n, hh, ww, pi, pj, c]
    return xs.reshape(n, hs, ws, 4 * c)


def group_conv_weight(w_hwio):
    """Conv weight [4,4,Cin,Cout] -> grouped [2,2,4*Cin,Cout].

    Group (di,dj) holds taps (2*di+pi, 2*dj+pj) flattened as (pi,pj,cin),
    so  conv(x)[oh,ow] = sum_{di,dj} s2d[oh+di, ow+dj, :] @ wg[di, dj].
    """
    kh, kw, cin, cout = w_hwio.shape
    assert kh == 4 and kw == 4
    wg = w_hwio.reshape(2, 2, 2, 2, cin, cout)          # [di, pi, dj, pj, ...]
    wg = wg.transpose(0, 2, 1, 3, 4, 5)                 # [di, dj, pi, pj, ...]
    return wg.reshape(2, 2, 4 * cin, cout)


def _pick_tile(m, target=512):
    """Largest divisor of m that is <= target and a multiple of 8."""
    if m <= target:
        return m
    for t in range(target, 7, -1):
        if m % t == 0 and t % 8 == 0:
            return t
    return m


# ---------------------------------------------------------------------------
# Pass 1: conv (4 accumulated tap matmuls), batch-tiled
# ---------------------------------------------------------------------------
def _make_conv_kernel(ho, wo, batchnorm):
    me = ho * wo

    def kernel(x_ref, w_ref, *rest):
        # x_ref: (ho+1, wo+1, 4*cin) bf16 ; w_ref: (2, 2, 4*cin, cout) bf16
        k4 = x_ref.shape[-1]
        cout = w_ref.shape[-1]
        acc = jnp.zeros((me, cout), jnp.float32)
        for di in range(2):
            for dj in range(2):
                xt = x_ref[di:di + ho, dj:dj + wo, :].reshape(me, k4)
                acc = acc + jnp.dot(xt, w_ref[di, dj],
                                    preferred_element_type=jnp.float32)
        if batchnorm:
            o_ref, sum_ref, ssq_ref = rest
            o_ref[...] = acc                               # pre-BN, f32
            sum_ref[...] = jnp.sum(acc, axis=0, keepdims=True)
            ssq_ref[...] = jnp.sum(acc * acc, axis=0, keepdims=True)
        else:
            b_ref, o_ref = rest
            y = acc + b_ref[...]                           # f32 epilogue
            y = jnp.where(y >= 0, y, SLOPE * y)
            o_ref[...] = y.astype(o_ref.dtype)             # bf16 for next layer

    return kernel


def conv_down_pass1(x_nhwc, wg, bias, *, batchnorm):
    """4x4 stride-2 pad-1 conv of x_nhwc with grouped weights wg."""
    n, h, w, c = x_nhwc.shape
    ho, wo = h // 2, w // 2
    me = ho * wo
    c4 = 4 * c
    cout = wg.shape[-1]

    xs = space_to_depth_pad(x_nhwc).astype(jnp.bfloat16)   # [n, ho+1, wo+1, 4c]
    wg = wg.astype(jnp.bfloat16)

    kernel = _make_conv_kernel(ho, wo, batchnorm)
    x_spec = pl.BlockSpec((None, ho + 1, wo + 1, c4), lambda i: (i, 0, 0, 0))
    w_spec = pl.BlockSpec((2, 2, c4, cout), lambda i: (0, 0, 0, 0))  # resident

    if batchnorm:
        in_specs = [x_spec, w_spec]
        args = (xs, wg)
        out_shape = (
            jax.ShapeDtypeStruct((n, me, cout), jnp.float32),   # pre-BN conv
            jax.ShapeDtypeStruct((n, 1, cout), jnp.float32),    # per-sample sum
            jax.ShapeDtypeStruct((n, 1, cout), jnp.float32),    # per-sample sumsq
        )
        out_specs = (
            pl.BlockSpec((None, me, cout), lambda i: (i, 0, 0)),
            pl.BlockSpec((None, 1, cout), lambda i: (i, 0, 0)),
            pl.BlockSpec((None, 1, cout), lambda i: (i, 0, 0)),
        )
    else:
        in_specs = [x_spec, w_spec, pl.BlockSpec((1, cout), lambda i: (0, 0))]
        args = (xs, wg, bias.reshape(1, cout).astype(jnp.float32))
        out_shape = jax.ShapeDtypeStruct((n, me, cout), jnp.bfloat16)
        out_specs = pl.BlockSpec((None, me, cout), lambda i: (i, 0, 0))

    res = pl.pallas_call(
        kernel,
        grid=(n,),
        in_specs=in_specs,
        out_specs=out_specs,
        out_shape=out_shape,
        compiler_params=_COMPILER_PARAMS,
    )(*args)
    return res, (n, ho, wo)


# ---------------------------------------------------------------------------
# Pass 2: M-tiled BatchNorm + LeakyReLU (optionally fused final 1x1 conv)
# ---------------------------------------------------------------------------
def _bn_act_kernel(x_ref, scale_ref, shift_ref, o_ref):
    y = x_ref[...] * scale_ref[...] + shift_ref[...]
    y = jnp.where(y >= 0, y, SLOPE * y)
    o_ref[...] = y.astype(o_ref.dtype)


def _bn_act_final_kernel(x_ref, scale_ref, shift_ref, wf_ref, bf_ref, o_ref):
    y = x_ref[...] * scale_ref[...] + shift_ref[...]
    y = jnp.where(y >= 0, y, SLOPE * y)
    o_ref[...] = jnp.dot(y.astype(wf_ref.dtype), wf_ref[...],
                         preferred_element_type=jnp.float32) + bf_ref[...]


def bn_stats(sums, ssqs, m_total, gamma, beta):
    """Training-mode BN: biased batch statistics over all N*Ho*Wo positions."""
    mean = jnp.sum(sums, axis=(0, 1)) / m_total
    var = jnp.sum(ssqs, axis=(0, 1)) / m_total - mean * mean
    inv = jax.lax.rsqrt(var + EPS)
    scale = gamma * inv
    shift = beta - mean * scale
    c = scale.shape[0]
    return scale.reshape(1, c).astype(jnp.float32), shift.reshape(1, c).astype(jnp.float32)


def bn_lrelu_pass2(conv_out, scale, shift, *, final_w=None, final_b=None):
    n, me, c = conv_out.shape
    m_total = n * me
    x = conv_out.reshape(m_total, c)
    tm = _pick_tile(m_total)
    grid = (m_total // tm,)

    x_spec = pl.BlockSpec((tm, c), lambda i: (i, 0))
    vec_spec = pl.BlockSpec((1, c), lambda i: (0, 0))

    if final_w is None:
        out = pl.pallas_call(
            _bn_act_kernel,
            grid=grid,
            in_specs=[x_spec, vec_spec, vec_spec],
            out_specs=pl.BlockSpec((tm, c), lambda i: (i, 0)),
            out_shape=jax.ShapeDtypeStruct((m_total, c), jnp.bfloat16),
            compiler_params=_COMPILER_PARAMS,
        )(x, scale, shift)
        return out.reshape(n, me, c)
    else:
        cf = final_w.shape[1]                       # lane-padded (128)
        out = pl.pallas_call(
            _bn_act_final_kernel,
            grid=grid,
            in_specs=[x_spec, vec_spec, vec_spec,
                      pl.BlockSpec((c, cf), lambda i: (0, 0)),
                      pl.BlockSpec((1, cf), lambda i: (0, 0))],
            out_specs=pl.BlockSpec((tm, cf), lambda i: (i, 0)),
            out_shape=jax.ShapeDtypeStruct((m_total, cf), jnp.float32),
            compiler_params=_COMPILER_PARAMS,
        )(x, scale, shift, final_w, final_b)
        return out.reshape(n, me, cf)


# ---------------------------------------------------------------------------
# Layer wrappers
# ---------------------------------------------------------------------------
def downsample_no_bn(h, p):
    out, (n, ho, wo) = conv_down_pass1(
        h, group_conv_weight(p["w"]), p["b"], batchnorm=False)
    return out.reshape(n, ho, wo, -1)


def downsample_bn(h, p, final_w=None, final_b=None):
    (conv, sums, ssqs), (n, ho, wo) = conv_down_pass1(
        h, group_conv_weight(p["w"]), None, batchnorm=True)
    scale, shift = bn_stats(sums, ssqs, n * ho * wo, p["gamma"], p["beta"])
    out = bn_lrelu_pass2(conv, scale, shift, final_w=final_w, final_b=final_b)
    return out.reshape(n, ho, wo, out.shape[-1])


# ---------------------------------------------------------------------------
# Parameter init (deterministic, synthetic; weights in HWIO conv layout)
# ---------------------------------------------------------------------------
def init_conv_params(key, cin, cout, k, batchnorm):
    kw_key, b_key = jax.random.split(key)
    w = 0.05 * jax.random.normal(kw_key, (k, k, cin, cout), jnp.float32)
    params = {"w": w}
    if batchnorm:
        # conv bias omitted: a per-channel constant is cancelled exactly by the
        # BatchNorm mean subtraction, so the forward output is unchanged.
        params["gamma"] = jnp.ones((cout,), jnp.float32)
        params["beta"] = jnp.zeros((cout,), jnp.float32)
    else:
        params["b"] = 0.05 * jax.random.normal(b_key, (cout,), jnp.float32)
    return params


def init_patchgan_params(key, input_channels):
    keys = jax.random.split(key, 5)
    return {
        "d1": init_conv_params(keys[0], input_channels, 64, 4, batchnorm=False),
        "d2": init_conv_params(keys[1], 64, 128, 4, batchnorm=True),
        "d3": init_conv_params(keys[2], 128, 256, 4, batchnorm=True),
        "d4": init_conv_params(keys[3], 256, 512, 4, batchnorm=True),
        "final": init_conv_params(keys[4], 512, 1, 1, batchnorm=False),
    }


# ---------------------------------------------------------------------------
# PatchGAN forward (inputs/outputs in PyTorch NCHW layout)
# ---------------------------------------------------------------------------
def patchgan_forward(params, x_nchw, y_nchw):
    x = jnp.transpose(x_nchw, (0, 2, 3, 1))          # NCHW -> NHWC
    y = jnp.transpose(y_nchw, (0, 2, 3, 1))
    h = jnp.concatenate([x, y], axis=-1)             # torch.cat([x, y], axis=1)

    h = downsample_no_bn(h, params["d1"])            # C64  (no BN)
    h = downsample_bn(h, params["d2"])               # C128
    h = downsample_bn(h, params["d3"])               # C256

    # Final 1x1 conv (512 -> 1) fused into d4's normalize pass, lane-padded
    # to 128 output columns so the store is dense; column 0 is the logit.
    pf = params["final"]
    cin_f = pf["w"].shape[2]
    wf = jnp.zeros((cin_f, LANE), jnp.float32).at[:, 0].set(pf["w"][0, 0, :, 0])
    wf = wf.astype(jnp.bfloat16)
    bf = jnp.zeros((1, LANE), jnp.float32).at[0, 0].set(pf["b"][0])

    h = downsample_bn(h, params["d4"], final_w=wf, final_b=bf)   # C512 + final
    out = h[..., :1]                                  # drop lane padding
    return jnp.transpose(out, (0, 3, 1, 2))           # NHWC -> NCHW


if __name__ == "__main__":
    key = jax.random.PRNGKey(0)
    kx, ky, kp = jax.random.split(key, 3)

    # x, y each have 4 channels -> concatenated input has 8 channels.
    x = jax.random.normal(kx, (2, 4, 16, 16), jnp.float32)
    y = jax.random.normal(ky, (2, 4, 16, 16), jnp.float32)
    params = init_patchgan_params(kp, input_channels=8)

    out = jax.jit(patchgan_forward)(params, x, y)
    out = jax.block_until_ready(out)
    assert out.shape == (2, 1, 1, 1), out.shape
    assert bool(jnp.all(jnp.isfinite(out)))
    print("KERNEL_OK")
</pallas_src>

<mosaic_0001>
module attributes {stable_mosaic.version = 11 : i64} {
  func.func @kernel(%arg0: i32, %arg1: memref<1x9x9x32xbf16, #tpu.memory_space<vmem>>, %arg2: memref<2x2x32x64xbf16, #tpu.memory_space<vmem>>, %arg3: memref<1x64xf32, #tpu.memory_space<vmem>>, %arg4: memref<1x64x64xbf16, #tpu.memory_space<vmem>>) attributes {dimension_semantics = [#tpu.dimension_semantics<parallel>], iteration_bounds = array<i64: 2>, scalar_prefetch = 0 : i64, scratch_operands = 0 : i64, tpu.core_type = #tpu.core_type<tc>, window_params = [{transform_indices = @transform_0, window_bounds = array<i64: 1, 9, 9, 32>}, {pipeline_mode = #tpu.pipeline_mode<synchronous>, transform_indices = @transform_1, window_bounds = array<i64: 2, 2, 32, 64>}, {pipeline_mode = #tpu.pipeline_mode<synchronous>, transform_indices = @transform_2, window_bounds = array<i64: 1, 64>}, {transform_indices = @transform_3, window_bounds = array<i64: 1, 64, 64>}]} {
    %cst = arith.constant 0.000000e+00 : f32
    %0 = vector.broadcast %cst : f32 to vector<64x64xf32>
    %c0 = arith.constant 0 : index
    %c0_0 = arith.constant 0 : index
    %c0_1 = arith.constant 0 : index
    %c0_2 = arith.constant 0 : index
    %1 = vector.load %arg1[%c0, %c0_0, %c0_1, %c0_2] : memref<1x9x9x32xbf16, #tpu.memory_space<vmem>>, vector<1x8x8x32xbf16>
    %2 = vector.shape_cast %1 : vector<1x8x8x32xbf16> to vector<8x8x32xbf16>
    %3 = vector.shape_cast %2 : vector<8x8x32xbf16> to vector<64x32xbf16>
    %c0_3 = arith.constant 0 : index
    %c0_4 = arith.constant 0 : index
    %c0_5 = arith.constant 0 : index
    %c0_6 = arith.constant 0 : index
    %4 = vector.load %arg2[%c0_3, %c0_4, %c0_5, %c0_6] : memref<2x2x32x64xbf16, #tpu.memory_space<vmem>>, vector<1x1x32x64xbf16>
    %5 = vector.shape_cast %4 : vector<1x1x32x64xbf16> to vector<32x64xbf16>
    %cst_7 = arith.constant dense<0.000000e+00> : vector<64x64xf32>
    %6 = tpu.matmul %3, %5, %cst_7 {dimension_numbers = #tpu.dot_dimension_numbers<[1], [0], [0], [1], [0, 0, 1, 1], [], []>} : vector<64x32xbf16>, vector<32x64xbf16>, vector<64x64xf32> -> vector<64x64xf32>
    %7 = arith.addf %0, %6 : vector<64x64xf32>
    %c0_8 = arith.constant 0 : index
    %c0_9 = arith.constant 0 : index
    %c1 = arith.constant 1 : index
    %c0_10 = arith.constant 0 : index
    %8 = vector.load %arg1[%c0_8, %c0_9, %c1, %c0_10] : memref<1x9x9x32xbf16, #tpu.memory_space<vmem>>, vector<1x8x8x32xbf16>
    %9 = vector.shape_cast %8 : vector<1x8x8x32xbf16> to vector<8x8x32xbf16>
    %10 = vector.shape_cast %9 : vector<8x8x32xbf16> to vector<64x32xbf16>
    %c0_11 = arith.constant 0 : index
    %c1_12 = arith.constant 1 : index
    %c0_13 = arith.constant 0 : index
    %c0_14 = arith.constant 0 : index
    %11 = vector.load %arg2[%c0_11, %c1_12, %c0_13, %c0_14] : memref<2x2x32x64xbf16, #tpu.memory_space<vmem>>, vector<1x1x32x64xbf16>
    %12 = vector.shape_cast %11 : vector<1x1x32x64xbf16> to vector<32x64xbf16>
    %cst_15 = arith.constant dense<0.000000e+00> : vector<64x64xf32>
    %13 = tpu.matmul %10, %12, %cst_15 {dimension_numbers = #tpu.dot_dimension_numbers<[1], [0], [0], [1], [0, 0, 1, 1], [], []>} : vector<64x32xbf16>, vector<32x64xbf16>, vector<64x64xf32> -> vector<64x64xf32>
    %14 = arith.addf %7, %13 : vector<64x64xf32>
    %c0_16 = arith.constant 0 : index
    %c1_17 = arith.constant 1 : index
    %c0_18 = arith.constant 0 : index
    %c0_19 = arith.constant 0 : index
    %15 = vector.load %arg1[%c0_16, %c1_17, %c0_18, %c0_19] : memref<1x9x9x32xbf16, #tpu.memory_space<vmem>>, vector<1x8x8x32xbf16>
    %16 = vector.shape_cast %15 : vector<1x8x8x32xbf16> to vector<8x8x32xbf16>
    %17 = vector.shape_cast %16 : vector<8x8x32xbf16> to vector<64x32xbf16>
    %c1_20 = arith.constant 1 : index
    %c0_21 = arith.constant 0 : index
    %c0_22 = arith.constant 0 : index
    %c0_23 = arith.constant 0 : index
    %18 = vector.load %arg2[%c1_20, %c0_21, %c0_22, %c0_23] : memref<2x2x32x64xbf16, #tpu.memory_space<vmem>>, vector<1x1x32x64xbf16>
    %19 = vector.shape_cast %18 : vector<1x1x32x64xbf16> to vector<32x64xbf16>
    %cst_24 = arith.constant dense<0.000000e+00> : vector<64x64xf32>
    %20 = tpu.matmul %17, %19, %cst_24 {dimension_numbers = #tpu.dot_dimension_numbers<[1], [0], [0], [1], [0, 0, 1, 1], [], []>} : vector<64x32xbf16>, vector<32x64xbf16>, vector<64x64xf32> -> vector<64x64xf32>
    %21 = arith.addf %14, %20 : vector<64x64xf32>
    %c0_25 = arith.constant 0 : index
    %c1_26 = arith.constant 1 : index
    %c1_27 = arith.constant 1 : index
    %c0_28 = arith.constant 0 : index
    %22 = vector.load %arg1[%c0_25, %c1_26, %c1_27, %c0_28] : memref<1x9x9x32xbf16, #tpu.memory_space<vmem>>, vector<1x8x8x32xbf16>
    %23 = vector.shape_cast %22 : vector<1x8x8x32xbf16> to vector<8x8x32xbf16>
    %24 = vector.shape_cast %23 : vector<8x8x32xbf16> to vector<64x32xbf16>
    %c1_29 = arith.constant 1 : index
    %c1_30 = arith.constant 1 : index
    %c0_31 = arith.constant 0 : index
    %c0_32 = arith.constant 0 : index
    %25 = vector.load %arg2[%c1_29, %c1_30, %c0_31, %c0_32] : memref<2x2x32x64xbf16, #tpu.memory_space<vmem>>, vector<1x1x32x64xbf16>
    %26 = vector.shape_cast %25 : vector<1x1x32x64xbf16> to vector<32x64xbf16>
    %cst_33 = arith.constant dense<0.000000e+00> : vector<64x64xf32>
    %27 = tpu.matmul %24, %26, %cst_33 {dimension_numbers = #tpu.dot_dimension_numbers<[1], [0], [0], [1], [0, 0, 1, 1], [], []>} : vector<64x32xbf16>, vector<32x64xbf16>, vector<64x64xf32> -> vector<64x64xf32>
    %28 = arith.addf %21, %27 : vector<64x64xf32>
    %c0_34 = arith.constant 0 : index
    %c0_35 = arith.constant 0 : index
    %29 = vector.load %arg3[%c0_34, %c0_35] : memref<1x64xf32, #tpu.memory_space<vmem>>, vector<1x64xf32>
    %30 = vector.broadcast %29 : vector<1x64xf32> to vector<64x64xf32>
    %31 = arith.addf %28, %30 : vector<64x64xf32>
    %cst_36 = arith.constant 0.000000e+00 : f32
    %32 = vector.broadcast %cst_36 : f32 to vector<64x64xf32>
    %33 = arith.cmpf oge, %31, %32 : vector<64x64xf32>
    %cst_37 = arith.constant 2.000000e-01 : f32
    %34 = vector.broadcast %cst_37 : f32 to vector<64x64xf32>
    %35 = arith.mulf %34, %31 : vector<64x64xf32>
    %36 = arith.select %33, %31, %35 : vector<64x64xi1>, vector<64x64xf32>
    %37 = arith.truncf %36 : vector<64x64xf32> to vector<64x64xbf16>
    %c0_38 = arith.constant 0 : index
    %c0_39 = arith.constant 0 : index
    %c0_40 = arith.constant 0 : index
    %38 = vector.load %arg4[%c0_38, %c0_39, %c0_40] : memref<1x64x64xbf16, #tpu.memory_space<vmem>>, vector<1x64x64xbf16>
    %39 = vector.shape_cast %38 : vector<1x64x64xbf16> to vector<64x64xbf16>
    %40 = vector.shape_cast %37 : vector<64x64xbf16> to vector<1x64x64xbf16>
    tpu.vector_store %arg4[%c0_38, %c0_39, %c0_40], %40 {strides = array<i32>} : memref<1x64x64xbf16, #tpu.memory_space<vmem>>, vector<1x64x64xbf16>,
    return
  }
  func.func @transform_0(%arg0: i32) -> (i32, i32, i32, i32) {
    %c0_i32 = arith.constant 0 : i32
    %c0_i32_0 = arith.constant 0 : i32
    %c0_i32_1 = arith.constant 0 : i32
    %c0_i32_2 = arith.constant 0 : i32
    return %arg0, %c0_i32, %c0_i32_0, %c0_i32_1 : i32, i32, i32, i32
  }
  func.func @transform_1(%arg0: i32) -> (i32, i32, i32, i32) {
    %c0_i32 = arith.constant 0 : i32
    %c0_i32_0 = arith.constant 0 : i32
    %c0_i32_1 = arith.constant 0 : i32
    %c0_i32_2 = arith.constant 0 : i32
    %c0_i32_3 = arith.constant 0 : i32
    return %c0_i32, %c0_i32_0, %c0_i32_1, %c0_i32_2 : i32, i32, i32, i32
  }
  func.func @transform_2(%arg0: i32) -> (i32, i32) {
    %c0_i32 = arith.constant 0 : i32
    %c0_i32_0 = arith.constant 0 : i32
    %c0_i32_1 = arith.constant 0 : i32
    return %c0_i32, %c0_i32_0 : i32, i32
  }
  func.func @transform_3(%arg0: i32) -> (i32, i32, i32) {
    %c0_i32 = arith.constant 0 : i32
    %c0_i32_0 = arith.constant 0 : i32
    %c0_i32_1 = arith.constant 0 : i32
    return %arg0, %c0_i32, %c0_i32_0 : i32, i32, i32
  }
}

module attributes {stable_mosaic.version = 11 : i64} {
  func.func @kernel(%arg0: i32, %arg1: memref<1x5x5x256xbf16, #tpu.memory_space<vmem>>, %arg2: memref<2x2x256x128xbf16, #tpu.memory_space<vmem>>, %arg3: memref<1x16x128xf32, #tpu.memory_space<vmem>>, %arg4: memref<1x1x128xf32, #tpu.memory_space<vmem>>, %arg5: memref<1x1x128xf32, #tpu.memory_space<vmem>>) attributes {dimension_semantics = [#tpu.dimension_semantics<parallel>], iteration_bounds = array<i64: 2>, scalar_prefetch = 0 : i64, scratch_operands = 0 : i64, tpu.core_type = #tpu.core_type<tc>, window_params = [{transform_indices = @transform_0, window_bounds = array<i64: 1, 5, 5, 256>}, {pipeline_mode = #tpu.pipeline_mode<synchronous>, transform_indices = @transform_1, window_bounds = array<i64: 2, 2, 256, 128>}, {transform_indices = @transform_2, window_bounds = array<i64: 1, 16, 128>}, {transform_indices = @transform_3, window_bounds = array<i64: 1, 1, 128>}, {transform_indices = @transform_4, window_bounds = array<i64: 1, 1, 128>}]} {
    %cst = arith.constant 0.000000e+00 : f32
    %0 = vector.broadcast %cst : f32 to vector<16x128xf32>
    %c0 = arith.constant 0 : index
    %c0_0 = arith.constant 0 : index
    %c0_1 = arith.constant 0 : index
    %c0_2 = arith.constant 0 : index
    %1 = vector.load %arg1[%c0, %c0_0, %c0_1, %c0_2] : memref<1x5x5x256xbf16, #tpu.memory_space<vmem>>, vector<1x4x4x256xbf16>
    %2 = vector.shape_cast %1 : vector<1x4x4x256xbf16> to vector<4x4x256xbf16>
    %3 = vector.shape_cast %2 : vector<4x4x256xbf16> to vector<16x256xbf16>
    %c0_3 = arith.constant 0 : index
    %c0_4 = arith.constant 0 : index
    %c0_5 = arith.constant 0 : index
    %c0_6 = arith.constant 0 : index
    %4 = vector.load %arg2[%c0_3, %c0_4, %c0_5, %c0_6] : memref<2x2x256x128xbf16, #tpu.memory_space<vmem>>, vector<1x1x256x128xbf16>
    %5 = vector.shape_cast %4 : vector<1x1x256x128xbf16> to vector<256x128xbf16>
    %cst_7 = arith.constant dense<0.000000e+00> : vector<16x128xf32>
    %6 = tpu.matmul %3, %5, %cst_7 {dimension_numbers = #tpu.dot_dimension_numbers<[1], [0], [0], [1], [0, 0, 1, 1], [], []>} : vector<16x256xbf16>, vector<256x128xbf16>, vector<16x128xf32> -> vector<16x128xf32>
    %7 = arith.addf %0, %6 : vector<16x128xf32>
    %c0_8 = arith.constant 0 : index
    %c0_9 = arith.constant 0 : index
    %c1 = arith.constant 1 : index
    %c0_10 = arith.constant 0 : index
    %8 = vector.load %arg1[%c0_8, %c0_9, %c1, %c0_10] : memref<1x5x5x256xbf16, #tpu.memory_space<vmem>>, vector<1x4x4x256xbf16>
    %9 = vector.shape_cast %8 : vector<1x4x4x256xbf16> to vector<4x4x256xbf16>
    %10 = vector.shape_cast %9 : vector<4x4x256xbf16> to vector<16x256xbf16>
    %c0_11 = arith.constant 0 : index
    %c1_12 = arith.constant 1 : index
    %c0_13 = arith.constant 0 : index
    %c0_14 = arith.constant 0 : index
    %11 = vector.load %arg2[%c0_11, %c1_12, %c0_13, %c0_14] : memref<2x2x256x128xbf16, #tpu.memory_space<vmem>>, vector<1x1x256x128xbf16>
    %12 = vector.shape_cast %11 : vector<1x1x256x128xbf16> to vector<256x128xbf16>
    %cst_15 = arith.constant dense<0.000000e+00> : vector<16x128xf32>
    %13 = tpu.matmul %10, %12, %cst_15 {dimension_numbers = #tpu.dot_dimension_numbers<[1], [0], [0], [1], [0, 0, 1, 1], [], []>} : vector<16x256xbf16>, vector<256x128xbf16>, vector<16x128xf32> -> vector<16x128xf32>
    %14 = arith.addf %7, %13 : vector<16x128xf32>
    %c0_16 = arith.constant 0 : index
    %c1_17 = arith.constant 1 : index
    %c0_18 = arith.constant 0 : index
    %c0_19 = arith.constant 0 : index
    %15 = vector.load %arg1[%c0_16, %c1_17, %c0_18, %c0_19] : memref<1x5x5x256xbf16, #tpu.memory_space<vmem>>, vector<1x4x4x256xbf16>
    %16 = vector.shape_cast %15 : vector<1x4x4x256xbf16> to vector<4x4x256xbf16>
    %17 = vector.shape_cast %16 : vector<4x4x256xbf16> to vector<16x256xbf16>
    %c1_20 = arith.constant 1 : index
    %c0_21 = arith.constant 0 : index
    %c0_22 = arith.constant 0 : index
    %c0_23 = arith.constant 0 : index
    %18 = vector.load %arg2[%c1_20, %c0_21, %c0_22, %c0_23] : memref<2x2x256x128xbf16, #tpu.memory_space<vmem>>, vector<1x1x256x128xbf16>
    %19 = vector.shape_cast %18 : vector<1x1x256x128xbf16> to vector<256x128xbf16>
    %cst_24 = arith.constant dense<0.000000e+00> : vector<16x128xf32>
    %20 = tpu.matmul %17, %19, %cst_24 {dimension_numbers = #tpu.dot_dimension_numbers<[1], [0], [0], [1], [0, 0, 1, 1], [], []>} : vector<16x256xbf16>, vector<256x128xbf16>, vector<16x128xf32> -> vector<16x128xf32>
    %21 = arith.addf %14, %20 : vector<16x128xf32>
    %c0_25 = arith.constant 0 : index
    %c1_26 = arith.constant 1 : index
    %c1_27 = arith.constant 1 : index
    %c0_28 = arith.constant 0 : index
    %22 = vector.load %arg1[%c0_25, %c1_26, %c1_27, %c0_28] : memref<1x5x5x256xbf16, #tpu.memory_space<vmem>>, vector<1x4x4x256xbf16>
    %23 = vector.shape_cast %22 : vector<1x4x4x256xbf16> to vector<4x4x256xbf16>
    %24 = vector.shape_cast %23 : vector<4x4x256xbf16> to vector<16x256xbf16>
    %c1_29 = arith.constant 1 : index
    %c1_30 = arith.constant 1 : index
    %c0_31 = arith.constant 0 : index
    %c0_32 = arith.constant 0 : index
    %25 = vector.load %arg2[%c1_29, %c1_30, %c0_31, %c0_32] : memref<2x2x256x128xbf16, #tpu.memory_space<vmem>>, vector<1x1x256x128xbf16>
    %26 = vector.shape_cast %25 : vector<1x1x256x128xbf16> to vector<256x128xbf16>
    %cst_33 = arith.constant dense<0.000000e+00> : vector<16x128xf32>
    %27 = tpu.matmul %24, %26, %cst_33 {dimension_numbers = #tpu.dot_dimension_numbers<[1], [0], [0], [1], [0, 0, 1, 1], [], []>} : vector<16x256xbf16>, vector<256x128xbf16>, vector<16x128xf32> -> vector<16x128xf32>
    %28 = arith.addf %21, %27 : vector<16x128xf32>
    %c0_34 = arith.constant 0 : index
    %c0_35 = arith.constant 0 : index
    %c0_36 = arith.constant 0 : index
    %29 = vector.load %arg3[%c0_34, %c0_35, %c0_36] : memref<1x16x128xf32, #tpu.memory_space<vmem>>, vector<1x16x128xf32>
    %30 = vector.shape_cast %29 : vector<1x16x128xf32> to vector<16x128xf32>
    %31 = vector.shape_cast %28 : vector<16x128xf32> to vector<1x16x128xf32>
    tpu.vector_store %arg3[%c0_34, %c0_35, %c0_36], %31 {strides = array<i32>} : memref<1x16x128xf32, #tpu.memory_space<vmem>>, vector<1x16x128xf32>,
    %cst_37 = arith.constant dense<0.000000e+00> : vector<128xf32>
    %32 = vector.multi_reduction <add>, %28, %cst_37 [0] : vector<16x128xf32> to vector<128xf32>
    %33 = vector.shape_cast %32 : vector<128xf32> to vector<1x128xf32>
    %c0_38 = arith.constant 0 : index
    %c0_39 = arith.constant 0 : index
    %c0_40 = arith.constant 0 : index
    %34 = vector.load %arg4[%c0_38, %c0_39, %c0_40] : memref<1x1x128xf32, #tpu.memory_space<vmem>>, vector<1x1x128xf32>
    %35 = vector.shape_cast %34 : vector<1x1x128xf32> to vector<1x128xf32>
    %36 = vector.shape_cast %33 : vector<1x128xf32> to vector<1x1x128xf32>
    tpu.vector_store %arg4[%c0_38, %c0_39, %c0_40], %36 {strides = array<i32>} : memref<1x1x128xf32, #tpu.memory_space<vmem>>, vector<1x1x128xf32>,
    %37 = arith.mulf %28, %28 : vector<16x128xf32>
    %cst_41 = arith.constant dense<0.000000e+00> : vector<128xf32>
    %38 = vector.multi_reduction <add>, %37, %cst_41 [0] : vector<16x128xf32> to vector<128xf32>
    %39 = vector.shape_cast %38 : vector<128xf32> to vector<1x128xf32>
    %c0_42 = arith.constant 0 : index
    %c0_43 = arith.constant 0 : index
    %c0_44 = arith.constant 0 : index
    %40 = vector.load %arg5[%c0_42, %c0_43, %c0_44] : memref<1x1x128xf32, #tpu.memory_space<vmem>>, vector<1x1x128xf32>
    %41 = vector.shape_cast %40 : vector<1x1x128xf32> to vector<1x128xf32>
    %42 = vector.shape_cast %39 : vector<1x128xf32> to vector<1x1x128xf32>
    tpu.vector_store %arg5[%c0_42, %c0_43, %c0_44], %42 {strides = array<i32>} : memref<1x1x128xf32, #tpu.memory_space<vmem>>, vector<1x1x128xf32>,
    return
  }
  func.func @transform_0(%arg0: i32) -> (i32, i32, i32, i32) {
    %c0_i32 = arith.constant 0 : i32
    %c0_i32_0 = arith.constant 0 : i32
    %c0_i32_1 = arith.constant 0 : i32
    %c0_i32_2 = arith.constant 0 : i32
    return %arg0, %c0_i32, %c0_i32_0, %c0_i32_1 : i32, i32, i32, i32
  }
  func.func @transform_1(%arg0: i32) -> (i32, i32, i32, i32) {
    %c0_i32 = arith.constant 0 : i32
    %c0_i32_0 = arith.constant 0 : i32
    %c0_i32_1 = arith.constant 0 : i32
    %c0_i32_2 = arith.constant 0 : i32
    %c0_i32_3 = arith.constant 0 : i32
    return %c0_i32, %c0_i32_0, %c0_i32_1, %c0_i32_2 : i32, i32, i32, i32
  }
  func.func @transform_2(%arg0: i32) -> (i32, i32, i32) {
    %c0_i32 = arith.constant 0 : i32
    %c0_i32_0 = arith.constant 0 : i32
    %c0_i32_1 = arith.constant 0 : i32
    return %arg0, %c0_i32, %c0_i32_0 : i32, i32, i32
  }
  func.func @transform_3(%arg0: i32) -> (i32, i32, i32) {
    %c0_i32 = arith.constant 0 : i32
    %c0_i32_0 = arith.constant 0 : i32
    %c0_i32_1 = arith.constant 0 : i32
    return %arg0, %c0_i32, %c0_i32_0 : i32, i32, i32
  }
  func.func @transform_4(%arg0: i32) -> (i32, i32, i32) {
    %c0_i32 = arith.constant 0 : i32
    %c0_i32_0 = arith.constant 0 : i32
    %c0_i32_1 = arith.constant 0 : i32
    return %arg0, %c0_i32, %c0_i32_0 : i32, i32, i32
  }
}

module attributes {stable_mosaic.version = 11 : i64} {
  func.func @_bn_act_kernel(%arg0: i32, %arg1: memref<32x128xf32, #tpu.memory_space<vmem>>, %arg2: memref<1x128xf32, #tpu.memory_space<vmem>>, %arg3: memref<1x128xf32, #tpu.memory_space<vmem>>, %arg4: memref<32x128xbf16, #tpu.memory_space<vmem>>) attributes {dimension_semantics = [#tpu.dimension_semantics<parallel>], iteration_bounds = array<i64: 1>, scalar_prefetch = 0 : i64, scratch_operands = 0 : i64, tpu.core_type = #tpu.core_type<tc>, window_params = [{transform_indices = @transform_0, window_bounds = array<i64: 32, 128>}, {pipeline_mode = #tpu.pipeline_mode<synchronous>, transform_indices = @transform_1, window_bounds = array<i64: 1, 128>}, {pipeline_mode = #tpu.pipeline_mode<synchronous>, transform_indices = @transform_2, window_bounds = array<i64: 1, 128>}, {transform_indices = @transform_3, window_bounds = array<i64: 32, 128>}]} {
    %c0 = arith.constant 0 : index
    %c0_0 = arith.constant 0 : index
    %0 = vector.load %arg1[%c0, %c0_0] : memref<32x128xf32, #tpu.memory_space<vmem>>, vector<32x128xf32>
    %c0_1 = arith.constant 0 : index
    %c0_2 = arith.constant 0 : index
    %1 = vector.load %arg2[%c0_1, %c0_2] : memref<1x128xf32, #tpu.memory_space<vmem>>, vector<1x128xf32>
    %2 = vector.broadcast %1 : vector<1x128xf32> to vector<32x128xf32>
    %3 = arith.mulf %0, %2 : vector<32x128xf32>
    %c0_3 = arith.constant 0 : index
    %c0_4 = arith.constant 0 : index
    %4 = vector.load %arg3[%c0_3, %c0_4] : memref<1x128xf32, #tpu.memory_space<vmem>>, vector<1x128xf32>
    %5 = vector.broadcast %4 : vector<1x128xf32> to vector<32x128xf32>
    %6 = arith.addf %3, %5 : vector<32x128xf32>
    %cst = arith.constant 0.000000e+00 : f32
    %7 = vector.broadcast %cst : f32 to vector<32x128xf32>
    %8 = arith.cmpf oge, %6, %7 : vector<32x128xf32>
    %cst_5 = arith.constant 2.000000e-01 : f32
    %9 = vector.broadcast %cst_5 : f32 to vector<32x128xf32>
    %10 = arith.mulf %9, %6 : vector<32x128xf32>
    %11 = arith.select %8, %6, %10 : vector<32x128xi1>, vector<32x128xf32>
    %12 = arith.truncf %11 : vector<32x128xf32> to vector<32x128xbf16>
    %c0_6 = arith.constant 0 : index
    %c0_7 = arith.constant 0 : index
    %13 = vector.load %arg4[%c0_6, %c0_7] : memref<32x128xbf16, #tpu.memory_space<vmem>>, vector<32x128xbf16>
    tpu.vector_store %arg4[%c0_6, %c0_7], %12 {strides = array<i32>} : memref<32x128xbf16, #tpu.memory_space<vmem>>, vector<32x128xbf16>,
    return
  }
  func.func @transform_0(%arg0: i32) -> (i32, i32) {
    %c0_i32 = arith.constant 0 : i32
    %c0_i32_0 = arith.constant 0 : i32
    return %arg0, %c0_i32 : i32, i32
  }
  func.func @transform_1(%arg0: i32) -> (i32, i32) {
    %c0_i32 = arith.constant 0 : i32
    %c0_i32_0 = arith.constant 0 : i32
    %c0_i32_1 = arith.constant 0 : i32
    return %c0_i32, %c0_i32_0 : i32, i32
  }
  func.func @transform_2(%arg0: i32) -> (i32, i32) {
    %c0_i32 = arith.constant 0 : i32
    %c0_i32_0 = arith.constant 0 : i32
    %c0_i32_1 = arith.constant 0 : i32
    return %c0_i32, %c0_i32_0 : i32, i32
  }
  func.func @transform_3(%arg0: i32) -> (i32, i32) {
    %c0_i32 = arith.constant 0 : i32
    %c0_i32_0 = arith.constant 0 : i32
    return %arg0, %c0_i32 : i32, i32
  }
}

module attributes {stable_mosaic.version = 11 : i64} {
  func.func @kernel(%arg0: i32, %arg1: memref<1x3x3x512xbf16, #tpu.memory_space<vmem>>, %arg2: memref<2x2x512x256xbf16, #tpu.memory_space<vmem>>, %arg3: memref<1x4x256xf32, #tpu.memory_space<vmem>>, %arg4: memref<1x1x256xf32, #tpu.memory_space<vmem>>, %arg5: memref<1x1x256xf32, #tpu.memory_space<vmem>>) attributes {dimension_semantics = [#tpu.dimension_semantics<parallel>], iteration_bounds = array<i64: 2>, scalar_prefetch = 0 : i64, scratch_operands = 0 : i64, tpu.core_type = #tpu.core_type<tc>, window_params = [{transform_indices = @transform_0, window_bounds = array<i64: 1, 3, 3, 512>}, {pipeline_mode = #tpu.pipeline_mode<synchronous>, transform_indices = @transform_1, window_bounds = array<i64: 2, 2, 512, 256>}, {transform_indices = @transform_2, window_bounds = array<i64: 1, 4, 256>}, {transform_indices = @transform_3, window_bounds = array<i64: 1, 1, 256>}, {transform_indices = @transform_4, window_bounds = array<i64: 1, 1, 256>}]} {
    %cst = arith.constant 0.000000e+00 : f32
    %0 = vector.broadcast %cst : f32 to vector<4x256xf32>
    %c0 = arith.constant 0 : index
    %c0_0 = arith.constant 0 : index
    %c0_1 = arith.constant 0 : index
    %c0_2 = arith.constant 0 : index
    %1 = vector.load %arg1[%c0, %c0_0, %c0_1, %c0_2] : memref<1x3x3x512xbf16, #tpu.memory_space<vmem>>, vector<1x2x2x512xbf16>
    %2 = vector.shape_cast %1 : vector<1x2x2x512xbf16> to vector<2x2x512xbf16>
    %3 = vector.shape_cast %2 : vector<2x2x512xbf16> to vector<4x512xbf16>
    %c0_3 = arith.constant 0 : index
    %c0_4 = arith.constant 0 : index
    %c0_5 = arith.constant 0 : index
    %c0_6 = arith.constant 0 : index
    %4 = vector.load %arg2[%c0_3, %c0_4, %c0_5, %c0_6] : memref<2x2x512x256xbf16, #tpu.memory_space<vmem>>, vector<1x1x512x256xbf16>
    %5 = vector.shape_cast %4 : vector<1x1x512x256xbf16> to vector<512x256xbf16>
    %cst_7 = arith.constant dense<0.000000e+00> : vector<4x256xf32>
    %6 = tpu.matmul %3, %5, %cst_7 {dimension_numbers = #tpu.dot_dimension_numbers<[1], [0], [0], [1], [0, 0, 1, 1], [], []>} : vector<4x512xbf16>, vector<512x256xbf16>, vector<4x256xf32> -> vector<4x256xf32>
    %7 = arith.addf %0, %6 : vector<4x256xf32>
    %c0_8 = arith.constant 0 : index
    %c0_9 = arith.constant 0 : index
    %c1 = arith.constant 1 : index
    %c0_10 = arith.constant 0 : index
    %8 = vector.load %arg1[%c0_8, %c0_9, %c1, %c0_10] : memref<1x3x3x512xbf16, #tpu.memory_space<vmem>>, vector<1x2x2x512xbf16>
    %9 = vector.shape_cast %8 : vector<1x2x2x512xbf16> to vector<2x2x512xbf16>
    %10 = vector.shape_cast %9 : vector<2x2x512xbf16> to vector<4x512xbf16>
    %c0_11 = arith.constant 0 : index
    %c1_12 = arith.constant 1 : index
    %c0_13 = arith.constant 0 : index
    %c0_14 = arith.constant 0 : index
    %11 = vector.load %arg2[%c0_11, %c1_12, %c0_13, %c0_14] : memref<2x2x512x256xbf16, #tpu.memory_space<vmem>>, vector<1x1x512x256xbf16>
    %12 = vector.shape_cast %11 : vector<1x1x512x256xbf16> to vector<512x256xbf16>
    %cst_15 = arith.constant dense<0.000000e+00> : vector<4x256xf32>
    %13 = tpu.matmul %10, %12, %cst_15 {dimension_numbers = #tpu.dot_dimension_numbers<[1], [0], [0], [1], [0, 0, 1, 1], [], []>} : vector<4x512xbf16>, vector<512x256xbf16>, vector<4x256xf32> -> vector<4x256xf32>
    %14 = arith.addf %7, %13 : vector<4x256xf32>
    %c0_16 = arith.constant 0 : index
    %c1_17 = arith.constant 1 : index
    %c0_18 = arith.constant 0 : index
    %c0_19 = arith.constant 0 : index
    %15 = vector.load %arg1[%c0_16, %c1_17, %c0_18, %c0_19] : memref<1x3x3x512xbf16, #tpu.memory_space<vmem>>, vector<1x2x2x512xbf16>
    %16 = vector.shape_cast %15 : vector<1x2x2x512xbf16> to vector<2x2x512xbf16>
    %17 = vector.shape_cast %16 : vector<2x2x512xbf16> to vector<4x512xbf16>
    %c1_20 = arith.constant 1 : index
    %c0_21 = arith.constant 0 : index
    %c0_22 = arith.constant 0 : index
    %c0_23 = arith.constant 0 : index
    %18 = vector.load %arg2[%c1_20, %c0_21, %c0_22, %c0_23] : memref<2x2x512x256xbf16, #tpu.memory_space<vmem>>, vector<1x1x512x256xbf16>
    %19 = vector.shape_cast %18 : vector<1x1x512x256xbf16> to vector<512x256xbf16>
    %cst_24 = arith.constant dense<0.000000e+00> : vector<4x256xf32>
    %20 = tpu.matmul %17, %19, %cst_24 {dimension_numbers = #tpu.dot_dimension_numbers<[1], [0], [0], [1], [0, 0, 1, 1], [], []>} : vector<4x512xbf16>, vector<512x256xbf16>, vector<4x256xf32> -> vector<4x256xf32>
    %21 = arith.addf %14, %20 : vector<4x256xf32>
    %c0_25 = arith.constant 0 : index
    %c1_26 = arith.constant 1 : index
    %c1_27 = arith.constant 1 : index
    %c0_28 = arith.constant 0 : index
    %22 = vector.load %arg1[%c0_25, %c1_26, %c1_27, %c0_28] : memref<1x3x3x512xbf16, #tpu.memory_space<vmem>>, vector<1x2x2x512xbf16>
    %23 = vector.shape_cast %22 : vector<1x2x2x512xbf16> to vector<2x2x512xbf16>
    %24 = vector.shape_cast %23 : vector<2x2x512xbf16> to vector<4x512xbf16>
    %c1_29 = arith.constant 1 : index
    %c1_30 = arith.constant 1 : index
    %c0_31 = arith.constant 0 : index
    %c0_32 = arith.constant 0 : index
    %25 = vector.load %arg2[%c1_29, %c1_30, %c0_31, %c0_32] : memref<2x2x512x256xbf16, #tpu.memory_space<vmem>>, vector<1x1x512x256xbf16>
    %26 = vector.shape_cast %25 : vector<1x1x512x256xbf16> to vector<512x256xbf16>
    %cst_33 = arith.constant dense<0.000000e+00> : vector<4x256xf32>
    %27 = tpu.matmul %24, %26, %cst_33 {dimension_numbers = #tpu.dot_dimension_numbers<[1], [0], [0], [1], [0, 0, 1, 1], [], []>} : vector<4x512xbf16>, vector<512x256xbf16>, vector<4x256xf32> -> vector<4x256xf32>
    %28 = arith.addf %21, %27 : vector<4x256xf32>
    %c0_34 = arith.constant 0 : index
    %c0_35 = arith.constant 0 : index
    %c0_36 = arith.constant 0 : index
    %29 = vector.load %arg3[%c0_34, %c0_35, %c0_36] : memref<1x4x256xf32, #tpu.memory_space<vmem>>, vector<1x4x256xf32>
    %30 = vector.shape_cast %29 : vector<1x4x256xf32> to vector<4x256xf32>
    %31 = vector.shape_cast %28 : vector<4x256xf32> to vector<1x4x256xf32>
    tpu.vector_store %arg3[%c0_34, %c0_35, %c0_36], %31 {strides = array<i32>} : memref<1x4x256xf32, #tpu.memory_space<vmem>>, vector<1x4x256xf32>,
    %cst_37 = arith.constant dense<0.000000e+00> : vector<256xf32>
    %32 = vector.multi_reduction <add>, %28, %cst_37 [0] : vector<4x256xf32> to vector<256xf32>
    %33 = vector.shape_cast %32 : vector<256xf32> to vector<1x256xf32>
    %c0_38 = arith.constant 0 : index
    %c0_39 = arith.constant 0 : index
    %c0_40 = arith.constant 0 : index
    %34 = vector.load %arg4[%c0_38, %c0_39, %c0_40] : memref<1x1x256xf32, #tpu.memory_space<vmem>>, vector<1x1x256xf32>
    %35 = vector.shape_cast %34 : vector<1x1x256xf32> to vector<1x256xf32>
    %36 = vector.shape_cast %33 : vector<1x256xf32> to vector<1x1x256xf32>
    tpu.vector_store %arg4[%c0_38, %c0_39, %c0_40], %36 {strides = array<i32>} : memref<1x1x256xf32, #tpu.memory_space<vmem>>, vector<1x1x256xf32>,
    %37 = arith.mulf %28, %28 : vector<4x256xf32>
    %cst_41 = arith.constant dense<0.000000e+00> : vector<256xf32>
    %38 = vector.multi_reduction <add>, %37, %cst_41 [0] : vector<4x256xf32> to vector<256xf32>
    %39 = vector.shape_cast %38 : vector<256xf32> to vector<1x256xf32>
    %c0_42 = arith.constant 0 : index
    %c0_43 = arith.constant 0 : index
    %c0_44 = arith.constant 0 : index
    %40 = vector.load %arg5[%c0_42, %c0_43, %c0_44] : memref<1x1x256xf32, #tpu.memory_space<vmem>>, vector<1x1x256xf32>
    %41 = vector.shape_cast %40 : vector<1x1x256xf32> to vector<1x256xf32>
    %42 = vector.shape_cast %39 : vector<1x256xf32> to vector<1x1x256xf32>
    tpu.vector_store %arg5[%c0_42, %c0_43, %c0_44], %42 {strides = array<i32>} : memref<1x1x256xf32, #tpu.memory_space<vmem>>, vector<1x1x256xf32>,
    return
  }
  func.func @transform_0(%arg0: i32) -> (i32, i32, i32, i32) {
    %c0_i32 = arith.constant 0 : i32
    %c0_i32_0 = arith.constant 0 : i32
    %c0_i32_1 = arith.constant 0 : i32
    %c0_i32_2 = arith.constant 0 : i32
    return %arg0, %c0_i32, %c0_i32_0, %c0_i32_1 : i32, i32, i32, i32
  }
  func.func @transform_1(%arg0: i32) -> (i32, i32, i32, i32) {
    %c0_i32 = arith.constant 0 : i32
    %c0_i32_0 = arith.constant 0 : i32
    %c0_i32_1 = arith.constant 0 : i32
    %c0_i32_2 = arith.constant 0 : i32
    %c0_i32_3 = arith.constant 0 : i32
    return %c0_i32, %c0_i32_0, %c0_i32_1, %c0_i32_2 : i32, i32, i32, i32
  }
  func.func @transform_2(%arg0: i32) -> (i32, i32, i32) {
    %c0_i32 = arith.constant 0 : i32
    %c0_i32_0 = arith.constant 0 : i32
    %c0_i32_1 = arith.constant 0 : i32
    return %arg0, %c0_i32, %c0_i32_0 : i32, i32, i32
  }
  func.func @transform_3(%arg0: i32) -> (i32, i32, i32) {
    %c0_i32 = arith.constant 0 : i32
    %c0_i32_0 = arith.constant 0 : i32
    %c0_i32_1 = arith.constant 0 : i32
    return %arg0, %c0_i32, %c0_i32_0 : i32, i32, i32
  }
  func.func @transform_4(%arg0: i32) -> (i32, i32, i32) {
    %c0_i32 = arith.constant 0 : i32
    %c0_i32_0 = arith.constant 0 : i32
    %c0_i32_1 = arith.constant 0 : i32
    return %arg0, %c0_i32, %c0_i32_0 : i32, i32, i32
  }
}

module attributes {stable_mosaic.version = 11 : i64} {
  func.func @_bn_act_kernel(%arg0: i32, %arg1: memref<8x256xf32, #tpu.memory_space<vmem>>, %arg2: memref<1x256xf32, #tpu.memory_space<vmem>>, %arg3: memref<1x256xf32, #tpu.memory_space<vmem>>, %arg4: memref<8x256xbf16, #tpu.memory_space<vmem>>) attributes {dimension_semantics = [#tpu.dimension_semantics<parallel>], iteration_bounds = array<i64: 1>, scalar_prefetch = 0 : i64, scratch_operands = 0 : i64, tpu.core_type = #tpu.core_type<tc>, window_params = [{transform_indices = @transform_0, window_bounds = array<i64: 8, 256>}, {pipeline_mode = #tpu.pipeline_mode<synchronous>, transform_indices = @transform_1, window_bounds = array<i64: 1, 256>}, {pipeline_mode = #tpu.pipeline_mode<synchronous>, transform_indices = @transform_2, window_bounds = array<i64: 1, 256>}, {transform_indices = @transform_3, window_bounds = array<i64: 8, 256>}]} {
    %c0 = arith.constant 0 : index
    %c0_0 = arith.constant 0 : index
    %0 = vector.load %arg1[%c0, %c0_0] : memref<8x256xf32, #tpu.memory_space<vmem>>, vector<8x256xf32>
    %c0_1 = arith.constant 0 : index
    %c0_2 = arith.constant 0 : index
    %1 = vector.load %arg2[%c0_1, %c0_2] : memref<1x256xf32, #tpu.memory_space<vmem>>, vector<1x256xf32>
    %2 = vector.broadcast %1 : vector<1x256xf32> to vector<8x256xf32>
    %3 = arith.mulf %0, %2 : vector<8x256xf32>
    %c0_3 = arith.constant 0 : index
    %c0_4 = arith.constant 0 : index
    %4 = vector.load %arg3[%c0_3, %c0_4] : memref<1x256xf32, #tpu.memory_space<vmem>>, vector<1x256xf32>
    %5 = vector.broadcast %4 : vector<1x256xf32> to vector<8x256xf32>
    %6 = arith.addf %3, %5 : vector<8x256xf32>
    %cst = arith.constant 0.000000e+00 : f32
    %7 = vector.broadcast %cst : f32 to vector<8x256xf32>
    %8 = arith.cmpf oge, %6, %7 : vector<8x256xf32>
    %cst_5 = arith.constant 2.000000e-01 : f32
    %9 = vector.broadcast %cst_5 : f32 to vector<8x256xf32>
    %10 = arith.mulf %9, %6 : vector<8x256xf32>
    %11 = arith.select %8, %6, %10 : vector<8x256xi1>, vector<8x256xf32>
    %12 = arith.truncf %11 : vector<8x256xf32> to vector<8x256xbf16>
    %c0_6 = arith.constant 0 : index
    %c0_7 = arith.constant 0 : index
    %13 = vector.load %arg4[%c0_6, %c0_7] : memref<8x256xbf16, #tpu.memory_space<vmem>>, vector<8x256xbf16>
    tpu.vector_store %arg4[%c0_6, %c0_7], %12 {strides = array<i32>} : memref<8x256xbf16, #tpu.memory_space<vmem>>, vector<8x256xbf16>,
    return
  }
  func.func @transform_0(%arg0: i32) -> (i32, i32) {
    %c0_i32 = arith.constant 0 : i32
    %c0_i32_0 = arith.constant 0 : i32
    return %arg0, %c0_i32 : i32, i32
  }
  func.func @transform_1(%arg0: i32) -> (i32, i32) {
    %c0_i32 = arith.constant 0 : i32
    %c0_i32_0 = arith.constant 0 : i32
    %c0_i32_1 = arith.constant 0 : i32
    return %c0_i32, %c0_i32_0 : i32, i32
  }
  func.func @transform_2(%arg0: i32) -> (i32, i32) {
    %c0_i32 = arith.constant 0 : i32
    %c0_i32_0 = arith.constant 0 : i32
    %c0_i32_1 = arith.constant 0 : i32
    return %c0_i32, %c0_i32_0 : i32, i32
  }
  func.func @transform_3(%arg0: i32) -> (i32, i32) {
    %c0_i32 = arith.constant 0 : i32
    %c0_i32_0 = arith.constant 0 : i32
    return %arg0, %c0_i32 : i32, i32
  }
}

module attributes {stable_mosaic.version = 11 : i64} {
  func.func @kernel(%arg0: i32, %arg1: memref<1x2x2x1024xbf16, #tpu.memory_space<vmem>>, %arg2: memref<2x2x1024x512xbf16, #tpu.memory_space<vmem>>, %arg3: memref<1x1x512xf32, #tpu.memory_space<vmem>>, %arg4: memref<1x1x512xf32, #tpu.memory_space<vmem>>, %arg5: memref<1x1x512xf32, #tpu.memory_space<vmem>>) attributes {dimension_semantics = [#tpu.dimension_semantics<parallel>], iteration_bounds = array<i64: 2>, scalar_prefetch = 0 : i64, scratch_operands = 0 : i64, tpu.core_type = #tpu.core_type<tc>, window_params = [{transform_indices = @transform_0, window_bounds = array<i64: 1, 2, 2, 1024>}, {pipeline_mode = #tpu.pipeline_mode<synchronous>, transform_indices = @transform_1, window_bounds = array<i64: 2, 2, 1024, 512>}, {transform_indices = @transform_2, window_bounds = array<i64: 1, 1, 512>}, {transform_indices = @transform_3, window_bounds = array<i64: 1, 1, 512>}, {transform_indices = @transform_4, window_bounds = array<i64: 1, 1, 512>}]} {
    %cst = arith.constant 0.000000e+00 : f32
    %0 = vector.broadcast %cst : f32 to vector<1x512xf32>
    %c0 = arith.constant 0 : index
    %c0_0 = arith.constant 0 : index
    %c0_1 = arith.constant 0 : index
    %c0_2 = arith.constant 0 : index
    %1 = vector.load %arg1[%c0, %c0_0, %c0_1, %c0_2] : memref<1x2x2x1024xbf16, #tpu.memory_space<vmem>>, vector<1x1x1x1024xbf16>
    %2 = vector.shape_cast %1 : vector<1x1x1x1024xbf16> to vector<1x1x1024xbf16>
    %3 = vector.shape_cast %2 : vector<1x1x1024xbf16> to vector<1x1024xbf16>
    %c0_3 = arith.constant 0 : index
    %c0_4 = arith.constant 0 : index
    %c0_5 = arith.constant 0 : index
    %c0_6 = arith.constant 0 : index
    %4 = vector.load %arg2[%c0_3, %c0_4, %c0_5, %c0_6] : memref<2x2x1024x512xbf16, #tpu.memory_space<vmem>>, vector<1x1x1024x512xbf16>
    %5 = vector.shape_cast %4 : vector<1x1x1024x512xbf16> to vector<1024x512xbf16>
    %cst_7 = arith.constant dense<0.000000e+00> : vector<1x512xf32>
    %6 = tpu.matmul %3, %5, %cst_7 {dimension_numbers = #tpu.dot_dimension_numbers<[1], [0], [0], [1], [0, 0, 1, 1], [], []>} : vector<1x1024xbf16>, vector<1024x512xbf16>, vector<1x512xf32> -> vector<1x512xf32>
    %7 = arith.addf %0, %6 : vector<1x512xf32>
    %c0_8 = arith.constant 0 : index
    %c0_9 = arith.constant 0 : index
    %c1 = arith.constant 1 : index
    %c0_10 = arith.constant 0 : index
    %8 = vector.load %arg1[%c0_8, %c0_9, %c1, %c0_10] : memref<1x2x2x1024xbf16, #tpu.memory_space<vmem>>, vector<1x1x1x1024xbf16>
    %9 = vector.shape_cast %8 : vector<1x1x1x1024xbf16> to vector<1x1x1024xbf16>
    %10 = vector.shape_cast %9 : vector<1x1x1024xbf16> to vector<1x1024xbf16>
    %c0_11 = arith.constant 0 : index
    %c1_12 = arith.constant 1 : index
    %c0_13 = arith.constant 0 : index
    %c0_14 = arith.constant 0 : index
    %11 = vector.load %arg2[%c0_11, %c1_12, %c0_13, %c0_14] : memref<2x2x1024x512xbf16, #tpu.memory_space<vmem>>, vector<1x1x1024x512xbf16>
    %12 = vector.shape_cast %11 : vector<1x1x1024x512xbf16> to vector<1024x512xbf16>
    %cst_15 = arith.constant dense<0.000000e+00> : vector<1x512xf32>
    %13 = tpu.matmul %10, %12, %cst_15 {dimension_numbers = #tpu.dot_dimension_numbers<[1], [0], [0], [1], [0, 0, 1, 1], [], []>} : vector<1x1024xbf16>, vector<1024x512xbf16>, vector<1x512xf32> -> vector<1x512xf32>
    %14 = arith.addf %7, %13 : vector<1x512xf32>
    %c0_16 = arith.constant 0 : index
    %c1_17 = arith.constant 1 : index
    %c0_18 = arith.constant 0 : index
    %c0_19 = arith.constant 0 : index
    %15 = vector.load %arg1[%c0_16, %c1_17, %c0_18, %c0_19] : memref<1x2x2x1024xbf16, #tpu.memory_space<vmem>>, vector<1x1x1x1024xbf16>
    %16 = vector.shape_cast %15 : vector<1x1x1x1024xbf16> to vector<1x1x1024xbf16>
    %17 = vector.shape_cast %16 : vector<1x1x1024xbf16> to vector<1x1024xbf16>
    %c1_20 = arith.constant 1 : index
    %c0_21 = arith.constant 0 : index
    %c0_22 = arith.constant 0 : index
    %c0_23 = arith.constant 0 : index
    %18 = vector.load %arg2[%c1_20, %c0_21, %c0_22, %c0_23] : memref<2x2x1024x512xbf16, #tpu.memory_space<vmem>>, vector<1x1x1024x512xbf16>
    %19 = vector.shape_cast %18 : vector<1x1x1024x512xbf16> to vector<1024x512xbf16>
    %cst_24 = arith.constant dense<0.000000e+00> : vector<1x512xf32>
    %20 = tpu.matmul %17, %19, %cst_24 {dimension_numbers = #tpu.dot_dimension_numbers<[1], [0], [0], [1], [0, 0, 1, 1], [], []>} : vector<1x1024xbf16>, vector<1024x512xbf16>, vector<1x512xf32> -> vector<1x512xf32>
    %21 = arith.addf %14, %20 : vector<1x512xf32>
    %c0_25 = arith.constant 0 : index
    %c1_26 = arith.constant 1 : index
    %c1_27 = arith.constant 1 : index
    %c0_28 = arith.constant 0 : index
    %22 = vector.load %arg1[%c0_25, %c1_26, %c1_27, %c0_28] : memref<1x2x2x1024xbf16, #tpu.memory_space<vmem>>, vector<1x1x1x1024xbf16>
    %23 = vector.shape_cast %22 : vector<1x1x1x1024xbf16> to vector<1x1x1024xbf16>
    %24 = vector.shape_cast %23 : vector<1x1x1024xbf16> to vector<1x1024xbf16>
    %c1_29 = arith.constant 1 : index
    %c1_30 = arith.constant 1 : index
    %c0_31 = arith.constant 0 : index
    %c0_32 = arith.constant 0 : index
    %25 = vector.load %arg2[%c1_29, %c1_30, %c0_31, %c0_32] : memref<2x2x1024x512xbf16, #tpu.memory_space<vmem>>, vector<1x1x1024x512xbf16>
    %26 = vector.shape_cast %25 : vector<1x1x1024x512xbf16> to vector<1024x512xbf16>
    %cst_33 = arith.constant dense<0.000000e+00> : vector<1x512xf32>
    %27 = tpu.matmul %24, %26, %cst_33 {dimension_numbers = #tpu.dot_dimension_numbers<[1], [0], [0], [1], [0, 0, 1, 1], [], []>} : vector<1x1024xbf16>, vector<1024x512xbf16>, vector<1x512xf32> -> vector<1x512xf32>
    %28 = arith.addf %21, %27 : vector<1x512xf32>
    %c0_34 = arith.constant 0 : index
    %c0_35 = arith.constant 0 : index
    %c0_36 = arith.constant 0 : index
    %29 = vector.load %arg3[%c0_34, %c0_35, %c0_36] : memref<1x1x512xf32, #tpu.memory_space<vmem>>, vector<1x1x512xf32>
    %30 = vector.shape_cast %29 : vector<1x1x512xf32> to vector<1x512xf32>
    %31 = vector.shape_cast %28 : vector<1x512xf32> to vector<1x1x512xf32>
    tpu.vector_store %arg3[%c0_34, %c0_35, %c0_36], %31 {strides = array<i32>} : memref<1x1x512xf32, #tpu.memory_space<vmem>>, vector<1x1x512xf32>,
    %cst_37 = arith.constant dense<0.000000e+00> : vector<512xf32>
    %32 = vector.multi_reduction <add>, %28, %cst_37 [0] : vector<1x512xf32> to vector<512xf32>
    %33 = vector.shape_cast %32 : vector<512xf32> to vector<1x512xf32>
    %c0_38 = arith.constant 0 : index
    %c0_39 = arith.constant 0 : index
    %c0_40 = arith.constant 0 : index
    %34 = vector.load %arg4[%c0_38, %c0_39, %c0_40] : memref<1x1x512xf32, #tpu.memory_space<vmem>>, vector<1x1x512xf32>
    %35 = vector.shape_cast %34 : vector<1x1x512xf32> to vector<1x512xf32>
    %36 = vector.shape_cast %33 : vector<1x512xf32> to vector<1x1x512xf32>
    tpu.vector_store %arg4[%c0_38, %c0_39, %c0_40], %36 {strides = array<i32>} : memref<1x1x512xf32, #tpu.memory_space<vmem>>, vector<1x1x512xf32>,
    %37 = arith.mulf %28, %28 : vector<1x512xf32>
    %cst_41 = arith.constant dense<0.000000e+00> : vector<512xf32>
    %38 = vector.multi_reduction <add>, %37, %cst_41 [0] : vector<1x512xf32> to vector<512xf32>
    %39 = vector.shape_cast %38 : vector<512xf32> to vector<1x512xf32>
    %c0_42 = arith.constant 0 : index
    %c0_43 = arith.constant 0 : index
    %c0_44 = arith.constant 0 : index
    %40 = vector.load %arg5[%c0_42, %c0_43, %c0_44] : memref<1x1x512xf32, #tpu.memory_space<vmem>>, vector<1x1x512xf32>
    %41 = vector.shape_cast %40 : vector<1x1x512xf32> to vector<1x512xf32>
    %42 = vector.shape_cast %39 : vector<1x512xf32> to vector<1x1x512xf32>
    tpu.vector_store %arg5[%c0_42, %c0_43, %c0_44], %42 {strides = array<i32>} : memref<1x1x512xf32, #tpu.memory_space<vmem>>, vector<1x1x512xf32>,
    return
  }
  func.func @transform_0(%arg0: i32) -> (i32, i32, i32, i32) {
    %c0_i32 = arith.constant 0 : i32
    %c0_i32_0 = arith.constant 0 : i32
    %c0_i32_1 = arith.constant 0 : i32
    %c0_i32_2 = arith.constant 0 : i32
    return %arg0, %c0_i32, %c0_i32_0, %c0_i32_1 : i32, i32, i32, i32
  }
  func.func @transform_1(%arg0: i32) -> (i32, i32, i32, i32) {
    %c0_i32 = arith.constant 0 : i32
    %c0_i32_0 = arith.constant 0 : i32
    %c0_i32_1 = arith.constant 0 : i32
    %c0_i32_2 = arith.constant 0 : i32
    %c0_i32_3 = arith.constant 0 : i32
    return %c0_i32, %c0_i32_0, %c0_i32_1, %c0_i32_2 : i32, i32, i32, i32
  }
  func.func @transform_2(%arg0: i32) -> (i32, i32, i32) {
    %c0_i32 = arith.constant 0 : i32
    %c0_i32_0 = arith.constant 0 : i32
    %c0_i32_1 = arith.constant 0 : i32
    return %arg0, %c0_i32, %c0_i32_0 : i32, i32, i32
  }
  func.func @transform_3(%arg0: i32) -> (i32, i32, i32) {
    %c0_i32 = arith.constant 0 : i32
    %c0_i32_0 = arith.constant 0 : i32
    %c0_i32_1 = arith.constant 0 : i32
    return %arg0, %c0_i32, %c0_i32_0 : i32, i32, i32
  }
  func.func @transform_4(%arg0: i32) -> (i32, i32, i32) {
    %c0_i32 = arith.constant 0 : i32
    %c0_i32_0 = arith.constant 0 : i32
    %c0_i32_1 = arith.constant 0 : i32
    return %arg0, %c0_i32, %c0_i32_0 : i32, i32, i32
  }
}

module attributes {stable_mosaic.version = 11 : i64} {
  func.func @_bn_act_final_kernel(%arg0: i32, %arg1: memref<2x512xf32, #tpu.memory_space<vmem>>, %arg2: memref<1x512xf32, #tpu.memory_space<vmem>>, %arg3: memref<1x512xf32, #tpu.memory_space<vmem>>, %arg4: memref<512x128xbf16, #tpu.memory_space<vmem>>, %arg5: memref<1x128xf32, #tpu.memory_space<vmem>>, %arg6: memref<2x128xf32, #tpu.memory_space<vmem>>) attributes {dimension_semantics = [#tpu.dimension_semantics<parallel>], iteration_bounds = array<i64: 1>, scalar_prefetch = 0 : i64, scratch_operands = 0 : i64, tpu.core_type = #tpu.core_type<tc>, window_params = [{transform_indices = @transform_0, window_bounds = array<i64: 2, 512>}, {pipeline_mode = #tpu.pipeline_mode<synchronous>, transform_indices = @transform_1, window_bounds = array<i64: 1, 512>}, {pipeline_mode = #tpu.pipeline_mode<synchronous>, transform_indices = @transform_2, window_bounds = array<i64: 1, 512>}, {pipeline_mode = #tpu.pipeline_mode<synchronous>, transform_indices = @transform_3, window_bounds = array<i64: 512, 128>}, {pipeline_mode = #tpu.pipeline_mode<synchronous>, transform_indices = @transform_4, window_bounds = array<i64: 1, 128>}, {transform_indices = @transform_5, window_bounds = array<i64: 2, 128>}]} {
    %c0 = arith.constant 0 : index
    %c0_0 = arith.constant 0 : index
    %0 = vector.load %arg1[%c0, %c0_0] : memref<2x512xf32, #tpu.memory_space<vmem>>, vector<2x512xf32>
    %c0_1 = arith.constant 0 : index
    %c0_2 = arith.constant 0 : index
    %1 = vector.load %arg2[%c0_1, %c0_2] : memref<1x512xf32, #tpu.memory_space<vmem>>, vector<1x512xf32>
    %2 = vector.broadcast %1 : vector<1x512xf32> to vector<2x512xf32>
    %3 = arith.mulf %0, %2 : vector<2x512xf32>
    %c0_3 = arith.constant 0 : index
    %c0_4 = arith.constant 0 : index
    %4 = vector.load %arg3[%c0_3, %c0_4] : memref<1x512xf32, #tpu.memory_space<vmem>>, vector<1x512xf32>
    %5 = vector.broadcast %4 : vector<1x512xf32> to vector<2x512xf32>
    %6 = arith.addf %3, %5 : vector<2x512xf32>
    %cst = arith.constant 0.000000e+00 : f32
    %7 = vector.broadcast %cst : f32 to vector<2x512xf32>
    %8 = arith.cmpf oge, %6, %7 : vector<2x512xf32>
    %cst_5 = arith.constant 2.000000e-01 : f32
    %9 = vector.broadcast %cst_5 : f32 to vector<2x512xf32>
    %10 = arith.mulf %9, %6 : vector<2x512xf32>
    %11 = arith.select %8, %6, %10 : vector<2x512xi1>, vector<2x512xf32>
    %12 = arith.truncf %11 : vector<2x512xf32> to vector<2x512xbf16>
    %c0_6 = arith.constant 0 : index
    %c0_7 = arith.constant 0 : index
    %13 = vector.load %arg4[%c0_6, %c0_7] : memref<512x128xbf16, #tpu.memory_space<vmem>>, vector<512x128xbf16>
    %cst_8 = arith.constant dense<0.000000e+00> : vector<2x128xf32>
    %14 = tpu.matmul %12, %13, %cst_8 {dimension_numbers = #tpu.dot_dimension_numbers<[1], [0], [0], [1], [0, 0, 1, 1], [], []>} : vector<2x512xbf16>, vector<512x128xbf16>, vector<2x128xf32> -> vector<2x128xf32>
    %c0_9 = arith.constant 0 : index
    %c0_10 = arith.constant 0 : index
    %15 = vector.load %arg5[%c0_9, %c0_10] : memref<1x128xf32, #tpu.memory_space<vmem>>, vector<1x128xf32>
    %16 = vector.broadcast %15 : vector<1x128xf32> to vector<2x128xf32>
    %17 = arith.addf %14, %16 : vector<2x128xf32>
    %c0_11 = arith.constant 0 : index
    %c0_12 = arith.constant 0 : index
    %18 = vector.load %arg6[%c0_11, %c0_12] : memref<2x128xf32, #tpu.memory_space<vmem>>, vector<2x128xf32>
    tpu.vector_store %arg6[%c0_11, %c0_12], %17 {strides = array<i32>} : memref<2x128xf32, #tpu.memory_space<vmem>>, vector<2x128xf32>,
    return
  }
  func.func @transform_0(%arg0: i32) -> (i32, i32) {
    %c0_i32 = arith.constant 0 : i32
    %c0_i32_0 = arith.constant 0 : i32
    return %arg0, %c0_i32 : i32, i32
  }
  func.func @transform_1(%arg0: i32) -> (i32, i32) {
    %c0_i32 = arith.constant 0 : i32
    %c0_i32_0 = arith.constant 0 : i32
    %c0_i32_1 = arith.constant 0 : i32
    return %c0_i32, %c0_i32_0 : i32, i32
  }
  func.func @transform_2(%arg0: i32) -> (i32, i32) {
    %c0_i32 = arith.constant 0 : i32
    %c0_i32_0 = arith.constant 0 : i32
    %c0_i32_1 = arith.constant 0 : i32
    return %c0_i32, %c0_i32_0 : i32, i32
  }
  func.func @transform_3(%arg0: i32) -> (i32, i32) {
    %c0_i32 = arith.constant 0 : i32
    %c0_i32_0 = arith.constant 0 : i32
    %c0_i32_1 = arith.constant 0 : i32
    return %c0_i32, %c0_i32_0 : i32, i32
  }
  func.func @transform_4(%arg0: i32) -> (i32, i32) {
    %c0_i32 = arith.constant 0 : i32
    %c0_i32_0 = arith.constant 0 : i32
    %c0_i32_1 = arith.constant 0 : i32
    return %c0_i32, %c0_i32_0 : i32, i32
  }
  func.func @transform_5(%arg0: i32) -> (i32, i32) {
    %c0_i32 = arith.constant 0 : i32
    %c0_i32_0 = arith.constant 0 : i32
    return %arg0, %c0_i32 : i32, i32
  }
}

</mosaic_0001>

<llo_original>
// kernel: patchgan_forward.7
$region0: #{patchgan_forward.7}
  #allocation0 [shape = 'u32[]', space=smem, size = 0x4, offset = 0x4, fixed_abs, tag = 'smem constant byte address 0x4 - core index']
  #allocation1 [shape = 'u32[72,128]{1,0:T(1,128)}', space=vmem, size = 0x9000, scoped, tag = 'internal scratch']
  %s0 = inlined_call_operand.vmem [shape: bf16[2,9,9,32], index: 0, kind: input, shape index: {}]
  %s1 = inlined_call_operand.vmem [shape: bf16[2,2,32,64], index: 1, kind: input, shape index: {}]
  %s2 = inlined_call_operand.hbm [shape: f32[1,64], index: 2, kind: input, shape index: {}]
  %s3 = inlined_call_operand.vmem [shape: bf16[2,64,64], index: 3, kind: output, shape index: {}]
  %s4 = sld [smem:[#allocation0]]
  $region49: #{patchgan_forward.7} parent=0
    _
  %s6 = ssub.s32 1, %s4
  %s7 = scalar_select 0, %s6, %s4
  $region1: #{patchgan_forward.7} parent=0
    #allocation2 [shape = 'u8[512]{0}', space=vmem, size = 0x400, scoped, tag = 'input window, operand 2, single buffered']
    #allocation3 [shape = 's32[2]{0}', space=sflag, size = 0x8, scoped, tag = 'scoped memory for patchgan_forward.7']
    %8 = vsyncpa [#allocation3], 0
    loop: start=0, step=1, limit=4
    $region2: #{patchgan_forward.7} parent=1 // loop_pre_header
      _
    $region3: #{patchgan_forward.7} parent=1 // loop_header
      %s10 = sphi 0, %s14
      %p11 = scmp.ge.s32.totalorder %s10, 4
      %s20 = sphi 0, %s22
      %s23 = sphi 0, %s20
      %s24 = sphi 0, %s23
      %s40 = sphi 0, %s24
      %s44 = sphi 0, %s44
      %s46 = sphi 0, %s44
      %s47 = sphi 0, %s46
      %s61 = sphi 0, %s47
      %s65 = sphi 0, %s65
      %s67 = sphi 0, %s65
      %s68 = sphi 0, %s67
      %s82 = sphi 0, %s68
      %s88 = sphi 0, %s90
      %s91 = sphi 0, %s88
      %s92 = sphi 0, %s91
      %s108 = sphi 0, %s92
    $region4: #{patchgan_forward.7} parent=1 // loop_header_branch
      %13 = sbr.rel (%p11) target = $region8
    $region5: #{patchgan_forward.7} parent=1 // loop_body
      %s15 = ssub.s32 %s10, 1
      %s16 = ssub.s32 %s10, 2
      %s17 = sadd.s32 %s10, 1
      %s18 = ssub.s32 %s10, %s17
      %p19 = scmp.eq.s32.totalorder %s18, 0
      %s21 = sadd.s32 %s20, 1
      %s22 = scalar_select %p19, %s20, %s21
      %p25 = pneg %p19
      %p26 = scmp.eq.s32.totalorder %s10, 1
      %p27 = por %p25, %p26
      %p28 = scmp.ne.s32.totalorder %s20, %s23
      %p29 = scmp.eq.s32.totalorder %s10, 0
      %p30 = por %p28, %p29
      %p31 = scmp.ne.s32.totalorder %s20, %s23
      %p32 = scmp.eq.s32.totalorder %s15, 1
      %p33 = por %p31, %p32
      %p34 = scmp.ne.s32.totalorder %s23, %s24
      %p35 = scmp.eq.s32.totalorder %s15, 0
      %p36 = por %p34, %p35
      %p37 = scmp.ne.s32.totalorder %s23, %s24
      %p38 = scmp.eq.s32.totalorder %s16, 1
      %p39 = por %p37, %p38
      %p41 = scmp.ne.s32.totalorder %s24, %s40
      %p42 = scmp.eq.s32.totalorder %s16, 0
      %p43 = por %p41, %p42
      %s45 = sadd.s32 %s44, 1
      %p48 = scmp.eq.s32.totalorder %s10, 1
      %p49 = scmp.ne.s32.totalorder %s44, %s46
      %p50 = scmp.eq.s32.totalorder %s10, 0
      %p51 = por %p49, %p50
      %p52 = scmp.ne.s32.totalorder %s44, %s46
      %p53 = scmp.eq.s32.totalorder %s15, 1
      %p54 = por %p52, %p53
      %p55 = scmp.ne.s32.totalorder %s46, %s47
      %p56 = scmp.eq.s32.totalorder %s15, 0
      %p57 = por %p55, %p56
      %p58 = scmp.ne.s32.totalorder %s46, %s47
      %p59 = scmp.eq.s32.totalorder %s16, 1
      %p60 = por %p58, %p59
      %p62 = scmp.ne.s32.totalorder %s47, %s61
      %p63 = scmp.eq.s32.totalorder %s16, 0
      %p64 = por %p62, %p63
      %s66 = sadd.s32 %s65, 1
      %p69 = scmp.eq.s32.totalorder %s10, 1
      %p70 = scmp.ne.s32.totalorder %s65, %s67
      %p71 = scmp.eq.s32.totalorder %s10, 0
      %p72 = por %p70, %p71
      %p73 = scmp.ne.s32.totalorder %s65, %s67
      %p74 = scmp.eq.s32.totalorder %s15, 1
      %p75 = por %p73, %p74
      %p76 = scmp.ne.s32.totalorder %s67, %s68
      %p77 = scmp.eq.s32.totalorder %s15, 0
      %p78 = por %p76, %p77
      %p79 = scmp.ne.s32.totalorder %s67, %s68
      %p80 = scmp.eq.s32.totalorder %s16, 1
      %p81 = por %p79, %p80
      %p83 = scmp.ne.s32.totalorder %s68, %s82
      %p84 = scmp.eq.s32.totalorder %s16, 0
      %p85 = por %p83, %p84
      %s86 = ssub.s32 %s10, %s17
      %p87 = scmp.eq.s32.totalorder %s86, 0
      %s89 = sadd.s32 %s88, 1
      %s90 = scalar_select %p87, %s88, %s89
      %p93 = pneg %p87
      %p94 = scmp.eq.s32.totalorder %s10, 1
      %p95 = por %p93, %p94
      %p96 = scmp.ne.s32.totalorder %s88, %s91
      %p97 = scmp.eq.s32.totalorder %s10, 0
      %p98 = por %p96, %p97
      %p99 = scmp.ne.s32.totalorder %s88, %s91
      %p100 = scmp.eq.s32.totalorder %s15, 1
      %p101 = por %p99, %p100
      %p102 = scmp.ne.s32.totalorder %s91, %s92
      %p103 = scmp.eq.s32.totalorder %s15, 0
      %p104 = por %p102, %p103
      %p105 = scmp.ne.s32.totalorder %s91, %s92
      %p106 = scmp.eq.s32.totalorder %s16, 1
      %p107 = por %p105, %p106
      %p109 = scmp.ne.s32.totalorder %s92, %s108
      %p110 = scmp.eq.s32.totalorder %s16, 0
      %p111 = por %p109, %p110
      %p112 = scmp.le.s32.totalorder 1, %s10
      %p113 = scmp.lt.s32.totalorder %s10, 3
      %p114 = pnand %p112, %p113
      %p115 = pneg %p114
      // Predicated region
      $region9: #{patchgan_forward.7} parent=5 // pred_check
        _
      $region10: #{patchgan_forward.7} parent=5 // pred_check_branch
        %117 = sbr.rel (%p114) target = $region12
      $region11: #{patchgan_forward.7} parent=5 // pred_region
        %s118 = ssub.s32 %s10, 1
        // Predicated region
        $region13: #{patchgan_forward.7} parent=11 // pred_check
          %p119 = pneg %p57
        $region14: #{patchgan_forward.7} parent=11 // pred_check_branch
          %121 = sbr.rel (%p119) target = $region16
        $region15: #{patchgan_forward.7} parent=11 // pred_region
          _
        $region16: #{patchgan_forward.7} parent=11 // pred_fallthru
          _
        // Predicated region
        $region17: #{patchgan_forward.7} parent=11 // pred_check
          %p122 = pneg %p78
        $region18: #{patchgan_forward.7} parent=11 // pred_check_branch
          %124 = sbr.rel (%p122) target = $region20
        $region19: #{patchgan_forward.7} parent=11 // pred_region
          %126 = vsyncadd [#allocation3], 0
          %s128 = sshll.u32 %s2, 4
          %s129 = int_to_ptr.hbm [resolvable:$true] %s128
          %s130 = sshll.u32 [#allocation2], 4
          %s131 = int_to_ptr.vmem [resolvable:$true] %s130
          %133 = dma.hbm_to_vmem [thread:$0]  %s129, 16, %s131, [#allocation3]
        $region20: #{patchgan_forward.7} parent=11 // pred_fallthru
          _
      $region12: #{patchgan_forward.7} parent=5 // pred_fallthru
        _
      %p134 = scmp.lt.s32.totalorder %s10, 2
      // Predicated region
      $region21: #{patchgan_forward.7} parent=5 // pred_check
        %p135 = pneg %p134
      $region22: #{patchgan_forward.7} parent=5 // pred_check_branch
        %137 = sbr.rel (%p135) target = $region24
      $region23: #{patchgan_forward.7} parent=5 // pred_region
        // Predicated region
        $region25: #{patchgan_forward.7} parent=23 // pred_check
          %p138 = pneg %p30
        $region26: #{patchgan_forward.7} parent=23 // pred_check_branch
          %140 = sbr.rel (%p138) target = $region28
        $region27: #{patchgan_forward.7} parent=23 // pred_region
          %p141 = scmp.lt.s32.totalorder %s10, 1
          %s142 = scalar_select %p141, %s10, 1
          %s143 = smul.addr %s142, 18
          %s144 = smul.addr %s143, 4
          %s145 = scalar_lea.vmem %s0, %s144
        $region28: #{patchgan_forward.7} parent=23 // pred_fallthru
          _
      $region24: #{patchgan_forward.7} parent=5 // pred_fallthru
        _
      %p146 = scmp.le.s32.totalorder 1, %s10
      %p147 = scmp.lt.s32.totalorder %s10, 3
      %p148 = pnand %p146, %p147
      %p149 = pneg %p148
      // Predicated region
      $region29: #{patchgan_forward.7} parent=5 // pred_check
        _
      $region30: #{patchgan_forward.7} parent=5 // pred_check_branch
        %151 = sbr.rel (%p148) target = $region32
      $region31: #{patchgan_forward.7} parent=5 // pred_region
        %s152 = ssub.s32 %s10, 1
        // Predicated region
        $region33: #{patchgan_forward.7} parent=31 // pred_check
          %p153 = pneg %p78
        $region34: #{patchgan_forward.7} parent=31 // pred_check_branch
          %155 = sbr.rel (%p153) target = $region36
        $region35: #{patchgan_forward.7} parent=31 // pred_region
          %157 = dma.done [#allocation3], 16
        $region36: #{patchgan_forward.7} parent=31 // pred_fallthru
          _
        %p158 = scmp.lt.s32.totalorder %s15, 1
        %s159 = scalar_select %p158, %s15, 1
        %s160 = smul.addr %s159, 18
        %s161 = smul.addr %s160, 4
        %s162 = scalar_lea.vmem %s0, %s161
        %p163 = pneg %p36
        %p164 = pneg %p33
        %p165 = pneg %p57
        %p166 = pneg %p54
        %p167 = pneg %p78
        %p168 = pneg %p75
        %p169 = pneg %p104
        %p170 = pneg %p101
        %p171 = scmp.lt.s32.totalorder %s15, 1
        %s172 = scalar_select %p171, %s15, 1
        %s173 = smul.addr %s172, 8
        %s174 = smul.addr %s173, 4
        %s175 = scalar_lea.vmem %s3, %s174
        %p176 = scmp.lt.s32.totalorder %s15, 1
        %s177 = scalar_select %p176, %s15, 1
        %s178 = smul.addr %s177, 18
        %s179 = smul.addr %s178, 4
        %s180 = scalar_lea.vmem %s0, %s179
        %p181 = scmp.lt.s32.totalorder %s15, 1
        %s182 = scalar_select %p181, %s15, 1
        %s183 = smul.addr %s182, 8
        %s184 = smul.addr %s183, 4
        %s185 = scalar_lea.vmem %s3, %s184
        %v187 = vld [vmem:[%s180] sm:$0xf]
        %v188 = vld [vmem:[%s180 + $0x8] sm:$0xf]
        %v189 = vld [vmem:[%s180 + $0x10] sm:$0xf]
        %v190 = vld [vmem:[%s180 + $0x18] sm:$0xf]
        %v191 = vld [vmem:[%s180 + $0x20] sm:$0xf]
        %v192 = vld [vmem:[%s180 + $0x28] sm:$0xf]
        %v193 = vld [vmem:[%s180 + $0x30] sm:$0xf]
        %v194 = vld [vmem:[%s180 + $0x38] sm:$0xf]
        %v195 = vld [vmem:[%s1] sm:$0xf]
        %v196 = vld [vmem:[%s1 + $0x4] sm:$0xf]
        %v197 = vld [vmem:[%s1 + $0x8] sm:$0xf]
        %v198 = vld [vmem:[%s1 + $0xc] sm:$0xf]
        %v199 = vld [vmem:[%s180 + $0x4] sm:$0x1]
        %v200 = vld [vmem:[%s180 + $0xc] sm:$0x1]
        %v201 = vld [vmem:[%s180 + $0x14] sm:$0x1]
        %v202 = vld [vmem:[%s180 + $0x1c] sm:$0x1]
        %v203 = vld [vmem:[%s180 + $0x24] sm:$0x1]
        %v204 = vld [vmem:[%s180 + $0x2c] sm:$0x1]
        %v205 = vld [vmem:[%s180 + $0x34] sm:$0x1]
        %v206 = vld [vmem:[%s180 + $0x3c] sm:$0x1]
        %vm207 = vsmask.f32 3328
        %vm208 = vsmask.f32 7440
        %vm209 = vmor %vm207, %vm208
        %v211 = vshrl.u32 %v187, 16
        %v213 = vrot.slane %v211, 4
        %v214 = vshll.u32 %v187, 16
        %v216 = vrot.slane %v214, 5
        %v217 = vor.u32 %v213, %v216
        %v218 = vrot.slane %v217, 4
        %v220 = vshll.u32 %v199, 16
        %v222 = vrot.slane %v220, 5
        %v223 = vsel %vm209, %v218, %v222
        %v225 = vshrl.u32 %v188, 16
        %v227 = vrot.slane %v225, 4
        %v228 = vshll.u32 %v188, 16
        %v230 = vrot.slane %v228, 5
        %v231 = vor.u32 %v227, %v230
        %v232 = vrot.slane %v231, 4
        %v234 = vshll.u32 %v200, 16
        %v236 = vrot.slane %v234, 5
        %v237 = vsel %vm209, %v232, %v236
        %v239 = vshrl.u32 %v189, 16
        %v241 = vrot.slane %v239, 4
        %v242 = vshll.u32 %v189, 16
        %v244 = vrot.slane %v242, 5
        %v245 = vor.u32 %v241, %v244
        %v246 = vrot.slane %v245, 4
        %v248 = vshll.u32 %v201, 16
        %v250 = vrot.slane %v248, 5
        %v251 = vsel %vm209, %v246, %v250
        %v253 = vshrl.u32 %v190, 16
        %v255 = vrot.slane %v253, 4
        %v256 = vshll.u32 %v190, 16
        %v258 = vrot.slane %v256, 5
        %v259 = vor.u32 %v255, %v258
        %v260 = vrot.slane %v259, 4
        %v262 = vshll.u32 %v202, 16
        %v264 = vrot.slane %v262, 5
        %v265 = vsel %vm209, %v260, %v264
        %v267 = vshrl.u32 %v191, 16
        %v269 = vrot.slane %v267, 4
        %v270 = vshll.u32 %v191, 16
        %v272 = vrot.slane %v270, 5
        %v273 = vor.u32 %v269, %v272
        %v274 = vrot.slane %v273, 4
        %v276 = vshll.u32 %v203, 16
        %v278 = vrot.slane %v276, 5
        %v279 = vsel %vm209, %v274, %v278
        %v281 = vshrl.u32 %v192, 16
        %v283 = vrot.slane %v281, 4
        %v284 = vshll.u32 %v192, 16
        %v286 = vrot.slane %v284, 5
        %v287 = vor.u32 %v283, %v286
        %v288 = vrot.slane %v287, 4
        %v290 = vshll.u32 %v204, 16
        %v292 = vrot.slane %v290, 5
        %v293 = vsel %vm209, %v288, %v292
        %v295 = vshrl.u32 %v193, 16
        %v297 = vrot.slane %v295, 4
        %v298 = vshll.u32 %v193, 16
        %v300 = vrot.slane %v298, 5
        %v301 = vor.u32 %v297, %v300
        %v302 = vrot.slane %v301, 4
        %v304 = vshll.u32 %v205, 16
        %v306 = vrot.slane %v304, 5
        %v307 = vsel %vm209, %v302, %v306
        %v309 = vshrl.u32 %v194, 16
        %v311 = vrot.slane %v309, 4
        %v312 = vshll.u32 %v194, 16
        %v314 = vrot.slane %v312, 5
        %v315 = vor.u32 %v311, %v314
        %v316 = vrot.slane %v315, 4
        %v318 = vshll.u32 %v206, 16
        %v320 = vrot.slane %v318, 5
        %v321 = vsel %vm209, %v316, %v320
        %s322 = scalar_lea.vmem %s1, 16
        %v323 = vld [vmem:[%s322] sm:$0xf]
        %v324 = vld [vmem:[%s322 + $0x4] sm:$0xf]
        %v325 = vld [vmem:[%s322 + $0x8] sm:$0xf]
        %v326 = vld [vmem:[%s322 + $0xc] sm:$0xf]
        %v327 = vunpack.c.l.b16 %v223
        %v328 = vunpack.c.l.b16 %v237
        %v329 = vunpack.c.l.b16 %v251
        %v330 = vunpack.c.l.b16 %v265
        %v331 = vunpack.c.l.b16 %v279
        %v332 = vunpack.c.l.b16 %v293
        %v333 = vunpack.c.l.b16 %v307
        %v334 = vunpack.c.l.b16 %v321
        %v335 = vpack.c.b16 %v328, %v327
        %v336 = vpack.c.b16 %v330, %v329
        %v337 = vpack.c.b16 %v332, %v331
        %v338 = vpack.c.b16 %v334, %v333
        %v343 = vunpack.c.l.b16 %v323
        %v344 = vunpack.c.l.b16 %v324
        %v345 = vunpack.c.l.b16 %v325
        %v346 = vunpack.c.l.b16 %v326
        %v347 = vpack.c.b16 %v344, %v343
        %v348 = vpack.c.b16 %v346, %v345
        %vm351 = vcmask 261120
        %v353 = vsel %vm351, %v335, 0
        %v356 = vsel %vm351, %v336, 0
        %v359 = vsel %vm351, %v337, 0
        %v362 = vsel %vm351, %v338, 0
        %364 = vmatpush.bf16.msra.mxu0 0
        %365 = vmatpush.bf16.msra.mxu0 0
        %366 = vmatpush.bf16.msra.mxu0 0
        %367 = vmatpush.bf16.msra.mxu0 0
        %368 = vmatpush.bf16.msra.mxu0 0
        %369 = vmatpush.bf16.msra.mxu0 0
        %370 = vmatpush.bf16.msra.mxu0 %v348
        %371 = vmatpush.bf16.msra.mxu0 %v347
        %372 = vmatmul.bf16.gmra.mxu0 %v353
        %v373 = vpop.f32.mrf.mxu0
        %v374 = vadd.f32 0.0, %v373
        %v375 = vpop.f32.mrf.mxu0
        %v376 = vadd.f32 0.0, %v375
        %377 = vmatmul.bf16.gmra.mxu0 %v356
        %v378 = vpop.f32.mrf.mxu0
        %v379 = vadd.f32 0.0, %v378
        %v380 = vpop.f32.mrf.mxu0
        %v381 = vadd.f32 0.0, %v380
        %382 = vmatmul.bf16.gmra.mxu0 %v359
        %v383 = vpop.f32.mrf.mxu0
        %v384 = vadd.f32 0.0, %v383
        %v385 = vpop.f32.mrf.mxu0
        %v386 = vadd.f32 0.0, %v385
        %387 = vmatmul.bf16.gmra.mxu0 %v362
        %v388 = vpop.f32.mrf.mxu0
        %v389 = vadd.f32 0.0, %v388
        %v390 = vpop.f32.mrf.mxu0
        %v391 = vadd.f32 0.0, %v390
        %392 = vdwg.mxu0
        %v401 = vunpack.c.l.b16 %v187
        %v402 = vunpack.c.l.b16 %v188
        %v403 = vunpack.c.l.b16 %v189
        %v404 = vunpack.c.l.b16 %v190
        %v405 = vunpack.c.l.b16 %v191
        %v406 = vunpack.c.l.b16 %v192
        %v407 = vunpack.c.l.b16 %v193
        %v408 = vunpack.c.l.b16 %v194
        %v409 = vpack.c.b16 %v402, %v401
        %v410 = vpack.c.b16 %v404, %v403
        %v411 = vpack.c.b16 %v406, %v405
        %v412 = vpack.c.b16 %v408, %v407
        %v417 = vunpack.c.l.b16 %v195
        %v418 = vunpack.c.l.b16 %v196
        %v419 = vunpack.c.l.b16 %v197
        %v420 = vunpack.c.l.b16 %v198
        %v421 = vpack.c.b16 %v418, %v417
        %v422 = vpack.c.b16 %v420, %v419
        %v426 = vsel %vm351, %v409, 0
        %v429 = vsel %vm351, %v410, 0
        %v432 = vsel %vm351, %v411, 0
        %v435 = vsel %vm351, %v412, 0
        %437 = vmatpush.bf16.msra.mxu0 0
        %438 = vmatpush.bf16.msra.mxu0 0
        %439 = vmatpush.bf16.msra.mxu0 0
        %440 = vmatpush.bf16.msra.mxu0 0
        %441 = vmatpush.bf16.msra.mxu0 0
        %442 = vmatpush.bf16.msra.mxu0 0
        %443 = vmatpush.bf16.msra.mxu0 %v422
        %444 = vmatpush.bf16.msra.mxu0 %v421
        %445 = vmatmul.bf16.gmra.mxu0 %v426
        %v446 = vpop.f32.mrf.mxu0
        %v447 = vadd.f32 %v374, %v446
        %v448 = vpop.f32.mrf.mxu0
        %v449 = vadd.f32 %v376, %v448
        %450 = vmatmul.bf16.gmra.mxu0 %v429
        %v451 = vpop.f32.mrf.mxu0
        %v452 = vadd.f32 %v379, %v451
        %v453 = vpop.f32.mrf.mxu0
        %v454 = vadd.f32 %v381, %v453
        %455 = vmatmul.bf16.gmra.mxu0 %v432
        %v456 = vpop.f32.mrf.mxu0
        %v457 = vadd.f32 %v384, %v456
        %v458 = vpop.f32.mrf.mxu0
        %v459 = vadd.f32 %v386, %v458
        %460 = vmatmul.bf16.gmra.mxu0 %v435
        %v461 = vpop.f32.mrf.mxu0
        %v462 = vadd.f32 %v389, %v461
        %v463 = vpop.f32.mrf.mxu0
        %v464 = vadd.f32 %v391, %v463
        %465 = vdwg.mxu0
        %s466 = scalar_lea.vmem %s180, 8
        %v467 = vld [vmem:[%s466] sm:$0xf]
        %v468 = vld [vmem:[%s466 + $0x8] sm:$0xf]
        %v469 = vld [vmem:[%s466 + $0x10] sm:$0xf]
        %v470 = vld [vmem:[%s466 + $0x18] sm:$0xf]
        %v471 = vld [vmem:[%s466 + $0x20] sm:$0xf]
        %v472 = vld [vmem:[%s466 + $0x28] sm:$0xf]
        %v473 = vld [vmem:[%s466 + $0x30] sm:$0xf]
        %v474 = vld [vmem:[%s466 + $0x38] sm:$0xf]
        %s475 = scalar_lea.vmem %s1, 32
        %v476 = vld [vmem:[%s475] sm:$0xf]
        %v477 = vld [vmem:[%s475 + $0x4] sm:$0xf]
        %v478 = vld [vmem:[%s475 + $0x8] sm:$0xf]
        %v479 = vld [vmem:[%s475 + $0xc] sm:$0xf]
        %v488 = vunpack.c.l.b16 %v467
        %v489 = vunpack.c.l.b16 %v468
        %v490 = vunpack.c.l.b16 %v469
        %v491 = vunpack.c.l.b16 %v470
        %v492 = vunpack.c.l.b16 %v471
        %v493 = vunpack.c.l.b16 %v472
        %v494 = vunpack.c.l.b16 %v473
        %v495 = vunpack.c.l.b16 %v474
        %v496 = vpack.c.b16 %v489, %v488
        %v497 = vpack.c.b16 %v491, %v490
        %v498 = vpack.c.b16 %v493, %v492
        %v499 = vpack.c.b16 %v495, %v494
        %v504 = vunpack.c.l.b16 %v476
        %v505 = vunpack.c.l.b16 %v477
        %v506 = vunpack.c.l.b16 %v478
        %v507 = vunpack.c.l.b16 %v479
        %v508 = vpack.c.b16 %v505, %v504
        %v509 = vpack.c.b16 %v507, %v506
        %v513 = vsel %vm351, %v496, 0
        %v516 = vsel %vm351, %v497, 0
        %v519 = vsel %vm351, %v498, 0
        %v522 = vsel %vm351, %v499, 0
        %524 = vmatpush.bf16.msra.mxu0 0
        %525 = vmatpush.bf16.msra.mxu0 0
        %526 = vmatpush.bf16.msra.mxu0 0
        %527 = vmatpush.bf16.msra.mxu0 0
        %528 = vmatpush.bf16.msra.mxu0 0
        %529 = vmatpush.bf16.msra.mxu0 0
        %530 = vmatpush.bf16.msra.mxu0 %v509
        %531 = vmatpush.bf16.msra.mxu0 %v508
        %532 = vmatmul.bf16.gmra.mxu0 %v513
        %v533 = vpop.f32.mrf.mxu0
        %v534 = vadd.f32 0.0, %v533
        %v535 = vpop.f32.mrf.mxu0
        %v536 = vadd.f32 0.0, %v535
        %537 = vmatmul.bf16.gmra.mxu0 %v516
        %v538 = vpop.f32.mrf.mxu0
        %v539 = vadd.f32 0.0, %v538
        %v540 = vpop.f32.mrf.mxu0
        %v541 = vadd.f32 0.0, %v540
        %542 = vmatmul.bf16.gmra.mxu0 %v519
        %v543 = vpop.f32.mrf.mxu0
        %v544 = vadd.f32 0.0, %v543
        %v545 = vpop.f32.mrf.mxu0
        %v546 = vadd.f32 0.0, %v545
        %547 = vmatmul.bf16.gmra.mxu0 %v522
        %v548 = vpop.f32.mrf.mxu0
        %v549 = vadd.f32 0.0, %v548
        %v550 = vpop.f32.mrf.mxu0
        %v551 = vadd.f32 0.0, %v550
        %552 = vdwg.mxu0
        %v553 = vadd.f32 %v447, %v534
        %v554 = vadd.f32 %v449, %v536
        %v555 = vadd.f32 %v452, %v539
        %v556 = vadd.f32 %v454, %v541
        %v557 = vadd.f32 %v457, %v544
        %v558 = vadd.f32 %v459, %v546
        %v559 = vadd.f32 %v462, %v549
        %v560 = vadd.f32 %v464, %v551
        %v561 = vld [vmem:[%s466] sm:$0xf]
        %v562 = vld [vmem:[%s466 + $0x4] sm:$0x1]
        %v563 = vld [vmem:[%s466 + $0x8] sm:$0xf]
        %v564 = vld [vmem:[%s466 + $0xc] sm:$0x1]
        %v565 = vld [vmem:[%s466 + $0x10] sm:$0xf]
        %v566 = vld [vmem:[%s466 + $0x14] sm:$0x1]
        %v567 = vld [vmem:[%s466 + $0x18] sm:$0xf]
        %v568 = vld [vmem:[%s466 + $0x1c] sm:$0x1]
        %v569 = vld [vmem:[%s466 + $0x20] sm:$0xf]
        %v570 = vld [vmem:[%s466 + $0x24] sm:$0x1]
        %v571 = vld [vmem:[%s466 + $0x28] sm:$0xf]
        %v572 = vld [vmem:[%s466 + $0x2c] sm:$0x1]
        %v573 = vld [vmem:[%s466 + $0x30] sm:$0xf]
        %v574 = vld [vmem:[%s466 + $0x34] sm:$0x1]
        %v575 = vld [vmem:[%s466 + $0x38] sm:$0xf]
        %v576 = vld [vmem:[%s466 + $0x3c] sm:$0x1]
        %v578 = vshrl.u32 %v561, 16
        %v580 = vrot.slane %v578, 4
        %v581 = vshll.u32 %v561, 16
        %v583 = vrot.slane %v581, 5
        %v584 = vor.u32 %v580, %v583
        %v585 = vrot.slane %v584, 4
        %v587 = vshll.u32 %v562, 16
        %v589 = vrot.slane %v587, 5
        %v590 = vsel %vm209, %v585, %v589
        %v592 = vshrl.u32 %v563, 16
        %v594 = vrot.slane %v592, 4
        %v595 = vshll.u32 %v563, 16
        %v597 = vrot.slane %v595, 5
        %v598 = vor.u32 %v594, %v597
        %v599 = vrot.slane %v598, 4
        %v601 = vshll.u32 %v564, 16
        %v603 = vrot.slane %v601, 5
        %v604 = vsel %vm209, %v599, %v603
        %v606 = vshrl.u32 %v565, 16
        %v608 = vrot.slane %v606, 4
        %v609 = vshll.u32 %v565, 16
        %v611 = vrot.slane %v609, 5
        %v612 = vor.u32 %v608, %v611
        %v613 = vrot.slane %v612, 4
        %v615 = vshll.u32 %v566, 16
        %v617 = vrot.slane %v615, 5
        %v618 = vsel %vm209, %v613, %v617
        %v620 = vshrl.u32 %v567, 16
        %v622 = vrot.slane %v620, 4
        %v623 = vshll.u32 %v567, 16
        %v625 = vrot.slane %v623, 5
        %v626 = vor.u32 %v622, %v625
        %v627 = vrot.slane %v626, 4
        %v629 = vshll.u32 %v568, 16
        %v631 = vrot.slane %v629, 5
        %v632 = vsel %vm209, %v627, %v631
        %v634 = vshrl.u32 %v569, 16
        %v636 = vrot.slane %v634, 4
        %v637 = vshll.u32 %v569, 16
        %v639 = vrot.slane %v637, 5
        %v640 = vor.u32 %v636, %v639
        %v641 = vrot.slane %v640, 4
        %v643 = vshll.u32 %v570, 16
        %v645 = vrot.slane %v643, 5
        %v646 = vsel %vm209, %v641, %v645
        %v648 = vshrl.u32 %v571, 16
        %v650 = vrot.slane %v648, 4
        %v651 = vshll.u32 %v571, 16
        %v653 = vrot.slane %v651, 5
        %v654 = vor.u32 %v650, %v653
        %v655 = vrot.slane %v654, 4
        %v657 = vshll.u32 %v572, 16
        %v659 = vrot.slane %v657, 5
        %v660 = vsel %vm209, %v655, %v659
        %v662 = vshrl.u32 %v573, 16
        %v664 = vrot.slane %v662, 4
        %v665 = vshll.u32 %v573, 16
        %v667 = vrot.slane %v665, 5
        %v668 = vor.u32 %v664, %v667
        %v669 = vrot.slane %v668, 4
        %v671 = vshll.u32 %v574, 16
        %v673 = vrot.slane %v671, 5
        %v674 = vsel %vm209, %v669, %v673
        %v676 = vshrl.u32 %v575, 16
        %v678 = vrot.slane %v676, 4
        %v679 = vshll.u32 %v575, 16
        %v681 = vrot.slane %v679, 5
        %v682 = vor.u32 %v678, %v681
        %v683 = vrot.slane %v682, 4
        %v685 = vshll.u32 %v576, 16
        %v687 = vrot.slane %v685, 5
        %v688 = vsel %vm209, %v683, %v687
        %s689 = scalar_lea.vmem %s1, 48
        %v690 = vld [vmem:[%s689] sm:$0xf]
        %v691 = vld [vmem:[%s689 + $0x4] sm:$0xf]
        %v692 = vld [vmem:[%s689 + $0x8] sm:$0xf]
        %v693 = vld [vmem:[%s689 + $0xc] sm:$0xf]
        %v694 = vunpack.c.l.b16 %v590
        %v695 = vunpack.c.l.b16 %v604
        %v696 = vunpack.c.l.b16 %v618
        %v697 = vunpack.c.l.b16 %v632
        %v698 = vunpack.c.l.b16 %v646
        %v699 = vunpack.c.l.b16 %v660
        %v700 = vunpack.c.l.b16 %v674
        %v701 = vunpack.c.l.b16 %v688
        %v702 = vpack.c.b16 %v695, %v694
        %v703 = vpack.c.b16 %v697, %v696
        %v704 = vpack.c.b16 %v699, %v698
        %v705 = vpack.c.b16 %v701, %v700
        %v710 = vunpack.c.l.b16 %v690
        %v711 = vunpack.c.l.b16 %v691
        %v712 = vunpack.c.l.b16 %v692
        %v713 = vunpack.c.l.b16 %v693
        %v714 = vpack.c.b16 %v711, %v710
        %v715 = vpack.c.b16 %v713, %v712
        %v719 = vsel %vm351, %v702, 0
        %v722 = vsel %vm351, %v703, 0
        %v725 = vsel %vm351, %v704, 0
        %v728 = vsel %vm351, %v705, 0
        %730 = vmatpush.bf16.msra.mxu0 0
        %731 = vmatpush.bf16.msra.mxu0 0
        %732 = vmatpush.bf16.msra.mxu0 0
        %733 = vmatpush.bf16.msra.mxu0 0
        %734 = vmatpush.bf16.msra.mxu0 0
        %735 = vmatpush.bf16.msra.mxu0 0
        %736 = vmatpush.bf16.msra.mxu0 %v715
        %737 = vmatpush.bf16.msra.mxu0 %v714
        %738 = vmatmul.bf16.gmra.mxu0 %v719
        %v739 = vpop.f32.mrf.mxu0
        %v740 = vadd.f32 0.0, %v739
        %v741 = vpop.f32.mrf.mxu0
        %v742 = vadd.f32 0.0, %v741
        %743 = vmatmul.bf16.gmra.mxu0 %v722
        %v744 = vpop.f32.mrf.mxu0
        %v745 = vadd.f32 0.0, %v744
        %v746 = vpop.f32.mrf.mxu0
        %v747 = vadd.f32 0.0, %v746
        %748 = vmatmul.bf16.gmra.mxu0 %v725
        %v749 = vpop.f32.mrf.mxu0
        %v750 = vadd.f32 0.0, %v749
        %v751 = vpop.f32.mrf.mxu0
        %v752 = vadd.f32 0.0, %v751
        %753 = vmatmul.bf16.gmra.mxu0 %v728
        %v754 = vpop.f32.mrf.mxu0
        %v755 = vadd.f32 0.0, %v754
        %v756 = vpop.f32.mrf.mxu0
        %v757 = vadd.f32 0.0, %v756
        %758 = vdwg.mxu0
        %v759 = vadd.f32 %v553, %v740
        %v760 = vadd.f32 %v554, %v742
        %v761 = vadd.f32 %v555, %v745
        %v762 = vadd.f32 %v556, %v747
        %v763 = vadd.f32 %v557, %v750
        %v764 = vadd.f32 %v558, %v752
        %v765 = vadd.f32 %v559, %v755
        %v766 = vadd.f32 %v560, %v757
        %v767 = vld [vmem:[#allocation2] sm:$0x1]
        %v769 = vperm.slane %v767, 0
        %v771 = vadd.f32 %v759, %v769
        %v772 = vadd.f32 %v760, %v769
        %v773 = vadd.f32 %v761, %v769
        %v774 = vadd.f32 %v762, %v769
        %v775 = vadd.f32 %v763, %v769
        %v776 = vadd.f32 %v764, %v769
        %v777 = vadd.f32 %v765, %v769
        %v778 = vadd.f32 %v766, %v769
        %vm779 = vcmp.ge.f32.partialorder %v771, 0.0
        %vm780 = vcmp.ge.f32.partialorder %v772, 0.0
        %vm781 = vcmp.ge.f32.partialorder %v773, 0.0
        %vm782 = vcmp.ge.f32.partialorder %v774, 0.0
        %vm783 = vcmp.ge.f32.partialorder %v775, 0.0
        %vm784 = vcmp.ge.f32.partialorder %v776, 0.0
        %vm785 = vcmp.ge.f32.partialorder %v777, 0.0
        %vm786 = vcmp.ge.f32.partialorder %v778, 0.0
        %v787 = vmul.f32 %v771, 0.2
        %v788 = vmul.f32 %v772, 0.2
        %v789 = vmul.f32 %v773, 0.2
        %v790 = vmul.f32 %v774, 0.2
        %v791 = vmul.f32 %v775, 0.2
        %v792 = vmul.f32 %v776, 0.2
        %v793 = vmul.f32 %v777, 0.2
        %v794 = vmul.f32 %v778, 0.2
        %v795 = vsel %vm779, %v771, %v787
        %v796 = vsel %vm780, %v772, %v788
        %v797 = vsel %vm781, %v773, %v789
        %v798 = vsel %vm782, %v774, %v790
        %v799 = vsel %vm783, %v775, %v791
        %v800 = vsel %vm784, %v776, %v792
        %v801 = vsel %vm785, %v777, %v793
        %v802 = vsel %vm786, %v778, %v794
        %v803 = vpack.c.bf16 %v795, %v795
        %v804 = vpack.c.bf16 %v796, %v796
        %v805 = vpack.c.bf16 %v797, %v797
        %v806 = vpack.c.bf16 %v798, %v798
        %v807 = vpack.c.bf16 %v799, %v799
        %v808 = vpack.c.bf16 %v800, %v800
        %v809 = vpack.c.bf16 %v801, %v801
        %v810 = vpack.c.bf16 %v802, %v802
        %vm811 = vcmask 519168
        %812 = vst.msk [vmem:[%s185] sm:$0xf] %vm811, %v803
        %813 = vst.msk [vmem:[%s185 + $0x4] sm:$0xf] %vm811, %v804
        %814 = vst.msk [vmem:[%s185 + $0x8] sm:$0xf] %vm811, %v805
        %815 = vst.msk [vmem:[%s185 + $0xc] sm:$0xf] %vm811, %v806
        %816 = vst.msk [vmem:[%s185 + $0x10] sm:$0xf] %vm811, %v807
        %817 = vst.msk [vmem:[%s185 + $0x14] sm:$0xf] %vm811, %v808
        %818 = vst.msk [vmem:[%s185 + $0x18] sm:$0xf] %vm811, %v809
        %819 = vst.msk [vmem:[%s185 + $0x1c] sm:$0xf] %vm811, %v810
        %p820 = scmp.lt.s32.totalorder %s15, 1
        %s821 = scalar_select %p820, %s15, 1
        %s822 = smul.addr %s821, 8
        %s823 = smul.addr %s822, 4
        %s824 = scalar_lea.vmem %s3, %s823
        // Predicated region
        $region37: #{patchgan_forward.7} parent=31 // pred_check
          %p825 = pneg %p101
        $region38: #{patchgan_forward.7} parent=31 // pred_check_branch
          %827 = sbr.rel (%p825) target = $region40
        $region39: #{patchgan_forward.7} parent=31 // pred_region
          _
        $region40: #{patchgan_forward.7} parent=31 // pred_fallthru
          _
      $region32: #{patchgan_forward.7} parent=5 // pred_fallthru
        _
      %p828 = scmp.le.s32.totalorder 2, %s10
      // Predicated region
      $region41: #{patchgan_forward.7} parent=5 // pred_check
        %p829 = pneg %p828
      $region42: #{patchgan_forward.7} parent=5 // pred_check_branch
        %831 = sbr.rel (%p829) target = $region44
      $region43: #{patchgan_forward.7} parent=5 // pred_region
        %s832 = ssub.s32 %s10, 2
        // Predicated region
        $region45: #{patchgan_forward.7} parent=43 // pred_check
          %p833 = pneg %p107
        $region46: #{patchgan_forward.7} parent=43 // pred_check_branch
          %835 = sbr.rel (%p833) target = $region48
        $region47: #{patchgan_forward.7} parent=43 // pred_region
          %p836 = scmp.lt.s32.totalorder %s16, 1
          %s837 = scalar_select %p836, %s16, 1
          %s838 = smul.addr %s837, 8
          %s839 = smul.addr %s838, 4
          %s840 = scalar_lea.vmem %s3, %s839
        $region48: #{patchgan_forward.7} parent=43 // pred_fallthru
          _
      $region44: #{patchgan_forward.7} parent=5 // pred_fallthru
        _
    $region6: #{patchgan_forward.7} parent=1 // loop_footer
      %s14 = sadd.s32 1, %s10
    $region7: #{patchgan_forward.7} parent=1 // loop_footer_branch
      %9 = sbr.rel target = $region3
    $region8: #{patchgan_forward.7} parent=1 // loop_exit
      _
    %841 = vsyncpa [#allocation3], 1
    %s842 = scalar_lea.sflag [#allocation3], 1
    %843 = vsyncpa %s842, 1

// kernel: patchgan_forward.9
$region0: #{patchgan_forward.9}
  #allocation0 [shape = 'u32[]', space=smem, size = 0x4, offset = 0x4, fixed_abs, tag = 'smem constant byte address 0x4 - core index']
  #allocation1 [shape = 'u32[72,128]{1,0:T(1,128)}', space=vmem, size = 0x9000, scoped, tag = 'internal scratch']
  %s0 = inlined_call_operand.vmem [shape: f32[32,128], index: 0, kind: input, shape index: {}]
  %s1 = inlined_call_operand.vmem [shape: f32[1,128], index: 1, kind: input, shape index: {}]
  %s2 = inlined_call_operand.vmem [shape: f32[1,128], index: 2, kind: input, shape index: {}]
  %s3 = inlined_call_operand.vmem [shape: bf16[32,128], index: 3, kind: output, shape index: {}]
  %s4 = sld [smem:[#allocation0]]
  $region22: #{patchgan_forward.9} parent=0
    _
  %s6 = ssub.s32 1, %s4
  %s7 = scalar_select 0, %s6, %s4
  // Predicated region
  $region2: #{patchgan_forward.9} parent=0 // pred_check
    _
  $region3: #{patchgan_forward.9} parent=0 // pred_check_branch
    %9 = sbr.rel (0) target = $region5
  $region4: #{patchgan_forward.9} parent=0 // pred_region
    _
  $region5: #{patchgan_forward.9} parent=0 // pred_fallthru
    _
  // Predicated region
  $region6: #{patchgan_forward.9} parent=0 // pred_check
    _
  $region7: #{patchgan_forward.9} parent=0 // pred_check_branch
    %11 = sbr.rel (0) target = $region9
  $region8: #{patchgan_forward.9} parent=0 // pred_region
    _
  $region9: #{patchgan_forward.9} parent=0 // pred_fallthru
    _
  // Predicated region
  $region10: #{patchgan_forward.9} parent=0 // pred_check
    _
  $region11: #{patchgan_forward.9} parent=0 // pred_check_branch
    %13 = sbr.rel (0) target = $region13
  $region12: #{patchgan_forward.9} parent=0 // pred_region
    _
  $region13: #{patchgan_forward.9} parent=0 // pred_fallthru
    _
  %v14 = vld [vmem:[%s0] sm:$0xff]
  %v15 = vld [vmem:[%s0 + $0x8] sm:$0xff]
  %v16 = vld [vmem:[%s0 + $0x10] sm:$0xff]
  %v17 = vld [vmem:[%s0 + $0x18] sm:$0xff]
  %v18 = vld [vmem:[%s1] sm:$0x1]
  %v20 = vperm.slane %v18, 0
  %v22 = vmul.f32 %v14, %v20
  %v23 = vmul.f32 %v15, %v20
  %v24 = vmul.f32 %v16, %v20
  %v25 = vmul.f32 %v17, %v20
  %v26 = vld [vmem:[%s2] sm:$0x1]
  %v28 = vperm.slane %v26, 0
  %v30 = vadd.f32 %v22, %v28
  %v31 = vadd.f32 %v23, %v28
  %v32 = vadd.f32 %v24, %v28
  %v33 = vadd.f32 %v25, %v28
  %vm34 = vcmp.ge.f32.partialorder %v30, 0.0
  %vm35 = vcmp.ge.f32.partialorder %v31, 0.0
  %vm36 = vcmp.ge.f32.partialorder %v32, 0.0
  %vm37 = vcmp.ge.f32.partialorder %v33, 0.0
  %v38 = vmul.f32 %v30, 0.2
  %v39 = vmul.f32 %v31, 0.2
  %v40 = vmul.f32 %v32, 0.2
  %v41 = vmul.f32 %v33, 0.2
  %v42 = vsel %vm34, %v30, %v38
  %v43 = vsel %vm35, %v31, %v39
  %v44 = vsel %vm36, %v32, %v40
  %v45 = vsel %vm37, %v33, %v41
  %v46 = vpack.c.bf16 %v42, %v42
  %v47 = vpack.c.bf16 %v43, %v43
  %v48 = vpack.c.bf16 %v44, %v44
  %v49 = vpack.c.bf16 %v45, %v45
  %50 = vst [vmem:[%s3] sm:$0xf] %v46
  %51 = vst [vmem:[%s3 + $0x4] sm:$0xf] %v47
  %52 = vst [vmem:[%s3 + $0x8] sm:$0xf] %v48
  %53 = vst [vmem:[%s3 + $0xc] sm:$0xf] %v49
  // Predicated region
  $region14: #{patchgan_forward.9} parent=0 // pred_check
    _
  $region15: #{patchgan_forward.9} parent=0 // pred_check_branch
    %55 = sbr.rel (0) target = $region17
  $region16: #{patchgan_forward.9} parent=0 // pred_region
    _
  $region17: #{patchgan_forward.9} parent=0 // pred_fallthru
    _
  // Predicated region
  $region18: #{patchgan_forward.9} parent=0 // pred_check
    _
  $region19: #{patchgan_forward.9} parent=0 // pred_check_branch
    %57 = sbr.rel (0) target = $region21
  $region20: #{patchgan_forward.9} parent=0 // pred_region
    _
  $region21: #{patchgan_forward.9} parent=0 // pred_fallthru
    _

// kernel: patchgan_forward.8
$region0: #{patchgan_forward.8}
  #allocation0 [shape = 'u32[]', space=smem, size = 0x4, offset = 0x4, fixed_abs, tag = 'smem constant byte address 0x4 - core index']
  #allocation1 [shape = 'u32[72,128]{1,0:T(1,128)}', space=vmem, size = 0x9000, scoped, tag = 'internal scratch']
  %s0 = inlined_call_operand.vmem [shape: bf16[2,5,5,256], index: 0, kind: input, shape index: {}]
  %s1 = inlined_call_operand.vmem [shape: bf16[2,2,256,128], index: 1, kind: input, shape index: {}]
  %s2 = inlined_call_operand.vmem [shape: f32[2,16,128], index: 2, kind: output, shape index: {0}]
  %s3 = inlined_call_operand.vmem [shape: f32[2,1,128], index: 3, kind: output, shape index: {1}]
  %s4 = inlined_call_operand.vmem [shape: f32[2,1,128], index: 4, kind: output, shape index: {2}]
  %5 = xla_tuple %s2, %s3, %s4
  %s6 = sld [smem:[#allocation0]]
  $region57: #{patchgan_forward.8} parent=0
    _
  %s8 = ssub.s32 1, %s6
  %s9 = scalar_select 0, %s8, %s6
  loop: start=0, step=1, limit=4
  $region2: #{patchgan_forward.8} parent=0 // loop_pre_header
    _
  $region3: #{patchgan_forward.8} parent=0 // loop_header
    %s11 = sphi 0, %s15
    %p12 = scmp.ge.s32.totalorder %s11, 4
    %s21 = sphi 0, %s23
    %s24 = sphi 0, %s21
    %s25 = sphi 0, %s24
    %s41 = sphi 0, %s25
    %s45 = sphi 0, %s45
    %s47 = sphi 0, %s45
    %s48 = sphi 0, %s47
    %s62 = sphi 0, %s48
    %s68 = sphi 0, %s70
    %s71 = sphi 0, %s68
    %s72 = sphi 0, %s71
    %s88 = sphi 0, %s72
    %s94 = sphi 0, %s96
    %s97 = sphi 0, %s94
    %s98 = sphi 0, %s97
    %s114 = sphi 0, %s98
    %s120 = sphi 0, %s122
    %s123 = sphi 0, %s120
    %s124 = sphi 0, %s123
    %s140 = sphi 0, %s124
  $region4: #{patchgan_forward.8} parent=0 // loop_header_branch
    %14 = sbr.rel (%p12) target = $region8
  $region5: #{patchgan_forward.8} parent=0 // loop_body
    %s16 = ssub.s32 %s11, 1
    %s17 = ssub.s32 %s11, 2
    %s18 = sadd.s32 %s11, 1
    %s19 = ssub.s32 %s11, %s18
    %p20 = scmp.eq.s32.totalorder %s19, 0
    %s22 = sadd.s32 %s21, 1
    %s23 = scalar_select %p20, %s21, %s22
    %p26 = pneg %p20
    %p27 = scmp.eq.s32.totalorder %s11, 1
    %p28 = por %p26, %p27
    %p29 = scmp.ne.s32.totalorder %s21, %s24
    %p30 = scmp.eq.s32.totalorder %s11, 0
    %p31 = por %p29, %p30
    %p32 = scmp.ne.s32.totalorder %s21, %s24
    %p33 = scmp.eq.s32.totalorder %s16, 1
    %p34 = por %p32, %p33
    %p35 = scmp.ne.s32.totalorder %s24, %s25
    %p36 = scmp.eq.s32.totalorder %s16, 0
    %p37 = por %p35, %p36
    %p38 = scmp.ne.s32.totalorder %s24, %s25
    %p39 = scmp.eq.s32.totalorder %s17, 1
    %p40 = por %p38, %p39
    %p42 = scmp.ne.s32.totalorder %s25, %s41
    %p43 = scmp.eq.s32.totalorder %s17, 0
    %p44 = por %p42, %p43
    %s46 = sadd.s32 %s45, 1
    %p49 = scmp.eq.s32.totalorder %s11, 1
    %p50 = scmp.ne.s32.totalorder %s45, %s47
    %p51 = scmp.eq.s32.totalorder %s11, 0
    %p52 = por %p50, %p51
    %p53 = scmp.ne.s32.totalorder %s45, %s47
    %p54 = scmp.eq.s32.totalorder %s16, 1
    %p55 = por %p53, %p54
    %p56 = scmp.ne.s32.totalorder %s47, %s48
    %p57 = scmp.eq.s32.totalorder %s16, 0
    %p58 = por %p56, %p57
    %p59 = scmp.ne.s32.totalorder %s47, %s48
    %p60 = scmp.eq.s32.totalorder %s17, 1
    %p61 = por %p59, %p60
    %p63 = scmp.ne.s32.totalorder %s48, %s62
    %p64 = scmp.eq.s32.totalorder %s17, 0
    %p65 = por %p63, %p64
    %s66 = ssub.s32 %s11, %s18
    %p67 = scmp.eq.s32.totalorder %s66, 0
    %s69 = sadd.s32 %s68, 1
    %s70 = scalar_select %p67, %s68, %s69
    %p73 = pneg %p67
    %p74 = scmp.eq.s32.totalorder %s11, 1
    %p75 = por %p73, %p74
    %p76 = scmp.ne.s32.totalorder %s68, %s71
    %p77 = scmp.eq.s32.totalorder %s11, 0
    %p78 = por %p76, %p77
    %p79 = scmp.ne.s32.totalorder %s68, %s71
    %p80 = scmp.eq.s32.totalorder %s16, 1
    %p81 = por %p79, %p80
    %p82 = scmp.ne.s32.totalorder %s71, %s72
    %p83 = scmp.eq.s32.totalorder %s16, 0
    %p84 = por %p82, %p83
    %p85 = scmp.ne.s32.totalorder %s71, %s72
    %p86 = scmp.eq.s32.totalorder %s17, 1
    %p87 = por %p85, %p86
    %p89 = scmp.ne.s32.totalorder %s72, %s88
    %p90 = scmp.eq.s32.totalorder %s17, 0
    %p91 = por %p89, %p90
    %s92 = ssub.s32 %s11, %s18
    %p93 = scmp.eq.s32.totalorder %s92, 0
    %s95 = sadd.s32 %s94, 1
    %s96 = scalar_select %p93, %s94, %s95
    %p99 = pneg %p93
    %p100 = scmp.eq.s32.totalorder %s11, 1
    %p101 = por %p99, %p100
    %p102 = scmp.ne.s32.totalorder %s94, %s97
    %p103 = scmp.eq.s32.totalorder %s11, 0
    %p104 = por %p102, %p103
    %p105 = scmp.ne.s32.totalorder %s94, %s97
    %p106 = scmp.eq.s32.totalorder %s16, 1
    %p107 = por %p105, %p106
    %p108 = scmp.ne.s32.totalorder %s97, %s98
    %p109 = scmp.eq.s32.totalorder %s16, 0
    %p110 = por %p108, %p109
    %p111 = scmp.ne.s32.totalorder %s97, %s98
    %p112 = scmp.eq.s32.totalorder %s17, 1
    %p113 = por %p111, %p112
    %p115 = scmp.ne.s32.totalorder %s98, %s114
    %p116 = scmp.eq.s32.totalorder %s17, 0
    %p117 = por %p115, %p116
    %s118 = ssub.s32 %s11, %s18
    %p119 = scmp.eq.s32.totalorder %s118, 0
    %s121 = sadd.s32 %s120, 1
    %s122 = scalar_select %p119, %s120, %s121
    %p125 = pneg %p119
    %p126 = scmp.eq.s32.totalorder %s11, 1
    %p127 = por %p125, %p126
    %p128 = scmp.ne.s32.totalorder %s120, %s123
    %p129 = scmp.eq.s32.totalorder %s11, 0
    %p130 = por %p128, %p129
    %p131 = scmp.ne.s32.totalorder %s120, %s123
    %p132 = scmp.eq.s32.totalorder %s16, 1
    %p133 = por %p131, %p132
    %p134 = scmp.ne.s32.totalorder %s123, %s124
    %p135 = scmp.eq.s32.totalorder %s16, 0
    %p136 = por %p134, %p135
    %p137 = scmp.ne.s32.totalorder %s123, %s124
    %p138 = scmp.eq.s32.totalorder %s17, 1
    %p139 = por %p137, %p138
    %p141 = scmp.ne.s32.totalorder %s124, %s140
    %p142 = scmp.eq.s32.totalorder %s17, 0
    %p143 = por %p141, %p142
    %p144 = scmp.le.s32.totalorder 1, %s11
    %p145 = scmp.lt.s32.totalorder %s11, 3
    %p146 = pnand %p144, %p145
    %p147 = pneg %p146
    // Predicated region
    $region9: #{patchgan_forward.8} parent=5 // pred_check
      _
    $region10: #{patchgan_forward.8} parent=5 // pred_check_branch
      %149 = sbr.rel (%p146) target = $region12
    $region11: #{patchgan_forward.8} parent=5 // pred_region
      %s150 = ssub.s32 %s11, 1
      // Predicated region
      $region13: #{patchgan_forward.8} parent=11 // pred_check
        %p151 = pneg %p58
      $region14: #{patchgan_forward.8} parent=11 // pred_check_branch
        %153 = sbr.rel (%p151) target = $region16
      $region15: #{patchgan_forward.8} parent=11 // pred_region
        _
      $region16: #{patchgan_forward.8} parent=11 // pred_fallthru
        _
    $region12: #{patchgan_forward.8} parent=5 // pred_fallthru
      _
    %p154 = scmp.lt.s32.totalorder %s11, 2
    // Predicated region
    $region17: #{patchgan_forward.8} parent=5 // pred_check
      %p155 = pneg %p154
    $region18: #{patchgan_forward.8} parent=5 // pred_check_branch
      %157 = sbr.rel (%p155) target = $region20
    $region19: #{patchgan_forward.8} parent=5 // pred_region
      // Predicated region
      $region21: #{patchgan_forward.8} parent=19 // pred_check
        %p158 = pneg %p31
      $region22: #{patchgan_forward.8} parent=19 // pred_check_branch
        %160 = sbr.rel (%p158) target = $region24
      $region23: #{patchgan_forward.8} parent=19 // pred_region
        %p161 = scmp.lt.s32.totalorder %s11, 1
        %s162 = scalar_select %p161, %s11, 1
        %s163 = smul.addr %s162, 10
        %s164 = smul.addr %s163, 4
        %s165 = scalar_lea.vmem %s0, %s164
      $region24: #{patchgan_forward.8} parent=19 // pred_fallthru
        _
    $region20: #{patchgan_forward.8} parent=5 // pred_fallthru
      _
    %p166 = scmp.le.s32.totalorder 1, %s11
    %p167 = scmp.lt.s32.totalorder %s11, 3
    %p168 = pnand %p166, %p167
    %p169 = pneg %p168
    // Predicated region
    $region25: #{patchgan_forward.8} parent=5 // pred_check
      _
    $region26: #{patchgan_forward.8} parent=5 // pred_check_branch
      %171 = sbr.rel (%p168) target = $region28
    $region27: #{patchgan_forward.8} parent=5 // pred_region
      %s172 = ssub.s32 %s11, 1
      %p173 = scmp.lt.s32.totalorder %s16, 1
      %s174 = scalar_select %p173, %s16, 1
      %s175 = smul.addr %s174, 10
      %s176 = smul.addr %s175, 4
      %s177 = scalar_lea.vmem %s0, %s176
      %p178 = pneg %p37
      %p179 = pneg %p34
      %p180 = pneg %p58
      %p181 = pneg %p55
      %p182 = pneg %p84
      %p183 = pneg %p81
      %p184 = scmp.lt.s32.totalorder %s16, 1
      %s185 = scalar_select %p184, %s16, 1
      %s186 = smul.addr %s185, 2
      %s187 = smul.addr %s186, 8
      %s188 = scalar_lea.vmem %s2, %s187
      %p189 = pneg %p110
      %p190 = pneg %p107
      %p191 = scmp.lt.s32.totalorder %s16, 1
      %s192 = scalar_select %p191, %s16, 1
      %s193 = scalar_lea.vmem %s3, %s192
      %p194 = pneg %p136
      %p195 = pneg %p133
      %p196 = scmp.lt.s32.totalorder %s16, 1
      %s197 = scalar_select %p196, %s16, 1
      %s198 = scalar_lea.vmem %s4, %s197
      %p199 = scmp.lt.s32.totalorder %s16, 1
      %s200 = scalar_select %p199, %s16, 1
      %s201 = smul.addr %s200, 10
      %s202 = smul.addr %s201, 4
      %s203 = scalar_lea.vmem %s0, %s202
      %p204 = scmp.lt.s32.totalorder %s16, 1
      %s205 = scalar_select %p204, %s16, 1
      %s206 = smul.addr %s205, 2
      %s207 = smul.addr %s206, 8
      %s208 = scalar_lea.vmem %s2, %s207
      %p209 = scmp.lt.s32.totalorder %s16, 1
      %s210 = scalar_select %p209, %s16, 1
      %s211 = scalar_lea.vmem %s3, %s210
      %p212 = scmp.lt.s32.totalorder %s16, 1
      %s213 = scalar_select %p212, %s16, 1
      %s214 = scalar_lea.vmem %s4, %s213
      %v215 = vld [vmem:[%s203] sm:$0x33]
      %v216 = vld [vmem:[%s203 + $0x8] sm:$0x33]
      %v217 = vld [vmem:[%s203 + $0x10] sm:$0x33]
      %v218 = vld [vmem:[%s203 + $0x18] sm:$0x33]
      %v223 = vrot.slane %v215, 2
      %v224 = vrot.slane %v216, 2
      %v225 = vrot.slane %v217, 2
      %v226 = vrot.slane %v218, 2
      %vm227 = vcmask 1041408
      %v230 = vsel %vm227, %v215, %v223
      %v233 = vsel %vm227, %v216, %v224
      %v236 = vsel %vm227, %v217, %v225
      %v239 = vsel %vm227, %v218, %v226
      %v240 = vld [vmem:[%s1] sm:$0xf]
      %v241 = vld [vmem:[%s1 + $0x4] sm:$0xf]
      %v242 = vld [vmem:[%s1 + $0x8] sm:$0xf]
      %v243 = vld [vmem:[%s1 + $0xc] sm:$0xf]
      %v244 = vld [vmem:[%s1 + $0x10] sm:$0xf]
      %v245 = vld [vmem:[%s1 + $0x14] sm:$0xf]
      %v246 = vld [vmem:[%s1 + $0x18] sm:$0xf]
      %v247 = vld [vmem:[%s1 + $0x1c] sm:$0xf]
      %v248 = vld [vmem:[%s1 + $0x20] sm:$0xf]
      %v249 = vld [vmem:[%s1 + $0x24] sm:$0xf]
      %v250 = vld [vmem:[%s1 + $0x28] sm:$0xf]
      %v251 = vld [vmem:[%s1 + $0x2c] sm:$0xf]
      %v252 = vld [vmem:[%s1 + $0x30] sm:$0xf]
      %v253 = vld [vmem:[%s1 + $0x34] sm:$0xf]
      %v254 = vld [vmem:[%s1 + $0x38] sm:$0xf]
      %v255 = vld [vmem:[%s1 + $0x3c] sm:$0xf]
      %v256 = vld [vmem:[%s1 + $0x40] sm:$0xf]
      %v257 = vld [vmem:[%s1 + $0x44] sm:$0xf]
      %v258 = vld [vmem:[%s1 + $0x48] sm:$0xf]
      %v259 = vld [vmem:[%s1 + $0x4c] sm:$0xf]
      %v260 = vld [vmem:[%s1 + $0x50] sm:$0xf]
      %v261 = vld [vmem:[%s1 + $0x54] sm:$0xf]
      %v262 = vld [vmem:[%s1 + $0x58] sm:$0xf]
      %v263 = vld [vmem:[%s1 + $0x5c] sm:$0xf]
      %v264 = vld [vmem:[%s1 + $0x60] sm:$0xf]
      %v265 = vld [vmem:[%s1 + $0x64] sm:$0xf]
      %v266 = vld [vmem:[%s1 + $0x68] sm:$0xf]
      %v267 = vld [vmem:[%s1 + $0x6c] sm:$0xf]
      %v268 = vld [vmem:[%s1 + $0x70] sm:$0xf]
      %v269 = vld [vmem:[%s1 + $0x74] sm:$0xf]
      %v270 = vld [vmem:[%s1 + $0x78] sm:$0xf]
      %v271 = vld [vmem:[%s1 + $0x7c] sm:$0xf]
      %v272 = vld [vmem:[%s203] sm:$0x77]
      %v273 = vld [vmem:[%s203 + $0x8] sm:$0x77]
      %v274 = vld [vmem:[%s203 + $0x10] sm:$0x77]
      %v275 = vld [vmem:[%s203 + $0x18] sm:$0x77]
      %v280 = vrot.slane %v272, 2
      %v281 = vrot.slane %v273, 2
      %v282 = vrot.slane %v274, 2
      %v283 = vrot.slane %v275, 2
      %v286 = vsel %vm227, %v272, %v280
      %vm287 = vcmask 1043458
      %v288 = vsel %vm287, %v272, %v280
      %v290 = vrot.slane %v288, 2
      %v293 = vsel %vm227, %v273, %v281
      %v294 = vsel %vm287, %v273, %v281
      %v296 = vrot.slane %v294, 2
      %v299 = vsel %vm227, %v274, %v282
      %v300 = vsel %vm287, %v274, %v282
      %v302 = vrot.slane %v300, 2
      %v305 = vsel %vm227, %v275, %v283
      %v306 = vsel %vm287, %v275, %v283
      %v308 = vrot.slane %v306, 2
      %vm309 = vsmask.f32 1280
      %vm310 = vsmask.f32 3336
      %vm311 = vmor %vm309, %vm310
      %vm312 = vsmask.f32 5392
      %vm313 = vmor %vm311, %vm312
      %vm314 = vsmask.f32 7448
      %vm315 = vmor %vm313, %vm314
      %v316 = vshrl.u32 %v286, 16
      %v318 = vrot.slane %v316, 6
      %v319 = vshll.u32 %v286, 16
      %v321 = vrot.slane %v319, 7
      %v322 = vor.u32 %v318, %v321
      %v323 = vrot.slane %v322, 2
      %v325 = vshll.u32 %v290, 16
      %v327 = vrot.slane %v325, 7
      %v328 = vsel %vm315, %v323, %v327
      %v329 = vshrl.u32 %v293, 16
      %v331 = vrot.slane %v329, 6
      %v332 = vshll.u32 %v293, 16
      %v334 = vrot.slane %v332, 7
      %v335 = vor.u32 %v331, %v334
      %v336 = vrot.slane %v335, 2
      %v338 = vshll.u32 %v296, 16
      %v340 = vrot.slane %v338, 7
      %v341 = vsel %vm315, %v336, %v340
      %v342 = vshrl.u32 %v299, 16
      %v344 = vrot.slane %v342, 6
      %v345 = vshll.u32 %v299, 16
      %v347 = vrot.slane %v345, 7
      %v348 = vor.u32 %v344, %v347
      %v349 = vrot.slane %v348, 2
      %v351 = vshll.u32 %v302, 16
      %v353 = vrot.slane %v351, 7
      %v354 = vsel %vm315, %v349, %v353
      %v355 = vshrl.u32 %v305, 16
      %v357 = vrot.slane %v355, 6
      %v358 = vshll.u32 %v305, 16
      %v360 = vrot.slane %v358, 7
      %v361 = vor.u32 %v357, %v360
      %v362 = vrot.slane %v361, 2
      %v364 = vshll.u32 %v308, 16
      %v366 = vrot.slane %v364, 7
      %v367 = vsel %vm315, %v362, %v366
      %s368 = scalar_lea.vmem %s1, 128
      %v369 = vld [vmem:[%s368] sm:$0xf]
      %v370 = vld [vmem:[%s368 + $0x4] sm:$0xf]
      %v371 = vld [vmem:[%s368 + $0x8] sm:$0xf]
      %v372 = vld [vmem:[%s368 + $0xc] sm:$0xf]
      %v373 = vld [vmem:[%s368 + $0x10] sm:$0xf]
      %v374 = vld [vmem:[%s368 + $0x14] sm:$0xf]
      %v375 = vld [vmem:[%s368 + $0x18] sm:$0xf]
      %v376 = vld [vmem:[%s368 + $0x1c] sm:$0xf]
      %v377 = vld [vmem:[%s368 + $0x20] sm:$0xf]
      %v378 = vld [vmem:[%s368 + $0x24] sm:$0xf]
      %v379 = vld [vmem:[%s368 + $0x28] sm:$0xf]
      %v380 = vld [vmem:[%s368 + $0x2c] sm:$0xf]
      %v381 = vld [vmem:[%s368 + $0x30] sm:$0xf]
      %v382 = vld [vmem:[%s368 + $0x34] sm:$0xf]
      %v383 = vld [vmem:[%s368 + $0x38] sm:$0xf]
      %v384 = vld [vmem:[%s368 + $0x3c] sm:$0xf]
      %v385 = vld [vmem:[%s368 + $0x40] sm:$0xf]
      %v386 = vld [vmem:[%s368 + $0x44] sm:$0xf]
      %v387 = vld [vmem:[%s368 + $0x48] sm:$0xf]
      %v388 = vld [vmem:[%s368 + $0x4c] sm:$0xf]
      %v389 = vld [vmem:[%s368 + $0x50] sm:$0xf]
      %v390 = vld [vmem:[%s368 + $0x54] sm:$0xf]
      %v391 = vld [vmem:[%s368 + $0x58] sm:$0xf]
      %v392 = vld [vmem:[%s368 + $0x5c] sm:$0xf]
      %v393 = vld [vmem:[%s368 + $0x60] sm:$0xf]
      %v394 = vld [vmem:[%s368 + $0x64] sm:$0xf]
      %v395 = vld [vmem:[%s368 + $0x68] sm:$0xf]
      %v396 = vld [vmem:[%s368 + $0x6c] sm:$0xf]
      %v397 = vld [vmem:[%s368 + $0x70] sm:$0xf]
      %v398 = vld [vmem:[%s368 + $0x74] sm:$0xf]
      %v399 = vld [vmem:[%s368 + $0x78] sm:$0xf]
      %v400 = vld [vmem:[%s368 + $0x7c] sm:$0xf]
      %402 = vst [vmem:[#allocation1] ss:$4 sm:$0xff] %v328
      %s404 = scalar_lea.vmem [#allocation1], 1
      %405 = vst [vmem:[%s404] ss:$4 sm:$0xff] %v341
      %s407 = scalar_lea.vmem [#allocation1], 2
      %408 = vst [vmem:[%s407] ss:$4 sm:$0xff] %v354
      %s410 = scalar_lea.vmem [#allocation1], 3
      %411 = vst [vmem:[%s410] ss:$4 sm:$0xff] %v367
      %v412 = vld.sshfl [vmem:[#allocation1] sm:$0xff pattern:$0x73625140]
      %v413 = vld.sshfl [vmem:[#allocation1 + $0x8] sm:$0xff pattern:$0x73625140]
      %v448 = vunpack.c.l.b16 %v369
      %v449 = vunpack.c.l.b16 %v370
      %v450 = vunpack.c.l.b16 %v371
      %v451 = vunpack.c.l.b16 %v372
      %v452 = vunpack.c.l.b16 %v373
      %v453 = vunpack.c.l.b16 %v374
      %v454 = vunpack.c.l.b16 %v375
      %v455 = vunpack.c.l.b16 %v376
      %v456 = vunpack.c.l.b16 %v377
      %v457 = vunpack.c.l.b16 %v378
      %v458 = vunpack.c.l.b16 %v379
      %v459 = vunpack.c.l.b16 %v380
      %v460 = vunpack.c.l.b16 %v381
      %v461 = vunpack.c.l.b16 %v382
      %v462 = vunpack.c.l.b16 %v383
      %v463 = vunpack.c.l.b16 %v384
      %v464 = vunpack.c.l.b16 %v385
      %v465 = vunpack.c.l.b16 %v386
      %v466 = vunpack.c.l.b16 %v387
      %v467 = vunpack.c.l.b16 %v388
      %v468 = vunpack.c.l.b16 %v389
      %v469 = vunpack.c.l.b16 %v390
      %v470 = vunpack.c.l.b16 %v391
      %v471 = vunpack.c.l.b16 %v392
      %v472 = vunpack.c.l.b16 %v393
      %v473 = vunpack.c.l.b16 %v394
      %v474 = vunpack.c.l.b16 %v395
      %v475 = vunpack.c.l.b16 %v396
      %v476 = vunpack.c.l.b16 %v397
      %v477 = vunpack.c.l.b16 %v398
      %v478 = vunpack.c.l.b16 %v399
      %v479 = vunpack.c.l.b16 %v400
      %v480 = vpack.c.b16 %v449, %v448
      %v481 = vpack.c.b16 %v451, %v450
      %v482 = vpack.c.b16 %v453, %v452
      %v483 = vpack.c.b16 %v455, %v454
      %v484 = vpack.c.b16 %v457, %v456
      %v485 = vpack.c.b16 %v459, %v458
      %v486 = vpack.c.b16 %v461, %v460
      %v487 = vpack.c.b16 %v463, %v462
      %v488 = vpack.c.b16 %v465, %v464
      %v489 = vpack.c.b16 %v467, %v466
      %v490 = vpack.c.b16 %v469, %v468
      %v491 = vpack.c.b16 %v471, %v470
      %v492 = vpack.c.b16 %v473, %v472
      %v493 = vpack.c.b16 %v475, %v474
      %v494 = vpack.c.b16 %v477, %v476
      %v495 = vpack.c.b16 %v479, %v478
      %512 = vmatpush.bf16.msra.mxu0 %v487
      %513 = vmatpush.bf16.msra.mxu0 %v486
      %514 = vmatpush.bf16.msra.mxu0 %v485
      %515 = vmatpush.bf16.msra.mxu0 %v484
      %516 = vmatpush.bf16.msra.mxu0 %v483
      %517 = vmatpush.bf16.msra.mxu0 %v482
      %518 = vmatpush.bf16.msra.mxu0 %v481
      %519 = vmatpush.bf16.msra.mxu0 %v480
      %520 = vmatmul.bf16.gmra.mxu0 %v412
      %v521 = vpop.f32.mrf.mxu0
      %v522 = vadd.f32 0.0, %v521
      %v523 = vpop.f32.mrf.mxu0
      %v524 = vadd.f32 0.0, %v523
      %525 = vdwg.mxu0
      %526 = vmatpush.bf16.msra.mxu0 %v495
      %527 = vmatpush.bf16.msra.mxu0 %v494
      %528 = vmatpush.bf16.msra.mxu0 %v493
      %529 = vmatpush.bf16.msra.mxu0 %v492
      %530 = vmatpush.bf16.msra.mxu0 %v491
      %531 = vmatpush.bf16.msra.mxu0 %v490
      %532 = vmatpush.bf16.msra.mxu0 %v489
      %533 = vmatpush.bf16.msra.mxu0 %v488
      %534 = vmatmul.bf16.gmra.mxu0 %v413
      %v535 = vpop.f32.mrf.mxu0
      %v536 = vadd.f32 %v522, %v535
      %v537 = vpop.f32.mrf.mxu0
      %v538 = vadd.f32 %v524, %v537
      %539 = vdwg.mxu0
      %540 = vst [vmem:[#allocation1] ss:$4 sm:$0xff] %v230
      %s541 = scalar_lea.vmem [#allocation1], 1
      %542 = vst [vmem:[%s541] ss:$4 sm:$0xff] %v233
      %s543 = scalar_lea.vmem [#allocation1], 2
      %544 = vst [vmem:[%s543] ss:$4 sm:$0xff] %v236
      %s545 = scalar_lea.vmem [#allocation1], 3
      %546 = vst [vmem:[%s545] ss:$4 sm:$0xff] %v239
      %v547 = vld.sshfl [vmem:[#allocation1] sm:$0xff pattern:$0x73625140]
      %v548 = vld.sshfl [vmem:[#allocation1 + $0x8] sm:$0xff pattern:$0x73625140]
      %v583 = vunpack.c.l.b16 %v240
      %v584 = vunpack.c.l.b16 %v241
      %v585 = vunpack.c.l.b16 %v242
      %v586 = vunpack.c.l.b16 %v243
      %v587 = vunpack.c.l.b16 %v244
      %v588 = vunpack.c.l.b16 %v245
      %v589 = vunpack.c.l.b16 %v246
      %v590 = vunpack.c.l.b16 %v247
      %v591 = vunpack.c.l.b16 %v248
      %v592 = vunpack.c.l.b16 %v249
      %v593 = vunpack.c.l.b16 %v250
      %v594 = vunpack.c.l.b16 %v251
      %v595 = vunpack.c.l.b16 %v252
      %v596 = vunpack.c.l.b16 %v253
      %v597 = vunpack.c.l.b16 %v254
      %v598 = vunpack.c.l.b16 %v255
      %v599 = vunpack.c.l.b16 %v256
      %v600 = vunpack.c.l.b16 %v257
      %v601 = vunpack.c.l.b16 %v258
      %v602 = vunpack.c.l.b16 %v259
      %v603 = vunpack.c.l.b16 %v260
      %v604 = vunpack.c.l.b16 %v261
      %v605 = vunpack.c.l.b16 %v262
      %v606 = vunpack.c.l.b16 %v263
      %v607 = vunpack.c.l.b16 %v264
      %v608 = vunpack.c.l.b16 %v265
      %v609 = vunpack.c.l.b16 %v266
      %v610 = vunpack.c.l.b16 %v267
      %v611 = vunpack.c.l.b16 %v268
      %v612 = vunpack.c.l.b16 %v269
      %v613 = vunpack.c.l.b16 %v270
      %v614 = vunpack.c.l.b16 %v271
      %v615 = vpack.c.b16 %v584, %v583
      %v616 = vpack.c.b16 %v586, %v585
      %v617 = vpack.c.b16 %v588, %v587
      %v618 = vpack.c.b16 %v590, %v589
      %v619 = vpack.c.b16 %v592, %v591
      %v620 = vpack.c.b16 %v594, %v593
      %v621 = vpack.c.b16 %v596, %v595
      %v622 = vpack.c.b16 %v598, %v597
      %v623 = vpack.c.b16 %v600, %v599
      %v624 = vpack.c.b16 %v602, %v601
      %v625 = vpack.c.b16 %v604, %v603
      %v626 = vpack.c.b16 %v606, %v605
      %v627 = vpack.c.b16 %v608, %v607
      %v628 = vpack.c.b16 %v610, %v609
      %v629 = vpack.c.b16 %v612, %v611
      %v630 = vpack.c.b16 %v614, %v613
      %647 = vmatpush.bf16.msra.mxu0 %v622
      %648 = vmatpush.bf16.msra.mxu0 %v621
      %649 = vmatpush.bf16.msra.mxu0 %v620
      %650 = vmatpush.bf16.msra.mxu0 %v619
      %651 = vmatpush.bf16.msra.mxu0 %v618
      %652 = vmatpush.bf16.msra.mxu0 %v617
      %653 = vmatpush.bf16.msra.mxu0 %v616
      %654 = vmatpush.bf16.msra.mxu0 %v615
      %655 = vmatmul.bf16.gmra.mxu0 %v547
      %v656 = vpop.f32.mrf.mxu0
      %v657 = vadd.f32 %v536, %v656
      %v658 = vpop.f32.mrf.mxu0
      %v659 = vadd.f32 %v538, %v658
      %660 = vdwg.mxu0
      %661 = vmatpush.bf16.msra.mxu0 %v630
      %662 = vmatpush.bf16.msra.mxu0 %v629
      %663 = vmatpush.bf16.msra.mxu0 %v628
      %664 = vmatpush.bf16.msra.mxu0 %v627
      %665 = vmatpush.bf16.msra.mxu0 %v626
      %666 = vmatpush.bf16.msra.mxu0 %v625
      %667 = vmatpush.bf16.msra.mxu0 %v624
      %668 = vmatpush.bf16.msra.mxu0 %v623
      %669 = vmatmul.bf16.gmra.mxu0 %v548
      %v670 = vpop.f32.mrf.mxu0
      %v671 = vadd.f32 %v657, %v670
      %v672 = vpop.f32.mrf.mxu0
      %v673 = vadd.f32 %v659, %v672
      %674 = vdwg.mxu0
      %s675 = scalar_lea.vmem %s203, 8
      %v676 = vld [vmem:[%s675] sm:$0x33]
      %v677 = vld [vmem:[%s675 + $0x8] sm:$0x33]
      %v678 = vld [vmem:[%s675 + $0x10] sm:$0x33]
      %v679 = vld [vmem:[%s675 + $0x18] sm:$0x33]
      %v684 = vrot.slane %v676, 2
      %v685 = vrot.slane %v677, 2
      %v686 = vrot.slane %v678, 2
      %v687 = vrot.slane %v679, 2
      %v690 = vsel %vm227, %v676, %v684
      %v693 = vsel %vm227, %v677, %v685
      %v696 = vsel %vm227, %v678, %v686
      %v699 = vsel %vm227, %v679, %v687
      %s700 = scalar_lea.vmem %s1, 256
      %v701 = vld [vmem:[%s700] sm:$0xf]
      %v702 = vld [vmem:[%s700 + $0x4] sm:$0xf]
      %v703 = vld [vmem:[%s700 + $0x8] sm:$0xf]
      %v704 = vld [vmem:[%s700 + $0xc] sm:$0xf]
      %v705 = vld [vmem:[%s700 + $0x10] sm:$0xf]
      %v706 = vld [vmem:[%s700 + $0x14] sm:$0xf]
      %v707 = vld [vmem:[%s700 + $0x18] sm:$0xf]
      %v708 = vld [vmem:[%s700 + $0x1c] sm:$0xf]
      %v709 = vld [vmem:[%s700 + $0x20] sm:$0xf]
      %v710 = vld [vmem:[%s700 + $0x24] sm:$0xf]
      %v711 = vld [vmem:[%s700 + $0x28] sm:$0xf]
      %v712 = vld [vmem:[%s700 + $0x2c] sm:$0xf]
      %v713 = vld [vmem:[%s700 + $0x30] sm:$0xf]
      %v714 = vld [vmem:[%s700 + $0x34] sm:$0xf]
      %v715 = vld [vmem:[%s700 + $0x38] sm:$0xf]
      %v716 = vld [vmem:[%s700 + $0x3c] sm:$0xf]
      %v717 = vld [vmem:[%s700 + $0x40] sm:$0xf]
      %v718 = vld [vmem:[%s700 + $0x44] sm:$0xf]
      %v719 = vld [vmem:[%s700 + $0x48] sm:$0xf]
      %v720 = vld [vmem:[%s700 + $0x4c] sm:$0xf]
      %v721 = vld [vmem:[%s700 + $0x50] sm:$0xf]
      %v722 = vld [vmem:[%s700 + $0x54] sm:$0xf]
      %v723 = vld [vmem:[%s700 + $0x58] sm:$0xf]
      %v724 = vld [vmem:[%s700 + $0x5c] sm:$0xf]
      %v725 = vld [vmem:[%s700 + $0x60] sm:$0xf]
      %v726 = vld [vmem:[%s700 + $0x64] sm:$0xf]
      %v727 = vld [vmem:[%s700 + $0x68] sm:$0xf]
      %v728 = vld [vmem:[%s700 + $0x6c] sm:$0xf]
      %v729 = vld [vmem:[%s700 + $0x70] sm:$0xf]
      %v730 = vld [vmem:[%s700 + $0x74] sm:$0xf]
      %v731 = vld [vmem:[%s700 + $0x78] sm:$0xf]
      %v732 = vld [vmem:[%s700 + $0x7c] sm:$0xf]
      %733 = vst [vmem:[#allocation1] ss:$4 sm:$0xff] %v690
      %s734 = scalar_lea.vmem [#allocation1], 1
      %735 = vst [vmem:[%s734] ss:$4 sm:$0xff] %v693
      %s736 = scalar_lea.vmem [#allocation1], 2
      %737 = vst [vmem:[%s736] ss:$4 sm:$0xff] %v696
      %s738 = scalar_lea.vmem [#allocation1], 3
      %739 = vst [vmem:[%s738] ss:$4 sm:$0xff] %v699
      %v740 = vld.sshfl [vmem:[#allocation1] sm:$0xff pattern:$0x73625140]
      %v741 = vld.sshfl [vmem:[#allocation1 + $0x8] sm:$0xff pattern:$0x73625140]
      %v776 = vunpack.c.l.b16 %v701
      %v777 = vunpack.c.l.b16 %v702
      %v778 = vunpack.c.l.b16 %v703
      %v779 = vunpack.c.l.b16 %v704
      %v780 = vunpack.c.l.b16 %v705
      %v781 = vunpack.c.l.b16 %v706
      %v782 = vunpack.c.l.b16 %v707
      %v783 = vunpack.c.l.b16 %v708
      %v784 = vunpack.c.l.b16 %v709
      %v785 = vunpack.c.l.b16 %v710
      %v786 = vunpack.c.l.b16 %v711
      %v787 = vunpack.c.l.b16 %v712
      %v788 = vunpack.c.l.b16 %v713
      %v789 = vunpack.c.l.b16 %v714
      %v790 = vunpack.c.l.b16 %v715
      %v791 = vunpack.c.l.b16 %v716
      %v792 = vunpack.c.l.b16 %v717
      %v793 = vunpack.c.l.b16 %v718
      %v794 = vunpack.c.l.b16 %v719
      %v795 = vunpack.c.l.b16 %v720
      %v796 = vunpack.c.l.b16 %v721
      %v797 = vunpack.c.l.b16 %v722
      %v798 = vunpack.c.l.b16 %v723
      %v799 = vunpack.c.l.b16 %v724
      %v800 = vunpack.c.l.b16 %v725
      %v801 = vunpack.c.l.b16 %v726
      %v802 = vunpack.c.l.b16 %v727
      %v803 = vunpack.c.l.b16 %v728
      %v804 = vunpack.c.l.b16 %v729
      %v805 = vunpack.c.l.b16 %v730
      %v806 = vunpack.c.l.b16 %v731
      %v807 = vunpack.c.l.b16 %v732
      %v808 = vpack.c.b16 %v777, %v776
      %v809 = vpack.c.b16 %v779, %v778
      %v810 = vpack.c.b16 %v781, %v780
      %v811 = vpack.c.b16 %v783, %v782
      %v812 = vpack.c.b16 %v785, %v784
      %v813 = vpack.c.b16 %v787, %v786
      %v814 = vpack.c.b16 %v789, %v788
      %v815 = vpack.c.b16 %v791, %v790
      %v816 = vpack.c.b16 %v793, %v792
      %v817 = vpack.c.b16 %v795, %v794
      %v818 = vpack.c.b16 %v797, %v796
      %v819 = vpack.c.b16 %v799, %v798
      %v820 = vpack.c.b16 %v801, %v800
      %v821 = vpack.c.b16 %v803, %v802
      %v822 = vpack.c.b16 %v805, %v804
      %v823 = vpack.c.b16 %v807, %v806
      %840 = vmatpush.bf16.msra.mxu0 %v815
      %841 = vmatpush.bf16.msra.mxu0 %v814
      %842 = vmatpush.bf16.msra.mxu0 %v813
      %843 = vmatpush.bf16.msra.mxu0 %v812
      %844 = vmatpush.bf16.msra.mxu0 %v811
      %845 = vmatpush.bf16.msra.mxu0 %v810
      %846 = vmatpush.bf16.msra.mxu0 %v809
      %847 = vmatpush.bf16.msra.mxu0 %v808
      %848 = vmatmul.bf16.gmra.mxu0 %v740
      %v849 = vpop.f32.mrf.mxu0
      %v850 = vadd.f32 0.0, %v849
      %v851 = vpop.f32.mrf.mxu0
      %v852 = vadd.f32 0.0, %v851
      %853 = vdwg.mxu0
      %854 = vmatpush.bf16.msra.mxu0 %v823
      %855 = vmatpush.bf16.msra.mxu0 %v822
      %856 = vmatpush.bf16.msra.mxu0 %v821
      %857 = vmatpush.bf16.msra.mxu0 %v820
      %858 = vmatpush.bf16.msra.mxu0 %v819
      %859 = vmatpush.bf16.msra.mxu0 %v818
      %860 = vmatpush.bf16.msra.mxu0 %v817
      %861 = vmatpush.bf16.msra.mxu0 %v816
      %862 = vmatmul.bf16.gmra.mxu0 %v741
      %v863 = vpop.f32.mrf.mxu0
      %v864 = vadd.f32 %v850, %v863
      %v865 = vpop.f32.mrf.mxu0
      %v866 = vadd.f32 %v852, %v865
      %867 = vdwg.mxu0
      %v868 = vadd.f32 %v671, %v864
      %v869 = vadd.f32 %v673, %v866
      %v870 = vld [vmem:[%s675] sm:$0x77]
      %v871 = vld [vmem:[%s675 + $0x8] sm:$0x77]
      %v872 = vld [vmem:[%s675 + $0x10] sm:$0x77]
      %v873 = vld [vmem:[%s675 + $0x18] sm:$0x77]
      %v878 = vrot.slane %v870, 2
      %v879 = vrot.slane %v871, 2
      %v880 = vrot.slane %v872, 2
      %v881 = vrot.slane %v873, 2
      %v884 = vsel %vm227, %v870, %v878
      %v885 = vsel %vm287, %v870, %v878
      %v887 = vrot.slane %v885, 2
      %v890 = vsel %vm227, %v871, %v879
      %v891 = vsel %vm287, %v871, %v879
      %v893 = vrot.slane %v891, 2
      %v896 = vsel %vm227, %v872, %v880
      %v897 = vsel %vm287, %v872, %v880
      %v899 = vrot.slane %v897, 2
      %v902 = vsel %vm227, %v873, %v881
      %v903 = vsel %vm287, %v873, %v881
      %v905 = vrot.slane %v903, 2
      %v906 = vshrl.u32 %v884, 16
      %v908 = vrot.slane %v906, 6
      %v909 = vshll.u32 %v884, 16
      %v911 = vrot.slane %v909, 7
      %v912 = vor.u32 %v908, %v911
      %v913 = vrot.slane %v912, 2
      %v915 = vshll.u32 %v887, 16
      %v917 = vrot.slane %v915, 7
      %v918 = vsel %vm315, %v913, %v917
      %v919 = vshrl.u32 %v890, 16
      %v921 = vrot.slane %v919, 6
      %v922 = vshll.u32 %v890, 16
      %v924 = vrot.slane %v922, 7
      %v925 = vor.u32 %v921, %v924
      %v926 = vrot.slane %v925, 2
      %v928 = vshll.u32 %v893, 16
      %v930 = vrot.slane %v928, 7
      %v931 = vsel %vm315, %v926, %v930
      %v932 = vshrl.u32 %v896, 16
      %v934 = vrot.slane %v932, 6
      %v935 = vshll.u32 %v896, 16
      %v937 = vrot.slane %v935, 7
      %v938 = vor.u32 %v934, %v937
      %v939 = vrot.slane %v938, 2
      %v941 = vshll.u32 %v899, 16
      %v943 = vrot.slane %v941, 7
      %v944 = vsel %vm315, %v939, %v943
      %v945 = vshrl.u32 %v902, 16
      %v947 = vrot.slane %v945, 6
      %v948 = vshll.u32 %v902, 16
      %v950 = vrot.slane %v948, 7
      %v951 = vor.u32 %v947, %v950
      %v952 = vrot.slane %v951, 2
      %v954 = vshll.u32 %v905, 16
      %v956 = vrot.slane %v954, 7
      %v957 = vsel %vm315, %v952, %v956
      %s958 = scalar_lea.vmem %s1, 384
      %v959 = vld [vmem:[%s958] sm:$0xf]
      %v960 = vld [vmem:[%s958 + $0x4] sm:$0xf]
      %v961 = vld [vmem:[%s958 + $0x8] sm:$0xf]
      %v962 = vld [vmem:[%s958 + $0xc] sm:$0xf]
      %v963 = vld [vmem:[%s958 + $0x10] sm:$0xf]
      %v964 = vld [vmem:[%s958 + $0x14] sm:$0xf]
      %v965 = vld [vmem:[%s958 + $0x18] sm:$0xf]
      %v966 = vld [vmem:[%s958 + $0x1c] sm:$0xf]
      %v967 = vld [vmem:[%s958 + $0x20] sm:$0xf]
      %v968 = vld [vmem:[%s958 + $0x24] sm:$0xf]
      %v969 = vld [vmem:[%s958 + $0x28] sm:$0xf]
      %v970 = vld [vmem:[%s958 + $0x2c] sm:$0xf]
      %v971 = vld [vmem:[%s958 + $0x30] sm:$0xf]
      %v972 = vld [vmem:[%s958 + $0x34] sm:$0xf]
      %v973 = vld [vmem:[%s958 + $0x38] sm:$0xf]
      %v974 = vld [vmem:[%s958 + $0x3c] sm:$0xf]
      %v975 = vld [vmem:[%s958 + $0x40] sm:$0xf]
      %v976 = vld [vmem:[%s958 + $0x44] sm:$0xf]
      %v977 = vld [vmem:[%s958 + $0x48] sm:$0xf]
      %v978 = vld [vmem:[%s958 + $0x4c] sm:$0xf]
      %v979 = vld [vmem:[%s958 + $0x50] sm:$0xf]
      %v980 = vld [vmem:[%s958 + $0x54] sm:$0xf]
      %v981 = vld [vmem:[%s958 + $0x58] sm:$0xf]
      %v982 = vld [vmem:[%s958 + $0x5c] sm:$0xf]
      %v983 = vld [vmem:[%s958 + $0x60] sm:$0xf]
      %v984 = vld [vmem:[%s958 + $0x64] sm:$0xf]
      %v985 = vld [vmem:[%s958 + $0x68] sm:$0xf]
      %v986 = vld [vmem:[%s958 + $0x6c] sm:$0xf]
      %v987 = vld [vmem:[%s958 + $0x70] sm:$0xf]
      %v988 = vld [vmem:[%s958 + $0x74] sm:$0xf]
      %v989 = vld [vmem:[%s958 + $0x78] sm:$0xf]
      %v990 = vld [vmem:[%s958 + $0x7c] sm:$0xf]
      %992 = vst [vmem:[#allocation1] ss:$4 sm:$0xff] %v918
      %s994 = scalar_lea.vmem [#allocation1], 1
      %995 = vst [vmem:[%s994] ss:$4 sm:$0xff] %v931
      %s997 = scalar_lea.vmem [#allocation1], 2
      %998 = vst [vmem:[%s997] ss:$4 sm:$0xff] %v944
      %s1000 = scalar_lea.vmem [#allocation1], 3
      %1001 = vst [vmem:[%s1000] ss:$4 sm:$0xff] %v957
      %v1002 = vld.sshfl [vmem:[#allocation1] sm:$0xff pattern:$0x73625140]
      %v1003 = vld.sshfl [vmem:[#allocation1 + $0x8] sm:$0xff pattern:$0x73625140]
      %v1038 = vunpack.c.l.b16 %v959
      %v1039 = vunpack.c.l.b16 %v960
      %v1040 = vunpack.c.l.b16 %v961
      %v1041 = vunpack.c.l.b16 %v962
      %v1042 = vunpack.c.l.b16 %v963
      %v1043 = vunpack.c.l.b16 %v964
      %v1044 = vunpack.c.l.b16 %v965
      %v1045 = vunpack.c.l.b16 %v966
      %v1046 = vunpack.c.l.b16 %v967
      %v1047 = vunpack.c.l.b16 %v968
      %v1048 = vunpack.c.l.b16 %v969
      %v1049 = vunpack.c.l.b16 %v970
      %v1050 = vunpack.c.l.b16 %v971
      %v1051 = vunpack.c.l.b16 %v972
      %v1052 = vunpack.c.l.b16 %v973
      %v1053 = vunpack.c.l.b16 %v974
      %v1054 = vunpack.c.l.b16 %v975
      %v1055 = vunpack.c.l.b16 %v976
      %v1056 = vunpack.c.l.b16 %v977
      %v1057 = vunpack.c.l.b16 %v978
      %v1058 = vunpack.c.l.b16 %v979
      %v1059 = vunpack.c.l.b16 %v980
      %v1060 = vunpack.c.l.b16 %v981
      %v1061 = vunpack.c.l.b16 %v982
      %v1062 = vunpack.c.l.b16 %v983
      %v1063 = vunpack.c.l.b16 %v984
      %v1064 = vunpack.c.l.b16 %v985
      %v1065 = vunpack.c.l.b16 %v986
      %v1066 = vunpack.c.l.b16 %v987
      %v1067 = vunpack.c.l.b16 %v988
      %v1068 = vunpack.c.l.b16 %v989
      %v1069 = vunpack.c.l.b16 %v990
      %v1070 = vpack.c.b16 %v1039, %v1038
      %v1071 = vpack.c.b16 %v1041, %v1040
      %v1072 = vpack.c.b16 %v1043, %v1042
      %v1073 = vpack.c.b16 %v1045, %v1044
      %v1074 = vpack.c.b16 %v1047, %v1046
      %v1075 = vpack.c.b16 %v1049, %v1048
      %v1076 = vpack.c.b16 %v1051, %v1050
      %v1077 = vpack.c.b16 %v1053, %v1052
      %v1078 = vpack.c.b16 %v1055, %v1054
      %v1079 = vpack.c.b16 %v1057, %v1056
      %v1080 = vpack.c.b16 %v1059, %v1058
      %v1081 = vpack.c.b16 %v1061, %v1060
      %v1082 = vpack.c.b16 %v1063, %v1062
      %v1083 = vpack.c.b16 %v1065, %v1064
      %v1084 = vpack.c.b16 %v1067, %v1066
      %v1085 = vpack.c.b16 %v1069, %v1068
      %1102 = vmatpush.bf16.msra.mxu0 %v1077
      %1103 = vmatpush.bf16.msra.mxu0 %v1076
      %1104 = vmatpush.bf16.msra.mxu0 %v1075
      %1105 = vmatpush.bf16.msra.mxu0 %v1074
      %1106 = vmatpush.bf16.msra.mxu0 %v1073
      %1107 = vmatpush.bf16.msra.mxu0 %v1072
      %1108 = vmatpush.bf16.msra.mxu0 %v1071
      %1109 = vmatpush.bf16.msra.mxu0 %v1070
      %1110 = vmatmul.bf16.gmra.mxu0 %v1002
      %v1111 = vpop.f32.mrf.mxu0
      %v1112 = vadd.f32 0.0, %v1111
      %v1113 = vpop.f32.mrf.mxu0
      %v1114 = vadd.f32 0.0, %v1113
      %1115 = vdwg.mxu0
      %1116 = vmatpush.bf16.msra.mxu0 %v1085
      %1117 = vmatpush.bf16.msra.mxu0 %v1084
      %1118 = vmatpush.bf16.msra.mxu0 %v1083
      %1119 = vmatpush.bf16.msra.mxu0 %v1082
      %1120 = vmatpush.bf16.msra.mxu0 %v1081
      %1121 = vmatpush.bf16.msra.mxu0 %v1080
      %1122 = vmatpush.bf16.msra.mxu0 %v1079
      %1123 = vmatpush.bf16.msra.mxu0 %v1078
      %1124 = vmatmul.bf16.gmra.mxu0 %v1003
      %v1125 = vpop.f32.mrf.mxu0
      %v1126 = vadd.f32 %v1112, %v1125
      %v1127 = vpop.f32.mrf.mxu0
      %v1128 = vadd.f32 %v1114, %v1127
      %1129 = vdwg.mxu0
      %v1130 = vadd.f32 %v868, %v1126
      %v1131 = vadd.f32 %v869, %v1128
      %1132 = vst [vmem:[%s208] sm:$0xff] %v1130
      %1133 = vst [vmem:[%s208 + $0x8] sm:$0xff] %v1131
      %v1134 = vadd.f32 %v1130, %v1131
      %v1135 = vrot.slane %v1134, 4
      %v1136 = vadd.f32 %v1134, %v1135
      %v1137 = vrot.slane %v1136, 2
      %v1138 = vadd.f32 %v1136, %v1137
      %v1139 = vrot.slane %v1138, 1
      %v1140 = vadd.f32 %v1138, %v1139
      %1141 = vst [vmem:[%s211] sm:$0x1] %v1140
      %v1142 = vmul.f32 %v1130, %v1130
      %v1143 = vmul.f32 %v1131, %v1131
      %v1144 = vadd.f32 %v1142, %v1143
      %v1145 = vrot.slane %v1144, 4
      %v1146 = vadd.f32 %v1144, %v1145
      %v1147 = vrot.slane %v1146, 2
      %v1148 = vadd.f32 %v1146, %v1147
      %v1149 = vrot.slane %v1148, 1
      %v1150 = vadd.f32 %v1148, %v1149
      %1151 = vst [vmem:[%s214] sm:$0x1] %v1150
      %p1152 = scmp.lt.s32.totalorder %s16, 1
      %s1153 = scalar_select %p1152, %s16, 1
      %s1154 = smul.addr %s1153, 2
      %s1155 = smul.addr %s1154, 8
      %s1156 = scalar_lea.vmem %s2, %s1155
      %p1157 = scmp.lt.s32.totalorder %s16, 1
      %s1158 = scalar_select %p1157, %s16, 1
      %s1159 = scalar_lea.vmem %s3, %s1158
      %p1160 = scmp.lt.s32.totalorder %s16, 1
      %s1161 = scalar_select %p1160, %s16, 1
      %s1162 = scalar_lea.vmem %s4, %s1161
      // Predicated region
      $region29: #{patchgan_forward.8} parent=27 // pred_check
        %p1163 = pneg %p81
      $region30: #{patchgan_forward.8} parent=27 // pred_check_branch
        %1165 = sbr.rel (%p1163) target = $region32
      $region31: #{patchgan_forward.8} parent=27 // pred_region
        _
      $region32: #{patchgan_forward.8} parent=27 // pred_fallthru
        _
      // Predicated region
      $region33: #{patchgan_forward.8} parent=27 // pred_check
        %p1166 = pneg %p107
      $region34: #{patchgan_forward.8} parent=27 // pred_check_branch
        %1168 = sbr.rel (%p1166) target = $region36
      $region35: #{patchgan_forward.8} parent=27 // pred_region
        _
      $region36: #{patchgan_forward.8} parent=27 // pred_fallthru
        _
      // Predicated region
      $region37: #{patchgan_forward.8} parent=27 // pred_check
        %p1169 = pneg %p133
      $region38: #{patchgan_forward.8} parent=27 // pred_check_branch
        %1171 = sbr.rel (%p1169) target = $region40
      $region39: #{patchgan_forward.8} parent=27 // pred_region
        _
      $region40: #{patchgan_forward.8} parent=27 // pred_fallthru
        _
    $region28: #{patchgan_forward.8} parent=5 // pred_fallthru
      _
    %p1172 = scmp.le.s32.totalorder 2, %s11
    // Predicated region
    $region41: #{patchgan_forward.8} parent=5 // pred_check
      %p1173 = pneg %p1172
    $region42: #{patchgan_forward.8} parent=5 // pred_check_branch
      %1175 = sbr.rel (%p1173) target = $region44
    $region43: #{patchgan_forward.8} parent=5 // pred_region
      %s1176 = ssub.s32 %s11, 2
      // Predicated region
      $region45: #{patchgan_forward.8} parent=43 // pred_check
        %p1177 = pneg %p87
      $region46: #{patchgan_forward.8} parent=43 // pred_check_branch
        %1179 = sbr.rel (%p1177) target = $region48
      $region47: #{patchgan_forward.8} parent=43 // pred_region
        %p1180 = scmp.lt.s32.totalorder %s17, 1
        %s1181 = scalar_select %p1180, %s17, 1
        %s1182 = smul.addr %s1181, 2
        %s1183 = smul.addr %s1182, 8
        %s1184 = scalar_lea.vmem %s2, %s1183
      $region48: #{patchgan_forward.8} parent=43 // pred_fallthru
        _
      // Predicated region
      $region49: #{patchgan_forward.8} parent=43 // pred_check
        %p1185 = pneg %p113
      $region50: #{patchgan_forward.8} parent=43 // pred_check_branch
        %1187 = sbr.rel (%p1185) target = $region52
      $region51: #{patchgan_forward.8} parent=43 // pred_region
        %p1188 = scmp.lt.s32.totalorder %s17, 1
        %s1189 = scalar_select %p1188, %s17, 1
        %s1190 = scalar_lea.vmem %s3, %s1189
      $region52: #{patchgan_forward.8} parent=43 // pred_fallthru
        _
      // Predicated region
      $region53: #{patchgan_forward.8} parent=43 // pred_check
        %p1191 = pneg %p139
      $region54: #{patchgan_forward.8} parent=43 // pred_check_branch
        %1193 = sbr.rel (%p1191) target = $region56
      $region55: #{patchgan_forward.8} parent=43 // pred_region
        %p1194 = scmp.lt.s32.totalorder %s17, 1
        %s1195 = scalar_select %p1194, %s17, 1
        %s1196 = scalar_lea.vmem %s4, %s1195
      $region56: #{patchgan_forward.8} parent=43 // pred_fallthru
        _
    $region44: #{patchgan_forward.8} parent=5 // pred_fallthru
      _
  $region6: #{patchgan_forward.8} parent=0 // loop_footer
    %s15 = sadd.s32 1, %s11
  $region7: #{patchgan_forward.8} parent=0 // loop_footer_branch
    %10 = sbr.rel target = $region3
  $region8: #{patchgan_forward.8} parent=0 // loop_exit
    _

// kernel: patchgan_forward.11
$region0: #{patchgan_forward.11}
  #allocation0 [shape = 'u32[]', space=smem, size = 0x4, offset = 0x4, fixed_abs, tag = 'smem constant byte address 0x4 - core index']
  #allocation1 [shape = 'u32[72,128]{1,0:T(1,128)}', space=vmem, size = 0x9000, scoped, tag = 'internal scratch']
  %s0 = inlined_call_operand.vmem [shape: f32[8,256], index: 0, kind: input, shape index: {}]
  %s1 = inlined_call_operand.vmem [shape: f32[1,256], index: 1, kind: input, shape index: {}]
  %s2 = inlined_call_operand.vmem [shape: f32[1,256], index: 2, kind: input, shape index: {}]
  %s3 = inlined_call_operand.vmem [shape: bf16[8,256], index: 3, kind: output, shape index: {}]
  %s4 = sld [smem:[#allocation0]]
  $region22: #{patchgan_forward.11} parent=0
    _
  %s6 = ssub.s32 1, %s4
  %s7 = scalar_select 0, %s6, %s4
  // Predicated region
  $region2: #{patchgan_forward.11} parent=0 // pred_check
    _
  $region3: #{patchgan_forward.11} parent=0 // pred_check_branch
    %9 = sbr.rel (0) target = $region5
  $region4: #{patchgan_forward.11} parent=0 // pred_region
    _
  $region5: #{patchgan_forward.11} parent=0 // pred_fallthru
    _
  // Predicated region
  $region6: #{patchgan_forward.11} parent=0 // pred_check
    _
  $region7: #{patchgan_forward.11} parent=0 // pred_check_branch
    %11 = sbr.rel (0) target = $region9
  $region8: #{patchgan_forward.11} parent=0 // pred_region
    _
  $region9: #{patchgan_forward.11} parent=0 // pred_fallthru
    _
  // Predicated region
  $region10: #{patchgan_forward.11} parent=0 // pred_check
    _
  $region11: #{patchgan_forward.11} parent=0 // pred_check_branch
    %13 = sbr.rel (0) target = $region13
  $region12: #{patchgan_forward.11} parent=0 // pred_region
    _
  $region13: #{patchgan_forward.11} parent=0 // pred_fallthru
    _
  %v14 = vld [vmem:[%s0] sm:$0xff]
  %v15 = vld [vmem:[%s0 + $0x8] sm:$0xff]
  %v16 = vld [vmem:[%s1] sm:$0x3]
  %v18 = vperm.slane %v16, 0
  %v19 = vperm.slane %v16, 1
  %v22 = vmul.f32 %v14, %v18
  %v23 = vmul.f32 %v15, %v19
  %v24 = vld [vmem:[%s2] sm:$0x3]
  %v26 = vperm.slane %v24, 0
  %v27 = vperm.slane %v24, 1
  %v30 = vadd.f32 %v22, %v26
  %v31 = vadd.f32 %v23, %v27
  %vm32 = vcmp.ge.f32.partialorder %v30, 0.0
  %vm33 = vcmp.ge.f32.partialorder %v31, 0.0
  %v34 = vmul.f32 %v30, 0.2
  %v35 = vmul.f32 %v31, 0.2
  %v36 = vsel %vm32, %v30, %v34
  %v37 = vsel %vm33, %v31, %v35
  %v38 = vpack.c.bf16 %v37, %v36
  %39 = vst [vmem:[%s3] sm:$0xff] %v38
  // Predicated region
  $region14: #{patchgan_forward.11} parent=0 // pred_check
    _
  $region15: #{patchgan_forward.11} parent=0 // pred_check_branch
    %41 = sbr.rel (0) target = $region17
  $region16: #{patchgan_forward.11} parent=0 // pred_region
    _
  $region17: #{patchgan_forward.11} parent=0 // pred_fallthru
    _
  // Predicated region
  $region18: #{patchgan_forward.11} parent=0 // pred_check
    _
  $region19: #{patchgan_forward.11} parent=0 // pred_check_branch
    %43 = sbr.rel (0) target = $region21
  $region20: #{patchgan_forward.11} parent=0 // pred_region
    _
  $region21: #{patchgan_forward.11} parent=0 // pred_fallthru
    _

// kernel: patchgan_forward.10
$region0: #{patchgan_forward.10}
  #allocation0 [shape = 'u32[]', space=smem, size = 0x4, offset = 0x4, fixed_abs, tag = 'smem constant byte address 0x4 - core index']
  #allocation1 [shape = 'u32[72,128]{1,0:T(1,128)}', space=vmem, size = 0x9000, scoped, tag = 'internal scratch']
  %s0 = inlined_call_operand.vmem [shape: bf16[2,3,3,512], index: 0, kind: input, shape index: {}]
  %s1 = inlined_call_operand.vmem [shape: bf16[2,2,512,256], index: 1, kind: input, shape index: {}]
  %s2 = inlined_call_operand.vmem [shape: f32[2,4,256], index: 2, kind: output, shape index: {0}]
  %s3 = inlined_call_operand.vmem [shape: f32[2,1,256], index: 3, kind: output, shape index: {1}]
  %s4 = inlined_call_operand.vmem [shape: f32[2,1,256], index: 4, kind: output, shape index: {2}]
  %5 = xla_tuple %s2, %s3, %s4
  %s6 = sld [smem:[#allocation0]]
  $region57: #{patchgan_forward.10} parent=0
    _
  %s8 = ssub.s32 1, %s6
  %s9 = scalar_select 0, %s8, %s6
  loop: start=0, step=1, limit=4
  $region2: #{patchgan_forward.10} parent=0 // loop_pre_header
    _
  $region3: #{patchgan_forward.10} parent=0 // loop_header
    %s11 = sphi 0, %s15
    %p12 = scmp.ge.s32.totalorder %s11, 4
    %s21 = sphi 0, %s23
    %s24 = sphi 0, %s21
    %s25 = sphi 0, %s24
    %s41 = sphi 0, %s25
    %s45 = sphi 0, %s45
    %s47 = sphi 0, %s45
    %s48 = sphi 0, %s47
    %s62 = sphi 0, %s48
    %s68 = sphi 0, %s70
    %s71 = sphi 0, %s68
    %s72 = sphi 0, %s71
    %s88 = sphi 0, %s72
    %s94 = sphi 0, %s96
    %s97 = sphi 0, %s94
    %s98 = sphi 0, %s97
    %s114 = sphi 0, %s98
    %s120 = sphi 0, %s122
    %s123 = sphi 0, %s120
    %s124 = sphi 0, %s123
    %s140 = sphi 0, %s124
  $region4: #{patchgan_forward.10} parent=0 // loop_header_branch
    %14 = sbr.rel (%p12) target = $region8
  $region5: #{patchgan_forward.10} parent=0 // loop_body
    %s16 = ssub.s32 %s11, 1
    %s17 = ssub.s32 %s11, 2
    %s18 = sadd.s32 %s11, 1
    %s19 = ssub.s32 %s11, %s18
    %p20 = scmp.eq.s32.totalorder %s19, 0
    %s22 = sadd.s32 %s21, 1
    %s23 = scalar_select %p20, %s21, %s22
    %p26 = pneg %p20
    %p27 = scmp.eq.s32.totalorder %s11, 1
    %p28 = por %p26, %p27
    %p29 = scmp.ne.s32.totalorder %s21, %s24
    %p30 = scmp.eq.s32.totalorder %s11, 0
    %p31 = por %p29, %p30
    %p32 = scmp.ne.s32.totalorder %s21, %s24
    %p33 = scmp.eq.s32.totalorder %s16, 1
    %p34 = por %p32, %p33
    %p35 = scmp.ne.s32.totalorder %s24, %s25
    %p36 = scmp.eq.s32.totalorder %s16, 0
    %p37 = por %p35, %p36
    %p38 = scmp.ne.s32.totalorder %s24, %s25
    %p39 = scmp.eq.s32.totalorder %s17, 1
    %p40 = por %p38, %p39
    %p42 = scmp.ne.s32.totalorder %s25, %s41
    %p43 = scmp.eq.s32.totalorder %s17, 0
    %p44 = por %p42, %p43
    %s46 = sadd.s32 %s45, 1
    %p49 = scmp.eq.s32.totalorder %s11, 1
    %p50 = scmp.ne.s32.totalorder %s45, %s47
    %p51 = scmp.eq.s32.totalorder %s11, 0
    %p52 = por %p50, %p51
    %p53 = scmp.ne.s32.totalorder %s45, %s47
    %p54 = scmp.eq.s32.totalorder %s16, 1
    %p55 = por %p53, %p54
    %p56 = scmp.ne.s32.totalorder %s47, %s48
    %p57 = scmp.eq.s32.totalorder %s16, 0
    %p58 = por %p56, %p57
    %p59 = scmp.ne.s32.totalorder %s47, %s48
    %p60 = scmp.eq.s32.totalorder %s17, 1
    %p61 = por %p59, %p60
    %p63 = scmp.ne.s32.totalorder %s48, %s62
    %p64 = scmp.eq.s32.totalorder %s17, 0
    %p65 = por %p63, %p64
    %s66 = ssub.s32 %s11, %s18
    %p67 = scmp.eq.s32.totalorder %s66, 0
    %s69 = sadd.s32 %s68, 1
    %s70 = scalar_select %p67, %s68, %s69
    %p73 = pneg %p67
    %p74 = scmp.eq.s32.totalorder %s11, 1
    %p75 = por %p73, %p74
    %p76 = scmp.ne.s32.totalorder %s68, %s71
    %p77 = scmp.eq.s32.totalorder %s11, 0
    %p78 = por %p76, %p77
    %p79 = scmp.ne.s32.totalorder %s68, %s71
    %p80 = scmp.eq.s32.totalorder %s16, 1
    %p81 = por %p79, %p80
    %p82 = scmp.ne.s32.totalorder %s71, %s72
    %p83 = scmp.eq.s32.totalorder %s16, 0
    %p84 = por %p82, %p83
    %p85 = scmp.ne.s32.totalorder %s71, %s72
    %p86 = scmp.eq.s32.totalorder %s17, 1
    %p87 = por %p85, %p86
    %p89 = scmp.ne.s32.totalorder %s72, %s88
    %p90 = scmp.eq.s32.totalorder %s17, 0
    %p91 = por %p89, %p90
    %s92 = ssub.s32 %s11, %s18
    %p93 = scmp.eq.s32.totalorder %s92, 0
    %s95 = sadd.s32 %s94, 1
    %s96 = scalar_select %p93, %s94, %s95
    %p99 = pneg %p93
    %p100 = scmp.eq.s32.totalorder %s11, 1
    %p101 = por %p99, %p100
    %p102 = scmp.ne.s32.totalorder %s94, %s97
    %p103 = scmp.eq.s32.totalorder %s11, 0
    %p104 = por %p102, %p103
    %p105 = scmp.ne.s32.totalorder %s94, %s97
    %p106 = scmp.eq.s32.totalorder %s16, 1
    %p107 = por %p105, %p106
    %p108 = scmp.ne.s32.totalorder %s97, %s98
    %p109 = scmp.eq.s32.totalorder %s16, 0
    %p110 = por %p108, %p109
    %p111 = scmp.ne.s32.totalorder %s97, %s98
    %p112 = scmp.eq.s32.totalorder %s17, 1
    %p113 = por %p111, %p112
    %p115 = scmp.ne.s32.totalorder %s98, %s114
    %p116 = scmp.eq.s32.totalorder %s17, 0
    %p117 = por %p115, %p116
    %s118 = ssub.s32 %s11, %s18
    %p119 = scmp.eq.s32.totalorder %s118, 0
    %s121 = sadd.s32 %s120, 1
    %s122 = scalar_select %p119, %s120, %s121
    %p125 = pneg %p119
    %p126 = scmp.eq.s32.totalorder %s11, 1
    %p127 = por %p125, %p126
    %p128 = scmp.ne.s32.totalorder %s120, %s123
    %p129 = scmp.eq.s32.totalorder %s11, 0
    %p130 = por %p128, %p129
    %p131 = scmp.ne.s32.totalorder %s120, %s123
    %p132 = scmp.eq.s32.totalorder %s16, 1
    %p133 = por %p131, %p132
    %p134 = scmp.ne.s32.totalorder %s123, %s124
    %p135 = scmp.eq.s32.totalorder %s16, 0
    %p136 = por %p134, %p135
    %p137 = scmp.ne.s32.totalorder %s123, %s124
    %p138 = scmp.eq.s32.totalorder %s17, 1
    %p139 = por %p137, %p138
    %p141 = scmp.ne.s32.totalorder %s124, %s140
    %p142 = scmp.eq.s32.totalorder %s17, 0
    %p143 = por %p141, %p142
    %p144 = scmp.le.s32.totalorder 1, %s11
    %p145 = scmp.lt.s32.totalorder %s11, 3
    %p146 = pnand %p144, %p145
    %p147 = pneg %p146
    // Predicated region
    $region9: #{patchgan_forward.10} parent=5 // pred_check
      _
    $region10: #{patchgan_forward.10} parent=5 // pred_check_branch
      %149 = sbr.rel (%p146) target = $region12
    $region11: #{patchgan_forward.10} parent=5 // pred_region
      %s150 = ssub.s32 %s11, 1
      // Predicated region
      $region13: #{patchgan_forward.10} parent=11 // pred_check
        %p151 = pneg %p58
      $region14: #{patchgan_forward.10} parent=11 // pred_check_branch
        %153 = sbr.rel (%p151) target = $region16
      $region15: #{patchgan_forward.10} parent=11 // pred_region
        _
      $region16: #{patchgan_forward.10} parent=11 // pred_fallthru
        _
    $region12: #{patchgan_forward.10} parent=5 // pred_fallthru
      _
    %p154 = scmp.lt.s32.totalorder %s11, 2
    // Predicated region
    $region17: #{patchgan_forward.10} parent=5 // pred_check
      %p155 = pneg %p154
    $region18: #{patchgan_forward.10} parent=5 // pred_check_branch
      %157 = sbr.rel (%p155) target = $region20
    $region19: #{patchgan_forward.10} parent=5 // pred_region
      // Predicated region
      $region21: #{patchgan_forward.10} parent=19 // pred_check
        %p158 = pneg %p31
      $region22: #{patchgan_forward.10} parent=19 // pred_check_branch
        %160 = sbr.rel (%p158) target = $region24
      $region23: #{patchgan_forward.10} parent=19 // pred_region
        %p161 = scmp.lt.s32.totalorder %s11, 1
        %s162 = scalar_select %p161, %s11, 1
        %s163 = smul.addr %s162, 12
        %s164 = smul.addr %s163, 2
        %s165 = scalar_lea.vmem %s0, %s164
      $region24: #{patchgan_forward.10} parent=19 // pred_fallthru
        _
    $region20: #{patchgan_forward.10} parent=5 // pred_fallthru
      _
    %p166 = scmp.le.s32.totalorder 1, %s11
    %p167 = scmp.lt.s32.totalorder %s11, 3
    %p168 = pnand %p166, %p167
    %p169 = pneg %p168
    // Predicated region
    $region25: #{patchgan_forward.10} parent=5 // pred_check
      _
    $region26: #{patchgan_forward.10} parent=5 // pred_check_branch
      %171 = sbr.rel (%p168) target = $region28
    $region27: #{patchgan_forward.10} parent=5 // pred_region
      %s172 = ssub.s32 %s11, 1
      %p173 = scmp.lt.s32.totalorder %s16, 1
      %s174 = scalar_select %p173, %s16, 1
      %s175 = smul.addr %s174, 12
      %s176 = smul.addr %s175, 2
      %s177 = scalar_lea.vmem %s0, %s176
      %p178 = pneg %p37
      %p179 = pneg %p34
      %p180 = pneg %p58
      %p181 = pneg %p55
      %p182 = pneg %p84
      %p183 = pneg %p81
      %p184 = scmp.lt.s32.totalorder %s16, 1
      %s185 = scalar_select %p184, %s16, 1
      %s186 = smul.addr %s185, 2
      %s187 = smul.addr %s186, 4
      %s188 = scalar_lea.vmem %s2, %s187
      %p189 = pneg %p110
      %p190 = pneg %p107
      %p191 = scmp.lt.s32.totalorder %s16, 1
      %s192 = scalar_select %p191, %s16, 1
      %s193 = smul.addr %s192, 2
      %s194 = scalar_lea.vmem %s3, %s193
      %p195 = pneg %p136
      %p196 = pneg %p133
      %p197 = scmp.lt.s32.totalorder %s16, 1
      %s198 = scalar_select %p197, %s16, 1
      %s199 = smul.addr %s198, 2
      %s200 = scalar_lea.vmem %s4, %s199
      %p201 = scmp.lt.s32.totalorder %s16, 1
      %s202 = scalar_select %p201, %s16, 1
      %s203 = smul.addr %s202, 12
      %s204 = smul.addr %s203, 2
      %s205 = scalar_lea.vmem %s0, %s204
      %p206 = scmp.lt.s32.totalorder %s16, 1
      %s207 = scalar_select %p206, %s16, 1
      %s208 = smul.addr %s207, 2
      %s209 = smul.addr %s208, 4
      %s210 = scalar_lea.vmem %s2, %s209
      %p211 = scmp.lt.s32.totalorder %s16, 1
      %s212 = scalar_select %p211, %s16, 1
      %s213 = smul.addr %s212, 2
      %s214 = scalar_lea.vmem %s3, %s213
      %p215 = scmp.lt.s32.totalorder %s16, 1
      %s216 = scalar_select %p215, %s16, 1
      %s217 = smul.addr %s216, 2
      %s218 = scalar_lea.vmem %s4, %s217
      %v219 = vld [vmem:[%s205] sm:$0x55]
      %v220 = vld [vmem:[%s205 + $0x8] sm:$0x55]
      %v223 = vrot.slane %v219, 1
      %v224 = vrot.slane %v219, 2
      %v225 = vrot.slane %v219, 3
      %v226 = vrot.slane %v220, 1
      %v227 = vrot.slane %v220, 2
      %v228 = vrot.slane %v220, 3
      %vm229 = vcmask 1040384
      %v232 = vsel %vm229, %v219, %v223
      %vm233 = vcmask 1042434
      %v236 = vsel %vm233, %v224, %v225
      %vm237 = vcmask 1041408
      %v238 = vsel %vm237, %v232, %v236
      %v241 = vsel %vm229, %v220, %v226
      %v244 = vsel %vm233, %v227, %v228
      %v245 = vsel %vm237, %v241, %v244
      %v246 = vld [vmem:[%s1] sm:$0xff]
      %v247 = vld [vmem:[%s1 + $0x8] sm:$0xff]
      %v248 = vld [vmem:[%s1 + $0x10] sm:$0xff]
      %v249 = vld [vmem:[%s1 + $0x18] sm:$0xff]
      %v250 = vld [vmem:[%s1 + $0x20] sm:$0xff]
      %v251 = vld [vmem:[%s1 + $0x28] sm:$0xff]
      %v252 = vld [vmem:[%s1 + $0x30] sm:$0xff]
      %v253 = vld [vmem:[%s1 + $0x38] sm:$0xff]
      %v254 = vld [vmem:[%s1 + $0x40] sm:$0xff]
      %v255 = vld [vmem:[%s1 + $0x48] sm:$0xff]
      %v256 = vld [vmem:[%s1 + $0x50] sm:$0xff]
      %v257 = vld [vmem:[%s1 + $0x58] sm:$0xff]
      %v258 = vld [vmem:[%s1 + $0x60] sm:$0xff]
      %v259 = vld [vmem:[%s1 + $0x68] sm:$0xff]
      %v260 = vld [vmem:[%s1 + $0x70] sm:$0xff]
      %v261 = vld [vmem:[%s1 + $0x78] sm:$0xff]
      %v262 = vld [vmem:[%s1 + $0x80] sm:$0xff]
      %v263 = vld [vmem:[%s1 + $0x88] sm:$0xff]
      %v264 = vld [vmem:[%s1 + $0x90] sm:$0xff]
      %v265 = vld [vmem:[%s1 + $0x98] sm:$0xff]
      %v266 = vld [vmem:[%s1 + $0xa0] sm:$0xff]
      %v267 = vld [vmem:[%s1 + $0xa8] sm:$0xff]
      %v268 = vld [vmem:[%s1 + $0xb0] sm:$0xff]
      %v269 = vld [vmem:[%s1 + $0xb8] sm:$0xff]
      %v270 = vld [vmem:[%s1 + $0xc0] sm:$0xff]
      %v271 = vld [vmem:[%s1 + $0xc8] sm:$0xff]
      %v272 = vld [vmem:[%s1 + $0xd0] sm:$0xff]
      %v273 = vld [vmem:[%s1 + $0xd8] sm:$0xff]
      %v274 = vld [vmem:[%s1 + $0xe0] sm:$0xff]
      %v275 = vld [vmem:[%s1 + $0xe8] sm:$0xff]
      %v276 = vld [vmem:[%s1 + $0xf0] sm:$0xff]
      %v277 = vld [vmem:[%s1 + $0xf8] sm:$0xff]
      %v278 = vld [vmem:[%s1 + $0x100] sm:$0xff]
      %v279 = vld [vmem:[%s1 + $0x108] sm:$0xff]
      %v280 = vld [vmem:[%s1 + $0x110] sm:$0xff]
      %v281 = vld [vmem:[%s1 + $0x118] sm:$0xff]
      %v282 = vld [vmem:[%s1 + $0x120] sm:$0xff]
      %v283 = vld [vmem:[%s1 + $0x128] sm:$0xff]
      %v284 = vld [vmem:[%s1 + $0x130] sm:$0xff]
      %v285 = vld [vmem:[%s1 + $0x138] sm:$0xff]
      %v286 = vld [vmem:[%s1 + $0x140] sm:$0xff]
      %v287 = vld [vmem:[%s1 + $0x148] sm:$0xff]
      %v288 = vld [vmem:[%s1 + $0x150] sm:$0xff]
      %v289 = vld [vmem:[%s1 + $0x158] sm:$0xff]
      %v290 = vld [vmem:[%s1 + $0x160] sm:$0xff]
      %v291 = vld [vmem:[%s1 + $0x168] sm:$0xff]
      %v292 = vld [vmem:[%s1 + $0x170] sm:$0xff]
      %v293 = vld [vmem:[%s1 + $0x178] sm:$0xff]
      %v294 = vld [vmem:[%s1 + $0x180] sm:$0xff]
      %v295 = vld [vmem:[%s1 + $0x188] sm:$0xff]
      %v296 = vld [vmem:[%s1 + $0x190] sm:$0xff]
      %v297 = vld [vmem:[%s1 + $0x198] sm:$0xff]
      %v298 = vld [vmem:[%s1 + $0x1a0] sm:$0xff]
      %v299 = vld [vmem:[%s1 + $0x1a8] sm:$0xff]
      %v300 = vld [vmem:[%s1 + $0x1b0] sm:$0xff]
      %v301 = vld [vmem:[%s1 + $0x1b8] sm:$0xff]
      %v302 = vld [vmem:[%s1 + $0x1c0] sm:$0xff]
      %v303 = vld [vmem:[%s1 + $0x1c8] sm:$0xff]
      %v304 = vld [vmem:[%s1 + $0x1d0] sm:$0xff]
      %v305 = vld [vmem:[%s1 + $0x1d8] sm:$0xff]
      %v306 = vld [vmem:[%s1 + $0x1e0] sm:$0xff]
      %v307 = vld [vmem:[%s1 + $0x1e8] sm:$0xff]
      %v308 = vld [vmem:[%s1 + $0x1f0] sm:$0xff]
      %v309 = vld [vmem:[%s1 + $0x1f8] sm:$0xff]
      %v310 = vld [vmem:[%s205] sm:$0xff]
      %v311 = vld [vmem:[%s205 + $0x8] sm:$0xff]
      %v314 = vrot.slane %v310, 1
      %v315 = vrot.slane %v310, 2
      %v316 = vrot.slane %v310, 3
      %v317 = vrot.slane %v311, 1
      %v318 = vrot.slane %v311, 2
      %v319 = vrot.slane %v311, 3
      %v322 = vsel %vm229, %v310, %v314
      %v325 = vsel %vm233, %v315, %v316
      %v326 = vsel %vm237, %v322, %v325
      %vm327 = vcmask 1041409
      %v328 = vsel %vm327, %v310, %v314
      %vm329 = vcmask 1043459
      %v330 = vsel %vm329, %v315, %v316
      %vm331 = vcmask 1042433
      %v332 = vsel %vm331, %v328, %v330
      %v334 = vrot.slane %v332, 1
      %v337 = vsel %vm229, %v311, %v317
      %v340 = vsel %vm233, %v318, %v319
      %v341 = vsel %vm237, %v337, %v340
      %v342 = vsel %vm327, %v311, %v317
      %v343 = vsel %vm329, %v318, %v319
      %v344 = vsel %vm331, %v342, %v343
      %v346 = vrot.slane %v344, 1
      %vm347 = vsmask.f32 256
      %vm348 = vsmask.f32 1284
      %vm349 = vmor %vm347, %vm348
      %vm350 = vsmask.f32 2312
      %vm351 = vmor %vm349, %vm350
      %vm352 = vsmask.f32 3340
      %vm353 = vmor %vm351, %vm352
      %vm354 = vsmask.f32 4368
      %vm355 = vmor %vm353, %vm354
      %vm356 = vsmask.f32 5396
      %vm357 = vmor %vm355, %vm356
      %vm358 = vsmask.f32 6424
      %vm359 = vmor %vm357, %vm358
      %vm360 = vsmask.f32 7452
      %vm361 = vmor %vm359, %vm360
      %v362 = vshrl.u32 %v326, 16
      %v364 = vrot.slane %v362, 7
      %v365 = vrot.slane %v364, 1
      %v367 = vshll.u32 %v334, 16
      %v369 = vsel %vm361, %v365, %v367
      %v370 = vshrl.u32 %v341, 16
      %v372 = vrot.slane %v370, 7
      %v373 = vrot.slane %v372, 1
      %v375 = vshll.u32 %v346, 16
      %v377 = vsel %vm361, %v373, %v375
      %s378 = scalar_lea.vmem %s1, 512
      %v379 = vld [vmem:[%s378] sm:$0xff]
      %v380 = vld [vmem:[%s378 + $0x8] sm:$0xff]
      %v381 = vld [vmem:[%s378 + $0x10] sm:$0xff]
      %v382 = vld [vmem:[%s378 + $0x18] sm:$0xff]
      %v383 = vld [vmem:[%s378 + $0x20] sm:$0xff]
      %v384 = vld [vmem:[%s378 + $0x28] sm:$0xff]
      %v385 = vld [vmem:[%s378 + $0x30] sm:$0xff]
      %v386 = vld [vmem:[%s378 + $0x38] sm:$0xff]
      %v387 = vld [vmem:[%s378 + $0x40] sm:$0xff]
      %v388 = vld [vmem:[%s378 + $0x48] sm:$0xff]
      %v389 = vld [vmem:[%s378 + $0x50] sm:$0xff]
      %v390 = vld [vmem:[%s378 + $0x58] sm:$0xff]
      %v391 = vld [vmem:[%s378 + $0x60] sm:$0xff]
      %v392 = vld [vmem:[%s378 + $0x68] sm:$0xff]
      %v393 = vld [vmem:[%s378 + $0x70] sm:$0xff]
      %v394 = vld [vmem:[%s378 + $0x78] sm:$0xff]
      %v395 = vld [vmem:[%s378 + $0x80] sm:$0xff]
      %v396 = vld [vmem:[%s378 + $0x88] sm:$0xff]
      %v397 = vld [vmem:[%s378 + $0x90] sm:$0xff]
      %v398 = vld [vmem:[%s378 + $0x98] sm:$0xff]
      %v399 = vld [vmem:[%s378 + $0xa0] sm:$0xff]
      %v400 = vld [vmem:[%s378 + $0xa8] sm:$0xff]
      %v401 = vld [vmem:[%s378 + $0xb0] sm:$0xff]
      %v402 = vld [vmem:[%s378 + $0xb8] sm:$0xff]
      %v403 = vld [vmem:[%s378 + $0xc0] sm:$0xff]
      %v404 = vld [vmem:[%s378 + $0xc8] sm:$0xff]
      %v405 = vld [vmem:[%s378 + $0xd0] sm:$0xff]
      %v406 = vld [vmem:[%s378 + $0xd8] sm:$0xff]
      %v407 = vld [vmem:[%s378 + $0xe0] sm:$0xff]
      %v408 = vld [vmem:[%s378 + $0xe8] sm:$0xff]
      %v409 = vld [vmem:[%s378 + $0xf0] sm:$0xff]
      %v410 = vld [vmem:[%s378 + $0xf8] sm:$0xff]
      %v411 = vld [vmem:[%s378 + $0x100] sm:$0xff]
      %v412 = vld [vmem:[%s378 + $0x108] sm:$0xff]
      %v413 = vld [vmem:[%s378 + $0x110] sm:$0xff]
      %v414 = vld [vmem:[%s378 + $0x118] sm:$0xff]
      %v415 = vld [vmem:[%s378 + $0x120] sm:$0xff]
      %v416 = vld [vmem:[%s378 + $0x128] sm:$0xff]
      %v417 = vld [vmem:[%s378 + $0x130] sm:$0xff]
      %v418 = vld [vmem:[%s378 + $0x138] sm:$0xff]
      %v419 = vld [vmem:[%s378 + $0x140] sm:$0xff]
      %v420 = vld [vmem:[%s378 + $0x148] sm:$0xff]
      %v421 = vld [vmem:[%s378 + $0x150] sm:$0xff]
      %v422 = vld [vmem:[%s378 + $0x158] sm:$0xff]
      %v423 = vld [vmem:[%s378 + $0x160] sm:$0xff]
      %v424 = vld [vmem:[%s378 + $0x168] sm:$0xff]
      %v425 = vld [vmem:[%s378 + $0x170] sm:$0xff]
      %v426 = vld [vmem:[%s378 + $0x178] sm:$0xff]
      %v427 = vld [vmem:[%s378 + $0x180] sm:$0xff]
      %v428 = vld [vmem:[%s378 + $0x188] sm:$0xff]
      %v429 = vld [vmem:[%s378 + $0x190] sm:$0xff]
      %v430 = vld [vmem:[%s378 + $0x198] sm:$0xff]
      %v431 = vld [vmem:[%s378 + $0x1a0] sm:$0xff]
      %v432 = vld [vmem:[%s378 + $0x1a8] sm:$0xff]
      %v433 = vld [vmem:[%s378 + $0x1b0] sm:$0xff]
      %v434 = vld [vmem:[%s378 + $0x1b8] sm:$0xff]
      %v435 = vld [vmem:[%s378 + $0x1c0] sm:$0xff]
      %v436 = vld [vmem:[%s378 + $0x1c8] sm:$0xff]
      %v437 = vld [vmem:[%s378 + $0x1d0] sm:$0xff]
      %v438 = vld [vmem:[%s378 + $0x1d8] sm:$0xff]
      %v439 = vld [vmem:[%s378 + $0x1e0] sm:$0xff]
      %v440 = vld [vmem:[%s378 + $0x1e8] sm:$0xff]
      %v441 = vld [vmem:[%s378 + $0x1f0] sm:$0xff]
      %v442 = vld [vmem:[%s378 + $0x1f8] sm:$0xff]
      %444 = vst [vmem:[#allocation1] ss:$9 sm:$0xff] %v369
      %s446 = scalar_lea.vmem [#allocation1], 1
      %447 = vst [vmem:[%s446] ss:$9 sm:$0xff] %v377
      %v448 = vld [vmem:[#allocation1] sm:$0xff]
      %v449 = vld [vmem:[#allocation1 + $0x9] sm:$0xff]
      %v450 = vld [vmem:[#allocation1 + $0x12] sm:$0xff]
      %v451 = vld [vmem:[#allocation1 + $0x1b] sm:$0xff]
      %v520 = vunpack.c.l.b16 %v379
      %v521 = vunpack.c.h.b16 %v379
      %v522 = vunpack.c.l.b16 %v380
      %v523 = vunpack.c.h.b16 %v380
      %v524 = vunpack.c.l.b16 %v381
      %v525 = vunpack.c.h.b16 %v381
      %v526 = vunpack.c.l.b16 %v382
      %v527 = vunpack.c.h.b16 %v382
      %v528 = vunpack.c.l.b16 %v383
      %v529 = vunpack.c.h.b16 %v383
      %v530 = vunpack.c.l.b16 %v384
      %v531 = vunpack.c.h.b16 %v384
      %v532 = vunpack.c.l.b16 %v385
      %v533 = vunpack.c.h.b16 %v385
      %v534 = vunpack.c.l.b16 %v386
      %v535 = vunpack.c.h.b16 %v386
      %v536 = vunpack.c.l.b16 %v387
      %v537 = vunpack.c.h.b16 %v387
      %v538 = vunpack.c.l.b16 %v388
      %v539 = vunpack.c.h.b16 %v388
      %v540 = vunpack.c.l.b16 %v389
      %v541 = vunpack.c.h.b16 %v389
      %v542 = vunpack.c.l.b16 %v390
      %v543 = vunpack.c.h.b16 %v390
      %v544 = vunpack.c.l.b16 %v391
      %v545 = vunpack.c.h.b16 %v391
      %v546 = vunpack.c.l.b16 %v392
      %v547 = vunpack.c.h.b16 %v392
      %v548 = vunpack.c.l.b16 %v393
      %v549 = vunpack.c.h.b16 %v393
      %v550 = vunpack.c.l.b16 %v394
      %v551 = vunpack.c.h.b16 %v394
      %v552 = vunpack.c.l.b16 %v395
      %v553 = vunpack.c.h.b16 %v395
      %v554 = vunpack.c.l.b16 %v396
      %v555 = vunpack.c.h.b16 %v396
      %v556 = vunpack.c.l.b16 %v397
      %v557 = vunpack.c.h.b16 %v397
      %v558 = vunpack.c.l.b16 %v398
      %v559 = vunpack.c.h.b16 %v398
      %v560 = vunpack.c.l.b16 %v399
      %v561 = vunpack.c.h.b16 %v399
      %v562 = vunpack.c.l.b16 %v400
      %v563 = vunpack.c.h.b16 %v400
      %v564 = vunpack.c.l.b16 %v401
      %v565 = vunpack.c.h.b16 %v401
      %v566 = vunpack.c.l.b16 %v402
      %v567 = vunpack.c.h.b16 %v402
      %v568 = vunpack.c.l.b16 %v403
      %v569 = vunpack.c.h.b16 %v403
      %v570 = vunpack.c.l.b16 %v404
      %v571 = vunpack.c.h.b16 %v404
      %v572 = vunpack.c.l.b16 %v405
      %v573 = vunpack.c.h.b16 %v405
      %v574 = vunpack.c.l.b16 %v406
      %v575 = vunpack.c.h.b16 %v406
      %v576 = vunpack.c.l.b16 %v407
      %v577 = vunpack.c.h.b16 %v407
      %v578 = vunpack.c.l.b16 %v408
      %v579 = vunpack.c.h.b16 %v408
      %v580 = vunpack.c.l.b16 %v409
      %v581 = vunpack.c.h.b16 %v409
      %v582 = vunpack.c.l.b16 %v410
      %v583 = vunpack.c.h.b16 %v410
      %v584 = vunpack.c.l.b16 %v411
      %v585 = vunpack.c.h.b16 %v411
      %v586 = vunpack.c.l.b16 %v412
      %v587 = vunpack.c.h.b16 %v412
      %v588 = vunpack.c.l.b16 %v413
      %v589 = vunpack.c.h.b16 %v413
      %v590 = vunpack.c.l.b16 %v414
      %v591 = vunpack.c.h.b16 %v414
      %v592 = vunpack.c.l.b16 %v415
      %v593 = vunpack.c.h.b16 %v415
      %v594 = vunpack.c.l.b16 %v416
      %v595 = vunpack.c.h.b16 %v416
      %v596 = vunpack.c.l.b16 %v417
      %v597 = vunpack.c.h.b16 %v417
      %v598 = vunpack.c.l.b16 %v418
      %v599 = vunpack.c.h.b16 %v418
      %v600 = vunpack.c.l.b16 %v419
      %v601 = vunpack.c.h.b16 %v419
      %v602 = vunpack.c.l.b16 %v420
      %v603 = vunpack.c.h.b16 %v420
      %v604 = vunpack.c.l.b16 %v421
      %v605 = vunpack.c.h.b16 %v421
      %v606 = vunpack.c.l.b16 %v422
      %v607 = vunpack.c.h.b16 %v422
      %v608 = vunpack.c.l.b16 %v423
      %v609 = vunpack.c.h.b16 %v423
      %v610 = vunpack.c.l.b16 %v424
      %v611 = vunpack.c.h.b16 %v424
      %v612 = vunpack.c.l.b16 %v425
      %v613 = vunpack.c.h.b16 %v425
      %v614 = vunpack.c.l.b16 %v426
      %v615 = vunpack.c.h.b16 %v426
      %v616 = vunpack.c.l.b16 %v427
      %v617 = vunpack.c.h.b16 %v427
      %v618 = vunpack.c.l.b16 %v428
      %v619 = vunpack.c.h.b16 %v428
      %v620 = vunpack.c.l.b16 %v429
      %v621 = vunpack.c.h.b16 %v429
      %v622 = vunpack.c.l.b16 %v430
      %v623 = vunpack.c.h.b16 %v430
      %v624 = vunpack.c.l.b16 %v431
      %v625 = vunpack.c.h.b16 %v431
      %v626 = vunpack.c.l.b16 %v432
      %v627 = vunpack.c.h.b16 %v432
      %v628 = vunpack.c.l.b16 %v433
      %v629 = vunpack.c.h.b16 %v433
      %v630 = vunpack.c.l.b16 %v434
      %v631 = vunpack.c.h.b16 %v434
      %v632 = vunpack.c.l.b16 %v435
      %v633 = vunpack.c.h.b16 %v435
      %v634 = vunpack.c.l.b16 %v436
      %v635 = vunpack.c.h.b16 %v436
      %v636 = vunpack.c.l.b16 %v437
      %v637 = vunpack.c.h.b16 %v437
      %v638 = vunpack.c.l.b16 %v438
      %v639 = vunpack.c.h.b16 %v438
      %v640 = vunpack.c.l.b16 %v439
      %v641 = vunpack.c.h.b16 %v439
      %v642 = vunpack.c.l.b16 %v440
      %v643 = vunpack.c.h.b16 %v440
      %v644 = vunpack.c.l.b16 %v441
      %v645 = vunpack.c.h.b16 %v441
      %v646 = vunpack.c.l.b16 %v442
      %v647 = vunpack.c.h.b16 %v442
      %v648 = vpack.c.b16 %v522, %v520
      %v649 = vpack.c.b16 %v523, %v521
      %v650 = vpack.c.b16 %v526, %v524
      %v651 = vpack.c.b16 %v527, %v525
      %v652 = vpack.c.b16 %v530, %v528
      %v653 = vpack.c.b16 %v531, %v529
      %v654 = vpack.c.b16 %v534, %v532
      %v655 = vpack.c.b16 %v535, %v533
      %v656 = vpack.c.b16 %v538, %v536
      %v657 = vpack.c.b16 %v539, %v537
      %v658 = vpack.c.b16 %v542, %v540
      %v659 = vpack.c.b16 %v543, %v541
      %v660 = vpack.c.b16 %v546, %v544
      %v661 = vpack.c.b16 %v547, %v545
      %v662 = vpack.c.b16 %v550, %v548
      %v663 = vpack.c.b16 %v551, %v549
      %v664 = vpack.c.b16 %v554, %v552
      %v665 = vpack.c.b16 %v555, %v553
      %v666 = vpack.c.b16 %v558, %v556
      %v667 = vpack.c.b16 %v559, %v557
      %v668 = vpack.c.b16 %v562, %v560
      %v669 = vpack.c.b16 %v563, %v561
      %v670 = vpack.c.b16 %v566, %v564
      %v671 = vpack.c.b16 %v567, %v565
      %v672 = vpack.c.b16 %v570, %v568
      %v673 = vpack.c.b16 %v571, %v569
      %v674 = vpack.c.b16 %v574, %v572
      %v675 = vpack.c.b16 %v575, %v573
      %v676 = vpack.c.b16 %v578, %v576
      %v677 = vpack.c.b16 %v579, %v577
      %v678 = vpack.c.b16 %v582, %v580
      %v679 = vpack.c.b16 %v583, %v581
      %v680 = vpack.c.b16 %v586, %v584
      %v681 = vpack.c.b16 %v587, %v585
      %v682 = vpack.c.b16 %v590, %v588
      %v683 = vpack.c.b16 %v591, %v589
      %v684 = vpack.c.b16 %v594, %v592
      %v685 = vpack.c.b16 %v595, %v593
      %v686 = vpack.c.b16 %v598, %v596
      %v687 = vpack.c.b16 %v599, %v597
      %v688 = vpack.c.b16 %v602, %v600
      %v689 = vpack.c.b16 %v603, %v601
      %v690 = vpack.c.b16 %v606, %v604
      %v691 = vpack.c.b16 %v607, %v605
      %v692 = vpack.c.b16 %v610, %v608
      %v693 = vpack.c.b16 %v611, %v609
      %v694 = vpack.c.b16 %v614, %v612
      %v695 = vpack.c.b16 %v615, %v613
      %v696 = vpack.c.b16 %v618, %v616
      %v697 = vpack.c.b16 %v619, %v617
      %v698 = vpack.c.b16 %v622, %v620
      %v699 = vpack.c.b16 %v623, %v621
      %v700 = vpack.c.b16 %v626, %v624
      %v701 = vpack.c.b16 %v627, %v625
      %v702 = vpack.c.b16 %v630, %v628
      %v703 = vpack.c.b16 %v631, %v629
      %v704 = vpack.c.b16 %v634, %v632
      %v705 = vpack.c.b16 %v635, %v633
      %v706 = vpack.c.b16 %v638, %v636
      %v707 = vpack.c.b16 %v639, %v637
      %v708 = vpack.c.b16 %v642, %v640
      %v709 = vpack.c.b16 %v643, %v641
      %v710 = vpack.c.b16 %v646, %v644
      %v711 = vpack.c.b16 %v647, %v645
      %776 = vmatpush.bf16.msra.mxu0 %v662
      %777 = vmatpush.bf16.msra.mxu0 %v660
      %778 = vmatpush.bf16.msra.mxu0 %v658
      %779 = vmatpush.bf16.msra.mxu0 %v656
      %780 = vmatpush.bf16.msra.mxu0 %v654
      %781 = vmatpush.bf16.msra.mxu0 %v652
      %782 = vmatpush.bf16.msra.mxu0 %v650
      %783 = vmatpush.bf16.msra.mxu0 %v648
      %784 = vmatmul.bf16.gmra.mxu0 %v448
      %v785 = vpop.f32.mrf.mxu0
      %v786 = vadd.f32 0.0, %v785
      %v787 = vpop.f32.mrf.mxu0
      %788 = vdwg.mxu0
      %789 = vmatpush.bf16.msra.mxu0 %v678
      %790 = vmatpush.bf16.msra.mxu0 %v676
      %791 = vmatpush.bf16.msra.mxu0 %v674
      %792 = vmatpush.bf16.msra.mxu0 %v672
      %793 = vmatpush.bf16.msra.mxu0 %v670
      %794 = vmatpush.bf16.msra.mxu0 %v668
      %795 = vmatpush.bf16.msra.mxu0 %v666
      %796 = vmatpush.bf16.msra.mxu0 %v664
      %797 = vmatmul.bf16.gmra.mxu0 %v449
      %v798 = vpop.f32.mrf.mxu0
      %v799 = vadd.f32 %v786, %v798
      %v800 = vpop.f32.mrf.mxu0
      %801 = vdwg.mxu0
      %802 = vmatpush.bf16.msra.mxu0 %v694
      %803 = vmatpush.bf16.msra.mxu0 %v692
      %804 = vmatpush.bf16.msra.mxu0 %v690
      %805 = vmatpush.bf16.msra.mxu0 %v688
      %806 = vmatpush.bf16.msra.mxu0 %v686
      %807 = vmatpush.bf16.msra.mxu0 %v684
      %808 = vmatpush.bf16.msra.mxu0 %v682
      %809 = vmatpush.bf16.msra.mxu0 %v680
      %810 = vmatmul.bf16.gmra.mxu0 %v450
      %v811 = vpop.f32.mrf.mxu0
      %v812 = vadd.f32 %v799, %v811
      %v813 = vpop.f32.mrf.mxu0
      %814 = vdwg.mxu0
      %815 = vmatpush.bf16.msra.mxu0 %v710
      %816 = vmatpush.bf16.msra.mxu0 %v708
      %817 = vmatpush.bf16.msra.mxu0 %v706
      %818 = vmatpush.bf16.msra.mxu0 %v704
      %819 = vmatpush.bf16.msra.mxu0 %v702
      %820 = vmatpush.bf16.msra.mxu0 %v700
      %821 = vmatpush.bf16.msra.mxu0 %v698
      %822 = vmatpush.bf16.msra.mxu0 %v696
      %823 = vmatmul.bf16.gmra.mxu0 %v451
      %v824 = vpop.f32.mrf.mxu0
      %v825 = vadd.f32 %v812, %v824
      %v826 = vpop.f32.mrf.mxu0
      %827 = vdwg.mxu0
      %828 = vmatpush.bf16.msra.mxu0 %v663
      %829 = vmatpush.bf16.msra.mxu0 %v661
      %830 = vmatpush.bf16.msra.mxu0 %v659
      %831 = vmatpush.bf16.msra.mxu0 %v657
      %832 = vmatpush.bf16.msra.mxu0 %v655
      %833 = vmatpush.bf16.msra.mxu0 %v653
      %834 = vmatpush.bf16.msra.mxu0 %v651
      %835 = vmatpush.bf16.msra.mxu0 %v649
      %836 = vmatmul.bf16.gmra.mxu0 %v448
      %v837 = vpop.f32.mrf.mxu0
      %v838 = vadd.f32 0.0, %v837
      %v839 = vpop.f32.mrf.mxu0
      %840 = vdwg.mxu0
      %841 = vmatpush.bf16.msra.mxu0 %v679
      %842 = vmatpush.bf16.msra.mxu0 %v677
      %843 = vmatpush.bf16.msra.mxu0 %v675
      %844 = vmatpush.bf16.msra.mxu0 %v673
      %845 = vmatpush.bf16.msra.mxu0 %v671
      %846 = vmatpush.bf16.msra.mxu0 %v669
      %847 = vmatpush.bf16.msra.mxu0 %v667
      %848 = vmatpush.bf16.msra.mxu0 %v665
      %849 = vmatmul.bf16.gmra.mxu0 %v449
      %v850 = vpop.f32.mrf.mxu0
      %v851 = vadd.f32 %v838, %v850
      %v852 = vpop.f32.mrf.mxu0
      %853 = vdwg.mxu0
      %854 = vmatpush.bf16.msra.mxu0 %v695
      %855 = vmatpush.bf16.msra.mxu0 %v693
      %856 = vmatpush.bf16.msra.mxu0 %v691
      %857 = vmatpush.bf16.msra.mxu0 %v689
      %858 = vmatpush.bf16.msra.mxu0 %v687
      %859 = vmatpush.bf16.msra.mxu0 %v685
      %860 = vmatpush.bf16.msra.mxu0 %v683
      %861 = vmatpush.bf16.msra.mxu0 %v681
      %862 = vmatmul.bf16.gmra.mxu0 %v450
      %v863 = vpop.f32.mrf.mxu0
      %v864 = vadd.f32 %v851, %v863
      %v865 = vpop.f32.mrf.mxu0
      %866 = vdwg.mxu0
      %867 = vmatpush.bf16.msra.mxu0 %v711
      %868 = vmatpush.bf16.msra.mxu0 %v709
      %869 = vmatpush.bf16.msra.mxu0 %v707
      %870 = vmatpush.bf16.msra.mxu0 %v705
      %871 = vmatpush.bf16.msra.mxu0 %v703
      %872 = vmatpush.bf16.msra.mxu0 %v701
      %873 = vmatpush.bf16.msra.mxu0 %v699
      %874 = vmatpush.bf16.msra.mxu0 %v697
      %875 = vmatmul.bf16.gmra.mxu0 %v451
      %v876 = vpop.f32.mrf.mxu0
      %v877 = vadd.f32 %v864, %v876
      %v878 = vpop.f32.mrf.mxu0
      %879 = vdwg.mxu0
      %880 = vst [vmem:[#allocation1] ss:$9 sm:$0xff] %v238
      %s881 = scalar_lea.vmem [#allocation1], 1
      %882 = vst [vmem:[%s881] ss:$9 sm:$0xff] %v245
      %v883 = vld [vmem:[#allocation1] sm:$0xff]
      %v884 = vld [vmem:[#allocation1 + $0x9] sm:$0xff]
      %v885 = vld [vmem:[#allocation1 + $0x12] sm:$0xff]
      %v886 = vld [vmem:[#allocation1 + $0x1b] sm:$0xff]
      %v955 = vunpack.c.l.b16 %v246
      %v956 = vunpack.c.h.b16 %v246
      %v957 = vunpack.c.l.b16 %v247
      %v958 = vunpack.c.h.b16 %v247
      %v959 = vunpack.c.l.b16 %v248
      %v960 = vunpack.c.h.b16 %v248
      %v961 = vunpack.c.l.b16 %v249
      %v962 = vunpack.c.h.b16 %v249
      %v963 = vunpack.c.l.b16 %v250
      %v964 = vunpack.c.h.b16 %v250
      %v965 = vunpack.c.l.b16 %v251
      %v966 = vunpack.c.h.b16 %v251
      %v967 = vunpack.c.l.b16 %v252
      %v968 = vunpack.c.h.b16 %v252
      %v969 = vunpack.c.l.b16 %v253
      %v970 = vunpack.c.h.b16 %v253
      %v971 = vunpack.c.l.b16 %v254
      %v972 = vunpack.c.h.b16 %v254
      %v973 = vunpack.c.l.b16 %v255
      %v974 = vunpack.c.h.b16 %v255
      %v975 = vunpack.c.l.b16 %v256
      %v976 = vunpack.c.h.b16 %v256
      %v977 = vunpack.c.l.b16 %v257
      %v978 = vunpack.c.h.b16 %v257
      %v979 = vunpack.c.l.b16 %v258
      %v980 = vunpack.c.h.b16 %v258
      %v981 = vunpack.c.l.b16 %v259
      %v982 = vunpack.c.h.b16 %v259
      %v983 = vunpack.c.l.b16 %v260
      %v984 = vunpack.c.h.b16 %v260
      %v985 = vunpack.c.l.b16 %v261
      %v986 = vunpack.c.h.b16 %v261
      %v987 = vunpack.c.l.b16 %v262
      %v988 = vunpack.c.h.b16 %v262
      %v989 = vunpack.c.l.b16 %v263
      %v990 = vunpack.c.h.b16 %v263
      %v991 = vunpack.c.l.b16 %v264
      %v992 = vunpack.c.h.b16 %v264
      %v993 = vunpack.c.l.b16 %v265
      %v994 = vunpack.c.h.b16 %v265
      %v995 = vunpack.c.l.b16 %v266
      %v996 = vunpack.c.h.b16 %v266
      %v997 = vunpack.c.l.b16 %v267
      %v998 = vunpack.c.h.b16 %v267
      %v999 = vunpack.c.l.b16 %v268
      %v1000 = vunpack.c.h.b16 %v268
      %v1001 = vunpack.c.l.b16 %v269
      %v1002 = vunpack.c.h.b16 %v269
      %v1003 = vunpack.c.l.b16 %v270
      %v1004 = vunpack.c.h.b16 %v270
      %v1005 = vunpack.c.l.b16 %v271
      %v1006 = vunpack.c.h.b16 %v271
      %v1007 = vunpack.c.l.b16 %v272
      %v1008 = vunpack.c.h.b16 %v272
      %v1009 = vunpack.c.l.b16 %v273
      %v1010 = vunpack.c.h.b16 %v273
      %v1011 = vunpack.c.l.b16 %v274
      %v1012 = vunpack.c.h.b16 %v274
      %v1013 = vunpack.c.l.b16 %v275
      %v1014 = vunpack.c.h.b16 %v275
      %v1015 = vunpack.c.l.b16 %v276
      %v1016 = vunpack.c.h.b16 %v276
      %v1017 = vunpack.c.l.b16 %v277
      %v1018 = vunpack.c.h.b16 %v277
      %v1019 = vunpack.c.l.b16 %v278
      %v1020 = vunpack.c.h.b16 %v278
      %v1021 = vunpack.c.l.b16 %v279
      %v1022 = vunpack.c.h.b16 %v279
      %v1023 = vunpack.c.l.b16 %v280
      %v1024 = vunpack.c.h.b16 %v280
      %v1025 = vunpack.c.l.b16 %v281
      %v1026 = vunpack.c.h.b16 %v281
      %v1027 = vunpack.c.l.b16 %v282
      %v1028 = vunpack.c.h.b16 %v282
      %v1029 = vunpack.c.l.b16 %v283
      %v1030 = vunpack.c.h.b16 %v283
      %v1031 = vunpack.c.l.b16 %v284
      %v1032 = vunpack.c.h.b16 %v284
      %v1033 = vunpack.c.l.b16 %v285
      %v1034 = vunpack.c.h.b16 %v285
      %v1035 = vunpack.c.l.b16 %v286
      %v1036 = vunpack.c.h.b16 %v286
      %v1037 = vunpack.c.l.b16 %v287
      %v1038 = vunpack.c.h.b16 %v287
      %v1039 = vunpack.c.l.b16 %v288
      %v1040 = vunpack.c.h.b16 %v288
      %v1041 = vunpack.c.l.b16 %v289
      %v1042 = vunpack.c.h.b16 %v289
      %v1043 = vunpack.c.l.b16 %v290
      %v1044 = vunpack.c.h.b16 %v290
      %v1045 = vunpack.c.l.b16 %v291
      %v1046 = vunpack.c.h.b16 %v291
      %v1047 = vunpack.c.l.b16 %v292
      %v1048 = vunpack.c.h.b16 %v292
      %v1049 = vunpack.c.l.b16 %v293
      %v1050 = vunpack.c.h.b16 %v293
      %v1051 = vunpack.c.l.b16 %v294
      %v1052 = vunpack.c.h.b16 %v294
      %v1053 = vunpack.c.l.b16 %v295
      %v1054 = vunpack.c.h.b16 %v295
      %v1055 = vunpack.c.l.b16 %v296
      %v1056 = vunpack.c.h.b16 %v296
      %v1057 = vunpack.c.l.b16 %v297
      %v1058 = vunpack.c.h.b16 %v297
      %v1059 = vunpack.c.l.b16 %v298
      %v1060 = vunpack.c.h.b16 %v298
      %v1061 = vunpack.c.l.b16 %v299
      %v1062 = vunpack.c.h.b16 %v299
      %v1063 = vunpack.c.l.b16 %v300
      %v1064 = vunpack.c.h.b16 %v300
      %v1065 = vunpack.c.l.b16 %v301
      %v1066 = vunpack.c.h.b16 %v301
      %v1067 = vunpack.c.l.b16 %v302
      %v1068 = vunpack.c.h.b16 %v302
      %v1069 = vunpack.c.l.b16 %v303
      %v1070 = vunpack.c.h.b16 %v303
      %v1071 = vunpack.c.l.b16 %v304
      %v1072 = vunpack.c.h.b16 %v304
      %v1073 = vunpack.c.l.b16 %v305
      %v1074 = vunpack.c.h.b16 %v305
      %v1075 = vunpack.c.l.b16 %v306
      %v1076 = vunpack.c.h.b16 %v306
      %v1077 = vunpack.c.l.b16 %v307
      %v1078 = vunpack.c.h.b16 %v307
      %v1079 = vunpack.c.l.b16 %v308
      %v1080 = vunpack.c.h.b16 %v308
      %v1081 = vunpack.c.l.b16 %v309
      %v1082 = vunpack.c.h.b16 %v309
      %v1083 = vpack.c.b16 %v957, %v955
      %v1084 = vpack.c.b16 %v958, %v956
      %v1085 = vpack.c.b16 %v961, %v959
      %v1086 = vpack.c.b16 %v962, %v960
      %v1087 = vpack.c.b16 %v965, %v963
      %v1088 = vpack.c.b16 %v966, %v964
      %v1089 = vpack.c.b16 %v969, %v967
      %v1090 = vpack.c.b16 %v970, %v968
      %v1091 = vpack.c.b16 %v973, %v971
      %v1092 = vpack.c.b16 %v974, %v972
      %v1093 = vpack.c.b16 %v977, %v975
      %v1094 = vpack.c.b16 %v978, %v976
      %v1095 = vpack.c.b16 %v981, %v979
      %v1096 = vpack.c.b16 %v982, %v980
      %v1097 = vpack.c.b16 %v985, %v983
      %v1098 = vpack.c.b16 %v986, %v984
      %v1099 = vpack.c.b16 %v989, %v987
      %v1100 = vpack.c.b16 %v990, %v988
      %v1101 = vpack.c.b16 %v993, %v991
      %v1102 = vpack.c.b16 %v994, %v992
      %v1103 = vpack.c.b16 %v997, %v995
      %v1104 = vpack.c.b16 %v998, %v996
      %v1105 = vpack.c.b16 %v1001, %v999
      %v1106 = vpack.c.b16 %v1002, %v1000
      %v1107 = vpack.c.b16 %v1005, %v1003
      %v1108 = vpack.c.b16 %v1006, %v1004
      %v1109 = vpack.c.b16 %v1009, %v1007
      %v1110 = vpack.c.b16 %v1010, %v1008
      %v1111 = vpack.c.b16 %v1013, %v1011
      %v1112 = vpack.c.b16 %v1014, %v1012
      %v1113 = vpack.c.b16 %v1017, %v1015
      %v1114 = vpack.c.b16 %v1018, %v1016
      %v1115 = vpack.c.b16 %v1021, %v1019
      %v1116 = vpack.c.b16 %v1022, %v1020
      %v1117 = vpack.c.b16 %v1025, %v1023
      %v1118 = vpack.c.b16 %v1026, %v1024
      %v1119 = vpack.c.b16 %v1029, %v1027
      %v1120 = vpack.c.b16 %v1030, %v1028
      %v1121 = vpack.c.b16 %v1033, %v1031
      %v1122 = vpack.c.b16 %v1034, %v1032
      %v1123 = vpack.c.b16 %v1037, %v1035
      %v1124 = vpack.c.b16 %v1038, %v1036
      %v1125 = vpack.c.b16 %v1041, %v1039
      %v1126 = vpack.c.b16 %v1042, %v1040
      %v1127 = vpack.c.b16 %v1045, %v1043
      %v1128 = vpack.c.b16 %v1046, %v1044
      %v1129 = vpack.c.b16 %v1049, %v1047
      %v1130 = vpack.c.b16 %v1050, %v1048
      %v1131 = vpack.c.b16 %v1053, %v1051
      %v1132 = vpack.c.b16 %v1054, %v1052
      %v1133 = vpack.c.b16 %v1057, %v1055
      %v1134 = vpack.c.b16 %v1058, %v1056
      %v1135 = vpack.c.b16 %v1061, %v1059
      %v1136 = vpack.c.b16 %v1062, %v1060
      %v1137 = vpack.c.b16 %v1065, %v1063
      %v1138 = vpack.c.b16 %v1066, %v1064
      %v1139 = vpack.c.b16 %v1069, %v1067
      %v1140 = vpack.c.b16 %v1070, %v1068
      %v1141 = vpack.c.b16 %v1073, %v1071
      %v1142 = vpack.c.b16 %v1074, %v1072
      %v1143 = vpack.c.b16 %v1077, %v1075
      %v1144 = vpack.c.b16 %v1078, %v1076
      %v1145 = vpack.c.b16 %v1081, %v1079
      %v1146 = vpack.c.b16 %v1082, %v1080
      %1211 = vmatpush.bf16.msra.mxu0 %v1097
      %1212 = vmatpush.bf16.msra.mxu0 %v1095
      %1213 = vmatpush.bf16.msra.mxu0 %v1093
      %1214 = vmatpush.bf16.msra.mxu0 %v1091
      %1215 = vmatpush.bf16.msra.mxu0 %v1089
      %1216 = vmatpush.bf16.msra.mxu0 %v1087
      %1217 = vmatpush.bf16.msra.mxu0 %v1085
      %1218 = vmatpush.bf16.msra.mxu0 %v1083
      %1219 = vmatmul.bf16.gmra.mxu0 %v883
      %v1220 = vpop.f32.mrf.mxu0
      %v1221 = vadd.f32 %v825, %v1220
      %v1222 = vpop.f32.mrf.mxu0
      %1223 = vdwg.mxu0
      %1224 = vmatpush.bf16.msra.mxu0 %v1113
      %1225 = vmatpush.bf16.msra.mxu0 %v1111
      %1226 = vmatpush.bf16.msra.mxu0 %v1109
      %1227 = vmatpush.bf16.msra.mxu0 %v1107
      %1228 = vmatpush.bf16.msra.mxu0 %v1105
      %1229 = vmatpush.bf16.msra.mxu0 %v1103
      %1230 = vmatpush.bf16.msra.mxu0 %v1101
      %1231 = vmatpush.bf16.msra.mxu0 %v1099
      %1232 = vmatmul.bf16.gmra.mxu0 %v884
      %v1233 = vpop.f32.mrf.mxu0
      %v1234 = vadd.f32 %v1221, %v1233
      %v1235 = vpop.f32.mrf.mxu0
      %1236 = vdwg.mxu0
      %1237 = vmatpush.bf16.msra.mxu0 %v1129
      %1238 = vmatpush.bf16.msra.mxu0 %v1127
      %1239 = vmatpush.bf16.msra.mxu0 %v1125
      %1240 = vmatpush.bf16.msra.mxu0 %v1123
      %1241 = vmatpush.bf16.msra.mxu0 %v1121
      %1242 = vmatpush.bf16.msra.mxu0 %v1119
      %1243 = vmatpush.bf16.msra.mxu0 %v1117
      %1244 = vmatpush.bf16.msra.mxu0 %v1115
      %1245 = vmatmul.bf16.gmra.mxu0 %v885
      %v1246 = vpop.f32.mrf.mxu0
      %v1247 = vadd.f32 %v1234, %v1246
      %v1248 = vpop.f32.mrf.mxu0
      %1249 = vdwg.mxu0
      %1250 = vmatpush.bf16.msra.mxu0 %v1145
      %1251 = vmatpush.bf16.msra.mxu0 %v1143
      %1252 = vmatpush.bf16.msra.mxu0 %v1141
      %1253 = vmatpush.bf16.msra.mxu0 %v1139
      %1254 = vmatpush.bf16.msra.mxu0 %v1137
      %1255 = vmatpush.bf16.msra.mxu0 %v1135
      %1256 = vmatpush.bf16.msra.mxu0 %v1133
      %1257 = vmatpush.bf16.msra.mxu0 %v1131
      %1258 = vmatmul.bf16.gmra.mxu0 %v886
      %v1259 = vpop.f32.mrf.mxu0
      %v1260 = vadd.f32 %v1247, %v1259
      %v1261 = vpop.f32.mrf.mxu0
      %1262 = vdwg.mxu0
      %1263 = vmatpush.bf16.msra.mxu0 %v1098
      %1264 = vmatpush.bf16.msra.mxu0 %v1096
      %1265 = vmatpush.bf16.msra.mxu0 %v1094
      %1266 = vmatpush.bf16.msra.mxu0 %v1092
      %1267 = vmatpush.bf16.msra.mxu0 %v1090
      %1268 = vmatpush.bf16.msra.mxu0 %v1088
      %1269 = vmatpush.bf16.msra.mxu0 %v1086
      %1270 = vmatpush.bf16.msra.mxu0 %v1084
      %1271 = vmatmul.bf16.gmra.mxu0 %v883
      %v1272 = vpop.f32.mrf.mxu0
      %v1273 = vadd.f32 %v877, %v1272
      %v1274 = vpop.f32.mrf.mxu0
      %1275 = vdwg.mxu0
      %1276 = vmatpush.bf16.msra.mxu0 %v1114
      %1277 = vmatpush.bf16.msra.mxu0 %v1112
      %1278 = vmatpush.bf16.msra.mxu0 %v1110
      %1279 = vmatpush.bf16.msra.mxu0 %v1108
      %1280 = vmatpush.bf16.msra.mxu0 %v1106
      %1281 = vmatpush.bf16.msra.mxu0 %v1104
      %1282 = vmatpush.bf16.msra.mxu0 %v1102
      %1283 = vmatpush.bf16.msra.mxu0 %v1100
      %1284 = vmatmul.bf16.gmra.mxu0 %v884
      %v1285 = vpop.f32.mrf.mxu0
      %v1286 = vadd.f32 %v1273, %v1285
      %v1287 = vpop.f32.mrf.mxu0
      %1288 = vdwg.mxu0
      %1289 = vmatpush.bf16.msra.mxu0 %v1130
      %1290 = vmatpush.bf16.msra.mxu0 %v1128
      %1291 = vmatpush.bf16.msra.mxu0 %v1126
      %1292 = vmatpush.bf16.msra.mxu0 %v1124
      %1293 = vmatpush.bf16.msra.mxu0 %v1122
      %1294 = vmatpush.bf16.msra.mxu0 %v1120
      %1295 = vmatpush.bf16.msra.mxu0 %v1118
      %1296 = vmatpush.bf16.msra.mxu0 %v1116
      %1297 = vmatmul.bf16.gmra.mxu0 %v885
      %v1298 = vpop.f32.mrf.mxu0
      %v1299 = vadd.f32 %v1286, %v1298
      %v1300 = vpop.f32.mrf.mxu0
      %1301 = vdwg.mxu0
      %1302 = vmatpush.bf16.msra.mxu0 %v1146
      %1303 = vmatpush.bf16.msra.mxu0 %v1144
      %1304 = vmatpush.bf16.msra.mxu0 %v1142
      %1305 = vmatpush.bf16.msra.mxu0 %v1140
      %1306 = vmatpush.bf16.msra.mxu0 %v1138
      %1307 = vmatpush.bf16.msra.mxu0 %v1136
      %1308 = vmatpush.bf16.msra.mxu0 %v1134
      %1309 = vmatpush.bf16.msra.mxu0 %v1132
      %1310 = vmatmul.bf16.gmra.mxu0 %v886
      %v1311 = vpop.f32.mrf.mxu0
      %v1312 = vadd.f32 %v1299, %v1311
      %v1313 = vpop.f32.mrf.mxu0
      %1314 = vdwg.mxu0
      %s1315 = scalar_lea.vmem %s205, 8
      %v1316 = vld [vmem:[%s1315] sm:$0x55]
      %v1317 = vld [vmem:[%s1315 + $0x8] sm:$0x55]
      %v1320 = vrot.slane %v1316, 1
      %v1321 = vrot.slane %v1316, 2
      %v1322 = vrot.slane %v1316, 3
      %v1323 = vrot.slane %v1317, 1
      %v1324 = vrot.slane %v1317, 2
      %v1325 = vrot.slane %v1317, 3
      %v1328 = vsel %vm229, %v1316, %v1320
      %v1331 = vsel %vm233, %v1321, %v1322
      %v1332 = vsel %vm237, %v1328, %v1331
      %v1335 = vsel %vm229, %v1317, %v1323
      %v1338 = vsel %vm233, %v1324, %v1325
      %v1339 = vsel %vm237, %v1335, %v1338
      %s1340 = scalar_lea.vmem %s1, 1024
      %v1341 = vld [vmem:[%s1340] sm:$0xff]
      %v1342 = vld [vmem:[%s1340 + $0x8] sm:$0xff]
      %v1343 = vld [vmem:[%s1340 + $0x10] sm:$0xff]
      %v1344 = vld [vmem:[%s1340 + $0x18] sm:$0xff]
      %v1345 = vld [vmem:[%s1340 + $0x20] sm:$0xff]
      %v1346 = vld [vmem:[%s1340 + $0x28] sm:$0xff]
      %v1347 = vld [vmem:[%s1340 + $0x30] sm:$0xff]
      %v1348 = vld [vmem:[%s1340 + $0x38] sm:$0xff]
      %v1349 = vld [vmem:[%s1340 + $0x40] sm:$0xff]
      %v1350 = vld [vmem:[%s1340 + $0x48] sm:$0xff]
      %v1351 = vld [vmem:[%s1340 + $0x50] sm:$0xff]
      %v1352 = vld [vmem:[%s1340 + $0x58] sm:$0xff]
      %v1353 = vld [vmem:[%s1340 + $0x60] sm:$0xff]
      %v1354 = vld [vmem:[%s1340 + $0x68] sm:$0xff]
      %v1355 = vld [vmem:[%s1340 + $0x70] sm:$0xff]
      %v1356 = vld [vmem:[%s1340 + $0x78] sm:$0xff]
      %v1357 = vld [vmem:[%s1340 + $0x80] sm:$0xff]
      %v1358 = vld [vmem:[%s1340 + $0x88] sm:$0xff]
      %v1359 = vld [vmem:[%s1340 + $0x90] sm:$0xff]
      %v1360 = vld [vmem:[%s1340 + $0x98] sm:$0xff]
      %v1361 = vld [vmem:[%s1340 + $0xa0] sm:$0xff]
      %v1362 = vld [vmem:[%s1340 + $0xa8] sm:$0xff]
      %v1363 = vld [vmem:[%s1340 + $0xb0] sm:$0xff]
      %v1364 = vld [vmem:[%s1340 + $0xb8] sm:$0xff]
      %v1365 = vld [vmem:[%s1340 + $0xc0] sm:$0xff]
      %v1366 = vld [vmem:[%s1340 + $0xc8] sm:$0xff]
      %v1367 = vld [vmem:[%s1340 + $0xd0] sm:$0xff]
      %v1368 = vld [vmem:[%s1340 + $0xd8] sm:$0xff]
      %v1369 = vld [vmem:[%s1340 + $0xe0] sm:$0xff]
      %v1370 = vld [vmem:[%s1340 + $0xe8] sm:$0xff]
      %v1371 = vld [vmem:[%s1340 + $0xf0] sm:$0xff]
      %v1372 = vld [vmem:[%s1340 + $0xf8] sm:$0xff]
      %v1373 = vld [vmem:[%s1340 + $0x100] sm:$0xff]
      %v1374 = vld [vmem:[%s1340 + $0x108] sm:$0xff]
      %v1375 = vld [vmem:[%s1340 + $0x110] sm:$0xff]
      %v1376 = vld [vmem:[%s1340 + $0x118] sm:$0xff]
      %v1377 = vld [vmem:[%s1340 + $0x120] sm:$0xff]
      %v1378 = vld [vmem:[%s1340 + $0x128] sm:$0xff]
      %v1379 = vld [vmem:[%s1340 + $0x130] sm:$0xff]
      %v1380 = vld [vmem:[%s1340 + $0x138] sm:$0xff]
      %v1381 = vld [vmem:[%s1340 + $0x140] sm:$0xff]
      %v1382 = vld [vmem:[%s1340 + $0x148] sm:$0xff]
      %v1383 = vld [vmem:[%s1340 + $0x150] sm:$0xff]
      %v1384 = vld [vmem:[%s1340 + $0x158] sm:$0xff]
      %v1385 = vld [vmem:[%s1340 + $0x160] sm:$0xff]
      %v1386 = vld [vmem:[%s1340 + $0x168] sm:$0xff]
      %v1387 = vld [vmem:[%s1340 + $0x170] sm:$0xff]
      %v1388 = vld [vmem:[%s1340 + $0x178] sm:$0xff]
      %v1389 = vld [vmem:[%s1340 + $0x180] sm:$0xff]
      %v1390 = vld [vmem:[%s1340 + $0x188] sm:$0xff]
      %v1391 = vld [vmem:[%s1340 + $0x190] sm:$0xff]
      %v1392 = vld [vmem:[%s1340 + $0x198] sm:$0xff]
      %v1393 = vld [vmem:[%s1340 + $0x1a0] sm:$0xff]
      %v1394 = vld [vmem:[%s1340 + $0x1a8] sm:$0xff]
      %v1395 = vld [vmem:[%s1340 + $0x1b0] sm:$0xff]
      %v1396 = vld [vmem:[%s1340 + $0x1b8] sm:$0xff]
      %v1397 = vld [vmem:[%s1340 + $0x1c0] sm:$0xff]
      %v1398 = vld [vmem:[%s1340 + $0x1c8] sm:$0xff]
      %v1399 = vld [vmem:[%s1340 + $0x1d0] sm:$0xff]
      %v1400 = vld [vmem:[%s1340 + $0x1d8] sm:$0xff]
      %v1401 = vld [vmem:[%s1340 + $0x1e0] sm:$0xff]
      %v1402 = vld [vmem:[%s1340 + $0x1e8] sm:$0xff]
      %v1403 = vld [vmem:[%s1340 + $0x1f0] sm:$0xff]
      %v1404 = vld [vmem:[%s1340 + $0x1f8] sm:$0xff]
      %1405 = vst [vmem:[#allocation1] ss:$9 sm:$0xff] %v1332
      %s1406 = scalar_lea.vmem [#allocation1], 1
      %1407 = vst [vmem:[%s1406] ss:$9 sm:$0xff] %v1339
      %v1408 = vld [vmem:[#allocation1] sm:$0xff]
      %v1409 = vld [vmem:[#allocation1 + $0x9] sm:$0xff]
      %v1410 = vld [vmem:[#allocation1 + $0x12] sm:$0xff]
      %v1411 = vld [vmem:[#allocation1 + $0x1b] sm:$0xff]
      %v1480 = vunpack.c.l.b16 %v1341
      %v1481 = vunpack.c.h.b16 %v1341
      %v1482 = vunpack.c.l.b16 %v1342
      %v1483 = vunpack.c.h.b16 %v1342
      %v1484 = vunpack.c.l.b16 %v1343
      %v1485 = vunpack.c.h.b16 %v1343
      %v1486 = vunpack.c.l.b16 %v1344
      %v1487 = vunpack.c.h.b16 %v1344
      %v1488 = vunpack.c.l.b16 %v1345
      %v1489 = vunpack.c.h.b16 %v1345
      %v1490 = vunpack.c.l.b16 %v1346
      %v1491 = vunpack.c.h.b16 %v1346
      %v1492 = vunpack.c.l.b16 %v1347
      %v1493 = vunpack.c.h.b16 %v1347
      %v1494 = vunpack.c.l.b16 %v1348
      %v1495 = vunpack.c.h.b16 %v1348
      %v1496 = vunpack.c.l.b16 %v1349
      %v1497 = vunpack.c.h.b16 %v1349
      %v1498 = vunpack.c.l.b16 %v1350
      %v1499 = vunpack.c.h.b16 %v1350
      %v1500 = vunpack.c.l.b16 %v1351
      %v1501 = vunpack.c.h.b16 %v1351
      %v1502 = vunpack.c.l.b16 %v1352
      %v1503 = vunpack.c.h.b16 %v1352
      %v1504 = vunpack.c.l.b16 %v1353
      %v1505 = vunpack.c.h.b16 %v1353
      %v1506 = vunpack.c.l.b16 %v1354
      %v1507 = vunpack.c.h.b16 %v1354
      %v1508 = vunpack.c.l.b16 %v1355
      %v1509 = vunpack.c.h.b16 %v1355
      %v1510 = vunpack.c.l.b16 %v1356
      %v1511 = vunpack.c.h.b16 %v1356
      %v1512 = vunpack.c.l.b16 %v1357
      %v1513 = vunpack.c.h.b16 %v1357
      %v1514 = vunpack.c.l.b16 %v1358
      %v1515 = vunpack.c.h.b16 %v1358
      %v1516 = vunpack.c.l.b16 %v1359
      %v1517 = vunpack.c.h.b16 %v1359
      %v1518 = vunpack.c.l.b16 %v1360
      %v1519 = vunpack.c.h.b16 %v1360
      %v1520 = vunpack.c.l.b16 %v1361
      %v1521 = vunpack.c.h.b16 %v1361
      %v1522 = vunpack.c.l.b16 %v1362
      %v1523 = vunpack.c.h.b16 %v1362
      %v1524 = vunpack.c.l.b16 %v1363
      %v1525 = vunpack.c.h.b16 %v1363
      %v1526 = vunpack.c.l.b16 %v1364
      %v1527 = vunpack.c.h.b16 %v1364
      %v1528 = vunpack.c.l.b16 %v1365
      %v1529 = vunpack.c.h.b16 %v1365
      %v1530 = vunpack.c.l.b16 %v1366
      %v1531 = vunpack.c.h.b16 %v1366
      %v1532 = vunpack.c.l.b16 %v1367
      %v1533 = vunpack.c.h.b16 %v1367
      %v1534 = vunpack.c.l.b16 %v1368
      %v1535 = vunpack.c.h.b16 %v1368
      %v1536 = vunpack.c.l.b16 %v1369
      %v1537 = vunpack.c.h.b16 %v1369
      %v1538 = vunpack.c.l.b16 %v1370
      %v1539 = vunpack.c.h.b16 %v1370
      %v1540 = vunpack.c.l.b16 %v1371
      %v1541 = vunpack.c.h.b16 %v1371
      %v1542 = vunpack.c.l.b16 %v1372
      %v1543 = vunpack.c.h.b16 %v1372
      %v1544 = vunpack.c.l.b16 %v1373
      %v1545 = vunpack.c.h.b16 %v1373
      %v1546 = vunpack.c.l.b16 %v1374
      %v1547 = vunpack.c.h.b16 %v1374
      %v1548 = vunpack.c.l.b16 %v1375
      %v1549 = vunpack.c.h.b16 %v1375
      %v1550 = vunpack.c.l.b16 %v1376
      %v1551 = vunpack.c.h.b16 %v1376
      %v1552 = vunpack.c.l.b16 %v1377
      %v1553 = vunpack.c.h.b16 %v1377
      %v1554 = vunpack.c.l.b16 %v1378
      %v1555 = vunpack.c.h.b16 %v1378
      %v1556 = vunpack.c.l.b16 %v1379
      %v1557 = vunpack.c.h.b16 %v1379
      %v1558 = vunpack.c.l.b16 %v1380
      %v1559 = vunpack.c.h.b16 %v1380
      %v1560 = vunpack.c.l.b16 %v1381
      %v1561 = vunpack.c.h.b16 %v1381
      %v1562 = vunpack.c.l.b16 %v1382
      %v1563 = vunpack.c.h.b16 %v1382
      %v1564 = vunpack.c.l.b16 %v1383
      %v1565 = vunpack.c.h.b16 %v1383
      %v1566 = vunpack.c.l.b16 %v1384
      %v1567 = vunpack.c.h.b16 %v1384
      %v1568 = vunpack.c.l.b16 %v1385
      %v1569 = vunpack.c.h.b16 %v1385
      %v1570 = vunpack.c.l.b16 %v1386
      %v1571 = vunpack.c.h.b16 %v1386
      %v1572 = vunpack.c.l.b16 %v1387
      %v1573 = vunpack.c.h.b16 %v1387
      %v1574 = vunpack.c.l.b16 %v1388
      %v1575 = vunpack.c.h.b16 %v1388
      %v1576 = vunpack.c.l.b16 %v1389
      %v1577 = vunpack.c.h.b16 %v1389
      %v1578 = vunpack.c.l.b16 %v1390
      %v1579 = vunpack.c.h.b16 %v1390
      %v1580 = vunpack.c.l.b16 %v1391
      %v1581 = vunpack.c.h.b16 %v1391
      %v1582 = vunpack.c.l.b16 %v1392
      %v1583 = vunpack.c.h.b16 %v1392
      %v1584 = vunpack.c.l.b16 %v1393
      %v1585 = vunpack.c.h.b16 %v1393
      %v1586 = vunpack.c.l.b16 %v1394
      %v1587 = vunpack.c.h.b16 %v1394
      %v1588 = vunpack.c.l.b16 %v1395
      %v1589 = vunpack.c.h.b16 %v1395
      %v1590 = vunpack.c.l.b16 %v1396
      %v1591 = vunpack.c.h.b16 %v1396
      %v1592 = vunpack.c.l.b16 %v1397
      %v1593 = vunpack.c.h.b16 %v1397
      %v1594 = vunpack.c.l.b16 %v1398
      %v1595 = vunpack.c.h.b16 %v1398
      %v1596 = vunpack.c.l.b16 %v1399
      %v1597 = vunpack.c.h.b16 %v1399
      %v1598 = vunpack.c.l.b16 %v1400
      %v1599 = vunpack.c.h.b16 %v1400
      %v1600 = vunpack.c.l.b16 %v1401
      %v1601 = vunpack.c.h.b16 %v1401
      %v1602 = vunpack.c.l.b16 %v1402
      %v1603 = vunpack.c.h.b16 %v1402
      %v1604 = vunpack.c.l.b16 %v1403
      %v1605 = vunpack.c.h.b16 %v1403
      %v1606 = vunpack.c.l.b16 %v1404
      %v1607 = vunpack.c.h.b16 %v1404
      %v1608 = vpack.c.b16 %v1482, %v1480
      %v1609 = vpack.c.b16 %v1483, %v1481
      %v1610 = vpack.c.b16 %v1486, %v1484
      %v1611 = vpack.c.b16 %v1487, %v1485
      %v1612 = vpack.c.b16 %v1490, %v1488
      %v1613 = vpack.c.b16 %v1491, %v1489
      %v1614 = vpack.c.b16 %v1494, %v1492
      %v1615 = vpack.c.b16 %v1495, %v1493
      %v1616 = vpack.c.b16 %v1498, %v1496
      %v1617 = vpack.c.b16 %v1499, %v1497
      %v1618 = vpack.c.b16 %v1502, %v1500
      %v1619 = vpack.c.b16 %v1503, %v1501
      %v1620 = vpack.c.b16 %v1506, %v1504
      %v1621 = vpack.c.b16 %v1507, %v1505
      %v1622 = vpack.c.b16 %v1510, %v1508
      %v1623 = vpack.c.b16 %v1511, %v1509
      %v1624 = vpack.c.b16 %v1514, %v1512
      %v1625 = vpack.c.b16 %v1515, %v1513
      %v1626 = vpack.c.b16 %v1518, %v1516
      %v1627 = vpack.c.b16 %v1519, %v1517
      %v1628 = vpack.c.b16 %v1522, %v1520
      %v1629 = vpack.c.b16 %v1523, %v1521
      %v1630 = vpack.c.b16 %v1526, %v1524
      %v1631 = vpack.c.b16 %v1527, %v1525
      %v1632 = vpack.c.b16 %v1530, %v1528
      %v1633 = vpack.c.b16 %v1531, %v1529
      %v1634 = vpack.c.b16 %v1534, %v1532
      %v1635 = vpack.c.b16 %v1535, %v1533
      %v1636 = vpack.c.b16 %v1538, %v1536
      %v1637 = vpack.c.b16 %v1539, %v1537
      %v1638 = vpack.c.b16 %v1542, %v1540
      %v1639 = vpack.c.b16 %v1543, %v1541
      %v1640 = vpack.c.b16 %v1546, %v1544
      %v1641 = vpack.c.b16 %v1547, %v1545
      %v1642 = vpack.c.b16 %v1550, %v1548
      %v1643 = vpack.c.b16 %v1551, %v1549
      %v1644 = vpack.c.b16 %v1554, %v1552
      %v1645 = vpack.c.b16 %v1555, %v1553
      %v1646 = vpack.c.b16 %v1558, %v1556
      %v1647 = vpack.c.b16 %v1559, %v1557
      %v1648 = vpack.c.b16 %v1562, %v1560
      %v1649 = vpack.c.b16 %v1563, %v1561
      %v1650 = vpack.c.b16 %v1566, %v1564
      %v1651 = vpack.c.b16 %v1567, %v1565
      %v1652 = vpack.c.b16 %v1570, %v1568
      %v1653 = vpack.c.b16 %v1571, %v1569
      %v1654 = vpack.c.b16 %v1574, %v1572
      %v1655 = vpack.c.b16 %v1575, %v1573
      %v1656 = vpack.c.b16 %v1578, %v1576
      %v1657 = vpack.c.b16 %v1579, %v1577
      %v1658 = vpack.c.b16 %v1582, %v1580
      %v1659 = vpack.c.b16 %v1583, %v1581
      %v1660 = vpack.c.b16 %v1586, %v1584
      %v1661 = vpack.c.b16 %v1587, %v1585
      %v1662 = vpack.c.b16 %v1590, %v1588
      %v1663 = vpack.c.b16 %v1591, %v1589
      %v1664 = vpack.c.b16 %v1594, %v1592
      %v1665 = vpack.c.b16 %v1595, %v1593
      %v1666 = vpack.c.b16 %v1598, %v1596
      %v1667 = vpack.c.b16 %v1599, %v1597
      %v1668 = vpack.c.b16 %v1602, %v1600
      %v1669 = vpack.c.b16 %v1603, %v1601
      %v1670 = vpack.c.b16 %v1606, %v1604
      %v1671 = vpack.c.b16 %v1607, %v1605
      %1736 = vmatpush.bf16.msra.mxu0 %v1622
      %1737 = vmatpush.bf16.msra.mxu0 %v1620
      %1738 = vmatpush.bf16.msra.mxu0 %v1618
      %1739 = vmatpush.bf16.msra.mxu0 %v1616
      %1740 = vmatpush.bf16.msra.mxu0 %v1614
      %1741 = vmatpush.bf16.msra.mxu0 %v1612
      %1742 = vmatpush.bf16.msra.mxu0 %v1610
      %1743 = vmatpush.bf16.msra.mxu0 %v1608
      %1744 = vmatmul.bf16.gmra.mxu0 %v1408
      %v1745 = vpop.f32.mrf.mxu0
      %v1746 = vadd.f32 0.0, %v1745
      %v1747 = vpop.f32.mrf.mxu0
      %1748 = vdwg.mxu0
      %1749 = vmatpush.bf16.msra.mxu0 %v1638
      %1750 = vmatpush.bf16.msra.mxu0 %v1636
      %1751 = vmatpush.bf16.msra.mxu0 %v1634
      %1752 = vmatpush.bf16.msra.mxu0 %v1632
      %1753 = vmatpush.bf16.msra.mxu0 %v1630
      %1754 = vmatpush.bf16.msra.mxu0 %v1628
      %1755 = vmatpush.bf16.msra.mxu0 %v1626
      %1756 = vmatpush.bf16.msra.mxu0 %v1624
      %1757 = vmatmul.bf16.gmra.mxu0 %v1409
      %v1758 = vpop.f32.mrf.mxu0
      %v1759 = vadd.f32 %v1746, %v1758
      %v1760 = vpop.f32.mrf.mxu0
      %1761 = vdwg.mxu0
      %1762 = vmatpush.bf16.msra.mxu0 %v1654
      %1763 = vmatpush.bf16.msra.mxu0 %v1652
      %1764 = vmatpush.bf16.msra.mxu0 %v1650
      %1765 = vmatpush.bf16.msra.mxu0 %v1648
      %1766 = vmatpush.bf16.msra.mxu0 %v1646
      %1767 = vmatpush.bf16.msra.mxu0 %v1644
      %1768 = vmatpush.bf16.msra.mxu0 %v1642
      %1769 = vmatpush.bf16.msra.mxu0 %v1640
      %1770 = vmatmul.bf16.gmra.mxu0 %v1410
      %v1771 = vpop.f32.mrf.mxu0
      %v1772 = vadd.f32 %v1759, %v1771
      %v1773 = vpop.f32.mrf.mxu0
      %1774 = vdwg.mxu0
      %1775 = vmatpush.bf16.msra.mxu0 %v1670
      %1776 = vmatpush.bf16.msra.mxu0 %v1668
      %1777 = vmatpush.bf16.msra.mxu0 %v1666
      %1778 = vmatpush.bf16.msra.mxu0 %v1664
      %1779 = vmatpush.bf16.msra.mxu0 %v1662
      %1780 = vmatpush.bf16.msra.mxu0 %v1660
      %1781 = vmatpush.bf16.msra.mxu0 %v1658
      %1782 = vmatpush.bf16.msra.mxu0 %v1656
      %1783 = vmatmul.bf16.gmra.mxu0 %v1411
      %v1784 = vpop.f32.mrf.mxu0
      %v1785 = vadd.f32 %v1772, %v1784
      %v1786 = vpop.f32.mrf.mxu0
      %1787 = vdwg.mxu0
      %1788 = vmatpush.bf16.msra.mxu0 %v1623
      %1789 = vmatpush.bf16.msra.mxu0 %v1621
      %1790 = vmatpush.bf16.msra.mxu0 %v1619
      %1791 = vmatpush.bf16.msra.mxu0 %v1617
      %1792 = vmatpush.bf16.msra.mxu0 %v1615
      %1793 = vmatpush.bf16.msra.mxu0 %v1613
      %1794 = vmatpush.bf16.msra.mxu0 %v1611
      %1795 = vmatpush.bf16.msra.mxu0 %v1609
      %1796 = vmatmul.bf16.gmra.mxu0 %v1408
      %v1797 = vpop.f32.mrf.mxu0
      %v1798 = vadd.f32 0.0, %v1797
      %v1799 = vpop.f32.mrf.mxu0
      %1800 = vdwg.mxu0
      %1801 = vmatpush.bf16.msra.mxu0 %v1639
      %1802 = vmatpush.bf16.msra.mxu0 %v1637
      %1803 = vmatpush.bf16.msra.mxu0 %v1635
      %1804 = vmatpush.bf16.msra.mxu0 %v1633
      %1805 = vmatpush.bf16.msra.mxu0 %v1631
      %1806 = vmatpush.bf16.msra.mxu0 %v1629
      %1807 = vmatpush.bf16.msra.mxu0 %v1627
      %1808 = vmatpush.bf16.msra.mxu0 %v1625
      %1809 = vmatmul.bf16.gmra.mxu0 %v1409
      %v1810 = vpop.f32.mrf.mxu0
      %v1811 = vadd.f32 %v1798, %v1810
      %v1812 = vpop.f32.mrf.mxu0
      %1813 = vdwg.mxu0
      %1814 = vmatpush.bf16.msra.mxu0 %v1655
      %1815 = vmatpush.bf16.msra.mxu0 %v1653
      %1816 = vmatpush.bf16.msra.mxu0 %v1651
      %1817 = vmatpush.bf16.msra.mxu0 %v1649
      %1818 = vmatpush.bf16.msra.mxu0 %v1647
      %1819 = vmatpush.bf16.msra.mxu0 %v1645
      %1820 = vmatpush.bf16.msra.mxu0 %v1643
      %1821 = vmatpush.bf16.msra.mxu0 %v1641
      %1822 = vmatmul.bf16.gmra.mxu0 %v1410
      %v1823 = vpop.f32.mrf.mxu0
      %v1824 = vadd.f32 %v1811, %v1823
      %v1825 = vpop.f32.mrf.mxu0
      %1826 = vdwg.mxu0
      %1827 = vmatpush.bf16.msra.mxu0 %v1671
      %1828 = vmatpush.bf16.msra.mxu0 %v1669
      %1829 = vmatpush.bf16.msra.mxu0 %v1667
      %1830 = vmatpush.bf16.msra.mxu0 %v1665
      %1831 = vmatpush.bf16.msra.mxu0 %v1663
      %1832 = vmatpush.bf16.msra.mxu0 %v1661
      %1833 = vmatpush.bf16.msra.mxu0 %v1659
      %1834 = vmatpush.bf16.msra.mxu0 %v1657
      %1835 = vmatmul.bf16.gmra.mxu0 %v1411
      %v1836 = vpop.f32.mrf.mxu0
      %v1837 = vadd.f32 %v1824, %v1836
      %v1838 = vpop.f32.mrf.mxu0
      %1839 = vdwg.mxu0
      %v1840 = vadd.f32 %v1260, %v1785
      %v1841 = vadd.f32 %v1312, %v1837
      %v1842 = vld [vmem:[%s1315] sm:$0xff]
      %v1843 = vld [vmem:[%s1315 + $0x8] sm:$0xff]
      %v1846 = vrot.slane %v1842, 1
      %v1847 = vrot.slane %v1842, 2
      %v1848 = vrot.slane %v1842, 3
      %v1849 = vrot.slane %v1843, 1
      %v1850 = vrot.slane %v1843, 2
      %v1851 = vrot.slane %v1843, 3
      %v1854 = vsel %vm229, %v1842, %v1846
      %v1857 = vsel %vm233, %v1847, %v1848
      %v1858 = vsel %vm237, %v1854, %v1857
      %v1859 = vsel %vm327, %v1842, %v1846
      %v1860 = vsel %vm329, %v1847, %v1848
      %v1861 = vsel %vm331, %v1859, %v1860
      %v1863 = vrot.slane %v1861, 1
      %v1866 = vsel %vm229, %v1843, %v1849
      %v1869 = vsel %vm233, %v1850, %v1851
      %v1870 = vsel %vm237, %v1866, %v1869
      %v1871 = vsel %vm327, %v1843, %v1849
      %v1872 = vsel %vm329, %v1850, %v1851
      %v1873 = vsel %vm331, %v1871, %v1872
      %v1875 = vrot.slane %v1873, 1
      %v1876 = vshrl.u32 %v1858, 16
      %v1878 = vrot.slane %v1876, 7
      %v1879 = vrot.slane %v1878, 1
      %v1881 = vshll.u32 %v1863, 16
      %v1883 = vsel %vm361, %v1879, %v1881
      %v1884 = vshrl.u32 %v1870, 16
      %v1886 = vrot.slane %v1884, 7
      %v1887 = vrot.slane %v1886, 1
      %v1889 = vshll.u32 %v1875, 16
      %v1891 = vsel %vm361, %v1887, %v1889
      %s1892 = scalar_lea.vmem %s1, 1536
      %v1893 = vld [vmem:[%s1892] sm:$0xff]
      %v1894 = vld [vmem:[%s1892 + $0x8] sm:$0xff]
      %v1895 = vld [vmem:[%s1892 + $0x10] sm:$0xff]
      %v1896 = vld [vmem:[%s1892 + $0x18] sm:$0xff]
      %v1897 = vld [vmem:[%s1892 + $0x20] sm:$0xff]
      %v1898 = vld [vmem:[%s1892 + $0x28] sm:$0xff]
      %v1899 = vld [vmem:[%s1892 + $0x30] sm:$0xff]
      %v1900 = vld [vmem:[%s1892 + $0x38] sm:$0xff]
      %v1901 = vld [vmem:[%s1892 + $0x40] sm:$0xff]
      %v1902 = vld [vmem:[%s1892 + $0x48] sm:$0xff]
      %v1903 = vld [vmem:[%s1892 + $0x50] sm:$0xff]
      %v1904 = vld [vmem:[%s1892 + $0x58] sm:$0xff]
      %v1905 = vld [vmem:[%s1892 + $0x60] sm:$0xff]
      %v1906 = vld [vmem:[%s1892 + $0x68] sm:$0xff]
      %v1907 = vld [vmem:[%s1892 + $0x70] sm:$0xff]
      %v1908 = vld [vmem:[%s1892 + $0x78] sm:$0xff]
      %v1909 = vld [vmem:[%s1892 + $0x80] sm:$0xff]
      %v1910 = vld [vmem:[%s1892 + $0x88] sm:$0xff]
      %v1911 = vld [vmem:[%s1892 + $0x90] sm:$0xff]
      %v1912 = vld [vmem:[%s1892 + $0x98] sm:$0xff]
      %v1913 = vld [vmem:[%s1892 + $0xa0] sm:$0xff]
      %v1914 = vld [vmem:[%s1892 + $0xa8] sm:$0xff]
      %v1915 = vld [vmem:[%s1892 + $0xb0] sm:$0xff]
      %v1916 = vld [vmem:[%s1892 + $0xb8] sm:$0xff]
      %v1917 = vld [vmem:[%s1892 + $0xc0] sm:$0xff]
      %v1918 = vld [vmem:[%s1892 + $0xc8] sm:$0xff]
      %v1919 = vld [vmem:[%s1892 + $0xd0] sm:$0xff]
      %v1920 = vld [vmem:[%s1892 + $0xd8] sm:$0xff]
      %v1921 = vld [vmem:[%s1892 + $0xe0] sm:$0xff]
      %v1922 = vld [vmem:[%s1892 + $0xe8] sm:$0xff]
      %v1923 = vld [vmem:[%s1892 + $0xf0] sm:$0xff]
      %v1924 = vld [vmem:[%s1892 + $0xf8] sm:$0xff]
      %v1925 = vld [vmem:[%s1892 + $0x100] sm:$0xff]
      %v1926 = vld [vmem:[%s1892 + $0x108] sm:$0xff]
      %v1927 = vld [vmem:[%s1892 + $0x110] sm:$0xff]
      %v1928 = vld [vmem:[%s1892 + $0x118] sm:$0xff]
      %v1929 = vld [vmem:[%s1892 + $0x120] sm:$0xff]
      %v1930 = vld [vmem:[%s1892 + $0x128] sm:$0xff]
      %v1931 = vld [vmem:[%s1892 + $0x130] sm:$0xff]
      %v1932 = vld [vmem:[%s1892 + $0x138] sm:$0xff]
      %v1933 = vld [vmem:[%s1892 + $0x140] sm:$0xff]
      %v1934 = vld [vmem:[%s1892 + $0x148] sm:$0xff]
      %v1935 = vld [vmem:[%s1892 + $0x150] sm:$0xff]
      %v1936 = vld [vmem:[%s1892 + $0x158] sm:$0xff]
      %v1937 = vld [vmem:[%s1892 + $0x160] sm:$0xff]
      %v1938 = vld [vmem:[%s1892 + $0x168] sm:$0xff]
      %v1939 = vld [vmem:[%s1892 + $0x170] sm:$0xff]
      %v1940 = vld [vmem:[%s1892 + $0x178] sm:$0xff]
      %v1941 = vld [vmem:[%s1892 + $0x180] sm:$0xff]
      %v1942 = vld [vmem:[%s1892 + $0x188] sm:$0xff]
      %v1943 = vld [vmem:[%s1892 + $0x190] sm:$0xff]
      %v1944 = vld [vmem:[%s1892 + $0x198] sm:$0xff]
      %v1945 = vld [vmem:[%s1892 + $0x1a0] sm:$0xff]
      %v1946 = vld [vmem:[%s1892 + $0x1a8] sm:$0xff]
      %v1947 = vld [vmem:[%s1892 + $0x1b0] sm:$0xff]
      %v1948 = vld [vmem:[%s1892 + $0x1b8] sm:$0xff]
      %v1949 = vld [vmem:[%s1892 + $0x1c0] sm:$0xff]
      %v1950 = vld [vmem:[%s1892 + $0x1c8] sm:$0xff]
      %v1951 = vld [vmem:[%s1892 + $0x1d0] sm:$0xff]
      %v1952 = vld [vmem:[%s1892 + $0x1d8] sm:$0xff]
      %v1953 = vld [vmem:[%s1892 + $0x1e0] sm:$0xff]
      %v1954 = vld [vmem:[%s1892 + $0x1e8] sm:$0xff]
      %v1955 = vld [vmem:[%s1892 + $0x1f0] sm:$0xff]
      %v1956 = vld [vmem:[%s1892 + $0x1f8] sm:$0xff]
      %1958 = vst [vmem:[#allocation1] ss:$9 sm:$0xff] %v1883
      %s1960 = scalar_lea.vmem [#allocation1], 1
      %1961 = vst [vmem:[%s1960] ss:$9 sm:$0xff] %v1891
      %v1962 = vld [vmem:[#allocation1] sm:$0xff]
      %v1963 = vld [vmem:[#allocation1 + $0x9] sm:$0xff]
      %v1964 = vld [vmem:[#allocation1 + $0x12] sm:$0xff]
      %v1965 = vld [vmem:[#allocation1 + $0x1b] sm:$0xff]
      %v2034 = vunpack.c.l.b16 %v1893
      %v2035 = vunpack.c.h.b16 %v1893
      %v2036 = vunpack.c.l.b16 %v1894
      %v2037 = vunpack.c.h.b16 %v1894
      %v2038 = vunpack.c.l.b16 %v1895
      %v2039 = vunpack.c.h.b16 %v1895
      %v2040 = vunpack.c.l.b16 %v1896
      %v2041 = vunpack.c.h.b16 %v1896
      %v2042 = vunpack.c.l.b16 %v1897
      %v2043 = vunpack.c.h.b16 %v1897
      %v2044 = vunpack.c.l.b16 %v1898
      %v2045 = vunpack.c.h.b16 %v1898
      %v2046 = vunpack.c.l.b16 %v1899
      %v2047 = vunpack.c.h.b16 %v1899
      %v2048 = vunpack.c.l.b16 %v1900
      %v2049 = vunpack.c.h.b16 %v1900
      %v2050 = vunpack.c.l.b16 %v1901
      %v2051 = vunpack.c.h.b16 %v1901
      %v2052 = vunpack.c.l.b16 %v1902
      %v2053 = vunpack.c.h.b16 %v1902
      %v2054 = vunpack.c.l.b16 %v1903
      %v2055 = vunpack.c.h.b16 %v1903
      %v2056 = vunpack.c.l.b16 %v1904
      %v2057 = vunpack.c.h.b16 %v1904
      %v2058 = vunpack.c.l.b16 %v1905
      %v2059 = vunpack.c.h.b16 %v1905
      %v2060 = vunpack.c.l.b16 %v1906
      %v2061 = vunpack.c.h.b16 %v1906
      %v2062 = vunpack.c.l.b16 %v1907
      %v2063 = vunpack.c.h.b16 %v1907
      %v2064 = vunpack.c.l.b16 %v1908
      %v2065 = vunpack.c.h.b16 %v1908
      %v2066 = vunpack.c.l.b16 %v1909
      %v2067 = vunpack.c.h.b16 %v1909
      %v2068 = vunpack.c.l.b16 %v1910
      %v2069 = vunpack.c.h.b16 %v1910
      %v2070 = vunpack.c.l.b16 %v1911
      %v2071 = vunpack.c.h.b16 %v1911
      %v2072 = vunpack.c.l.b16 %v1912
      %v2073 = vunpack.c.h.b16 %v1912
      %v2074 = vunpack.c.l.b16 %v1913
      %v2075 = vunpack.c.h.b16 %v1913
      %v2076 = vunpack.c.l.b16 %v1914
      %v2077 = vunpack.c.h.b16 %v1914
      %v2078 = vunpack.c.l.b16 %v1915
      %v2079 = vunpack.c.h.b16 %v1915
      %v2080 = vunpack.c.l.b16 %v1916
      %v2081 = vunpack.c.h.b16 %v1916
      %v2082 = vunpack.c.l.b16 %v1917
      %v2083 = vunpack.c.h.b16 %v1917
      %v2084 = vunpack.c.l.b16 %v1918
      %v2085 = vunpack.c.h.b16 %v1918
      %v2086 = vunpack.c.l.b16 %v1919
      %v2087 = vunpack.c.h.b16 %v1919
      %v2088 = vunpack.c.l.b16 %v1920
      %v2089 = vunpack.c.h.b16 %v1920
      %v2090 = vunpack.c.l.b16 %v1921
      %v2091 = vunpack.c.h.b16 %v1921
      %v2092 = vunpack.c.l.b16 %v1922
      %v2093 = vunpack.c.h.b16 %v1922
      %v2094 = vunpack.c.l.b16 %v1923
      %v2095 = vunpack.c.h.b16 %v1923
      %v2096 = vunpack.c.l.b16 %v1924
      %v2097 = vunpack.c.h.b16 %v1924
      %v2098 = vunpack.c.l.b16 %v1925
      %v2099 = vunpack.c.h.b16 %v1925
      %v2100 = vunpack.c.l.b16 %v1926
      %v2101 = vunpack.c.h.b16 %v1926
      %v2102 = vunpack.c.l.b16 %v1927
      %v2103 = vunpack.c.h.b16 %v1927
      %v2104 = vunpack.c.l.b16 %v1928
      %v2105 = vunpack.c.h.b16 %v1928
      %v2106 = vunpack.c.l.b16 %v1929
      %v2107 = vunpack.c.h.b16 %v1929
      %v2108 = vunpack.c.l.b16 %v1930
      %v2109 = vunpack.c.h.b16 %v1930
      %v2110 = vunpack.c.l.b16 %v1931
      %v2111 = vunpack.c.h.b16 %v1931
      %v2112 = vunpack.c.l.b16 %v1932
      %v2113 = vunpack.c.h.b16 %v1932
      %v2114 = vunpack.c.l.b16 %v1933
      %v2115 = vunpack.c.h.b16 %v1933
      %v2116 = vunpack.c.l.b16 %v1934
      %v2117 = vunpack.c.h.b16 %v1934
      %v2118 = vunpack.c.l.b16 %v1935
      %v2119 = vunpack.c.h.b16 %v1935
      %v2120 = vunpack.c.l.b16 %v1936
      %v2121 = vunpack.c.h.b16 %v1936
      %v2122 = vunpack.c.l.b16 %v1937
      %v2123 = vunpack.c.h.b16 %v1937
      %v2124 = vunpack.c.l.b16 %v1938
      %v2125 = vunpack.c.h.b16 %v1938
      %v2126 = vunpack.c.l.b16 %v1939
      %v2127 = vunpack.c.h.b16 %v1939
      %v2128 = vunpack.c.l.b16 %v1940
      %v2129 = vunpack.c.h.b16 %v1940
      %v2130 = vunpack.c.l.b16 %v1941
      %v2131 = vunpack.c.h.b16 %v1941
      %v2132 = vunpack.c.l.b16 %v1942
      %v2133 = vunpack.c.h.b16 %v1942
      %v2134 = vunpack.c.l.b16 %v1943
      %v2135 = vunpack.c.h.b16 %v1943
      %v2136 = vunpack.c.l.b16 %v1944
      %v2137 = vunpack.c.h.b16 %v1944
      %v2138 = vunpack.c.l.b16 %v1945
      %v2139 = vunpack.c.h.b16 %v1945
      %v2140 = vunpack.c.l.b16 %v1946
      %v2141 = vunpack.c.h.b16 %v1946
      %v2142 = vunpack.c.l.b16 %v1947
      %v2143 = vunpack.c.h.b16 %v1947
      %v2144 = vunpack.c.l.b16 %v1948
      %v2145 = vunpack.c.h.b16 %v1948
      %v2146 = vunpack.c.l.b16 %v1949
      %v2147 = vunpack.c.h.b16 %v1949
      %v2148 = vunpack.c.l.b16 %v1950
      %v2149 = vunpack.c.h.b16 %v1950
      %v2150 = vunpack.c.l.b16 %v1951
      %v2151 = vunpack.c.h.b16 %v1951
      %v2152 = vunpack.c.l.b16 %v1952
      %v2153 = vunpack.c.h.b16 %v1952
      %v2154 = vunpack.c.l.b16 %v1953
      %v2155 = vunpack.c.h.b16 %v1953
      %v2156 = vunpack.c.l.b16 %v1954
      %v2157 = vunpack.c.h.b16 %v1954
      %v2158 = vunpack.c.l.b16 %v1955
      %v2159 = vunpack.c.h.b16 %v1955
      %v2160 = vunpack.c.l.b16 %v1956
      %v2161 = vunpack.c.h.b16 %v1956
      %v2162 = vpack.c.b16 %v2036, %v2034
      %v2163 = vpack.c.b16 %v2037, %v2035
      %v2164 = vpack.c.b16 %v2040, %v2038
      %v2165 = vpack.c.b16 %v2041, %v2039
      %v2166 = vpack.c.b16 %v2044, %v2042
      %v2167 = vpack.c.b16 %v2045, %v2043
      %v2168 = vpack.c.b16 %v2048, %v2046
      %v2169 = vpack.c.b16 %v2049, %v2047
      %v2170 = vpack.c.b16 %v2052, %v2050
      %v2171 = vpack.c.b16 %v2053, %v2051
      %v2172 = vpack.c.b16 %v2056, %v2054
      %v2173 = vpack.c.b16 %v2057, %v2055
      %v2174 = vpack.c.b16 %v2060, %v2058
      %v2175 = vpack.c.b16 %v2061, %v2059
      %v2176 = vpack.c.b16 %v2064, %v2062
      %v2177 = vpack.c.b16 %v2065, %v2063
      %v2178 = vpack.c.b16 %v2068, %v2066
      %v2179 = vpack.c.b16 %v2069, %v2067
      %v2180 = vpack.c.b16 %v2072, %v2070
      %v2181 = vpack.c.b16 %v2073, %v2071
      %v2182 = vpack.c.b16 %v2076, %v2074
      %v2183 = vpack.c.b16 %v2077, %v2075
      %v2184 = vpack.c.b16 %v2080, %v2078
      %v2185 = vpack.c.b16 %v2081, %v2079
      %v2186 = vpack.c.b16 %v2084, %v2082
      %v2187 = vpack.c.b16 %v2085, %v2083
      %v2188 = vpack.c.b16 %v2088, %v2086
      %v2189 = vpack.c.b16 %v2089, %v2087
      %v2190 = vpack.c.b16 %v2092, %v2090
      %v2191 = vpack.c.b16 %v2093, %v2091
      %v2192 = vpack.c.b16 %v2096, %v2094
      %v2193 = vpack.c.b16 %v2097, %v2095
      %v2194 = vpack.c.b16 %v2100, %v2098
      %v2195 = vpack.c.b16 %v2101, %v2099
      %v2196 = vpack.c.b16 %v2104, %v2102
      %v2197 = vpack.c.b16 %v2105, %v2103
      %v2198 = vpack.c.b16 %v2108, %v2106
      %v2199 = vpack.c.b16 %v2109, %v2107
      %v2200 = vpack.c.b16 %v2112, %v2110
      %v2201 = vpack.c.b16 %v2113, %v2111
      %v2202 = vpack.c.b16 %v2116, %v2114
      %v2203 = vpack.c.b16 %v2117, %v2115
      %v2204 = vpack.c.b16 %v2120, %v2118
      %v2205 = vpack.c.b16 %v2121, %v2119
      %v2206 = vpack.c.b16 %v2124, %v2122
      %v2207 = vpack.c.b16 %v2125, %v2123
      %v2208 = vpack.c.b16 %v2128, %v2126
      %v2209 = vpack.c.b16 %v2129, %v2127
      %v2210 = vpack.c.b16 %v2132, %v2130
      %v2211 = vpack.c.b16 %v2133, %v2131
      %v2212 = vpack.c.b16 %v2136, %v2134
      %v2213 = vpack.c.b16 %v2137, %v2135
      %v2214 = vpack.c.b16 %v2140, %v2138
      %v2215 = vpack.c.b16 %v2141, %v2139
      %v2216 = vpack.c.b16 %v2144, %v2142
      %v2217 = vpack.c.b16 %v2145, %v2143
      %v2218 = vpack.c.b16 %v2148, %v2146
      %v2219 = vpack.c.b16 %v2149, %v2147
      %v2220 = vpack.c.b16 %v2152, %v2150
      %v2221 = vpack.c.b16 %v2153, %v2151
      %v2222 = vpack.c.b16 %v2156, %v2154
      %v2223 = vpack.c.b16 %v2157, %v2155
      %v2224 = vpack.c.b16 %v2160, %v2158
      %v2225 = vpack.c.b16 %v2161, %v2159
      %2290 = vmatpush.bf16.msra.mxu0 %v2176
      %2291 = vmatpush.bf16.msra.mxu0 %v2174
      %2292 = vmatpush.bf16.msra.mxu0 %v2172
      %2293 = vmatpush.bf16.msra.mxu0 %v2170
      %2294 = vmatpush.bf16.msra.mxu0 %v2168
      %2295 = vmatpush.bf16.msra.mxu0 %v2166
      %2296 = vmatpush.bf16.msra.mxu0 %v2164
      %2297 = vmatpush.bf16.msra.mxu0 %v2162
      %2298 = vmatmul.bf16.gmra.mxu0 %v1962
      %v2299 = vpop.f32.mrf.mxu0
      %v2300 = vadd.f32 0.0, %v2299
      %v2301 = vpop.f32.mrf.mxu0
      %2302 = vdwg.mxu0
      %2303 = vmatpush.bf16.msra.mxu0 %v2192
      %2304 = vmatpush.bf16.msra.mxu0 %v2190
      %2305 = vmatpush.bf16.msra.mxu0 %v2188
      %2306 = vmatpush.bf16.msra.mxu0 %v2186
      %2307 = vmatpush.bf16.msra.mxu0 %v2184
      %2308 = vmatpush.bf16.msra.mxu0 %v2182
      %2309 = vmatpush.bf16.msra.mxu0 %v2180
      %2310 = vmatpush.bf16.msra.mxu0 %v2178
      %2311 = vmatmul.bf16.gmra.mxu0 %v1963
      %v2312 = vpop.f32.mrf.mxu0
      %v2313 = vadd.f32 %v2300, %v2312
      %v2314 = vpop.f32.mrf.mxu0
      %2315 = vdwg.mxu0
      %2316 = vmatpush.bf16.msra.mxu0 %v2208
      %2317 = vmatpush.bf16.msra.mxu0 %v2206
      %2318 = vmatpush.bf16.msra.mxu0 %v2204
      %2319 = vmatpush.bf16.msra.mxu0 %v2202
      %2320 = vmatpush.bf16.msra.mxu0 %v2200
      %2321 = vmatpush.bf16.msra.mxu0 %v2198
      %2322 = vmatpush.bf16.msra.mxu0 %v2196
      %2323 = vmatpush.bf16.msra.mxu0 %v2194
      %2324 = vmatmul.bf16.gmra.mxu0 %v1964
      %v2325 = vpop.f32.mrf.mxu0
      %v2326 = vadd.f32 %v2313, %v2325
      %v2327 = vpop.f32.mrf.mxu0
      %2328 = vdwg.mxu0
      %2329 = vmatpush.bf16.msra.mxu0 %v2224
      %2330 = vmatpush.bf16.msra.mxu0 %v2222
      %2331 = vmatpush.bf16.msra.mxu0 %v2220
      %2332 = vmatpush.bf16.msra.mxu0 %v2218
      %2333 = vmatpush.bf16.msra.mxu0 %v2216
      %2334 = vmatpush.bf16.msra.mxu0 %v2214
      %2335 = vmatpush.bf16.msra.mxu0 %v2212
      %2336 = vmatpush.bf16.msra.mxu0 %v2210
      %2337 = vmatmul.bf16.gmra.mxu0 %v1965
      %v2338 = vpop.f32.mrf.mxu0
      %v2339 = vadd.f32 %v2326, %v2338
      %v2340 = vpop.f32.mrf.mxu0
      %2341 = vdwg.mxu0
      %2342 = vmatpush.bf16.msra.mxu0 %v2177
      %2343 = vmatpush.bf16.msra.mxu0 %v2175
      %2344 = vmatpush.bf16.msra.mxu0 %v2173
      %2345 = vmatpush.bf16.msra.mxu0 %v2171
      %2346 = vmatpush.bf16.msra.mxu0 %v2169
      %2347 = vmatpush.bf16.msra.mxu0 %v2167
      %2348 = vmatpush.bf16.msra.mxu0 %v2165
      %2349 = vmatpush.bf16.msra.mxu0 %v2163
      %2350 = vmatmul.bf16.gmra.mxu0 %v1962
      %v2351 = vpop.f32.mrf.mxu0
      %v2352 = vadd.f32 0.0, %v2351
      %v2353 = vpop.f32.mrf.mxu0
      %2354 = vdwg.mxu0
      %2355 = vmatpush.bf16.msra.mxu0 %v2193
      %2356 = vmatpush.bf16.msra.mxu0 %v2191
      %2357 = vmatpush.bf16.msra.mxu0 %v2189
      %2358 = vmatpush.bf16.msra.mxu0 %v2187
      %2359 = vmatpush.bf16.msra.mxu0 %v2185
      %2360 = vmatpush.bf16.msra.mxu0 %v2183
      %2361 = vmatpush.bf16.msra.mxu0 %v2181
      %2362 = vmatpush.bf16.msra.mxu0 %v2179
      %2363 = vmatmul.bf16.gmra.mxu0 %v1963
      %v2364 = vpop.f32.mrf.mxu0
      %v2365 = vadd.f32 %v2352, %v2364
      %v2366 = vpop.f32.mrf.mxu0
      %2367 = vdwg.mxu0
      %2368 = vmatpush.bf16.msra.mxu0 %v2209
      %2369 = vmatpush.bf16.msra.mxu0 %v2207
      %2370 = vmatpush.bf16.msra.mxu0 %v2205
      %2371 = vmatpush.bf16.msra.mxu0 %v2203
      %2372 = vmatpush.bf16.msra.mxu0 %v2201
      %2373 = vmatpush.bf16.msra.mxu0 %v2199
      %2374 = vmatpush.bf16.msra.mxu0 %v2197
      %2375 = vmatpush.bf16.msra.mxu0 %v2195
      %2376 = vmatmul.bf16.gmra.mxu0 %v1964
      %v2377 = vpop.f32.mrf.mxu0
      %v2378 = vadd.f32 %v2365, %v2377
      %v2379 = vpop.f32.mrf.mxu0
      %2380 = vdwg.mxu0
      %2381 = vmatpush.bf16.msra.mxu0 %v2225
      %2382 = vmatpush.bf16.msra.mxu0 %v2223
      %2383 = vmatpush.bf16.msra.mxu0 %v2221
      %2384 = vmatpush.bf16.msra.mxu0 %v2219
      %2385 = vmatpush.bf16.msra.mxu0 %v2217
      %2386 = vmatpush.bf16.msra.mxu0 %v2215
      %2387 = vmatpush.bf16.msra.mxu0 %v2213
      %2388 = vmatpush.bf16.msra.mxu0 %v2211
      %2389 = vmatmul.bf16.gmra.mxu0 %v1965
      %v2390 = vpop.f32.mrf.mxu0
      %v2391 = vadd.f32 %v2378, %v2390
      %v2392 = vpop.f32.mrf.mxu0
      %2393 = vdwg.mxu0
      %v2394 = vadd.f32 %v1840, %v2339
      %v2395 = vadd.f32 %v1841, %v2391
      %v2398 = vrot.slane %v2395, 4
      %vm2399 = vcmask 1043456
      %v2400 = vsel %vm2399, %v2394, %v2398
      %2402 = vst [vmem:[%s210] sm:$0xff] %v2400
      %v2403 = vsel %vm2399, %v2394, 0.0
      %v2404 = vrot.slane %v2403, 4
      %v2405 = vadd.f32 %v2403, %v2404
      %v2406 = vrot.slane %v2405, 2
      %v2407 = vadd.f32 %v2405, %v2406
      %v2408 = vrot.slane %v2407, 1
      %v2409 = vadd.f32 %v2407, %v2408
      %v2410 = vsel %vm2399, %v2395, 0.0
      %v2411 = vrot.slane %v2410, 4
      %v2412 = vadd.f32 %v2410, %v2411
      %v2413 = vrot.slane %v2412, 2
      %v2414 = vadd.f32 %v2412, %v2413
      %v2415 = vrot.slane %v2414, 1
      %v2416 = vadd.f32 %v2414, %v2415
      %v2419 = vrot.slane %v2416, 7
      %v2420 = vsel %vm229, %v2409, %v2419
      %v2422 = vlaneseq
      %vm2423 = vcmp.ge.s32.totalorder %v2422, 0
      %vm2424 = vcmp.lt.s32.totalorder %v2422, 256
      %vm2425 = vmand %vm2423, %vm2424
      %2426 = vst.msk [vmem:[%s214] sm:$0x3] %vm2425, %v2420
      %v2427 = vmul.f32 %v2394, %v2394
      %v2428 = vmul.f32 %v2395, %v2395
      %v2429 = vsel %vm2399, %v2427, 0.0
      %v2430 = vrot.slane %v2429, 4
      %v2431 = vadd.f32 %v2429, %v2430
      %v2432 = vrot.slane %v2431, 2
      %v2433 = vadd.f32 %v2431, %v2432
      %v2434 = vrot.slane %v2433, 1
      %v2435 = vadd.f32 %v2433, %v2434
      %v2436 = vsel %vm2399, %v2428, 0.0
      %v2437 = vrot.slane %v2436, 4
      %v2438 = vadd.f32 %v2436, %v2437
      %v2439 = vrot.slane %v2438, 2
      %v2440 = vadd.f32 %v2438, %v2439
      %v2441 = vrot.slane %v2440, 1
      %v2442 = vadd.f32 %v2440, %v2441
      %v2445 = vrot.slane %v2442, 7
      %v2446 = vsel %vm229, %v2435, %v2445
      %2448 = vst.msk [vmem:[%s218] sm:$0x3] %vm2425, %v2446
      %p2449 = scmp.lt.s32.totalorder %s16, 1
      %s2450 = scalar_select %p2449, %s16, 1
      %s2451 = smul.addr %s2450, 2
      %s2452 = smul.addr %s2451, 4
      %s2453 = scalar_lea.vmem %s2, %s2452
      %p2454 = scmp.lt.s32.totalorder %s16, 1
      %s2455 = scalar_select %p2454, %s16, 1
      %s2456 = smul.addr %s2455, 2
      %s2457 = scalar_lea.vmem %s3, %s2456
      %p2458 = scmp.lt.s32.totalorder %s16, 1
      %s2459 = scalar_select %p2458, %s16, 1
      %s2460 = smul.addr %s2459, 2
      %s2461 = scalar_lea.vmem %s4, %s2460
      // Predicated region
      $region29: #{patchgan_forward.10} parent=27 // pred_check
        %p2462 = pneg %p81
      $region30: #{patchgan_forward.10} parent=27 // pred_check_branch
        %2464 = sbr.rel (%p2462) target = $region32
      $region31: #{patchgan_forward.10} parent=27 // pred_region
        _
      $region32: #{patchgan_forward.10} parent=27 // pred_fallthru
        _
      // Predicated region
      $region33: #{patchgan_forward.10} parent=27 // pred_check
        %p2465 = pneg %p107
      $region34: #{patchgan_forward.10} parent=27 // pred_check_branch
        %2467 = sbr.rel (%p2465) target = $region36
      $region35: #{patchgan_forward.10} parent=27 // pred_region
        _
      $region36: #{patchgan_forward.10} parent=27 // pred_fallthru
        _
      // Predicated region
      $region37: #{patchgan_forward.10} parent=27 // pred_check
        %p2468 = pneg %p133
      $region38: #{patchgan_forward.10} parent=27 // pred_check_branch
        %2470 = sbr.rel (%p2468) target = $region40
      $region39: #{patchgan_forward.10} parent=27 // pred_region
        _
      $region40: #{patchgan_forward.10} parent=27 // pred_fallthru
        _
    $region28: #{patchgan_forward.10} parent=5 // pred_fallthru
      _
    %p2471 = scmp.le.s32.totalorder 2, %s11
    // Predicated region
    $region41: #{patchgan_forward.10} parent=5 // pred_check
      %p2472 = pneg %p2471
    $region42: #{patchgan_forward.10} parent=5 // pred_check_branch
      %2474 = sbr.rel (%p2472) target = $region44
    $region43: #{patchgan_forward.10} parent=5 // pred_region
      %s2475 = ssub.s32 %s11, 2
      // Predicated region
      $region45: #{patchgan_forward.10} parent=43 // pred_check
        %p2476 = pneg %p87
      $region46: #{patchgan_forward.10} parent=43 // pred_check_branch
        %2478 = sbr.rel (%p2476) target = $region48
      $region47: #{patchgan_forward.10} parent=43 // pred_region
        %p2479 = scmp.lt.s32.totalorder %s17, 1
        %s2480 = scalar_select %p2479, %s17, 1
        %s2481 = smul.addr %s2480, 2
        %s2482 = smul.addr %s2481, 4
        %s2483 = scalar_lea.vmem %s2, %s2482
      $region48: #{patchgan_forward.10} parent=43 // pred_fallthru
        _
      // Predicated region
      $region49: #{patchgan_forward.10} parent=43 // pred_check
        %p2484 = pneg %p113
      $region50: #{patchgan_forward.10} parent=43 // pred_check_branch
        %2486 = sbr.rel (%p2484) target = $region52
      $region51: #{patchgan_forward.10} parent=43 // pred_region
        %p2487 = scmp.lt.s32.totalorder %s17, 1
        %s2488 = scalar_select %p2487, %s17, 1
        %s2489 = smul.addr %s2488, 2
        %s2490 = scalar_lea.vmem %s3, %s2489
      $region52: #{patchgan_forward.10} parent=43 // pred_fallthru
        _
      // Predicated region
      $region53: #{patchgan_forward.10} parent=43 // pred_check
        %p2491 = pneg %p139
      $region54: #{patchgan_forward.10} parent=43 // pred_check_branch
        %2493 = sbr.rel (%p2491) target = $region56
      $region55: #{patchgan_forward.10} parent=43 // pred_region
        %p2494 = scmp.lt.s32.totalorder %s17, 1
        %s2495 = scalar_select %p2494, %s17, 1
        %s2496 = smul.addr %s2495, 2
        %s2497 = scalar_lea.vmem %s4, %s2496
      $region56: #{patchgan_forward.10} parent=43 // pred_fallthru
        _
    $region44: #{patchgan_forward.10} parent=5 // pred_fallthru
      _
  $region6: #{patchgan_forward.10} parent=0 // loop_footer
    %s15 = sadd.s32 1, %s11
  $region7: #{patchgan_forward.10} parent=0 // loop_footer_branch
    %10 = sbr.rel target = $region3
  $region8: #{patchgan_forward.10} parent=0 // loop_exit
    _

// kernel: patchgan_forward.13
$region0: #{patchgan_forward.13}
  #allocation0 [shape = 'u32[]', space=smem, size = 0x4, offset = 0x4, fixed_abs, tag = 'smem constant byte address 0x4 - core index']
  #allocation1 [shape = 'u32[72,128]{1,0:T(1,128)}', space=vmem, size = 0x9000, scoped, tag = 'internal scratch']
  %s0 = inlined_call_operand.vmem [shape: f32[2,512], index: 0, kind: input, shape index: {}]
  %s1 = inlined_call_operand.vmem [shape: f32[1,512], index: 1, kind: input, shape index: {}]
  %s2 = inlined_call_operand.vmem [shape: f32[1,512], index: 2, kind: input, shape index: {}]
  %s3 = inlined_call_operand.vmem [shape: bf16[512,128], index: 3, kind: input, shape index: {}]
  %s4 = inlined_call_operand.vmem [shape: f32[1,128], index: 4, kind: input, shape index: {}]
  %s5 = inlined_call_operand.vmem [shape: f32[2,128], index: 5, kind: output, shape index: {}]
  %s6 = sld [smem:[#allocation0]]
  $region30: #{patchgan_forward.13} parent=0
    _
  %s8 = ssub.s32 1, %s6
  %s9 = scalar_select 0, %s8, %s6
  // Predicated region
  $region2: #{patchgan_forward.13} parent=0 // pred_check
    _
  $region3: #{patchgan_forward.13} parent=0 // pred_check_branch
    %11 = sbr.rel (0) target = $region5
  $region4: #{patchgan_forward.13} parent=0 // pred_region
    _
  $region5: #{patchgan_forward.13} parent=0 // pred_fallthru
    _
  // Predicated region
  $region6: #{patchgan_forward.13} parent=0 // pred_check
    _
  $region7: #{patchgan_forward.13} parent=0 // pred_check_branch
    %13 = sbr.rel (0) target = $region9
  $region8: #{patchgan_forward.13} parent=0 // pred_region
    _
  $region9: #{patchgan_forward.13} parent=0 // pred_fallthru
    _
  // Predicated region
  $region10: #{patchgan_forward.13} parent=0 // pred_check
    _
  $region11: #{patchgan_forward.13} parent=0 // pred_check_branch
    %15 = sbr.rel (0) target = $region13
  $region12: #{patchgan_forward.13} parent=0 // pred_region
    _
  $region13: #{patchgan_forward.13} parent=0 // pred_fallthru
    _
  // Predicated region
  $region14: #{patchgan_forward.13} parent=0 // pred_check
    _
  $region15: #{patchgan_forward.13} parent=0 // pred_check_branch
    %17 = sbr.rel (0) target = $region17
  $region16: #{patchgan_forward.13} parent=0 // pred_region
    _
  $region17: #{patchgan_forward.13} parent=0 // pred_fallthru
    _
  // Predicated region
  $region18: #{patchgan_forward.13} parent=0 // pred_check
    _
  $region19: #{patchgan_forward.13} parent=0 // pred_check_branch
    %19 = sbr.rel (0) target = $region21
  $region20: #{patchgan_forward.13} parent=0 // pred_region
    _
  $region21: #{patchgan_forward.13} parent=0 // pred_fallthru
    _
  %v20 = vld [vmem:[%s0] sm:$0xff]
  %v21 = vld [vmem:[%s1] sm:$0xf]
  %v23 = vperm.slane %v21, 0
  %v24 = vperm.slane %v21, 1
  %v25 = vperm.slane %v21, 2
  %v26 = vperm.slane %v21, 3
  %v27 = vrot.slane %v24, 6
  %v28 = vrot.slane %v25, 4
  %v29 = vrot.slane %v26, 2
  %vm30 = vcmask 1041408
  %v31 = vsel %vm30, %v23, %v27
  %vm32 = vcmask 1045508
  %v33 = vsel %vm32, %v28, %v29
  %vm34 = vcmask 1043456
  %v35 = vsel %vm34, %v31, %v33
  %v37 = vmul.f32 %v20, %v35
  %v38 = vld [vmem:[%s2] sm:$0xf]
  %v40 = vperm.slane %v38, 0
  %v41 = vperm.slane %v38, 1
  %v42 = vperm.slane %v38, 2
  %v43 = vperm.slane %v38, 3
  %v44 = vrot.slane %v41, 6
  %v45 = vrot.slane %v42, 4
  %v46 = vrot.slane %v43, 2
  %v47 = vsel %vm30, %v40, %v44
  %v48 = vsel %vm32, %v45, %v46
  %v49 = vsel %vm34, %v47, %v48
  %v51 = vadd.f32 %v37, %v49
  %vm52 = vcmp.ge.f32.partialorder %v51, 0.0
  %v53 = vmul.f32 %v51, 0.2
  %v54 = vsel %vm52, %v51, %v53
  %56 = vst [vmem:[#allocation1] ss:$4 sm:$0xff] %v54
  %v57 = vld.sshfl [vmem:[#allocation1] sm:$0xff pattern:$0x73625140]
  %v58 = vld.sshfl [vmem:[#allocation1 + $0x8] sm:$0xff pattern:$0x73625140]
  %v59 = vld.sshfl [vmem:[#allocation1 + $0x10] sm:$0xff pattern:$0x73625140]
  %v60 = vld.sshfl [vmem:[#allocation1 + $0x18] sm:$0xff pattern:$0x73625140]
  %v65 = vpack.c.bf16 %v57, %v57
  %v66 = vpack.c.bf16 %v58, %v58
  %v67 = vpack.c.bf16 %v59, %v59
  %v68 = vpack.c.bf16 %v60, %v60
  %v69 = vld [vmem:[%s3] sm:$0xf]
  %v70 = vld [vmem:[%s3 + $0x4] sm:$0xf]
  %v71 = vld [vmem:[%s3 + $0x8] sm:$0xf]
  %v72 = vld [vmem:[%s3 + $0xc] sm:$0xf]
  %v73 = vld [vmem:[%s3 + $0x10] sm:$0xf]
  %v74 = vld [vmem:[%s3 + $0x14] sm:$0xf]
  %v75 = vld [vmem:[%s3 + $0x18] sm:$0xf]
  %v76 = vld [vmem:[%s3 + $0x1c] sm:$0xf]
  %v77 = vld [vmem:[%s3 + $0x20] sm:$0xf]
  %v78 = vld [vmem:[%s3 + $0x24] sm:$0xf]
  %v79 = vld [vmem:[%s3 + $0x28] sm:$0xf]
  %v80 = vld [vmem:[%s3 + $0x2c] sm:$0xf]
  %v81 = vld [vmem:[%s3 + $0x30] sm:$0xf]
  %v82 = vld [vmem:[%s3 + $0x34] sm:$0xf]
  %v83 = vld [vmem:[%s3 + $0x38] sm:$0xf]
  %v84 = vld [vmem:[%s3 + $0x3c] sm:$0xf]
  %v85 = vld [vmem:[%s3 + $0x40] sm:$0xf]
  %v86 = vld [vmem:[%s3 + $0x44] sm:$0xf]
  %v87 = vld [vmem:[%s3 + $0x48] sm:$0xf]
  %v88 = vld [vmem:[%s3 + $0x4c] sm:$0xf]
  %v89 = vld [vmem:[%s3 + $0x50] sm:$0xf]
  %v90 = vld [vmem:[%s3 + $0x54] sm:$0xf]
  %v91 = vld [vmem:[%s3 + $0x58] sm:$0xf]
  %v92 = vld [vmem:[%s3 + $0x5c] sm:$0xf]
  %v93 = vld [vmem:[%s3 + $0x60] sm:$0xf]
  %v94 = vld [vmem:[%s3 + $0x64] sm:$0xf]
  %v95 = vld [vmem:[%s3 + $0x68] sm:$0xf]
  %v96 = vld [vmem:[%s3 + $0x6c] sm:$0xf]
  %v97 = vld [vmem:[%s3 + $0x70] sm:$0xf]
  %v98 = vld [vmem:[%s3 + $0x74] sm:$0xf]
  %v99 = vld [vmem:[%s3 + $0x78] sm:$0xf]
  %v100 = vld [vmem:[%s3 + $0x7c] sm:$0xf]
  %v101 = vld [vmem:[%s3 + $0x80] sm:$0xf]
  %v102 = vld [vmem:[%s3 + $0x84] sm:$0xf]
  %v103 = vld [vmem:[%s3 + $0x88] sm:$0xf]
  %v104 = vld [vmem:[%s3 + $0x8c] sm:$0xf]
  %v105 = vld [vmem:[%s3 + $0x90] sm:$0xf]
  %v106 = vld [vmem:[%s3 + $0x94] sm:$0xf]
  %v107 = vld [vmem:[%s3 + $0x98] sm:$0xf]
  %v108 = vld [vmem:[%s3 + $0x9c] sm:$0xf]
  %v109 = vld [vmem:[%s3 + $0xa0] sm:$0xf]
  %v110 = vld [vmem:[%s3 + $0xa4] sm:$0xf]
  %v111 = vld [vmem:[%s3 + $0xa8] sm:$0xf]
  %v112 = vld [vmem:[%s3 + $0xac] sm:$0xf]
  %v113 = vld [vmem:[%s3 + $0xb0] sm:$0xf]
  %v114 = vld [vmem:[%s3 + $0xb4] sm:$0xf]
  %v115 = vld [vmem:[%s3 + $0xb8] sm:$0xf]
  %v116 = vld [vmem:[%s3 + $0xbc] sm:$0xf]
  %v117 = vld [vmem:[%s3 + $0xc0] sm:$0xf]
  %v118 = vld [vmem:[%s3 + $0xc4] sm:$0xf]
  %v119 = vld [vmem:[%s3 + $0xc8] sm:$0xf]
  %v120 = vld [vmem:[%s3 + $0xcc] sm:$0xf]
  %v121 = vld [vmem:[%s3 + $0xd0] sm:$0xf]
  %v122 = vld [vmem:[%s3 + $0xd4] sm:$0xf]
  %v123 = vld [vmem:[%s3 + $0xd8] sm:$0xf]
  %v124 = vld [vmem:[%s3 + $0xdc] sm:$0xf]
  %v125 = vld [vmem:[%s3 + $0xe0] sm:$0xf]
  %v126 = vld [vmem:[%s3 + $0xe4] sm:$0xf]
  %v127 = vld [vmem:[%s3 + $0xe8] sm:$0xf]
  %v128 = vld [vmem:[%s3 + $0xec] sm:$0xf]
  %v129 = vld [vmem:[%s3 + $0xf0] sm:$0xf]
  %v130 = vld [vmem:[%s3 + $0xf4] sm:$0xf]
  %v131 = vld [vmem:[%s3 + $0xf8] sm:$0xf]
  %v132 = vld [vmem:[%s3 + $0xfc] sm:$0xf]
  %v133 = vld [vmem:[%s4] sm:$0x1]
  %v135 = vperm.slane %v133, 0
  %v201 = vunpack.c.l.b16 %v69
  %v202 = vunpack.c.l.b16 %v70
  %v203 = vunpack.c.l.b16 %v71
  %v204 = vunpack.c.l.b16 %v72
  %v205 = vunpack.c.l.b16 %v73
  %v206 = vunpack.c.l.b16 %v74
  %v207 = vunpack.c.l.b16 %v75
  %v208 = vunpack.c.l.b16 %v76
  %v209 = vunpack.c.l.b16 %v77
  %v210 = vunpack.c.l.b16 %v78
  %v211 = vunpack.c.l.b16 %v79
  %v212 = vunpack.c.l.b16 %v80
  %v213 = vunpack.c.l.b16 %v81
  %v214 = vunpack.c.l.b16 %v82
  %v215 = vunpack.c.l.b16 %v83
  %v216 = vunpack.c.l.b16 %v84
  %v217 = vunpack.c.l.b16 %v85
  %v218 = vunpack.c.l.b16 %v86
  %v219 = vunpack.c.l.b16 %v87
  %v220 = vunpack.c.l.b16 %v88
  %v221 = vunpack.c.l.b16 %v89
  %v222 = vunpack.c.l.b16 %v90
  %v223 = vunpack.c.l.b16 %v91
  %v224 = vunpack.c.l.b16 %v92
  %v225 = vunpack.c.l.b16 %v93
  %v226 = vunpack.c.l.b16 %v94
  %v227 = vunpack.c.l.b16 %v95
  %v228 = vunpack.c.l.b16 %v96
  %v229 = vunpack.c.l.b16 %v97
  %v230 = vunpack.c.l.b16 %v98
  %v231 = vunpack.c.l.b16 %v99
  %v232 = vunpack.c.l.b16 %v100
  %v233 = vunpack.c.l.b16 %v101
  %v234 = vunpack.c.l.b16 %v102
  %v235 = vunpack.c.l.b16 %v103
  %v236 = vunpack.c.l.b16 %v104
  %v237 = vunpack.c.l.b16 %v105
  %v238 = vunpack.c.l.b16 %v106
  %v239 = vunpack.c.l.b16 %v107
  %v240 = vunpack.c.l.b16 %v108
  %v241 = vunpack.c.l.b16 %v109
  %v242 = vunpack.c.l.b16 %v110
  %v243 = vunpack.c.l.b16 %v111
  %v244 = vunpack.c.l.b16 %v112
  %v245 = vunpack.c.l.b16 %v113
  %v246 = vunpack.c.l.b16 %v114
  %v247 = vunpack.c.l.b16 %v115
  %v248 = vunpack.c.l.b16 %v116
  %v249 = vunpack.c.l.b16 %v117
  %v250 = vunpack.c.l.b16 %v118
  %v251 = vunpack.c.l.b16 %v119
  %v252 = vunpack.c.l.b16 %v120
  %v253 = vunpack.c.l.b16 %v121
  %v254 = vunpack.c.l.b16 %v122
  %v255 = vunpack.c.l.b16 %v123
  %v256 = vunpack.c.l.b16 %v124
  %v257 = vunpack.c.l.b16 %v125
  %v258 = vunpack.c.l.b16 %v126
  %v259 = vunpack.c.l.b16 %v127
  %v260 = vunpack.c.l.b16 %v128
  %v261 = vunpack.c.l.b16 %v129
  %v262 = vunpack.c.l.b16 %v130
  %v263 = vunpack.c.l.b16 %v131
  %v264 = vunpack.c.l.b16 %v132
  %v265 = vpack.c.b16 %v202, %v201
  %v266 = vpack.c.b16 %v204, %v203
  %v267 = vpack.c.b16 %v206, %v205
  %v268 = vpack.c.b16 %v208, %v207
  %v269 = vpack.c.b16 %v210, %v209
  %v270 = vpack.c.b16 %v212, %v211
  %v271 = vpack.c.b16 %v214, %v213
  %v272 = vpack.c.b16 %v216, %v215
  %v273 = vpack.c.b16 %v218, %v217
  %v274 = vpack.c.b16 %v220, %v219
  %v275 = vpack.c.b16 %v222, %v221
  %v276 = vpack.c.b16 %v224, %v223
  %v277 = vpack.c.b16 %v226, %v225
  %v278 = vpack.c.b16 %v228, %v227
  %v279 = vpack.c.b16 %v230, %v229
  %v280 = vpack.c.b16 %v232, %v231
  %v281 = vpack.c.b16 %v234, %v233
  %v282 = vpack.c.b16 %v236, %v235
  %v283 = vpack.c.b16 %v238, %v237
  %v284 = vpack.c.b16 %v240, %v239
  %v285 = vpack.c.b16 %v242, %v241
  %v286 = vpack.c.b16 %v244, %v243
  %v287 = vpack.c.b16 %v246, %v245
  %v288 = vpack.c.b16 %v248, %v247
  %v289 = vpack.c.b16 %v250, %v249
  %v290 = vpack.c.b16 %v252, %v251
  %v291 = vpack.c.b16 %v254, %v253
  %v292 = vpack.c.b16 %v256, %v255
  %v293 = vpack.c.b16 %v258, %v257
  %v294 = vpack.c.b16 %v260, %v259
  %v295 = vpack.c.b16 %v262, %v261
  %v296 = vpack.c.b16 %v264, %v263
  %329 = vmatpush.bf16.msra.mxu0 %v272
  %330 = vmatpush.bf16.msra.mxu0 %v271
  %331 = vmatpush.bf16.msra.mxu0 %v270
  %332 = vmatpush.bf16.msra.mxu0 %v269
  %333 = vmatpush.bf16.msra.mxu0 %v268
  %334 = vmatpush.bf16.msra.mxu0 %v267
  %335 = vmatpush.bf16.msra.mxu0 %v266
  %336 = vmatpush.bf16.msra.mxu0 %v265
  %337 = vmatmul.bf16.gmra.mxu0 %v65
  %v338 = vpop.f32.mrf.mxu0
  %v339 = vadd.f32 %v135, %v338
  %v340 = vpop.f32.mrf.mxu0
  %341 = vdwg.mxu0
  %342 = vmatpush.bf16.msra.mxu0 %v280
  %343 = vmatpush.bf16.msra.mxu0 %v279
  %344 = vmatpush.bf16.msra.mxu0 %v278
  %345 = vmatpush.bf16.msra.mxu0 %v277
  %346 = vmatpush.bf16.msra.mxu0 %v276
  %347 = vmatpush.bf16.msra.mxu0 %v275
  %348 = vmatpush.bf16.msra.mxu0 %v274
  %349 = vmatpush.bf16.msra.mxu0 %v273
  %350 = vmatmul.bf16.gmra.mxu0 %v66
  %v351 = vpop.f32.mrf.mxu0
  %v352 = vadd.f32 %v339, %v351
  %v353 = vpop.f32.mrf.mxu0
  %354 = vdwg.mxu0
  %355 = vmatpush.bf16.msra.mxu0 %v288
  %356 = vmatpush.bf16.msra.mxu0 %v287
  %357 = vmatpush.bf16.msra.mxu0 %v286
  %358 = vmatpush.bf16.msra.mxu0 %v285
  %359 = vmatpush.bf16.msra.mxu0 %v284
  %360 = vmatpush.bf16.msra.mxu0 %v283
  %361 = vmatpush.bf16.msra.mxu0 %v282
  %362 = vmatpush.bf16.msra.mxu0 %v281
  %363 = vmatmul.bf16.gmra.mxu0 %v67
  %v364 = vpop.f32.mrf.mxu0
  %v365 = vadd.f32 %v352, %v364
  %v366 = vpop.f32.mrf.mxu0
  %367 = vdwg.mxu0
  %368 = vmatpush.bf16.msra.mxu0 %v296
  %369 = vmatpush.bf16.msra.mxu0 %v295
  %370 = vmatpush.bf16.msra.mxu0 %v294
  %371 = vmatpush.bf16.msra.mxu0 %v293
  %372 = vmatpush.bf16.msra.mxu0 %v292
  %373 = vmatpush.bf16.msra.mxu0 %v291
  %374 = vmatpush.bf16.msra.mxu0 %v290
  %375 = vmatpush.bf16.msra.mxu0 %v289
  %376 = vmatmul.bf16.gmra.mxu0 %v68
  %v377 = vpop.f32.mrf.mxu0
  %v378 = vadd.f32 %v365, %v377
  %v379 = vpop.f32.mrf.mxu0
  %380 = vdwg.mxu0
  %381 = vst [vmem:[%s5] sm:$0x3] %v378
  // Predicated region
  $region22: #{patchgan_forward.13} parent=0 // pred_check
    _
  $region23: #{patchgan_forward.13} parent=0 // pred_check_branch
    %383 = sbr.rel (0) target = $region25
  $region24: #{patchgan_forward.13} parent=0 // pred_region
    _
  $region25: #{patchgan_forward.13} parent=0 // pred_fallthru
    _
  // Predicated region
  $region26: #{patchgan_forward.13} parent=0 // pred_check
    _
  $region27: #{patchgan_forward.13} parent=0 // pred_check_branch
    %385 = sbr.rel (0) target = $region29
  $region28: #{patchgan_forward.13} parent=0 // pred_region
    _
  $region29: #{patchgan_forward.13} parent=0 // pred_fallthru
    _

// kernel: patchgan_forward.12
$region0: #{patchgan_forward.12}
  #allocation0 [shape = 'u32[]', space=smem, size = 0x4, offset = 0x4, fixed_abs, tag = 'smem constant byte address 0x4 - core index']
  #allocation1 [shape = 'u32[72,128]{1,0:T(1,128)}', space=vmem, size = 0x9000, scoped, tag = 'internal scratch']
  %s0 = inlined_call_operand.vmem [shape: bf16[2,2,2,1024], index: 0, kind: input, shape index: {}]
  %s1 = inlined_call_operand.vmem [shape: bf16[2,2,1024,512], index: 1, kind: input, shape index: {}]
  %s2 = inlined_call_operand.vmem [shape: f32[2,1,512], index: 2, kind: output, shape index: {0}]
  %s3 = inlined_call_operand.vmem [shape: f32[2,1,512], index: 3, kind: output, shape index: {1}]
  %s4 = inlined_call_operand.vmem [shape: f32[2,1,512], index: 4, kind: output, shape index: {2}]
  %5 = xla_tuple %s2, %s3, %s4
  %s6 = sld [smem:[#allocation0]]
  $region57: #{patchgan_forward.12} parent=0
    _
  %s8 = ssub.s32 1, %s6
  %s9 = scalar_select 0, %s8, %s6
  loop: start=0, step=1, limit=4
  $region2: #{patchgan_forward.12} parent=0 // loop_pre_header
    _
  $region3: #{patchgan_forward.12} parent=0 // loop_header
    %s11 = sphi 0, %s15
    %p12 = scmp.ge.s32.totalorder %s11, 4
    %s21 = sphi 0, %s23
    %s24 = sphi 0, %s21
    %s25 = sphi 0, %s24
    %s41 = sphi 0, %s25
    %s45 = sphi 0, %s45
    %s47 = sphi 0, %s45
    %s48 = sphi 0, %s47
    %s62 = sphi 0, %s48
    %s68 = sphi 0, %s70
    %s71 = sphi 0, %s68
    %s72 = sphi 0, %s71
    %s88 = sphi 0, %s72
    %s94 = sphi 0, %s96
    %s97 = sphi 0, %s94
    %s98 = sphi 0, %s97
    %s114 = sphi 0, %s98
    %s120 = sphi 0, %s122
    %s123 = sphi 0, %s120
    %s124 = sphi 0, %s123
    %s140 = sphi 0, %s124
  $region4: #{patchgan_forward.12} parent=0 // loop_header_branch
    %14 = sbr.rel (%p12) target = $region8
  $region5: #{patchgan_forward.12} parent=0 // loop_body
    %s16 = ssub.s32 %s11, 1
    %s17 = ssub.s32 %s11, 2
    %s18 = sadd.s32 %s11, 1
    %s19 = ssub.s32 %s11, %s18
    %p20 = scmp.eq.s32.totalorder %s19, 0
    %s22 = sadd.s32 %s21, 1
    %s23 = scalar_select %p20, %s21, %s22
    %p26 = pneg %p20
    %p27 = scmp.eq.s32.totalorder %s11, 1
    %p28 = por %p26, %p27
    %p29 = scmp.ne.s32.totalorder %s21, %s24
    %p30 = scmp.eq.s32.totalorder %s11, 0
    %p31 = por %p29, %p30
    %p32 = scmp.ne.s32.totalorder %s21, %s24
    %p33 = scmp.eq.s32.totalorder %s16, 1
    %p34 = por %p32, %p33
    %p35 = scmp.ne.s32.totalorder %s24, %s25
    %p36 = scmp.eq.s32.totalorder %s16, 0
    %p37 = por %p35, %p36
    %p38 = scmp.ne.s32.totalorder %s24, %s25
    %p39 = scmp.eq.s32.totalorder %s17, 1
    %p40 = por %p38, %p39
    %p42 = scmp.ne.s32.totalorder %s25, %s41
    %p43 = scmp.eq.s32.totalorder %s17, 0
    %p44 = por %p42, %p43
    %s46 = sadd.s32 %s45, 1
    %p49 = scmp.eq.s32.totalorder %s11, 1
    %p50 = scmp.ne.s32.totalorder %s45, %s47
    %p51 = scmp.eq.s32.totalorder %s11, 0
    %p52 = por %p50, %p51
    %p53 = scmp.ne.s32.totalorder %s45, %s47
    %p54 = scmp.eq.s32.totalorder %s16, 1
    %p55 = por %p53, %p54
    %p56 = scmp.ne.s32.totalorder %s47, %s48
    %p57 = scmp.eq.s32.totalorder %s16, 0
    %p58 = por %p56, %p57
    %p59 = scmp.ne.s32.totalorder %s47, %s48
    %p60 = scmp.eq.s32.totalorder %s17, 1
    %p61 = por %p59, %p60
    %p63 = scmp.ne.s32.totalorder %s48, %s62
    %p64 = scmp.eq.s32.totalorder %s17, 0
    %p65 = por %p63, %p64
    %s66 = ssub.s32 %s11, %s18
    %p67 = scmp.eq.s32.totalorder %s66, 0
    %s69 = sadd.s32 %s68, 1
    %s70 = scalar_select %p67, %s68, %s69
    %p73 = pneg %p67
    %p74 = scmp.eq.s32.totalorder %s11, 1
    %p75 = por %p73, %p74
    %p76 = scmp.ne.s32.totalorder %s68, %s71
    %p77 = scmp.eq.s32.totalorder %s11, 0
    %p78 = por %p76, %p77
    %p79 = scmp.ne.s32.totalorder %s68, %s71
    %p80 = scmp.eq.s32.totalorder %s16, 1
    %p81 = por %p79, %p80
    %p82 = scmp.ne.s32.totalorder %s71, %s72
    %p83 = scmp.eq.s32.totalorder %s16, 0
    %p84 = por %p82, %p83
    %p85 = scmp.ne.s32.totalorder %s71, %s72
    %p86 = scmp.eq.s32.totalorder %s17, 1
    %p87 = por %p85, %p86
    %p89 = scmp.ne.s32.totalorder %s72, %s88
    %p90 = scmp.eq.s32.totalorder %s17, 0
    %p91 = por %p89, %p90
    %s92 = ssub.s32 %s11, %s18
    %p93 = scmp.eq.s32.totalorder %s92, 0
    %s95 = sadd.s32 %s94, 1
    %s96 = scalar_select %p93, %s94, %s95
    %p99 = pneg %p93
    %p100 = scmp.eq.s32.totalorder %s11, 1
    %p101 = por %p99, %p100
    %p102 = scmp.ne.s32.totalorder %s94, %s97
    %p103 = scmp.eq.s32.totalorder %s11, 0
    %p104 = por %p102, %p103
    %p105 = scmp.ne.s32.totalorder %s94, %s97
    %p106 = scmp.eq.s32.totalorder %s16, 1
    %p107 = por %p105, %p106
    %p108 = scmp.ne.s32.totalorder %s97, %s98
    %p109 = scmp.eq.s32.totalorder %s16, 0
    %p110 = por %p108, %p109
    %p111 = scmp.ne.s32.totalorder %s97, %s98
    %p112 = scmp.eq.s32.totalorder %s17, 1
    %p113 = por %p111, %p112
    %p115 = scmp.ne.s32.totalorder %s98, %s114
    %p116 = scmp.eq.s32.totalorder %s17, 0
    %p117 = por %p115, %p116
    %s118 = ssub.s32 %s11, %s18
    %p119 = scmp.eq.s32.totalorder %s118, 0
    %s121 = sadd.s32 %s120, 1
    %s122 = scalar_select %p119, %s120, %s121
    %p125 = pneg %p119
    %p126 = scmp.eq.s32.totalorder %s11, 1
    %p127 = por %p125, %p126
    %p128 = scmp.ne.s32.totalorder %s120, %s123
    %p129 = scmp.eq.s32.totalorder %s11, 0
    %p130 = por %p128, %p129
    %p131 = scmp.ne.s32.totalorder %s120, %s123
    %p132 = scmp.eq.s32.totalorder %s16, 1
    %p133 = por %p131, %p132
    %p134 = scmp.ne.s32.totalorder %s123, %s124
    %p135 = scmp.eq.s32.totalorder %s16, 0
    %p136 = por %p134, %p135
    %p137 = scmp.ne.s32.totalorder %s123, %s124
    %p138 = scmp.eq.s32.totalorder %s17, 1
    %p139 = por %p137, %p138
    %p141 = scmp.ne.s32.totalorder %s124, %s140
    %p142 = scmp.eq.s32.totalorder %s17, 0
    %p143 = por %p141, %p142
    %p144 = scmp.le.s32.totalorder 1, %s11
    %p145 = scmp.lt.s32.totalorder %s11, 3
    %p146 = pnand %p144, %p145
    %p147 = pneg %p146
    // Predicated region
    $region9: #{patchgan_forward.12} parent=5 // pred_check
      _
    $region10: #{patchgan_forward.12} parent=5 // pred_check_branch
      %149 = sbr.rel (%p146) target = $region12
    $region11: #{patchgan_forward.12} parent=5 // pred_region
      %s150 = ssub.s32 %s11, 1
      // Predicated region
      $region13: #{patchgan_forward.12} parent=11 // pred_check
        %p151 = pneg %p58
      $region14: #{patchgan_forward.12} parent=11 // pred_check_branch
        %153 = sbr.rel (%p151) target = $region16
      $region15: #{patchgan_forward.12} parent=11 // pred_region
        _
      $region16: #{patchgan_forward.12} parent=11 // pred_fallthru
        _
    $region12: #{patchgan_forward.12} parent=5 // pred_fallthru
      _
    %p154 = scmp.lt.s32.totalorder %s11, 2
    // Predicated region
    $region17: #{patchgan_forward.12} parent=5 // pred_check
      %p155 = pneg %p154
    $region18: #{patchgan_forward.12} parent=5 // pred_check_branch
      %157 = sbr.rel (%p155) target = $region20
    $region19: #{patchgan_forward.12} parent=5 // pred_region
      // Predicated region
      $region21: #{patchgan_forward.12} parent=19 // pred_check
        %p158 = pneg %p31
      $region22: #{patchgan_forward.12} parent=19 // pred_check_branch
        %160 = sbr.rel (%p158) target = $region24
      $region23: #{patchgan_forward.12} parent=19 // pred_region
        %p161 = scmp.lt.s32.totalorder %s11, 1
        %s162 = scalar_select %p161, %s11, 1
        %s163 = smul.addr %s162, 16
        %s164 = scalar_lea.vmem %s0, %s163
      $region24: #{patchgan_forward.12} parent=19 // pred_fallthru
        _
    $region20: #{patchgan_forward.12} parent=5 // pred_fallthru
      _
    %p165 = scmp.le.s32.totalorder 1, %s11
    %p166 = scmp.lt.s32.totalorder %s11, 3
    %p167 = pnand %p165, %p166
    %p168 = pneg %p167
    // Predicated region
    $region25: #{patchgan_forward.12} parent=5 // pred_check
      _
    $region26: #{patchgan_forward.12} parent=5 // pred_check_branch
      %170 = sbr.rel (%p167) target = $region28
    $region27: #{patchgan_forward.12} parent=5 // pred_region
      %s171 = ssub.s32 %s11, 1
      %p172 = scmp.lt.s32.totalorder %s16, 1
      %s173 = scalar_select %p172, %s16, 1
      %s174 = smul.addr %s173, 16
      %s175 = scalar_lea.vmem %s0, %s174
      %p176 = pneg %p37
      %p177 = pneg %p34
      %p178 = pneg %p58
      %p179 = pneg %p55
      %p180 = pneg %p84
      %p181 = pneg %p81
      %p182 = scmp.lt.s32.totalorder %s16, 1
      %s183 = scalar_select %p182, %s16, 1
      %s184 = smul.addr %s183, 4
      %s185 = scalar_lea.vmem %s2, %s184
      %p186 = pneg %p110
      %p187 = pneg %p107
      %p188 = scmp.lt.s32.totalorder %s16, 1
      %s189 = scalar_select %p188, %s16, 1
      %s190 = smul.addr %s189, 4
      %s191 = scalar_lea.vmem %s3, %s190
      %p192 = pneg %p136
      %p193 = pneg %p133
      %p194 = scmp.lt.s32.totalorder %s16, 1
      %s195 = scalar_select %p194, %s16, 1
      %s196 = smul.addr %s195, 4
      %s197 = scalar_lea.vmem %s4, %s196
      %p198 = scmp.lt.s32.totalorder %s16, 1
      %s199 = scalar_select %p198, %s16, 1
      %s200 = smul.addr %s199, 16
      %s201 = scalar_lea.vmem %s0, %s200
      %p202 = scmp.lt.s32.totalorder %s16, 1
      %s203 = scalar_select %p202, %s16, 1
      %s204 = smul.addr %s203, 4
      %s205 = scalar_lea.vmem %s2, %s204
      %p206 = scmp.lt.s32.totalorder %s16, 1
      %s207 = scalar_select %p206, %s16, 1
      %s208 = smul.addr %s207, 4
      %s209 = scalar_lea.vmem %s3, %s208
      %p210 = scmp.lt.s32.totalorder %s16, 1
      %s211 = scalar_select %p210, %s16, 1
      %s212 = smul.addr %s211, 4
      %s213 = scalar_lea.vmem %s4, %s212
      %v214 = vld [vmem:[%s201] sm:$0xff]
      %v215 = vld [vmem:[%s1] sm:$0xff]
      %v216 = vld [vmem:[%s1 + $0x8] sm:$0xff]
      %v217 = vld [vmem:[%s1 + $0x10] sm:$0xff]
      %v218 = vld [vmem:[%s1 + $0x18] sm:$0xff]
      %v219 = vld [vmem:[%s1 + $0x20] sm:$0xff]
      %v220 = vld [vmem:[%s1 + $0x28] sm:$0xff]
      %v221 = vld [vmem:[%s1 + $0x30] sm:$0xff]
      %v222 = vld [vmem:[%s1 + $0x38] sm:$0xff]
      %v223 = vld [vmem:[%s1 + $0x40] sm:$0xff]
      %v224 = vld [vmem:[%s1 + $0x48] sm:$0xff]
      %v225 = vld [vmem:[%s1 + $0x50] sm:$0xff]
      %v226 = vld [vmem:[%s1 + $0x58] sm:$0xff]
      %v227 = vld [vmem:[%s1 + $0x60] sm:$0xff]
      %v228 = vld [vmem:[%s1 + $0x68] sm:$0xff]
      %v229 = vld [vmem:[%s1 + $0x70] sm:$0xff]
      %v230 = vld [vmem:[%s1 + $0x78] sm:$0xff]
      %v231 = vld [vmem:[%s1 + $0x80] sm:$0xff]
      %v232 = vld [vmem:[%s1 + $0x88] sm:$0xff]
      %v233 = vld [vmem:[%s1 + $0x90] sm:$0xff]
      %v234 = vld [vmem:[%s1 + $0x98] sm:$0xff]
      %v235 = vld [vmem:[%s1 + $0xa0] sm:$0xff]
      %v236 = vld [vmem:[%s1 + $0xa8] sm:$0xff]
      %v237 = vld [vmem:[%s1 + $0xb0] sm:$0xff]
      %v238 = vld [vmem:[%s1 + $0xb8] sm:$0xff]
      %v239 = vld [vmem:[%s1 + $0xc0] sm:$0xff]
      %v240 = vld [vmem:[%s1 + $0xc8] sm:$0xff]
      %v241 = vld [vmem:[%s1 + $0xd0] sm:$0xff]
      %v242 = vld [vmem:[%s1 + $0xd8] sm:$0xff]
      %v243 = vld [vmem:[%s1 + $0xe0] sm:$0xff]
      %v244 = vld [vmem:[%s1 + $0xe8] sm:$0xff]
      %v245 = vld [vmem:[%s1 + $0xf0] sm:$0xff]
      %v246 = vld [vmem:[%s1 + $0xf8] sm:$0xff]
      %v247 = vld [vmem:[%s1 + $0x100] sm:$0xff]
      %v248 = vld [vmem:[%s1 + $0x108] sm:$0xff]
      %v249 = vld [vmem:[%s1 + $0x110] sm:$0xff]
      %v250 = vld [vmem:[%s1 + $0x118] sm:$0xff]
      %v251 = vld [vmem:[%s1 + $0x120] sm:$0xff]
      %v252 = vld [vmem:[%s1 + $0x128] sm:$0xff]
      %v253 = vld [vmem:[%s1 + $0x130] sm:$0xff]
      %v254 = vld [vmem:[%s1 + $0x138] sm:$0xff]
      %v255 = vld [vmem:[%s1 + $0x140] sm:$0xff]
      %v256 = vld [vmem:[%s1 + $0x148] sm:$0xff]
      %v257 = vld [vmem:[%s1 + $0x150] sm:$0xff]
      %v258 = vld [vmem:[%s1 + $0x158] sm:$0xff]
      %v259 = vld [vmem:[%s1 + $0x160] sm:$0xff]
      %v260 = vld [vmem:[%s1 + $0x168] sm:$0xff]
      %v261 = vld [vmem:[%s1 + $0x170] sm:$0xff]
      %v262 = vld [vmem:[%s1 + $0x178] sm:$0xff]
      %v263 = vld [vmem:[%s1 + $0x180] sm:$0xff]
      %v264 = vld [vmem:[%s1 + $0x188] sm:$0xff]
      %v265 = vld [vmem:[%s1 + $0x190] sm:$0xff]
      %v266 = vld [vmem:[%s1 + $0x198] sm:$0xff]
      %v267 = vld [vmem:[%s1 + $0x1a0] sm:$0xff]
      %v268 = vld [vmem:[%s1 + $0x1a8] sm:$0xff]
      %v269 = vld [vmem:[%s1 + $0x1b0] sm:$0xff]
      %v270 = vld [vmem:[%s1 + $0x1b8] sm:$0xff]
      %v271 = vld [vmem:[%s1 + $0x1c0] sm:$0xff]
      %v272 = vld [vmem:[%s1 + $0x1c8] sm:$0xff]
      %v273 = vld [vmem:[%s1 + $0x1d0] sm:$0xff]
      %v274 = vld [vmem:[%s1 + $0x1d8] sm:$0xff]
      %v275 = vld [vmem:[%s1 + $0x1e0] sm:$0xff]
      %v276 = vld [vmem:[%s1 + $0x1e8] sm:$0xff]
      %v277 = vld [vmem:[%s1 + $0x1f0] sm:$0xff]
      %v278 = vld [vmem:[%s1 + $0x1f8] sm:$0xff]
      %v279 = vld [vmem:[%s1 + $0x200] sm:$0xff]
      %v280 = vld [vmem:[%s1 + $0x208] sm:$0xff]
      %v281 = vld [vmem:[%s1 + $0x210] sm:$0xff]
      %v282 = vld [vmem:[%s1 + $0x218] sm:$0xff]
      %v283 = vld [vmem:[%s1 + $0x220] sm:$0xff]
      %v284 = vld [vmem:[%s1 + $0x228] sm:$0xff]
      %v285 = vld [vmem:[%s1 + $0x230] sm:$0xff]
      %v286 = vld [vmem:[%s1 + $0x238] sm:$0xff]
      %v287 = vld [vmem:[%s1 + $0x240] sm:$0xff]
      %v288 = vld [vmem:[%s1 + $0x248] sm:$0xff]
      %v289 = vld [vmem:[%s1 + $0x250] sm:$0xff]
      %v290 = vld [vmem:[%s1 + $0x258] sm:$0xff]
      %v291 = vld [vmem:[%s1 + $0x260] sm:$0xff]
      %v292 = vld [vmem:[%s1 + $0x268] sm:$0xff]
      %v293 = vld [vmem:[%s1 + $0x270] sm:$0xff]
      %v294 = vld [vmem:[%s1 + $0x278] sm:$0xff]
      %v295 = vld [vmem:[%s1 + $0x280] sm:$0xff]
      %v296 = vld [vmem:[%s1 + $0x288] sm:$0xff]
      %v297 = vld [vmem:[%s1 + $0x290] sm:$0xff]
      %v298 = vld [vmem:[%s1 + $0x298] sm:$0xff]
      %v299 = vld [vmem:[%s1 + $0x2a0] sm:$0xff]
      %v300 = vld [vmem:[%s1 + $0x2a8] sm:$0xff]
      %v301 = vld [vmem:[%s1 + $0x2b0] sm:$0xff]
      %v302 = vld [vmem:[%s1 + $0x2b8] sm:$0xff]
      %v303 = vld [vmem:[%s1 + $0x2c0] sm:$0xff]
      %v304 = vld [vmem:[%s1 + $0x2c8] sm:$0xff]
      %v305 = vld [vmem:[%s1 + $0x2d0] sm:$0xff]
      %v306 = vld [vmem:[%s1 + $0x2d8] sm:$0xff]
      %v307 = vld [vmem:[%s1 + $0x2e0] sm:$0xff]
      %v308 = vld [vmem:[%s1 + $0x2e8] sm:$0xff]
      %v309 = vld [vmem:[%s1 + $0x2f0] sm:$0xff]
      %v310 = vld [vmem:[%s1 + $0x2f8] sm:$0xff]
      %v311 = vld [vmem:[%s1 + $0x300] sm:$0xff]
      %v312 = vld [vmem:[%s1 + $0x308] sm:$0xff]
      %v313 = vld [vmem:[%s1 + $0x310] sm:$0xff]
      %v314 = vld [vmem:[%s1 + $0x318] sm:$0xff]
      %v315 = vld [vmem:[%s1 + $0x320] sm:$0xff]
      %v316 = vld [vmem:[%s1 + $0x328] sm:$0xff]
      %v317 = vld [vmem:[%s1 + $0x330] sm:$0xff]
      %v318 = vld [vmem:[%s1 + $0x338] sm:$0xff]
      %v319 = vld [vmem:[%s1 + $0x340] sm:$0xff]
      %v320 = vld [vmem:[%s1 + $0x348] sm:$0xff]
      %v321 = vld [vmem:[%s1 + $0x350] sm:$0xff]
      %v322 = vld [vmem:[%s1 + $0x358] sm:$0xff]
      %v323 = vld [vmem:[%s1 + $0x360] sm:$0xff]
      %v324 = vld [vmem:[%s1 + $0x368] sm:$0xff]
      %v325 = vld [vmem:[%s1 + $0x370] sm:$0xff]
      %v326 = vld [vmem:[%s1 + $0x378] sm:$0xff]
      %v327 = vld [vmem:[%s1 + $0x380] sm:$0xff]
      %v328 = vld [vmem:[%s1 + $0x388] sm:$0xff]
      %v329 = vld [vmem:[%s1 + $0x390] sm:$0xff]
      %v330 = vld [vmem:[%s1 + $0x398] sm:$0xff]
      %v331 = vld [vmem:[%s1 + $0x3a0] sm:$0xff]
      %v332 = vld [vmem:[%s1 + $0x3a8] sm:$0xff]
      %v333 = vld [vmem:[%s1 + $0x3b0] sm:$0xff]
      %v334 = vld [vmem:[%s1 + $0x3b8] sm:$0xff]
      %v335 = vld [vmem:[%s1 + $0x3c0] sm:$0xff]
      %v336 = vld [vmem:[%s1 + $0x3c8] sm:$0xff]
      %v337 = vld [vmem:[%s1 + $0x3d0] sm:$0xff]
      %v338 = vld [vmem:[%s1 + $0x3d8] sm:$0xff]
      %v339 = vld [vmem:[%s1 + $0x3e0] sm:$0xff]
      %v340 = vld [vmem:[%s1 + $0x3e8] sm:$0xff]
      %v341 = vld [vmem:[%s1 + $0x3f0] sm:$0xff]
      %v342 = vld [vmem:[%s1 + $0x3f8] sm:$0xff]
      %v343 = vld [vmem:[%s1 + $0x400] sm:$0xff]
      %v344 = vld [vmem:[%s1 + $0x408] sm:$0xff]
      %v345 = vld [vmem:[%s1 + $0x410] sm:$0xff]
      %v346 = vld [vmem:[%s1 + $0x418] sm:$0xff]
      %v347 = vld [vmem:[%s1 + $0x420] sm:$0xff]
      %v348 = vld [vmem:[%s1 + $0x428] sm:$0xff]
      %v349 = vld [vmem:[%s1 + $0x430] sm:$0xff]
      %v350 = vld [vmem:[%s1 + $0x438] sm:$0xff]
      %v351 = vld [vmem:[%s1 + $0x440] sm:$0xff]
      %v352 = vld [vmem:[%s1 + $0x448] sm:$0xff]
      %v353 = vld [vmem:[%s1 + $0x450] sm:$0xff]
      %v354 = vld [vmem:[%s1 + $0x458] sm:$0xff]
      %v355 = vld [vmem:[%s1 + $0x460] sm:$0xff]
      %v356 = vld [vmem:[%s1 + $0x468] sm:$0xff]
      %v357 = vld [vmem:[%s1 + $0x470] sm:$0xff]
      %v358 = vld [vmem:[%s1 + $0x478] sm:$0xff]
      %v359 = vld [vmem:[%s1 + $0x480] sm:$0xff]
      %v360 = vld [vmem:[%s1 + $0x488] sm:$0xff]
      %v361 = vld [vmem:[%s1 + $0x490] sm:$0xff]
      %v362 = vld [vmem:[%s1 + $0x498] sm:$0xff]
      %v363 = vld [vmem:[%s1 + $0x4a0] sm:$0xff]
      %v364 = vld [vmem:[%s1 + $0x4a8] sm:$0xff]
      %v365 = vld [vmem:[%s1 + $0x4b0] sm:$0xff]
      %v366 = vld [vmem:[%s1 + $0x4b8] sm:$0xff]
      %v367 = vld [vmem:[%s1 + $0x4c0] sm:$0xff]
      %v368 = vld [vmem:[%s1 + $0x4c8] sm:$0xff]
      %v369 = vld [vmem:[%s1 + $0x4d0] sm:$0xff]
      %v370 = vld [vmem:[%s1 + $0x4d8] sm:$0xff]
      %v371 = vld [vmem:[%s1 + $0x4e0] sm:$0xff]
      %v372 = vld [vmem:[%s1 + $0x4e8] sm:$0xff]
      %v373 = vld [vmem:[%s1 + $0x4f0] sm:$0xff]
      %v374 = vld [vmem:[%s1 + $0x4f8] sm:$0xff]
      %v375 = vld [vmem:[%s1 + $0x500] sm:$0xff]
      %v376 = vld [vmem:[%s1 + $0x508] sm:$0xff]
      %v377 = vld [vmem:[%s1 + $0x510] sm:$0xff]
      %v378 = vld [vmem:[%s1 + $0x518] sm:$0xff]
      %v379 = vld [vmem:[%s1 + $0x520] sm:$0xff]
      %v380 = vld [vmem:[%s1 + $0x528] sm:$0xff]
      %v381 = vld [vmem:[%s1 + $0x530] sm:$0xff]
      %v382 = vld [vmem:[%s1 + $0x538] sm:$0xff]
      %v383 = vld [vmem:[%s1 + $0x540] sm:$0xff]
      %v384 = vld [vmem:[%s1 + $0x548] sm:$0xff]
      %v385 = vld [vmem:[%s1 + $0x550] sm:$0xff]
      %v386 = vld [vmem:[%s1 + $0x558] sm:$0xff]
      %v387 = vld [vmem:[%s1 + $0x560] sm:$0xff]
      %v388 = vld [vmem:[%s1 + $0x568] sm:$0xff]
      %v389 = vld [vmem:[%s1 + $0x570] sm:$0xff]
      %v390 = vld [vmem:[%s1 + $0x578] sm:$0xff]
      %v391 = vld [vmem:[%s1 + $0x580] sm:$0xff]
      %v392 = vld [vmem:[%s1 + $0x588] sm:$0xff]
      %v393 = vld [vmem:[%s1 + $0x590] sm:$0xff]
      %v394 = vld [vmem:[%s1 + $0x598] sm:$0xff]
      %v395 = vld [vmem:[%s1 + $0x5a0] sm:$0xff]
      %v396 = vld [vmem:[%s1 + $0x5a8] sm:$0xff]
      %v397 = vld [vmem:[%s1 + $0x5b0] sm:$0xff]
      %v398 = vld [vmem:[%s1 + $0x5b8] sm:$0xff]
      %v399 = vld [vmem:[%s1 + $0x5c0] sm:$0xff]
      %v400 = vld [vmem:[%s1 + $0x5c8] sm:$0xff]
      %v401 = vld [vmem:[%s1 + $0x5d0] sm:$0xff]
      %v402 = vld [vmem:[%s1 + $0x5d8] sm:$0xff]
      %v403 = vld [vmem:[%s1 + $0x5e0] sm:$0xff]
      %v404 = vld [vmem:[%s1 + $0x5e8] sm:$0xff]
      %v405 = vld [vmem:[%s1 + $0x5f0] sm:$0xff]
      %v406 = vld [vmem:[%s1 + $0x5f8] sm:$0xff]
      %v407 = vld [vmem:[%s1 + $0x600] sm:$0xff]
      %v408 = vld [vmem:[%s1 + $0x608] sm:$0xff]
      %v409 = vld [vmem:[%s1 + $0x610] sm:$0xff]
      %v410 = vld [vmem:[%s1 + $0x618] sm:$0xff]
      %v411 = vld [vmem:[%s1 + $0x620] sm:$0xff]
      %v412 = vld [vmem:[%s1 + $0x628] sm:$0xff]
      %v413 = vld [vmem:[%s1 + $0x630] sm:$0xff]
      %v414 = vld [vmem:[%s1 + $0x638] sm:$0xff]
      %v415 = vld [vmem:[%s1 + $0x640] sm:$0xff]
      %v416 = vld [vmem:[%s1 + $0x648] sm:$0xff]
      %v417 = vld [vmem:[%s1 + $0x650] sm:$0xff]
      %v418 = vld [vmem:[%s1 + $0x658] sm:$0xff]
      %v419 = vld [vmem:[%s1 + $0x660] sm:$0xff]
      %v420 = vld [vmem:[%s1 + $0x668] sm:$0xff]
      %v421 = vld [vmem:[%s1 + $0x670] sm:$0xff]
      %v422 = vld [vmem:[%s1 + $0x678] sm:$0xff]
      %v423 = vld [vmem:[%s1 + $0x680] sm:$0xff]
      %v424 = vld [vmem:[%s1 + $0x688] sm:$0xff]
      %v425 = vld [vmem:[%s1 + $0x690] sm:$0xff]
      %v426 = vld [vmem:[%s1 + $0x698] sm:$0xff]
      %v427 = vld [vmem:[%s1 + $0x6a0] sm:$0xff]
      %v428 = vld [vmem:[%s1 + $0x6a8] sm:$0xff]
      %v429 = vld [vmem:[%s1 + $0x6b0] sm:$0xff]
      %v430 = vld [vmem:[%s1 + $0x6b8] sm:$0xff]
      %v431 = vld [vmem:[%s1 + $0x6c0] sm:$0xff]
      %v432 = vld [vmem:[%s1 + $0x6c8] sm:$0xff]
      %v433 = vld [vmem:[%s1 + $0x6d0] sm:$0xff]
      %v434 = vld [vmem:[%s1 + $0x6d8] sm:$0xff]
      %v435 = vld [vmem:[%s1 + $0x6e0] sm:$0xff]
      %v436 = vld [vmem:[%s1 + $0x6e8] sm:$0xff]
      %v437 = vld [vmem:[%s1 + $0x6f0] sm:$0xff]
      %v438 = vld [vmem:[%s1 + $0x6f8] sm:$0xff]
      %v439 = vld [vmem:[%s1 + $0x700] sm:$0xff]
      %v440 = vld [vmem:[%s1 + $0x708] sm:$0xff]
      %v441 = vld [vmem:[%s1 + $0x710] sm:$0xff]
      %v442 = vld [vmem:[%s1 + $0x718] sm:$0xff]
      %v443 = vld [vmem:[%s1 + $0x720] sm:$0xff]
      %v444 = vld [vmem:[%s1 + $0x728] sm:$0xff]
      %v445 = vld [vmem:[%s1 + $0x730] sm:$0xff]
      %v446 = vld [vmem:[%s1 + $0x738] sm:$0xff]
      %v447 = vld [vmem:[%s1 + $0x740] sm:$0xff]
      %v448 = vld [vmem:[%s1 + $0x748] sm:$0xff]
      %v449 = vld [vmem:[%s1 + $0x750] sm:$0xff]
      %v450 = vld [vmem:[%s1 + $0x758] sm:$0xff]
      %v451 = vld [vmem:[%s1 + $0x760] sm:$0xff]
      %v452 = vld [vmem:[%s1 + $0x768] sm:$0xff]
      %v453 = vld [vmem:[%s1 + $0x770] sm:$0xff]
      %v454 = vld [vmem:[%s1 + $0x778] sm:$0xff]
      %v455 = vld [vmem:[%s1 + $0x780] sm:$0xff]
      %v456 = vld [vmem:[%s1 + $0x788] sm:$0xff]
      %v457 = vld [vmem:[%s1 + $0x790] sm:$0xff]
      %v458 = vld [vmem:[%s1 + $0x798] sm:$0xff]
      %v459 = vld [vmem:[%s1 + $0x7a0] sm:$0xff]
      %v460 = vld [vmem:[%s1 + $0x7a8] sm:$0xff]
      %v461 = vld [vmem:[%s1 + $0x7b0] sm:$0xff]
      %v462 = vld [vmem:[%s1 + $0x7b8] sm:$0xff]
      %v463 = vld [vmem:[%s1 + $0x7c0] sm:$0xff]
      %v464 = vld [vmem:[%s1 + $0x7c8] sm:$0xff]
      %v465 = vld [vmem:[%s1 + $0x7d0] sm:$0xff]
      %v466 = vld [vmem:[%s1 + $0x7d8] sm:$0xff]
      %v467 = vld [vmem:[%s1 + $0x7e0] sm:$0xff]
      %v468 = vld [vmem:[%s1 + $0x7e8] sm:$0xff]
      %v469 = vld [vmem:[%s1 + $0x7f0] sm:$0xff]
      %v470 = vld [vmem:[%s1 + $0x7f8] sm:$0xff]
      %s471 = scalar_lea.vmem %s1, 2048
      %v472 = vld [vmem:[%s471] sm:$0xff]
      %v473 = vld [vmem:[%s471 + $0x8] sm:$0xff]
      %v474 = vld [vmem:[%s471 + $0x10] sm:$0xff]
      %v475 = vld [vmem:[%s471 + $0x18] sm:$0xff]
      %v476 = vld [vmem:[%s471 + $0x20] sm:$0xff]
      %v477 = vld [vmem:[%s471 + $0x28] sm:$0xff]
      %v478 = vld [vmem:[%s471 + $0x30] sm:$0xff]
      %v479 = vld [vmem:[%s471 + $0x38] sm:$0xff]
      %v480 = vld [vmem:[%s471 + $0x40] sm:$0xff]
      %v481 = vld [vmem:[%s471 + $0x48] sm:$0xff]
      %v482 = vld [vmem:[%s471 + $0x50] sm:$0xff]
      %v483 = vld [vmem:[%s471 + $0x58] sm:$0xff]
      %v484 = vld [vmem:[%s471 + $0x60] sm:$0xff]
      %v485 = vld [vmem:[%s471 + $0x68] sm:$0xff]
      %v486 = vld [vmem:[%s471 + $0x70] sm:$0xff]
      %v487 = vld [vmem:[%s471 + $0x78] sm:$0xff]
      %v488 = vld [vmem:[%s471 + $0x80] sm:$0xff]
      %v489 = vld [vmem:[%s471 + $0x88] sm:$0xff]
      %v490 = vld [vmem:[%s471 + $0x90] sm:$0xff]
      %v491 = vld [vmem:[%s471 + $0x98] sm:$0xff]
      %v492 = vld [vmem:[%s471 + $0xa0] sm:$0xff]
      %v493 = vld [vmem:[%s471 + $0xa8] sm:$0xff]
      %v494 = vld [vmem:[%s471 + $0xb0] sm:$0xff]
      %v495 = vld [vmem:[%s471 + $0xb8] sm:$0xff]
      %v496 = vld [vmem:[%s471 + $0xc0] sm:$0xff]
      %v497 = vld [vmem:[%s471 + $0xc8] sm:$0xff]
      %v498 = vld [vmem:[%s471 + $0xd0] sm:$0xff]
      %v499 = vld [vmem:[%s471 + $0xd8] sm:$0xff]
      %v500 = vld [vmem:[%s471 + $0xe0] sm:$0xff]
      %v501 = vld [vmem:[%s471 + $0xe8] sm:$0xff]
      %v502 = vld [vmem:[%s471 + $0xf0] sm:$0xff]
      %v503 = vld [vmem:[%s471 + $0xf8] sm:$0xff]
      %v504 = vld [vmem:[%s471 + $0x100] sm:$0xff]
      %v505 = vld [vmem:[%s471 + $0x108] sm:$0xff]
      %v506 = vld [vmem:[%s471 + $0x110] sm:$0xff]
      %v507 = vld [vmem:[%s471 + $0x118] sm:$0xff]
      %v508 = vld [vmem:[%s471 + $0x120] sm:$0xff]
      %v509 = vld [vmem:[%s471 + $0x128] sm:$0xff]
      %v510 = vld [vmem:[%s471 + $0x130] sm:$0xff]
      %v511 = vld [vmem:[%s471 + $0x138] sm:$0xff]
      %v512 = vld [vmem:[%s471 + $0x140] sm:$0xff]
      %v513 = vld [vmem:[%s471 + $0x148] sm:$0xff]
      %v514 = vld [vmem:[%s471 + $0x150] sm:$0xff]
      %v515 = vld [vmem:[%s471 + $0x158] sm:$0xff]
      %v516 = vld [vmem:[%s471 + $0x160] sm:$0xff]
      %v517 = vld [vmem:[%s471 + $0x168] sm:$0xff]
      %v518 = vld [vmem:[%s471 + $0x170] sm:$0xff]
      %v519 = vld [vmem:[%s471 + $0x178] sm:$0xff]
      %v520 = vld [vmem:[%s471 + $0x180] sm:$0xff]
      %v521 = vld [vmem:[%s471 + $0x188] sm:$0xff]
      %v522 = vld [vmem:[%s471 + $0x190] sm:$0xff]
      %v523 = vld [vmem:[%s471 + $0x198] sm:$0xff]
      %v524 = vld [vmem:[%s471 + $0x1a0] sm:$0xff]
      %v525 = vld [vmem:[%s471 + $0x1a8] sm:$0xff]
      %v526 = vld [vmem:[%s471 + $0x1b0] sm:$0xff]
      %v527 = vld [vmem:[%s471 + $0x1b8] sm:$0xff]
      %v528 = vld [vmem:[%s471 + $0x1c0] sm:$0xff]
      %v529 = vld [vmem:[%s471 + $0x1c8] sm:$0xff]
      %v530 = vld [vmem:[%s471 + $0x1d0] sm:$0xff]
      %v531 = vld [vmem:[%s471 + $0x1d8] sm:$0xff]
      %v532 = vld [vmem:[%s471 + $0x1e0] sm:$0xff]
      %v533 = vld [vmem:[%s471 + $0x1e8] sm:$0xff]
      %v534 = vld [vmem:[%s471 + $0x1f0] sm:$0xff]
      %v535 = vld [vmem:[%s471 + $0x1f8] sm:$0xff]
      %v536 = vld [vmem:[%s471 + $0x200] sm:$0xff]
      %v537 = vld [vmem:[%s471 + $0x208] sm:$0xff]
      %v538 = vld [vmem:[%s471 + $0x210] sm:$0xff]
      %v539 = vld [vmem:[%s471 + $0x218] sm:$0xff]
      %v540 = vld [vmem:[%s471 + $0x220] sm:$0xff]
      %v541 = vld [vmem:[%s471 + $0x228] sm:$0xff]
      %v542 = vld [vmem:[%s471 + $0x230] sm:$0xff]
      %v543 = vld [vmem:[%s471 + $0x238] sm:$0xff]
      %v544 = vld [vmem:[%s471 + $0x240] sm:$0xff]
      %v545 = vld [vmem:[%s471 + $0x248] sm:$0xff]
      %v546 = vld [vmem:[%s471 + $0x250] sm:$0xff]
      %v547 = vld [vmem:[%s471 + $0x258] sm:$0xff]
      %v548 = vld [vmem:[%s471 + $0x260] sm:$0xff]
      %v549 = vld [vmem:[%s471 + $0x268] sm:$0xff]
      %v550 = vld [vmem:[%s471 + $0x270] sm:$0xff]
      %v551 = vld [vmem:[%s471 + $0x278] sm:$0xff]
      %v552 = vld [vmem:[%s471 + $0x280] sm:$0xff]
      %v553 = vld [vmem:[%s471 + $0x288] sm:$0xff]
      %v554 = vld [vmem:[%s471 + $0x290] sm:$0xff]
      %v555 = vld [vmem:[%s471 + $0x298] sm:$0xff]
      %v556 = vld [vmem:[%s471 + $0x2a0] sm:$0xff]
      %v557 = vld [vmem:[%s471 + $0x2a8] sm:$0xff]
      %v558 = vld [vmem:[%s471 + $0x2b0] sm:$0xff]
      %v559 = vld [vmem:[%s471 + $0x2b8] sm:$0xff]
      %v560 = vld [vmem:[%s471 + $0x2c0] sm:$0xff]
      %v561 = vld [vmem:[%s471 + $0x2c8] sm:$0xff]
      %v562 = vld [vmem:[%s471 + $0x2d0] sm:$0xff]
      %v563 = vld [vmem:[%s471 + $0x2d8] sm:$0xff]
      %v564 = vld [vmem:[%s471 + $0x2e0] sm:$0xff]
      %v565 = vld [vmem:[%s471 + $0x2e8] sm:$0xff]
      %v566 = vld [vmem:[%s471 + $0x2f0] sm:$0xff]
      %v567 = vld [vmem:[%s471 + $0x2f8] sm:$0xff]
      %v568 = vld [vmem:[%s471 + $0x300] sm:$0xff]
      %v569 = vld [vmem:[%s471 + $0x308] sm:$0xff]
      %v570 = vld [vmem:[%s471 + $0x310] sm:$0xff]
      %v571 = vld [vmem:[%s471 + $0x318] sm:$0xff]
      %v572 = vld [vmem:[%s471 + $0x320] sm:$0xff]
      %v573 = vld [vmem:[%s471 + $0x328] sm:$0xff]
      %v574 = vld [vmem:[%s471 + $0x330] sm:$0xff]
      %v575 = vld [vmem:[%s471 + $0x338] sm:$0xff]
      %v576 = vld [vmem:[%s471 + $0x340] sm:$0xff]
      %v577 = vld [vmem:[%s471 + $0x348] sm:$0xff]
      %v578 = vld [vmem:[%s471 + $0x350] sm:$0xff]
      %v579 = vld [vmem:[%s471 + $0x358] sm:$0xff]
      %v580 = vld [vmem:[%s471 + $0x360] sm:$0xff]
      %v581 = vld [vmem:[%s471 + $0x368] sm:$0xff]
      %v582 = vld [vmem:[%s471 + $0x370] sm:$0xff]
      %v583 = vld [vmem:[%s471 + $0x378] sm:$0xff]
      %v584 = vld [vmem:[%s471 + $0x380] sm:$0xff]
      %v585 = vld [vmem:[%s471 + $0x388] sm:$0xff]
      %v586 = vld [vmem:[%s471 + $0x390] sm:$0xff]
      %v587 = vld [vmem:[%s471 + $0x398] sm:$0xff]
      %v588 = vld [vmem:[%s471 + $0x3a0] sm:$0xff]
      %v589 = vld [vmem:[%s471 + $0x3a8] sm:$0xff]
      %v590 = vld [vmem:[%s471 + $0x3b0] sm:$0xff]
      %v591 = vld [vmem:[%s471 + $0x3b8] sm:$0xff]
      %v592 = vld [vmem:[%s471 + $0x3c0] sm:$0xff]
      %v593 = vld [vmem:[%s471 + $0x3c8] sm:$0xff]
      %v594 = vld [vmem:[%s471 + $0x3d0] sm:$0xff]
      %v595 = vld [vmem:[%s471 + $0x3d8] sm:$0xff]
      %v596 = vld [vmem:[%s471 + $0x3e0] sm:$0xff]
      %v597 = vld [vmem:[%s471 + $0x3e8] sm:$0xff]
      %v598 = vld [vmem:[%s471 + $0x3f0] sm:$0xff]
      %v599 = vld [vmem:[%s471 + $0x3f8] sm:$0xff]
      %v600 = vld [vmem:[%s471 + $0x400] sm:$0xff]
      %v601 = vld [vmem:[%s471 + $0x408] sm:$0xff]
      %v602 = vld [vmem:[%s471 + $0x410] sm:$0xff]
      %v603 = vld [vmem:[%s471 + $0x418] sm:$0xff]
      %v604 = vld [vmem:[%s471 + $0x420] sm:$0xff]
      %v605 = vld [vmem:[%s471 + $0x428] sm:$0xff]
      %v606 = vld [vmem:[%s471 + $0x430] sm:$0xff]
      %v607 = vld [vmem:[%s471 + $0x438] sm:$0xff]
      %v608 = vld [vmem:[%s471 + $0x440] sm:$0xff]
      %v609 = vld [vmem:[%s471 + $0x448] sm:$0xff]
      %v610 = vld [vmem:[%s471 + $0x450] sm:$0xff]
      %v611 = vld [vmem:[%s471 + $0x458] sm:$0xff]
      %v612 = vld [vmem:[%s471 + $0x460] sm:$0xff]
      %v613 = vld [vmem:[%s471 + $0x468] sm:$0xff]
      %v614 = vld [vmem:[%s471 + $0x470] sm:$0xff]
      %v615 = vld [vmem:[%s471 + $0x478] sm:$0xff]
      %v616 = vld [vmem:[%s471 + $0x480] sm:$0xff]
      %v617 = vld [vmem:[%s471 + $0x488] sm:$0xff]
      %v618 = vld [vmem:[%s471 + $0x490] sm:$0xff]
      %v619 = vld [vmem:[%s471 + $0x498] sm:$0xff]
      %v620 = vld [vmem:[%s471 + $0x4a0] sm:$0xff]
      %v621 = vld [vmem:[%s471 + $0x4a8] sm:$0xff]
      %v622 = vld [vmem:[%s471 + $0x4b0] sm:$0xff]
      %v623 = vld [vmem:[%s471 + $0x4b8] sm:$0xff]
      %v624 = vld [vmem:[%s471 + $0x4c0] sm:$0xff]
      %v625 = vld [vmem:[%s471 + $0x4c8] sm:$0xff]
      %v626 = vld [vmem:[%s471 + $0x4d0] sm:$0xff]
      %v627 = vld [vmem:[%s471 + $0x4d8] sm:$0xff]
      %v628 = vld [vmem:[%s471 + $0x4e0] sm:$0xff]
      %v629 = vld [vmem:[%s471 + $0x4e8] sm:$0xff]
      %v630 = vld [vmem:[%s471 + $0x4f0] sm:$0xff]
      %v631 = vld [vmem:[%s471 + $0x4f8] sm:$0xff]
      %v632 = vld [vmem:[%s471 + $0x500] sm:$0xff]
      %v633 = vld [vmem:[%s471 + $0x508] sm:$0xff]
      %v634 = vld [vmem:[%s471 + $0x510] sm:$0xff]
      %v635 = vld [vmem:[%s471 + $0x518] sm:$0xff]
      %v636 = vld [vmem:[%s471 + $0x520] sm:$0xff]
      %v637 = vld [vmem:[%s471 + $0x528] sm:$0xff]
      %v638 = vld [vmem:[%s471 + $0x530] sm:$0xff]
      %v639 = vld [vmem:[%s471 + $0x538] sm:$0xff]
      %v640 = vld [vmem:[%s471 + $0x540] sm:$0xff]
      %v641 = vld [vmem:[%s471 + $0x548] sm:$0xff]
      %v642 = vld [vmem:[%s471 + $0x550] sm:$0xff]
      %v643 = vld [vmem:[%s471 + $0x558] sm:$0xff]
      %v644 = vld [vmem:[%s471 + $0x560] sm:$0xff]
      %v645 = vld [vmem:[%s471 + $0x568] sm:$0xff]
      %v646 = vld [vmem:[%s471 + $0x570] sm:$0xff]
      %v647 = vld [vmem:[%s471 + $0x578] sm:$0xff]
      %v648 = vld [vmem:[%s471 + $0x580] sm:$0xff]
      %v649 = vld [vmem:[%s471 + $0x588] sm:$0xff]
      %v650 = vld [vmem:[%s471 + $0x590] sm:$0xff]
      %v651 = vld [vmem:[%s471 + $0x598] sm:$0xff]
      %v652 = vld [vmem:[%s471 + $0x5a0] sm:$0xff]
      %v653 = vld [vmem:[%s471 + $0x5a8] sm:$0xff]
      %v654 = vld [vmem:[%s471 + $0x5b0] sm:$0xff]
      %v655 = vld [vmem:[%s471 + $0x5b8] sm:$0xff]
      %v656 = vld [vmem:[%s471 + $0x5c0] sm:$0xff]
      %v657 = vld [vmem:[%s471 + $0x5c8] sm:$0xff]
      %v658 = vld [vmem:[%s471 + $0x5d0] sm:$0xff]
      %v659 = vld [vmem:[%s471 + $0x5d8] sm:$0xff]
      %v660 = vld [vmem:[%s471 + $0x5e0] sm:$0xff]
      %v661 = vld [vmem:[%s471 + $0x5e8] sm:$0xff]
      %v662 = vld [vmem:[%s471 + $0x5f0] sm:$0xff]
      %v663 = vld [vmem:[%s471 + $0x5f8] sm:$0xff]
      %v664 = vld [vmem:[%s471 + $0x600] sm:$0xff]
      %v665 = vld [vmem:[%s471 + $0x608] sm:$0xff]
      %v666 = vld [vmem:[%s471 + $0x610] sm:$0xff]
      %v667 = vld [vmem:[%s471 + $0x618] sm:$0xff]
      %v668 = vld [vmem:[%s471 + $0x620] sm:$0xff]
      %v669 = vld [vmem:[%s471 + $0x628] sm:$0xff]
      %v670 = vld [vmem:[%s471 + $0x630] sm:$0xff]
      %v671 = vld [vmem:[%s471 + $0x638] sm:$0xff]
      %v672 = vld [vmem:[%s471 + $0x640] sm:$0xff]
      %v673 = vld [vmem:[%s471 + $0x648] sm:$0xff]
      %v674 = vld [vmem:[%s471 + $0x650] sm:$0xff]
      %v675 = vld [vmem:[%s471 + $0x658] sm:$0xff]
      %v676 = vld [vmem:[%s471 + $0x660] sm:$0xff]
      %v677 = vld [vmem:[%s471 + $0x668] sm:$0xff]
      %v678 = vld [vmem:[%s471 + $0x670] sm:$0xff]
      %v679 = vld [vmem:[%s471 + $0x678] sm:$0xff]
      %v680 = vld [vmem:[%s471 + $0x680] sm:$0xff]
      %v681 = vld [vmem:[%s471 + $0x688] sm:$0xff]
      %v682 = vld [vmem:[%s471 + $0x690] sm:$0xff]
      %v683 = vld [vmem:[%s471 + $0x698] sm:$0xff]
      %v684 = vld [vmem:[%s471 + $0x6a0] sm:$0xff]
      %v685 = vld [vmem:[%s471 + $0x6a8] sm:$0xff]
      %v686 = vld [vmem:[%s471 + $0x6b0] sm:$0xff]
      %v687 = vld [vmem:[%s471 + $0x6b8] sm:$0xff]
      %v688 = vld [vmem:[%s471 + $0x6c0] sm:$0xff]
      %v689 = vld [vmem:[%s471 + $0x6c8] sm:$0xff]
      %v690 = vld [vmem:[%s471 + $0x6d0] sm:$0xff]
      %v691 = vld [vmem:[%s471 + $0x6d8] sm:$0xff]
      %v692 = vld [vmem:[%s471 + $0x6e0] sm:$0xff]
      %v693 = vld [vmem:[%s471 + $0x6e8] sm:$0xff]
      %v694 = vld [vmem:[%s471 + $0x6f0] sm:$0xff]
      %v695 = vld [vmem:[%s471 + $0x6f8] sm:$0xff]
      %v696 = vld [vmem:[%s471 + $0x700] sm:$0xff]
      %v697 = vld [vmem:[%s471 + $0x708] sm:$0xff]
      %v698 = vld [vmem:[%s471 + $0x710] sm:$0xff]
      %v699 = vld [vmem:[%s471 + $0x718] sm:$0xff]
      %v700 = vld [vmem:[%s471 + $0x720] sm:$0xff]
      %v701 = vld [vmem:[%s471 + $0x728] sm:$0xff]
      %v702 = vld [vmem:[%s471 + $0x730] sm:$0xff]
      %v703 = vld [vmem:[%s471 + $0x738] sm:$0xff]
      %v704 = vld [vmem:[%s471 + $0x740] sm:$0xff]
      %v705 = vld [vmem:[%s471 + $0x748] sm:$0xff]
      %v706 = vld [vmem:[%s471 + $0x750] sm:$0xff]
      %v707 = vld [vmem:[%s471 + $0x758] sm:$0xff]
      %v708 = vld [vmem:[%s471 + $0x760] sm:$0xff]
      %v709 = vld [vmem:[%s471 + $0x768] sm:$0xff]
      %v710 = vld [vmem:[%s471 + $0x770] sm:$0xff]
      %v711 = vld [vmem:[%s471 + $0x778] sm:$0xff]
      %v712 = vld [vmem:[%s471 + $0x780] sm:$0xff]
      %v713 = vld [vmem:[%s471 + $0x788] sm:$0xff]
      %v714 = vld [vmem:[%s471 + $0x790] sm:$0xff]
      %v715 = vld [vmem:[%s471 + $0x798] sm:$0xff]
      %v716 = vld [vmem:[%s471 + $0x7a0] sm:$0xff]
      %v717 = vld [vmem:[%s471 + $0x7a8] sm:$0xff]
      %v718 = vld [vmem:[%s471 + $0x7b0] sm:$0xff]
      %v719 = vld [vmem:[%s471 + $0x7b8] sm:$0xff]
      %v720 = vld [vmem:[%s471 + $0x7c0] sm:$0xff]
      %v721 = vld [vmem:[%s471 + $0x7c8] sm:$0xff]
      %v722 = vld [vmem:[%s471 + $0x7d0] sm:$0xff]
      %v723 = vld [vmem:[%s471 + $0x7d8] sm:$0xff]
      %v724 = vld [vmem:[%s471 + $0x7e0] sm:$0xff]
      %v725 = vld [vmem:[%s471 + $0x7e8] sm:$0xff]
      %v726 = vld [vmem:[%s471 + $0x7f0] sm:$0xff]
      %v727 = vld [vmem:[%s471 + $0x7f8] sm:$0xff]
      %729 = vst [vmem:[#allocation1] ss:$9 sm:$0xff] %v214
      %v730 = vld [vmem:[#allocation1] sm:$0xff]
      %v731 = vld [vmem:[#allocation1 + $0x9] sm:$0xff]
      %v732 = vld [vmem:[#allocation1 + $0x12] sm:$0xff]
      %v733 = vld [vmem:[#allocation1 + $0x1b] sm:$0xff]
      %v734 = vld [vmem:[#allocation1 + $0x24] sm:$0xff]
      %v735 = vld [vmem:[#allocation1 + $0x2d] sm:$0xff]
      %v736 = vld [vmem:[#allocation1 + $0x36] sm:$0xff]
      %v737 = vld [vmem:[#allocation1 + $0x3f] sm:$0xff]
      %v738 = vshrl.u32 %v730, 16
      %v740 = vshrl.u32 %v731, 16
      %v742 = vshrl.u32 %v732, 16
      %v744 = vshrl.u32 %v733, 16
      %v746 = vshrl.u32 %v734, 16
      %v748 = vshrl.u32 %v735, 16
      %v750 = vshrl.u32 %v736, 16
      %v752 = vshrl.u32 %v737, 16
      %v1018 = vunpack.c.l.b16 %v472
      %v1019 = vunpack.c.h.b16 %v472
      %v1020 = vunpack.c.l.b16 %v473
      %v1021 = vunpack.c.h.b16 %v473
      %v1022 = vunpack.c.l.b16 %v474
      %v1023 = vunpack.c.h.b16 %v474
      %v1024 = vunpack.c.l.b16 %v475
      %v1025 = vunpack.c.h.b16 %v475
      %v1026 = vunpack.c.l.b16 %v476
      %v1027 = vunpack.c.h.b16 %v476
      %v1028 = vunpack.c.l.b16 %v477
      %v1029 = vunpack.c.h.b16 %v477
      %v1030 = vunpack.c.l.b16 %v478
      %v1031 = vunpack.c.h.b16 %v478
      %v1032 = vunpack.c.l.b16 %v479
      %v1033 = vunpack.c.h.b16 %v479
      %v1034 = vunpack.c.l.b16 %v480
      %v1035 = vunpack.c.h.b16 %v480
      %v1036 = vunpack.c.l.b16 %v481
      %v1037 = vunpack.c.h.b16 %v481
      %v1038 = vunpack.c.l.b16 %v482
      %v1039 = vunpack.c.h.b16 %v482
      %v1040 = vunpack.c.l.b16 %v483
      %v1041 = vunpack.c.h.b16 %v483
      %v1042 = vunpack.c.l.b16 %v484
      %v1043 = vunpack.c.h.b16 %v484
      %v1044 = vunpack.c.l.b16 %v485
      %v1045 = vunpack.c.h.b16 %v485
      %v1046 = vunpack.c.l.b16 %v486
      %v1047 = vunpack.c.h.b16 %v486
      %v1048 = vunpack.c.l.b16 %v487
      %v1049 = vunpack.c.h.b16 %v487
      %v1050 = vunpack.c.l.b16 %v488
      %v1051 = vunpack.c.h.b16 %v488
      %v1052 = vunpack.c.l.b16 %v489
      %v1053 = vunpack.c.h.b16 %v489
      %v1054 = vunpack.c.l.b16 %v490
      %v1055 = vunpack.c.h.b16 %v490
      %v1056 = vunpack.c.l.b16 %v491
      %v1057 = vunpack.c.h.b16 %v491
      %v1058 = vunpack.c.l.b16 %v492
      %v1059 = vunpack.c.h.b16 %v492
      %v1060 = vunpack.c.l.b16 %v493
      %v1061 = vunpack.c.h.b16 %v493
      %v1062 = vunpack.c.l.b16 %v494
      %v1063 = vunpack.c.h.b16 %v494
      %v1064 = vunpack.c.l.b16 %v495
      %v1065 = vunpack.c.h.b16 %v495
      %v1066 = vunpack.c.l.b16 %v496
      %v1067 = vunpack.c.h.b16 %v496
      %v1068 = vunpack.c.l.b16 %v497
      %v1069 = vunpack.c.h.b16 %v497
      %v1070 = vunpack.c.l.b16 %v498
      %v1071 = vunpack.c.h.b16 %v498
      %v1072 = vunpack.c.l.b16 %v499
      %v1073 = vunpack.c.h.b16 %v499
      %v1074 = vunpack.c.l.b16 %v500
      %v1075 = vunpack.c.h.b16 %v500
      %v1076 = vunpack.c.l.b16 %v501
      %v1077 = vunpack.c.h.b16 %v501
      %v1078 = vunpack.c.l.b16 %v502
      %v1079 = vunpack.c.h.b16 %v502
      %v1080 = vunpack.c.l.b16 %v503
      %v1081 = vunpack.c.h.b16 %v503
      %v1082 = vunpack.c.l.b16 %v504
      %v1083 = vunpack.c.h.b16 %v504
      %v1084 = vunpack.c.l.b16 %v505
      %v1085 = vunpack.c.h.b16 %v505
      %v1086 = vunpack.c.l.b16 %v506
      %v1087 = vunpack.c.h.b16 %v506
      %v1088 = vunpack.c.l.b16 %v507
      %v1089 = vunpack.c.h.b16 %v507
      %v1090 = vunpack.c.l.b16 %v508
      %v1091 = vunpack.c.h.b16 %v508
      %v1092 = vunpack.c.l.b16 %v509
      %v1093 = vunpack.c.h.b16 %v509
      %v1094 = vunpack.c.l.b16 %v510
      %v1095 = vunpack.c.h.b16 %v510
      %v1096 = vunpack.c.l.b16 %v511
      %v1097 = vunpack.c.h.b16 %v511
      %v1098 = vunpack.c.l.b16 %v512
      %v1099 = vunpack.c.h.b16 %v512
      %v1100 = vunpack.c.l.b16 %v513
      %v1101 = vunpack.c.h.b16 %v513
      %v1102 = vunpack.c.l.b16 %v514
      %v1103 = vunpack.c.h.b16 %v514
      %v1104 = vunpack.c.l.b16 %v515
      %v1105 = vunpack.c.h.b16 %v515
      %v1106 = vunpack.c.l.b16 %v516
      %v1107 = vunpack.c.h.b16 %v516
      %v1108 = vunpack.c.l.b16 %v517
      %v1109 = vunpack.c.h.b16 %v517
      %v1110 = vunpack.c.l.b16 %v518
      %v1111 = vunpack.c.h.b16 %v518
      %v1112 = vunpack.c.l.b16 %v519
      %v1113 = vunpack.c.h.b16 %v519
      %v1114 = vunpack.c.l.b16 %v520
      %v1115 = vunpack.c.h.b16 %v520
      %v1116 = vunpack.c.l.b16 %v521
      %v1117 = vunpack.c.h.b16 %v521
      %v1118 = vunpack.c.l.b16 %v522
      %v1119 = vunpack.c.h.b16 %v522
      %v1120 = vunpack.c.l.b16 %v523
      %v1121 = vunpack.c.h.b16 %v523
      %v1122 = vunpack.c.l.b16 %v524
      %v1123 = vunpack.c.h.b16 %v524
      %v1124 = vunpack.c.l.b16 %v525
      %v1125 = vunpack.c.h.b16 %v525
      %v1126 = vunpack.c.l.b16 %v526
      %v1127 = vunpack.c.h.b16 %v526
      %v1128 = vunpack.c.l.b16 %v527
      %v1129 = vunpack.c.h.b16 %v527
      %v1130 = vunpack.c.l.b16 %v528
      %v1131 = vunpack.c.h.b16 %v528
      %v1132 = vunpack.c.l.b16 %v529
      %v1133 = vunpack.c.h.b16 %v529
      %v1134 = vunpack.c.l.b16 %v530
      %v1135 = vunpack.c.h.b16 %v530
      %v1136 = vunpack.c.l.b16 %v531
      %v1137 = vunpack.c.h.b16 %v531
      %v1138 = vunpack.c.l.b16 %v532
      %v1139 = vunpack.c.h.b16 %v532
      %v1140 = vunpack.c.l.b16 %v533
      %v1141 = vunpack.c.h.b16 %v533
      %v1142 = vunpack.c.l.b16 %v534
      %v1143 = vunpack.c.h.b16 %v534
      %v1144 = vunpack.c.l.b16 %v535
      %v1145 = vunpack.c.h.b16 %v535
      %v1146 = vunpack.c.l.b16 %v536
      %v1147 = vunpack.c.h.b16 %v536
      %v1148 = vunpack.c.l.b16 %v537
      %v1149 = vunpack.c.h.b16 %v537
      %v1150 = vunpack.c.l.b16 %v538
      %v1151 = vunpack.c.h.b16 %v538
      %v1152 = vunpack.c.l.b16 %v539
      %v1153 = vunpack.c.h.b16 %v539
      %v1154 = vunpack.c.l.b16 %v540
      %v1155 = vunpack.c.h.b16 %v540
      %v1156 = vunpack.c.l.b16 %v541
      %v1157 = vunpack.c.h.b16 %v541
      %v1158 = vunpack.c.l.b16 %v542
      %v1159 = vunpack.c.h.b16 %v542
      %v1160 = vunpack.c.l.b16 %v543
      %v1161 = vunpack.c.h.b16 %v543
      %v1162 = vunpack.c.l.b16 %v544
      %v1163 = vunpack.c.h.b16 %v544
      %v1164 = vunpack.c.l.b16 %v545
      %v1165 = vunpack.c.h.b16 %v545
      %v1166 = vunpack.c.l.b16 %v546
      %v1167 = vunpack.c.h.b16 %v546
      %v1168 = vunpack.c.l.b16 %v547
      %v1169 = vunpack.c.h.b16 %v547
      %v1170 = vunpack.c.l.b16 %v548
      %v1171 = vunpack.c.h.b16 %v548
      %v1172 = vunpack.c.l.b16 %v549
      %v1173 = vunpack.c.h.b16 %v549
      %v1174 = vunpack.c.l.b16 %v550
      %v1175 = vunpack.c.h.b16 %v550
      %v1176 = vunpack.c.l.b16 %v551
      %v1177 = vunpack.c.h.b16 %v551
      %v1178 = vunpack.c.l.b16 %v552
      %v1179 = vunpack.c.h.b16 %v552
      %v1180 = vunpack.c.l.b16 %v553
      %v1181 = vunpack.c.h.b16 %v553
      %v1182 = vunpack.c.l.b16 %v554
      %v1183 = vunpack.c.h.b16 %v554
      %v1184 = vunpack.c.l.b16 %v555
      %v1185 = vunpack.c.h.b16 %v555
      %v1186 = vunpack.c.l.b16 %v556
      %v1187 = vunpack.c.h.b16 %v556
      %v1188 = vunpack.c.l.b16 %v557
      %v1189 = vunpack.c.h.b16 %v557
      %v1190 = vunpack.c.l.b16 %v558
      %v1191 = vunpack.c.h.b16 %v558
      %v1192 = vunpack.c.l.b16 %v559
      %v1193 = vunpack.c.h.b16 %v559
      %v1194 = vunpack.c.l.b16 %v560
      %v1195 = vunpack.c.h.b16 %v560
      %v1196 = vunpack.c.l.b16 %v561
      %v1197 = vunpack.c.h.b16 %v561
      %v1198 = vunpack.c.l.b16 %v562
      %v1199 = vunpack.c.h.b16 %v562
      %v1200 = vunpack.c.l.b16 %v563
      %v1201 = vunpack.c.h.b16 %v563
      %v1202 = vunpack.c.l.b16 %v564
      %v1203 = vunpack.c.h.b16 %v564
      %v1204 = vunpack.c.l.b16 %v565
      %v1205 = vunpack.c.h.b16 %v565
      %v1206 = vunpack.c.l.b16 %v566
      %v1207 = vunpack.c.h.b16 %v566
      %v1208 = vunpack.c.l.b16 %v567
      %v1209 = vunpack.c.h.b16 %v567
      %v1210 = vunpack.c.l.b16 %v568
      %v1211 = vunpack.c.h.b16 %v568
      %v1212 = vunpack.c.l.b16 %v569
      %v1213 = vunpack.c.h.b16 %v569
      %v1214 = vunpack.c.l.b16 %v570
      %v1215 = vunpack.c.h.b16 %v570
      %v1216 = vunpack.c.l.b16 %v571
      %v1217 = vunpack.c.h.b16 %v571
      %v1218 = vunpack.c.l.b16 %v572
      %v1219 = vunpack.c.h.b16 %v572
      %v1220 = vunpack.c.l.b16 %v573
      %v1221 = vunpack.c.h.b16 %v573
      %v1222 = vunpack.c.l.b16 %v574
      %v1223 = vunpack.c.h.b16 %v574
      %v1224 = vunpack.c.l.b16 %v575
      %v1225 = vunpack.c.h.b16 %v575
      %v1226 = vunpack.c.l.b16 %v576
      %v1227 = vunpack.c.h.b16 %v576
      %v1228 = vunpack.c.l.b16 %v577
      %v1229 = vunpack.c.h.b16 %v577
      %v1230 = vunpack.c.l.b16 %v578
      %v1231 = vunpack.c.h.b16 %v578
      %v1232 = vunpack.c.l.b16 %v579
      %v1233 = vunpack.c.h.b16 %v579
      %v1234 = vunpack.c.l.b16 %v580
      %v1235 = vunpack.c.h.b16 %v580
      %v1236 = vunpack.c.l.b16 %v581
      %v1237 = vunpack.c.h.b16 %v581
      %v1238 = vunpack.c.l.b16 %v582
      %v1239 = vunpack.c.h.b16 %v582
      %v1240 = vunpack.c.l.b16 %v583
      %v1241 = vunpack.c.h.b16 %v583
      %v1242 = vunpack.c.l.b16 %v584
      %v1243 = vunpack.c.h.b16 %v584
      %v1244 = vunpack.c.l.b16 %v585
      %v1245 = vunpack.c.h.b16 %v585
      %v1246 = vunpack.c.l.b16 %v586
      %v1247 = vunpack.c.h.b16 %v586
      %v1248 = vunpack.c.l.b16 %v587
      %v1249 = vunpack.c.h.b16 %v587
      %v1250 = vunpack.c.l.b16 %v588
      %v1251 = vunpack.c.h.b16 %v588
      %v1252 = vunpack.c.l.b16 %v589
      %v1253 = vunpack.c.h.b16 %v589
      %v1254 = vunpack.c.l.b16 %v590
      %v1255 = vunpack.c.h.b16 %v590
      %v1256 = vunpack.c.l.b16 %v591
      %v1257 = vunpack.c.h.b16 %v591
      %v1258 = vunpack.c.l.b16 %v592
      %v1259 = vunpack.c.h.b16 %v592
      %v1260 = vunpack.c.l.b16 %v593
      %v1261 = vunpack.c.h.b16 %v593
      %v1262 = vunpack.c.l.b16 %v594
      %v1263 = vunpack.c.h.b16 %v594
      %v1264 = vunpack.c.l.b16 %v595
      %v1265 = vunpack.c.h.b16 %v595
      %v1266 = vunpack.c.l.b16 %v596
      %v1267 = vunpack.c.h.b16 %v596
      %v1268 = vunpack.c.l.b16 %v597
      %v1269 = vunpack.c.h.b16 %v597
      %v1270 = vunpack.c.l.b16 %v598
      %v1271 = vunpack.c.h.b16 %v598
      %v1272 = vunpack.c.l.b16 %v599
      %v1273 = vunpack.c.h.b16 %v599
      %v1274 = vunpack.c.l.b16 %v600
      %v1275 = vunpack.c.h.b16 %v600
      %v1276 = vunpack.c.l.b16 %v601
      %v1277 = vunpack.c.h.b16 %v601
      %v1278 = vunpack.c.l.b16 %v602
      %v1279 = vunpack.c.h.b16 %v602
      %v1280 = vunpack.c.l.b16 %v603
      %v1281 = vunpack.c.h.b16 %v603
      %v1282 = vunpack.c.l.b16 %v604
      %v1283 = vunpack.c.h.b16 %v604
      %v1284 = vunpack.c.l.b16 %v605
      %v1285 = vunpack.c.h.b16 %v605
      %v1286 = vunpack.c.l.b16 %v606
      %v1287 = vunpack.c.h.b16 %v606
      %v1288 = vunpack.c.l.b16 %v607
      %v1289 = vunpack.c.h.b16 %v607
      %v1290 = vunpack.c.l.b16 %v608
      %v1291 = vunpack.c.h.b16 %v608
      %v1292 = vunpack.c.l.b16 %v609
      %v1293 = vunpack.c.h.b16 %v609
      %v1294 = vunpack.c.l.b16 %v610
      %v1295 = vunpack.c.h.b16 %v610
      %v1296 = vunpack.c.l.b16 %v611
      %v1297 = vunpack.c.h.b16 %v611
      %v1298 = vunpack.c.l.b16 %v612
      %v1299 = vunpack.c.h.b16 %v612
      %v1300 = vunpack.c.l.b16 %v613
      %v1301 = vunpack.c.h.b16 %v613
      %v1302 = vunpack.c.l.b16 %v614
      %v1303 = vunpack.c.h.b16 %v614
      %v1304 = vunpack.c.l.b16 %v615
      %v1305 = vunpack.c.h.b16 %v615
      %v1306 = vunpack.c.l.b16 %v616
      %v1307 = vunpack.c.h.b16 %v616
      %v1308 = vunpack.c.l.b16 %v617
      %v1309 = vunpack.c.h.b16 %v617
      %v1310 = vunpack.c.l.b16 %v618
      %v1311 = vunpack.c.h.b16 %v618
      %v1312 = vunpack.c.l.b16 %v619
      %v1313 = vunpack.c.h.b16 %v619
      %v1314 = vunpack.c.l.b16 %v620
      %v1315 = vunpack.c.h.b16 %v620
      %v1316 = vunpack.c.l.b16 %v621
      %v1317 = vunpack.c.h.b16 %v621
      %v1318 = vunpack.c.l.b16 %v622
      %v1319 = vunpack.c.h.b16 %v622
      %v1320 = vunpack.c.l.b16 %v623
      %v1321 = vunpack.c.h.b16 %v623
      %v1322 = vunpack.c.l.b16 %v624
      %v1323 = vunpack.c.h.b16 %v624
      %v1324 = vunpack.c.l.b16 %v625
      %v1325 = vunpack.c.h.b16 %v625
      %v1326 = vunpack.c.l.b16 %v626
      %v1327 = vunpack.c.h.b16 %v626
      %v1328 = vunpack.c.l.b16 %v627
      %v1329 = vunpack.c.h.b16 %v627
      %v1330 = vunpack.c.l.b16 %v628
      %v1331 = vunpack.c.h.b16 %v628
      %v1332 = vunpack.c.l.b16 %v629
      %v1333 = vunpack.c.h.b16 %v629
      %v1334 = vunpack.c.l.b16 %v630
      %v1335 = vunpack.c.h.b16 %v630
      %v1336 = vunpack.c.l.b16 %v631
      %v1337 = vunpack.c.h.b16 %v631
      %v1338 = vunpack.c.l.b16 %v632
      %v1339 = vunpack.c.h.b16 %v632
      %v1340 = vunpack.c.l.b16 %v633
      %v1341 = vunpack.c.h.b16 %v633
      %v1342 = vunpack.c.l.b16 %v634
      %v1343 = vunpack.c.h.b16 %v634
      %v1344 = vunpack.c.l.b16 %v635
      %v1345 = vunpack.c.h.b16 %v635
      %v1346 = vunpack.c.l.b16 %v636
      %v1347 = vunpack.c.h.b16 %v636
      %v1348 = vunpack.c.l.b16 %v637
      %v1349 = vunpack.c.h.b16 %v637
      %v1350 = vunpack.c.l.b16 %v638
      %v1351 = vunpack.c.h.b16 %v638
      %v1352 = vunpack.c.l.b16 %v639
      %v1353 = vunpack.c.h.b16 %v639
      %v1354 = vunpack.c.l.b16 %v640
      %v1355 = vunpack.c.h.b16 %v640
      %v1356 = vunpack.c.l.b16 %v641
      %v1357 = vunpack.c.h.b16 %v641
      %v1358 = vunpack.c.l.b16 %v642
      %v1359 = vunpack.c.h.b16 %v642
      %v1360 = vunpack.c.l.b16 %v643
      %v1361 = vunpack.c.h.b16 %v643
      %v1362 = vunpack.c.l.b16 %v644
      %v1363 = vunpack.c.h.b16 %v644
      %v1364 = vunpack.c.l.b16 %v645
      %v1365 = vunpack.c.h.b16 %v645
      %v1366 = vunpack.c.l.b16 %v646
      %v1367 = vunpack.c.h.b16 %v646
      %v1368 = vunpack.c.l.b16 %v647
      %v1369 = vunpack.c.h.b16 %v647
      %v1370 = vunpack.c.l.b16 %v648
      %v1371 = vunpack.c.h.b16 %v648
      %v1372 = vunpack.c.l.b16 %v649
      %v1373 = vunpack.c.h.b16 %v649
      %v1374 = vunpack.c.l.b16 %v650
      %v1375 = vunpack.c.h.b16 %v650
      %v1376 = vunpack.c.l.b16 %v651
      %v1377 = vunpack.c.h.b16 %v651
      %v1378 = vunpack.c.l.b16 %v652
      %v1379 = vunpack.c.h.b16 %v652
      %v1380 = vunpack.c.l.b16 %v653
      %v1381 = vunpack.c.h.b16 %v653
      %v1382 = vunpack.c.l.b16 %v654
      %v1383 = vunpack.c.h.b16 %v654
      %v1384 = vunpack.c.l.b16 %v655
      %v1385 = vunpack.c.h.b16 %v655
      %v1386 = vunpack.c.l.b16 %v656
      %v1387 = vunpack.c.h.b16 %v656
      %v1388 = vunpack.c.l.b16 %v657
      %v1389 = vunpack.c.h.b16 %v657
      %v1390 = vunpack.c.l.b16 %v658
      %v1391 = vunpack.c.h.b16 %v658
      %v1392 = vunpack.c.l.b16 %v659
      %v1393 = vunpack.c.h.b16 %v659
      %v1394 = vunpack.c.l.b16 %v660
      %v1395 = vunpack.c.h.b16 %v660
      %v1396 = vunpack.c.l.b16 %v661
      %v1397 = vunpack.c.h.b16 %v661
      %v1398 = vunpack.c.l.b16 %v662
      %v1399 = vunpack.c.h.b16 %v662
      %v1400 = vunpack.c.l.b16 %v663
      %v1401 = vunpack.c.h.b16 %v663
      %v1402 = vunpack.c.l.b16 %v664
      %v1403 = vunpack.c.h.b16 %v664
      %v1404 = vunpack.c.l.b16 %v665
      %v1405 = vunpack.c.h.b16 %v665
      %v1406 = vunpack.c.l.b16 %v666
      %v1407 = vunpack.c.h.b16 %v666
      %v1408 = vunpack.c.l.b16 %v667
      %v1409 = vunpack.c.h.b16 %v667
      %v1410 = vunpack.c.l.b16 %v668
      %v1411 = vunpack.c.h.b16 %v668
      %v1412 = vunpack.c.l.b16 %v669
      %v1413 = vunpack.c.h.b16 %v669
      %v1414 = vunpack.c.l.b16 %v670
      %v1415 = vunpack.c.h.b16 %v670
      %v1416 = vunpack.c.l.b16 %v671
      %v1417 = vunpack.c.h.b16 %v671
      %v1418 = vunpack.c.l.b16 %v672
      %v1419 = vunpack.c.h.b16 %v672
      %v1420 = vunpack.c.l.b16 %v673
      %v1421 = vunpack.c.h.b16 %v673
      %v1422 = vunpack.c.l.b16 %v674
      %v1423 = vunpack.c.h.b16 %v674
      %v1424 = vunpack.c.l.b16 %v675
      %v1425 = vunpack.c.h.b16 %v675
      %v1426 = vunpack.c.l.b16 %v676
      %v1427 = vunpack.c.h.b16 %v676
      %v1428 = vunpack.c.l.b16 %v677
      %v1429 = vunpack.c.h.b16 %v677
      %v1430 = vunpack.c.l.b16 %v678
      %v1431 = vunpack.c.h.b16 %v678
      %v1432 = vunpack.c.l.b16 %v679
      %v1433 = vunpack.c.h.b16 %v679
      %v1434 = vunpack.c.l.b16 %v680
      %v1435 = vunpack.c.h.b16 %v680
      %v1436 = vunpack.c.l.b16 %v681
      %v1437 = vunpack.c.h.b16 %v681
      %v1438 = vunpack.c.l.b16 %v682
      %v1439 = vunpack.c.h.b16 %v682
      %v1440 = vunpack.c.l.b16 %v683
      %v1441 = vunpack.c.h.b16 %v683
      %v1442 = vunpack.c.l.b16 %v684
      %v1443 = vunpack.c.h.b16 %v684
      %v1444 = vunpack.c.l.b16 %v685
      %v1445 = vunpack.c.h.b16 %v685
      %v1446 = vunpack.c.l.b16 %v686
      %v1447 = vunpack.c.h.b16 %v686
      %v1448 = vunpack.c.l.b16 %v687
      %v1449 = vunpack.c.h.b16 %v687
      %v1450 = vunpack.c.l.b16 %v688
      %v1451 = vunpack.c.h.b16 %v688
      %v1452 = vunpack.c.l.b16 %v689
      %v1453 = vunpack.c.h.b16 %v689
      %v1454 = vunpack.c.l.b16 %v690
      %v1455 = vunpack.c.h.b16 %v690
      %v1456 = vunpack.c.l.b16 %v691
      %v1457 = vunpack.c.h.b16 %v691
      %v1458 = vunpack.c.l.b16 %v692
      %v1459 = vunpack.c.h.b16 %v692
      %v1460 = vunpack.c.l.b16 %v693
      %v1461 = vunpack.c.h.b16 %v693
      %v1462 = vunpack.c.l.b16 %v694
      %v1463 = vunpack.c.h.b16 %v694
      %v1464 = vunpack.c.l.b16 %v695
      %v1465 = vunpack.c.h.b16 %v695
      %v1466 = vunpack.c.l.b16 %v696
      %v1467 = vunpack.c.h.b16 %v696
      %v1468 = vunpack.c.l.b16 %v697
      %v1469 = vunpack.c.h.b16 %v697
      %v1470 = vunpack.c.l.b16 %v698
      %v1471 = vunpack.c.h.b16 %v698
      %v1472 = vunpack.c.l.b16 %v699
      %v1473 = vunpack.c.h.b16 %v699
      %v1474 = vunpack.c.l.b16 %v700
      %v1475 = vunpack.c.h.b16 %v700
      %v1476 = vunpack.c.l.b16 %v701
      %v1477 = vunpack.c.h.b16 %v701
      %v1478 = vunpack.c.l.b16 %v702
      %v1479 = vunpack.c.h.b16 %v702
      %v1480 = vunpack.c.l.b16 %v703
      %v1481 = vunpack.c.h.b16 %v703
      %v1482 = vunpack.c.l.b16 %v704
      %v1483 = vunpack.c.h.b16 %v704
      %v1484 = vunpack.c.l.b16 %v705
      %v1485 = vunpack.c.h.b16 %v705
      %v1486 = vunpack.c.l.b16 %v706
      %v1487 = vunpack.c.h.b16 %v706
      %v1488 = vunpack.c.l.b16 %v707
      %v1489 = vunpack.c.h.b16 %v707
      %v1490 = vunpack.c.l.b16 %v708
      %v1491 = vunpack.c.h.b16 %v708
      %v1492 = vunpack.c.l.b16 %v709
      %v1493 = vunpack.c.h.b16 %v709
      %v1494 = vunpack.c.l.b16 %v710
      %v1495 = vunpack.c.h.b16 %v710
      %v1496 = vunpack.c.l.b16 %v711
      %v1497 = vunpack.c.h.b16 %v711
      %v1498 = vunpack.c.l.b16 %v712
      %v1499 = vunpack.c.h.b16 %v712
      %v1500 = vunpack.c.l.b16 %v713
      %v1501 = vunpack.c.h.b16 %v713
      %v1502 = vunpack.c.l.b16 %v714
      %v1503 = vunpack.c.h.b16 %v714
      %v1504 = vunpack.c.l.b16 %v715
      %v1505 = vunpack.c.h.b16 %v715
      %v1506 = vunpack.c.l.b16 %v716
      %v1507 = vunpack.c.h.b16 %v716
      %v1508 = vunpack.c.l.b16 %v717
      %v1509 = vunpack.c.h.b16 %v717
      %v1510 = vunpack.c.l.b16 %v718
      %v1511 = vunpack.c.h.b16 %v718
      %v1512 = vunpack.c.l.b16 %v719
      %v1513 = vunpack.c.h.b16 %v719
      %v1514 = vunpack.c.l.b16 %v720
      %v1515 = vunpack.c.h.b16 %v720
      %v1516 = vunpack.c.l.b16 %v721
      %v1517 = vunpack.c.h.b16 %v721
      %v1518 = vunpack.c.l.b16 %v722
      %v1519 = vunpack.c.h.b16 %v722
      %v1520 = vunpack.c.l.b16 %v723
      %v1521 = vunpack.c.h.b16 %v723
      %v1522 = vunpack.c.l.b16 %v724
      %v1523 = vunpack.c.h.b16 %v724
      %v1524 = vunpack.c.l.b16 %v725
      %v1525 = vunpack.c.h.b16 %v725
      %v1526 = vunpack.c.l.b16 %v726
      %v1527 = vunpack.c.h.b16 %v726
      %v1528 = vunpack.c.l.b16 %v727
      %v1529 = vunpack.c.h.b16 %v727
      %v1530 = vpack.c.b16 %v1022, %v1018
      %v1531 = vpack.c.b16 %v1023, %v1019
      %v1532 = vpack.c.b16 %v1024, %v1020
      %v1533 = vpack.c.b16 %v1025, %v1021
      %v1534 = vpack.c.b16 %v1030, %v1026
      %v1535 = vpack.c.b16 %v1031, %v1027
      %v1536 = vpack.c.b16 %v1032, %v1028
      %v1537 = vpack.c.b16 %v1033, %v1029
      %v1538 = vpack.c.b16 %v1038, %v1034
      %v1539 = vpack.c.b16 %v1039, %v1035
      %v1540 = vpack.c.b16 %v1040, %v1036
      %v1541 = vpack.c.b16 %v1041, %v1037
      %v1542 = vpack.c.b16 %v1046, %v1042
      %v1543 = vpack.c.b16 %v1047, %v1043
      %v1544 = vpack.c.b16 %v1048, %v1044
      %v1545 = vpack.c.b16 %v1049, %v1045
      %v1546 = vpack.c.b16 %v1054, %v1050
      %v1547 = vpack.c.b16 %v1055, %v1051
      %v1548 = vpack.c.b16 %v1056, %v1052
      %v1549 = vpack.c.b16 %v1057, %v1053
      %v1550 = vpack.c.b16 %v1062, %v1058
      %v1551 = vpack.c.b16 %v1063, %v1059
      %v1552 = vpack.c.b16 %v1064, %v1060
      %v1553 = vpack.c.b16 %v1065, %v1061
      %v1554 = vpack.c.b16 %v1070, %v1066
      %v1555 = vpack.c.b16 %v1071, %v1067
      %v1556 = vpack.c.b16 %v1072, %v1068
      %v1557 = vpack.c.b16 %v1073, %v1069
      %v1558 = vpack.c.b16 %v1078, %v1074
      %v1559 = vpack.c.b16 %v1079, %v1075
      %v1560 = vpack.c.b16 %v1080, %v1076
      %v1561 = vpack.c.b16 %v1081, %v1077
      %v1562 = vpack.c.b16 %v1086, %v1082
      %v1563 = vpack.c.b16 %v1087, %v1083
      %v1564 = vpack.c.b16 %v1088, %v1084
      %v1565 = vpack.c.b16 %v1089, %v1085
      %v1566 = vpack.c.b16 %v1094, %v1090
      %v1567 = vpack.c.b16 %v1095, %v1091
      %v1568 = vpack.c.b16 %v1096, %v1092
      %v1569 = vpack.c.b16 %v1097, %v1093
      %v1570 = vpack.c.b16 %v1102, %v1098
      %v1571 = vpack.c.b16 %v1103, %v1099
      %v1572 = vpack.c.b16 %v1104, %v1100
      %v1573 = vpack.c.b16 %v1105, %v1101
      %v1574 = vpack.c.b16 %v1110, %v1106
      %v1575 = vpack.c.b16 %v1111, %v1107
      %v1576 = vpack.c.b16 %v1112, %v1108
      %v1577 = vpack.c.b16 %v1113, %v1109
      %v1578 = vpack.c.b16 %v1118, %v1114
      %v1579 = vpack.c.b16 %v1119, %v1115
      %v1580 = vpack.c.b16 %v1120, %v1116
      %v1581 = vpack.c.b16 %v1121, %v1117
      %v1582 = vpack.c.b16 %v1126, %v1122
      %v1583 = vpack.c.b16 %v1127, %v1123
      %v1584 = vpack.c.b16 %v1128, %v1124
      %v1585 = vpack.c.b16 %v1129, %v1125
      %v1586 = vpack.c.b16 %v1134, %v1130
      %v1587 = vpack.c.b16 %v1135, %v1131
      %v1588 = vpack.c.b16 %v1136, %v1132
      %v1589 = vpack.c.b16 %v1137, %v1133
      %v1590 = vpack.c.b16 %v1142, %v1138
      %v1591 = vpack.c.b16 %v1143, %v1139
      %v1592 = vpack.c.b16 %v1144, %v1140
      %v1593 = vpack.c.b16 %v1145, %v1141
      %v1594 = vpack.c.b16 %v1150, %v1146
      %v1595 = vpack.c.b16 %v1151, %v1147
      %v1596 = vpack.c.b16 %v1152, %v1148
      %v1597 = vpack.c.b16 %v1153, %v1149
      %v1598 = vpack.c.b16 %v1158, %v1154
      %v1599 = vpack.c.b16 %v1159, %v1155
      %v1600 = vpack.c.b16 %v1160, %v1156
      %v1601 = vpack.c.b16 %v1161, %v1157
      %v1602 = vpack.c.b16 %v1166, %v1162
      %v1603 = vpack.c.b16 %v1167, %v1163
      %v1604 = vpack.c.b16 %v1168, %v1164
      %v1605 = vpack.c.b16 %v1169, %v1165
      %v1606 = vpack.c.b16 %v1174, %v1170
      %v1607 = vpack.c.b16 %v1175, %v1171
      %v1608 = vpack.c.b16 %v1176, %v1172
      %v1609 = vpack.c.b16 %v1177, %v1173
      %v1610 = vpack.c.b16 %v1182, %v1178
      %v1611 = vpack.c.b16 %v1183, %v1179
      %v1612 = vpack.c.b16 %v1184, %v1180
      %v1613 = vpack.c.b16 %v1185, %v1181
      %v1614 = vpack.c.b16 %v1190, %v1186
      %v1615 = vpack.c.b16 %v1191, %v1187
      %v1616 = vpack.c.b16 %v1192, %v1188
      %v1617 = vpack.c.b16 %v1193, %v1189
      %v1618 = vpack.c.b16 %v1198, %v1194
      %v1619 = vpack.c.b16 %v1199, %v1195
      %v1620 = vpack.c.b16 %v1200, %v1196
      %v1621 = vpack.c.b16 %v1201, %v1197
      %v1622 = vpack.c.b16 %v1206, %v1202
      %v1623 = vpack.c.b16 %v1207, %v1203
      %v1624 = vpack.c.b16 %v1208, %v1204
      %v1625 = vpack.c.b16 %v1209, %v1205
      %v1626 = vpack.c.b16 %v1214, %v1210
      %v1627 = vpack.c.b16 %v1215, %v1211
      %v1628 = vpack.c.b16 %v1216, %v1212
      %v1629 = vpack.c.b16 %v1217, %v1213
      %v1630 = vpack.c.b16 %v1222, %v1218
      %v1631 = vpack.c.b16 %v1223, %v1219
      %v1632 = vpack.c.b16 %v1224, %v1220
      %v1633 = vpack.c.b16 %v1225, %v1221
      %v1634 = vpack.c.b16 %v1230, %v1226
      %v1635 = vpack.c.b16 %v1231, %v1227
      %v1636 = vpack.c.b16 %v1232, %v1228
      %v1637 = vpack.c.b16 %v1233, %v1229
      %v1638 = vpack.c.b16 %v1238, %v1234
      %v1639 = vpack.c.b16 %v1239, %v1235
      %v1640 = vpack.c.b16 %v1240, %v1236
      %v1641 = vpack.c.b16 %v1241, %v1237
      %v1642 = vpack.c.b16 %v1246, %v1242
      %v1643 = vpack.c.b16 %v1247, %v1243
      %v1644 = vpack.c.b16 %v1248, %v1244
      %v1645 = vpack.c.b16 %v1249, %v1245
      %v1646 = vpack.c.b16 %v1254, %v1250
      %v1647 = vpack.c.b16 %v1255, %v1251
      %v1648 = vpack.c.b16 %v1256, %v1252
      %v1649 = vpack.c.b16 %v1257, %v1253
      %v1650 = vpack.c.b16 %v1262, %v1258
      %v1651 = vpack.c.b16 %v1263, %v1259
      %v1652 = vpack.c.b16 %v1264, %v1260
      %v1653 = vpack.c.b16 %v1265, %v1261
      %v1654 = vpack.c.b16 %v1270, %v1266
      %v1655 = vpack.c.b16 %v1271, %v1267
      %v1656 = vpack.c.b16 %v1272, %v1268
      %v1657 = vpack.c.b16 %v1273, %v1269
      %v1658 = vpack.c.b16 %v1278, %v1274
      %v1659 = vpack.c.b16 %v1279, %v1275
      %v1660 = vpack.c.b16 %v1280, %v1276
      %v1661 = vpack.c.b16 %v1281, %v1277
      %v1662 = vpack.c.b16 %v1286, %v1282
      %v1663 = vpack.c.b16 %v1287, %v1283
      %v1664 = vpack.c.b16 %v1288, %v1284
      %v1665 = vpack.c.b16 %v1289, %v1285
      %v1666 = vpack.c.b16 %v1294, %v1290
      %v1667 = vpack.c.b16 %v1295, %v1291
      %v1668 = vpack.c.b16 %v1296, %v1292
      %v1669 = vpack.c.b16 %v1297, %v1293
      %v1670 = vpack.c.b16 %v1302, %v1298
      %v1671 = vpack.c.b16 %v1303, %v1299
      %v1672 = vpack.c.b16 %v1304, %v1300
      %v1673 = vpack.c.b16 %v1305, %v1301
      %v1674 = vpack.c.b16 %v1310, %v1306
      %v1675 = vpack.c.b16 %v1311, %v1307
      %v1676 = vpack.c.b16 %v1312, %v1308
      %v1677 = vpack.c.b16 %v1313, %v1309
      %v1678 = vpack.c.b16 %v1318, %v1314
      %v1679 = vpack.c.b16 %v1319, %v1315
      %v1680 = vpack.c.b16 %v1320, %v1316
      %v1681 = vpack.c.b16 %v1321, %v1317
      %v1682 = vpack.c.b16 %v1326, %v1322
      %v1683 = vpack.c.b16 %v1327, %v1323
      %v1684 = vpack.c.b16 %v1328, %v1324
      %v1685 = vpack.c.b16 %v1329, %v1325
      %v1686 = vpack.c.b16 %v1334, %v1330
      %v1687 = vpack.c.b16 %v1335, %v1331
      %v1688 = vpack.c.b16 %v1336, %v1332
      %v1689 = vpack.c.b16 %v1337, %v1333
      %v1690 = vpack.c.b16 %v1342, %v1338
      %v1691 = vpack.c.b16 %v1343, %v1339
      %v1692 = vpack.c.b16 %v1344, %v1340
      %v1693 = vpack.c.b16 %v1345, %v1341
      %v1694 = vpack.c.b16 %v1350, %v1346
      %v1695 = vpack.c.b16 %v1351, %v1347
      %v1696 = vpack.c.b16 %v1352, %v1348
      %v1697 = vpack.c.b16 %v1353, %v1349
      %v1698 = vpack.c.b16 %v1358, %v1354
      %v1699 = vpack.c.b16 %v1359, %v1355
      %v1700 = vpack.c.b16 %v1360, %v1356
      %v1701 = vpack.c.b16 %v1361, %v1357
      %v1702 = vpack.c.b16 %v1366, %v1362
      %v1703 = vpack.c.b16 %v1367, %v1363
      %v1704 = vpack.c.b16 %v1368, %v1364
      %v1705 = vpack.c.b16 %v1369, %v1365
      %v1706 = vpack.c.b16 %v1374, %v1370
      %v1707 = vpack.c.b16 %v1375, %v1371
      %v1708 = vpack.c.b16 %v1376, %v1372
      %v1709 = vpack.c.b16 %v1377, %v1373
      %v1710 = vpack.c.b16 %v1382, %v1378
      %v1711 = vpack.c.b16 %v1383, %v1379
      %v1712 = vpack.c.b16 %v1384, %v1380
      %v1713 = vpack.c.b16 %v1385, %v1381
      %v1714 = vpack.c.b16 %v1390, %v1386
      %v1715 = vpack.c.b16 %v1391, %v1387
      %v1716 = vpack.c.b16 %v1392, %v1388
      %v1717 = vpack.c.b16 %v1393, %v1389
      %v1718 = vpack.c.b16 %v1398, %v1394
      %v1719 = vpack.c.b16 %v1399, %v1395
      %v1720 = vpack.c.b16 %v1400, %v1396
      %v1721 = vpack.c.b16 %v1401, %v1397
      %v1722 = vpack.c.b16 %v1406, %v1402
      %v1723 = vpack.c.b16 %v1407, %v1403
      %v1724 = vpack.c.b16 %v1408, %v1404
      %v1725 = vpack.c.b16 %v1409, %v1405
      %v1726 = vpack.c.b16 %v1414, %v1410
      %v1727 = vpack.c.b16 %v1415, %v1411
      %v1728 = vpack.c.b16 %v1416, %v1412
      %v1729 = vpack.c.b16 %v1417, %v1413
      %v1730 = vpack.c.b16 %v1422, %v1418
      %v1731 = vpack.c.b16 %v1423, %v1419
      %v1732 = vpack.c.b16 %v1424, %v1420
      %v1733 = vpack.c.b16 %v1425, %v1421
      %v1734 = vpack.c.b16 %v1430, %v1426
      %v1735 = vpack.c.b16 %v1431, %v1427
      %v1736 = vpack.c.b16 %v1432, %v1428
      %v1737 = vpack.c.b16 %v1433, %v1429
      %v1738 = vpack.c.b16 %v1438, %v1434
      %v1739 = vpack.c.b16 %v1439, %v1435
      %v1740 = vpack.c.b16 %v1440, %v1436
      %v1741 = vpack.c.b16 %v1441, %v1437
      %v1742 = vpack.c.b16 %v1446, %v1442
      %v1743 = vpack.c.b16 %v1447, %v1443
      %v1744 = vpack.c.b16 %v1448, %v1444
      %v1745 = vpack.c.b16 %v1449, %v1445
      %v1746 = vpack.c.b16 %v1454, %v1450
      %v1747 = vpack.c.b16 %v1455, %v1451
      %v1748 = vpack.c.b16 %v1456, %v1452
      %v1749 = vpack.c.b16 %v1457, %v1453
      %v1750 = vpack.c.b16 %v1462, %v1458
      %v1751 = vpack.c.b16 %v1463, %v1459
      %v1752 = vpack.c.b16 %v1464, %v1460
      %v1753 = vpack.c.b16 %v1465, %v1461
      %v1754 = vpack.c.b16 %v1470, %v1466
      %v1755 = vpack.c.b16 %v1471, %v1467
      %v1756 = vpack.c.b16 %v1472, %v1468
      %v1757 = vpack.c.b16 %v1473, %v1469
      %v1758 = vpack.c.b16 %v1478, %v1474
      %v1759 = vpack.c.b16 %v1479, %v1475
      %v1760 = vpack.c.b16 %v1480, %v1476
      %v1761 = vpack.c.b16 %v1481, %v1477
      %v1762 = vpack.c.b16 %v1486, %v1482
      %v1763 = vpack.c.b16 %v1487, %v1483
      %v1764 = vpack.c.b16 %v1488, %v1484
      %v1765 = vpack.c.b16 %v1489, %v1485
      %v1766 = vpack.c.b16 %v1494, %v1490
      %v1767 = vpack.c.b16 %v1495, %v1491
      %v1768 = vpack.c.b16 %v1496, %v1492
      %v1769 = vpack.c.b16 %v1497, %v1493
      %v1770 = vpack.c.b16 %v1502, %v1498
      %v1771 = vpack.c.b16 %v1503, %v1499
      %v1772 = vpack.c.b16 %v1504, %v1500
      %v1773 = vpack.c.b16 %v1505, %v1501
      %v1774 = vpack.c.b16 %v1510, %v1506
      %v1775 = vpack.c.b16 %v1511, %v1507
      %v1776 = vpack.c.b16 %v1512, %v1508
      %v1777 = vpack.c.b16 %v1513, %v1509
      %v1778 = vpack.c.b16 %v1518, %v1514
      %v1779 = vpack.c.b16 %v1519, %v1515
      %v1780 = vpack.c.b16 %v1520, %v1516
      %v1781 = vpack.c.b16 %v1521, %v1517
      %v1782 = vpack.c.b16 %v1526, %v1522
      %v1783 = vpack.c.b16 %v1527, %v1523
      %v1784 = vpack.c.b16 %v1528, %v1524
      %v1785 = vpack.c.b16 %v1529, %v1525
      %2042 = vmatpush.bf16.msra.mxu0 %v1558
      %2043 = vmatpush.bf16.msra.mxu0 %v1554
      %2044 = vmatpush.bf16.msra.mxu0 %v1550
      %2045 = vmatpush.bf16.msra.mxu0 %v1546
      %2046 = vmatpush.bf16.msra.mxu0 %v1542
      %2047 = vmatpush.bf16.msra.mxu0 %v1538
      %2048 = vmatpush.bf16.msra.mxu0 %v1534
      %2049 = vmatpush.bf16.msra.mxu0 %v1530
      %2050 = vmatmul.bf16.gmra.mxu0 %v738
      %v2051 = vpop.f32.mrf.mxu0
      %v2052 = vadd.f32 0.0, %v2051
      %v2053 = vpop.f32.mrf.mxu0
      %2054 = vdwg.mxu0
      %2055 = vmatpush.bf16.msra.mxu0 %v1590
      %2056 = vmatpush.bf16.msra.mxu0 %v1586
      %2057 = vmatpush.bf16.msra.mxu0 %v1582
      %2058 = vmatpush.bf16.msra.mxu0 %v1578
      %2059 = vmatpush.bf16.msra.mxu0 %v1574
      %2060 = vmatpush.bf16.msra.mxu0 %v1570
      %2061 = vmatpush.bf16.msra.mxu0 %v1566
      %2062 = vmatpush.bf16.msra.mxu0 %v1562
      %2063 = vmatmul.bf16.gmra.mxu0 %v740
      %v2064 = vpop.f32.mrf.mxu0
      %v2065 = vadd.f32 %v2052, %v2064
      %v2066 = vpop.f32.mrf.mxu0
      %2067 = vdwg.mxu0
      %2068 = vmatpush.bf16.msra.mxu0 %v1622
      %2069 = vmatpush.bf16.msra.mxu0 %v1618
      %2070 = vmatpush.bf16.msra.mxu0 %v1614
      %2071 = vmatpush.bf16.msra.mxu0 %v1610
      %2072 = vmatpush.bf16.msra.mxu0 %v1606
      %2073 = vmatpush.bf16.msra.mxu0 %v1602
      %2074 = vmatpush.bf16.msra.mxu0 %v1598
      %2075 = vmatpush.bf16.msra.mxu0 %v1594
      %2076 = vmatmul.bf16.gmra.mxu0 %v742
      %v2077 = vpop.f32.mrf.mxu0
      %v2078 = vadd.f32 %v2065, %v2077
      %v2079 = vpop.f32.mrf.mxu0
      %2080 = vdwg.mxu0
      %2081 = vmatpush.bf16.msra.mxu0 %v1654
      %2082 = vmatpush.bf16.msra.mxu0 %v1650
      %2083 = vmatpush.bf16.msra.mxu0 %v1646
      %2084 = vmatpush.bf16.msra.mxu0 %v1642
      %2085 = vmatpush.bf16.msra.mxu0 %v1638
      %2086 = vmatpush.bf16.msra.mxu0 %v1634
      %2087 = vmatpush.bf16.msra.mxu0 %v1630
      %2088 = vmatpush.bf16.msra.mxu0 %v1626
      %2089 = vmatmul.bf16.gmra.mxu0 %v744
      %v2090 = vpop.f32.mrf.mxu0
      %v2091 = vadd.f32 %v2078, %v2090
      %v2092 = vpop.f32.mrf.mxu0
      %2093 = vdwg.mxu0
      %2094 = vmatpush.bf16.msra.mxu0 %v1686
      %2095 = vmatpush.bf16.msra.mxu0 %v1682
      %2096 = vmatpush.bf16.msra.mxu0 %v1678
      %2097 = vmatpush.bf16.msra.mxu0 %v1674
      %2098 = vmatpush.bf16.msra.mxu0 %v1670
      %2099 = vmatpush.bf16.msra.mxu0 %v1666
      %2100 = vmatpush.bf16.msra.mxu0 %v1662
      %2101 = vmatpush.bf16.msra.mxu0 %v1658
      %2102 = vmatmul.bf16.gmra.mxu0 %v746
      %v2103 = vpop.f32.mrf.mxu0
      %v2104 = vadd.f32 %v2091, %v2103
      %v2105 = vpop.f32.mrf.mxu0
      %2106 = vdwg.mxu0
      %2107 = vmatpush.bf16.msra.mxu0 %v1718
      %2108 = vmatpush.bf16.msra.mxu0 %v1714
      %2109 = vmatpush.bf16.msra.mxu0 %v1710
      %2110 = vmatpush.bf16.msra.mxu0 %v1706
      %2111 = vmatpush.bf16.msra.mxu0 %v1702
      %2112 = vmatpush.bf16.msra.mxu0 %v1698
      %2113 = vmatpush.bf16.msra.mxu0 %v1694
      %2114 = vmatpush.bf16.msra.mxu0 %v1690
      %2115 = vmatmul.bf16.gmra.mxu0 %v748
      %v2116 = vpop.f32.mrf.mxu0
      %v2117 = vadd.f32 %v2104, %v2116
      %v2118 = vpop.f32.mrf.mxu0
      %2119 = vdwg.mxu0
      %2120 = vmatpush.bf16.msra.mxu0 %v1750
      %2121 = vmatpush.bf16.msra.mxu0 %v1746
      %2122 = vmatpush.bf16.msra.mxu0 %v1742
      %2123 = vmatpush.bf16.msra.mxu0 %v1738
      %2124 = vmatpush.bf16.msra.mxu0 %v1734
      %2125 = vmatpush.bf16.msra.mxu0 %v1730
      %2126 = vmatpush.bf16.msra.mxu0 %v1726
      %2127 = vmatpush.bf16.msra.mxu0 %v1722
      %2128 = vmatmul.bf16.gmra.mxu0 %v750
      %v2129 = vpop.f32.mrf.mxu0
      %v2130 = vadd.f32 %v2117, %v2129
      %v2131 = vpop.f32.mrf.mxu0
      %2132 = vdwg.mxu0
      %2133 = vmatpush.bf16.msra.mxu0 %v1782
      %2134 = vmatpush.bf16.msra.mxu0 %v1778
      %2135 = vmatpush.bf16.msra.mxu0 %v1774
      %2136 = vmatpush.bf16.msra.mxu0 %v1770
      %2137 = vmatpush.bf16.msra.mxu0 %v1766
      %2138 = vmatpush.bf16.msra.mxu0 %v1762
      %2139 = vmatpush.bf16.msra.mxu0 %v1758
      %2140 = vmatpush.bf16.msra.mxu0 %v1754
      %2141 = vmatmul.bf16.gmra.mxu0 %v752
      %v2142 = vpop.f32.mrf.mxu0
      %v2143 = vadd.f32 %v2130, %v2142
      %v2144 = vpop.f32.mrf.mxu0
      %2145 = vdwg.mxu0
      %2146 = vmatpush.bf16.msra.mxu0 %v1559
      %2147 = vmatpush.bf16.msra.mxu0 %v1555
      %2148 = vmatpush.bf16.msra.mxu0 %v1551
      %2149 = vmatpush.bf16.msra.mxu0 %v1547
      %2150 = vmatpush.bf16.msra.mxu0 %v1543
      %2151 = vmatpush.bf16.msra.mxu0 %v1539
      %2152 = vmatpush.bf16.msra.mxu0 %v1535
      %2153 = vmatpush.bf16.msra.mxu0 %v1531
      %2154 = vmatmul.bf16.gmra.mxu0 %v738
      %v2155 = vpop.f32.mrf.mxu0
      %v2156 = vadd.f32 0.0, %v2155
      %v2157 = vpop.f32.mrf.mxu0
      %2158 = vdwg.mxu0
      %2159 = vmatpush.bf16.msra.mxu0 %v1591
      %2160 = vmatpush.bf16.msra.mxu0 %v1587
      %2161 = vmatpush.bf16.msra.mxu0 %v1583
      %2162 = vmatpush.bf16.msra.mxu0 %v1579
      %2163 = vmatpush.bf16.msra.mxu0 %v1575
      %2164 = vmatpush.bf16.msra.mxu0 %v1571
      %2165 = vmatpush.bf16.msra.mxu0 %v1567
      %2166 = vmatpush.bf16.msra.mxu0 %v1563
      %2167 = vmatmul.bf16.gmra.mxu0 %v740
      %v2168 = vpop.f32.mrf.mxu0
      %v2169 = vadd.f32 %v2156, %v2168
      %v2170 = vpop.f32.mrf.mxu0
      %2171 = vdwg.mxu0
      %2172 = vmatpush.bf16.msra.mxu0 %v1623
      %2173 = vmatpush.bf16.msra.mxu0 %v1619
      %2174 = vmatpush.bf16.msra.mxu0 %v1615
      %2175 = vmatpush.bf16.msra.mxu0 %v1611
      %2176 = vmatpush.bf16.msra.mxu0 %v1607
      %2177 = vmatpush.bf16.msra.mxu0 %v1603
      %2178 = vmatpush.bf16.msra.mxu0 %v1599
      %2179 = vmatpush.bf16.msra.mxu0 %v1595
      %2180 = vmatmul.bf16.gmra.mxu0 %v742
      %v2181 = vpop.f32.mrf.mxu0
      %v2182 = vadd.f32 %v2169, %v2181
      %v2183 = vpop.f32.mrf.mxu0
      %2184 = vdwg.mxu0
      %2185 = vmatpush.bf16.msra.mxu0 %v1655
      %2186 = vmatpush.bf16.msra.mxu0 %v1651
      %2187 = vmatpush.bf16.msra.mxu0 %v1647
      %2188 = vmatpush.bf16.msra.mxu0 %v1643
      %2189 = vmatpush.bf16.msra.mxu0 %v1639
      %2190 = vmatpush.bf16.msra.mxu0 %v1635
      %2191 = vmatpush.bf16.msra.mxu0 %v1631
      %2192 = vmatpush.bf16.msra.mxu0 %v1627
      %2193 = vmatmul.bf16.gmra.mxu0 %v744
      %v2194 = vpop.f32.mrf.mxu0
      %v2195 = vadd.f32 %v2182, %v2194
      %v2196 = vpop.f32.mrf.mxu0
      %2197 = vdwg.mxu0
      %2198 = vmatpush.bf16.msra.mxu0 %v1687
      %2199 = vmatpush.bf16.msra.mxu0 %v1683
      %2200 = vmatpush.bf16.msra.mxu0 %v1679
      %2201 = vmatpush.bf16.msra.mxu0 %v1675
      %2202 = vmatpush.bf16.msra.mxu0 %v1671
      %2203 = vmatpush.bf16.msra.mxu0 %v1667
      %2204 = vmatpush.bf16.msra.mxu0 %v1663
      %2205 = vmatpush.bf16.msra.mxu0 %v1659
      %2206 = vmatmul.bf16.gmra.mxu0 %v746
      %v2207 = vpop.f32.mrf.mxu0
      %v2208 = vadd.f32 %v2195, %v2207
      %v2209 = vpop.f32.mrf.mxu0
      %2210 = vdwg.mxu0
      %2211 = vmatpush.bf16.msra.mxu0 %v1719
      %2212 = vmatpush.bf16.msra.mxu0 %v1715
      %2213 = vmatpush.bf16.msra.mxu0 %v1711
      %2214 = vmatpush.bf16.msra.mxu0 %v1707
      %2215 = vmatpush.bf16.msra.mxu0 %v1703
      %2216 = vmatpush.bf16.msra.mxu0 %v1699
      %2217 = vmatpush.bf16.msra.mxu0 %v1695
      %2218 = vmatpush.bf16.msra.mxu0 %v1691
      %2219 = vmatmul.bf16.gmra.mxu0 %v748
      %v2220 = vpop.f32.mrf.mxu0
      %v2221 = vadd.f32 %v2208, %v2220
      %v2222 = vpop.f32.mrf.mxu0
      %2223 = vdwg.mxu0
      %2224 = vmatpush.bf16.msra.mxu0 %v1751
      %2225 = vmatpush.bf16.msra.mxu0 %v1747
      %2226 = vmatpush.bf16.msra.mxu0 %v1743
      %2227 = vmatpush.bf16.msra.mxu0 %v1739
      %2228 = vmatpush.bf16.msra.mxu0 %v1735
      %2229 = vmatpush.bf16.msra.mxu0 %v1731
      %2230 = vmatpush.bf16.msra.mxu0 %v1727
      %2231 = vmatpush.bf16.msra.mxu0 %v1723
      %2232 = vmatmul.bf16.gmra.mxu0 %v750
      %v2233 = vpop.f32.mrf.mxu0
      %v2234 = vadd.f32 %v2221, %v2233
      %v2235 = vpop.f32.mrf.mxu0
      %2236 = vdwg.mxu0
      %2237 = vmatpush.bf16.msra.mxu0 %v1783
      %2238 = vmatpush.bf16.msra.mxu0 %v1779
      %2239 = vmatpush.bf16.msra.mxu0 %v1775
      %2240 = vmatpush.bf16.msra.mxu0 %v1771
      %2241 = vmatpush.bf16.msra.mxu0 %v1767
      %2242 = vmatpush.bf16.msra.mxu0 %v1763
      %2243 = vmatpush.bf16.msra.mxu0 %v1759
      %2244 = vmatpush.bf16.msra.mxu0 %v1755
      %2245 = vmatmul.bf16.gmra.mxu0 %v752
      %v2246 = vpop.f32.mrf.mxu0
      %v2247 = vadd.f32 %v2234, %v2246
      %v2248 = vpop.f32.mrf.mxu0
      %2249 = vdwg.mxu0
      %2250 = vmatpush.bf16.msra.mxu0 %v1560
      %2251 = vmatpush.bf16.msra.mxu0 %v1556
      %2252 = vmatpush.bf16.msra.mxu0 %v1552
      %2253 = vmatpush.bf16.msra.mxu0 %v1548
      %2254 = vmatpush.bf16.msra.mxu0 %v1544
      %2255 = vmatpush.bf16.msra.mxu0 %v1540
      %2256 = vmatpush.bf16.msra.mxu0 %v1536
      %2257 = vmatpush.bf16.msra.mxu0 %v1532
      %2258 = vmatmul.bf16.gmra.mxu0 %v738
      %v2259 = vpop.f32.mrf.mxu0
      %v2260 = vadd.f32 0.0, %v2259
      %v2261 = vpop.f32.mrf.mxu0
      %2262 = vdwg.mxu0
      %2263 = vmatpush.bf16.msra.mxu0 %v1592
      %2264 = vmatpush.bf16.msra.mxu0 %v1588
      %2265 = vmatpush.bf16.msra.mxu0 %v1584
      %2266 = vmatpush.bf16.msra.mxu0 %v1580
      %2267 = vmatpush.bf16.msra.mxu0 %v1576
      %2268 = vmatpush.bf16.msra.mxu0 %v1572
      %2269 = vmatpush.bf16.msra.mxu0 %v1568
      %2270 = vmatpush.bf16.msra.mxu0 %v1564
      %2271 = vmatmul.bf16.gmra.mxu0 %v740
      %v2272 = vpop.f32.mrf.mxu0
      %v2273 = vadd.f32 %v2260, %v2272
      %v2274 = vpop.f32.mrf.mxu0
      %2275 = vdwg.mxu0
      %2276 = vmatpush.bf16.msra.mxu0 %v1624
      %2277 = vmatpush.bf16.msra.mxu0 %v1620
      %2278 = vmatpush.bf16.msra.mxu0 %v1616
      %2279 = vmatpush.bf16.msra.mxu0 %v1612
      %2280 = vmatpush.bf16.msra.mxu0 %v1608
      %2281 = vmatpush.bf16.msra.mxu0 %v1604
      %2282 = vmatpush.bf16.msra.mxu0 %v1600
      %2283 = vmatpush.bf16.msra.mxu0 %v1596
      %2284 = vmatmul.bf16.gmra.mxu0 %v742
      %v2285 = vpop.f32.mrf.mxu0
      %v2286 = vadd.f32 %v2273, %v2285
      %v2287 = vpop.f32.mrf.mxu0
      %2288 = vdwg.mxu0
      %2289 = vmatpush.bf16.msra.mxu0 %v1656
      %2290 = vmatpush.bf16.msra.mxu0 %v1652
      %2291 = vmatpush.bf16.msra.mxu0 %v1648
      %2292 = vmatpush.bf16.msra.mxu0 %v1644
      %2293 = vmatpush.bf16.msra.mxu0 %v1640
      %2294 = vmatpush.bf16.msra.mxu0 %v1636
      %2295 = vmatpush.bf16.msra.mxu0 %v1632
      %2296 = vmatpush.bf16.msra.mxu0 %v1628
      %2297 = vmatmul.bf16.gmra.mxu0 %v744
      %v2298 = vpop.f32.mrf.mxu0
      %v2299 = vadd.f32 %v2286, %v2298
      %v2300 = vpop.f32.mrf.mxu0
      %2301 = vdwg.mxu0
      %2302 = vmatpush.bf16.msra.mxu0 %v1688
      %2303 = vmatpush.bf16.msra.mxu0 %v1684
      %2304 = vmatpush.bf16.msra.mxu0 %v1680
      %2305 = vmatpush.bf16.msra.mxu0 %v1676
      %2306 = vmatpush.bf16.msra.mxu0 %v1672
      %2307 = vmatpush.bf16.msra.mxu0 %v1668
      %2308 = vmatpush.bf16.msra.mxu0 %v1664
      %2309 = vmatpush.bf16.msra.mxu0 %v1660
      %2310 = vmatmul.bf16.gmra.mxu0 %v746
      %v2311 = vpop.f32.mrf.mxu0
      %v2312 = vadd.f32 %v2299, %v2311
      %v2313 = vpop.f32.mrf.mxu0
      %2314 = vdwg.mxu0
      %2315 = vmatpush.bf16.msra.mxu0 %v1720
      %2316 = vmatpush.bf16.msra.mxu0 %v1716
      %2317 = vmatpush.bf16.msra.mxu0 %v1712
      %2318 = vmatpush.bf16.msra.mxu0 %v1708
      %2319 = vmatpush.bf16.msra.mxu0 %v1704
      %2320 = vmatpush.bf16.msra.mxu0 %v1700
      %2321 = vmatpush.bf16.msra.mxu0 %v1696
      %2322 = vmatpush.bf16.msra.mxu0 %v1692
      %2323 = vmatmul.bf16.gmra.mxu0 %v748
      %v2324 = vpop.f32.mrf.mxu0
      %v2325 = vadd.f32 %v2312, %v2324
      %v2326 = vpop.f32.mrf.mxu0
      %2327 = vdwg.mxu0
      %2328 = vmatpush.bf16.msra.mxu0 %v1752
      %2329 = vmatpush.bf16.msra.mxu0 %v1748
      %2330 = vmatpush.bf16.msra.mxu0 %v1744
      %2331 = vmatpush.bf16.msra.mxu0 %v1740
      %2332 = vmatpush.bf16.msra.mxu0 %v1736
      %2333 = vmatpush.bf16.msra.mxu0 %v1732
      %2334 = vmatpush.bf16.msra.mxu0 %v1728
      %2335 = vmatpush.bf16.msra.mxu0 %v1724
      %2336 = vmatmul.bf16.gmra.mxu0 %v750
      %v2337 = vpop.f32.mrf.mxu0
      %v2338 = vadd.f32 %v2325, %v2337
      %v2339 = vpop.f32.mrf.mxu0
      %2340 = vdwg.mxu0
      %2341 = vmatpush.bf16.msra.mxu0 %v1784
      %2342 = vmatpush.bf16.msra.mxu0 %v1780
      %2343 = vmatpush.bf16.msra.mxu0 %v1776
      %2344 = vmatpush.bf16.msra.mxu0 %v1772
      %2345 = vmatpush.bf16.msra.mxu0 %v1768
      %2346 = vmatpush.bf16.msra.mxu0 %v1764
      %2347 = vmatpush.bf16.msra.mxu0 %v1760
      %2348 = vmatpush.bf16.msra.mxu0 %v1756
      %2349 = vmatmul.bf16.gmra.mxu0 %v752
      %v2350 = vpop.f32.mrf.mxu0
      %v2351 = vadd.f32 %v2338, %v2350
      %v2352 = vpop.f32.mrf.mxu0
      %2353 = vdwg.mxu0
      %2354 = vmatpush.bf16.msra.mxu0 %v1561
      %2355 = vmatpush.bf16.msra.mxu0 %v1557
      %2356 = vmatpush.bf16.msra.mxu0 %v1553
      %2357 = vmatpush.bf16.msra.mxu0 %v1549
      %2358 = vmatpush.bf16.msra.mxu0 %v1545
      %2359 = vmatpush.bf16.msra.mxu0 %v1541
      %2360 = vmatpush.bf16.msra.mxu0 %v1537
      %2361 = vmatpush.bf16.msra.mxu0 %v1533
      %2362 = vmatmul.bf16.gmra.mxu0 %v738
      %v2363 = vpop.f32.mrf.mxu0
      %v2364 = vadd.f32 0.0, %v2363
      %v2365 = vpop.f32.mrf.mxu0
      %2366 = vdwg.mxu0
      %2367 = vmatpush.bf16.msra.mxu0 %v1593
      %2368 = vmatpush.bf16.msra.mxu0 %v1589
      %2369 = vmatpush.bf16.msra.mxu0 %v1585
      %2370 = vmatpush.bf16.msra.mxu0 %v1581
      %2371 = vmatpush.bf16.msra.mxu0 %v1577
      %2372 = vmatpush.bf16.msra.mxu0 %v1573
      %2373 = vmatpush.bf16.msra.mxu0 %v1569
      %2374 = vmatpush.bf16.msra.mxu0 %v1565
      %2375 = vmatmul.bf16.gmra.mxu0 %v740
      %v2376 = vpop.f32.mrf.mxu0
      %v2377 = vadd.f32 %v2364, %v2376
      %v2378 = vpop.f32.mrf.mxu0
      %2379 = vdwg.mxu0
      %2380 = vmatpush.bf16.msra.mxu0 %v1625
      %2381 = vmatpush.bf16.msra.mxu0 %v1621
      %2382 = vmatpush.bf16.msra.mxu0 %v1617
      %2383 = vmatpush.bf16.msra.mxu0 %v1613
      %2384 = vmatpush.bf16.msra.mxu0 %v1609
      %2385 = vmatpush.bf16.msra.mxu0 %v1605
      %2386 = vmatpush.bf16.msra.mxu0 %v1601
      %2387 = vmatpush.bf16.msra.mxu0 %v1597
      %2388 = vmatmul.bf16.gmra.mxu0 %v742
      %v2389 = vpop.f32.mrf.mxu0
      %v2390 = vadd.f32 %v2377, %v2389
      %v2391 = vpop.f32.mrf.mxu0
      %2392 = vdwg.mxu0
      %2393 = vmatpush.bf16.msra.mxu0 %v1657
      %2394 = vmatpush.bf16.msra.mxu0 %v1653
      %2395 = vmatpush.bf16.msra.mxu0 %v1649
      %2396 = vmatpush.bf16.msra.mxu0 %v1645
      %2397 = vmatpush.bf16.msra.mxu0 %v1641
      %2398 = vmatpush.bf16.msra.mxu0 %v1637
      %2399 = vmatpush.bf16.msra.mxu0 %v1633
      %2400 = vmatpush.bf16.msra.mxu0 %v1629
      %2401 = vmatmul.bf16.gmra.mxu0 %v744
      %v2402 = vpop.f32.mrf.mxu0
      %v2403 = vadd.f32 %v2390, %v2402
      %v2404 = vpop.f32.mrf.mxu0
      %2405 = vdwg.mxu0
      %2406 = vmatpush.bf16.msra.mxu0 %v1689
      %2407 = vmatpush.bf16.msra.mxu0 %v1685
      %2408 = vmatpush.bf16.msra.mxu0 %v1681
      %2409 = vmatpush.bf16.msra.mxu0 %v1677
      %2410 = vmatpush.bf16.msra.mxu0 %v1673
      %2411 = vmatpush.bf16.msra.mxu0 %v1669
      %2412 = vmatpush.bf16.msra.mxu0 %v1665
      %2413 = vmatpush.bf16.msra.mxu0 %v1661
      %2414 = vmatmul.bf16.gmra.mxu0 %v746
      %v2415 = vpop.f32.mrf.mxu0
      %v2416 = vadd.f32 %v2403, %v2415
      %v2417 = vpop.f32.mrf.mxu0
      %2418 = vdwg.mxu0
      %2419 = vmatpush.bf16.msra.mxu0 %v1721
      %2420 = vmatpush.bf16.msra.mxu0 %v1717
      %2421 = vmatpush.bf16.msra.mxu0 %v1713
      %2422 = vmatpush.bf16.msra.mxu0 %v1709
      %2423 = vmatpush.bf16.msra.mxu0 %v1705
      %2424 = vmatpush.bf16.msra.mxu0 %v1701
      %2425 = vmatpush.bf16.msra.mxu0 %v1697
      %2426 = vmatpush.bf16.msra.mxu0 %v1693
      %2427 = vmatmul.bf16.gmra.mxu0 %v748
      %v2428 = vpop.f32.mrf.mxu0
      %v2429 = vadd.f32 %v2416, %v2428
      %v2430 = vpop.f32.mrf.mxu0
      %2431 = vdwg.mxu0
      %2432 = vmatpush.bf16.msra.mxu0 %v1753
      %2433 = vmatpush.bf16.msra.mxu0 %v1749
      %2434 = vmatpush.bf16.msra.mxu0 %v1745
      %2435 = vmatpush.bf16.msra.mxu0 %v1741
      %2436 = vmatpush.bf16.msra.mxu0 %v1737
      %2437 = vmatpush.bf16.msra.mxu0 %v1733
      %2438 = vmatpush.bf16.msra.mxu0 %v1729
      %2439 = vmatpush.bf16.msra.mxu0 %v1725
      %2440 = vmatmul.bf16.gmra.mxu0 %v750
      %v2441 = vpop.f32.mrf.mxu0
      %v2442 = vadd.f32 %v2429, %v2441
      %v2443 = vpop.f32.mrf.mxu0
      %2444 = vdwg.mxu0
      %2445 = vmatpush.bf16.msra.mxu0 %v1785
      %2446 = vmatpush.bf16.msra.mxu0 %v1781
      %2447 = vmatpush.bf16.msra.mxu0 %v1777
      %2448 = vmatpush.bf16.msra.mxu0 %v1773
      %2449 = vmatpush.bf16.msra.mxu0 %v1769
      %2450 = vmatpush.bf16.msra.mxu0 %v1765
      %2451 = vmatpush.bf16.msra.mxu0 %v1761
      %2452 = vmatpush.bf16.msra.mxu0 %v1757
      %2453 = vmatmul.bf16.gmra.mxu0 %v752
      %v2454 = vpop.f32.mrf.mxu0
      %v2455 = vadd.f32 %v2442, %v2454
      %v2456 = vpop.f32.mrf.mxu0
      %2457 = vdwg.mxu0
      %2458 = vst [vmem:[#allocation1] ss:$9 sm:$0xff] %v214
      %v2459 = vld [vmem:[#allocation1] sm:$0xff]
      %v2460 = vld [vmem:[#allocation1 + $0x9] sm:$0xff]
      %v2461 = vld [vmem:[#allocation1 + $0x12] sm:$0xff]
      %v2462 = vld [vmem:[#allocation1 + $0x1b] sm:$0xff]
      %v2463 = vld [vmem:[#allocation1 + $0x24] sm:$0xff]
      %v2464 = vld [vmem:[#allocation1 + $0x2d] sm:$0xff]
      %v2465 = vld [vmem:[#allocation1 + $0x36] sm:$0xff]
      %v2466 = vld [vmem:[#allocation1 + $0x3f] sm:$0xff]
      %v2731 = vunpack.c.l.b16 %v215
      %v2732 = vunpack.c.h.b16 %v215
      %v2733 = vunpack.c.l.b16 %v216
      %v2734 = vunpack.c.h.b16 %v216
      %v2735 = vunpack.c.l.b16 %v217
      %v2736 = vunpack.c.h.b16 %v217
      %v2737 = vunpack.c.l.b16 %v218
      %v2738 = vunpack.c.h.b16 %v218
      %v2739 = vunpack.c.l.b16 %v219
      %v2740 = vunpack.c.h.b16 %v219
      %v2741 = vunpack.c.l.b16 %v220
      %v2742 = vunpack.c.h.b16 %v220
      %v2743 = vunpack.c.l.b16 %v221
      %v2744 = vunpack.c.h.b16 %v221
      %v2745 = vunpack.c.l.b16 %v222
      %v2746 = vunpack.c.h.b16 %v222
      %v2747 = vunpack.c.l.b16 %v223
      %v2748 = vunpack.c.h.b16 %v223
      %v2749 = vunpack.c.l.b16 %v224
      %v2750 = vunpack.c.h.b16 %v224
      %v2751 = vunpack.c.l.b16 %v225
      %v2752 = vunpack.c.h.b16 %v225
      %v2753 = vunpack.c.l.b16 %v226
      %v2754 = vunpack.c.h.b16 %v226
      %v2755 = vunpack.c.l.b16 %v227
      %v2756 = vunpack.c.h.b16 %v227
      %v2757 = vunpack.c.l.b16 %v228
      %v2758 = vunpack.c.h.b16 %v228
      %v2759 = vunpack.c.l.b16 %v229
      %v2760 = vunpack.c.h.b16 %v229
      %v2761 = vunpack.c.l.b16 %v230
      %v2762 = vunpack.c.h.b16 %v230
      %v2763 = vunpack.c.l.b16 %v231
      %v2764 = vunpack.c.h.b16 %v231
      %v2765 = vunpack.c.l.b16 %v232
      %v2766 = vunpack.c.h.b16 %v232
      %v2767 = vunpack.c.l.b16 %v233
      %v2768 = vunpack.c.h.b16 %v233
      %v2769 = vunpack.c.l.b16 %v234
      %v2770 = vunpack.c.h.b16 %v234
      %v2771 = vunpack.c.l.b16 %v235
      %v2772 = vunpack.c.h.b16 %v235
      %v2773 = vunpack.c.l.b16 %v236
      %v2774 = vunpack.c.h.b16 %v236
      %v2775 = vunpack.c.l.b16 %v237
      %v2776 = vunpack.c.h.b16 %v237
      %v2777 = vunpack.c.l.b16 %v238
      %v2778 = vunpack.c.h.b16 %v238
      %v2779 = vunpack.c.l.b16 %v239
      %v2780 = vunpack.c.h.b16 %v239
      %v2781 = vunpack.c.l.b16 %v240
      %v2782 = vunpack.c.h.b16 %v240
      %v2783 = vunpack.c.l.b16 %v241
      %v2784 = vunpack.c.h.b16 %v241
      %v2785 = vunpack.c.l.b16 %v242
      %v2786 = vunpack.c.h.b16 %v242
      %v2787 = vunpack.c.l.b16 %v243
      %v2788 = vunpack.c.h.b16 %v243
      %v2789 = vunpack.c.l.b16 %v244
      %v2790 = vunpack.c.h.b16 %v244
      %v2791 = vunpack.c.l.b16 %v245
      %v2792 = vunpack.c.h.b16 %v245
      %v2793 = vunpack.c.l.b16 %v246
      %v2794 = vunpack.c.h.b16 %v246
      %v2795 = vunpack.c.l.b16 %v247
      %v2796 = vunpack.c.h.b16 %v247
      %v2797 = vunpack.c.l.b16 %v248
      %v2798 = vunpack.c.h.b16 %v248
      %v2799 = vunpack.c.l.b16 %v249
      %v2800 = vunpack.c.h.b16 %v249
      %v2801 = vunpack.c.l.b16 %v250
      %v2802 = vunpack.c.h.b16 %v250
      %v2803 = vunpack.c.l.b16 %v251
      %v2804 = vunpack.c.h.b16 %v251
      %v2805 = vunpack.c.l.b16 %v252
      %v2806 = vunpack.c.h.b16 %v252
      %v2807 = vunpack.c.l.b16 %v253
      %v2808 = vunpack.c.h.b16 %v253
      %v2809 = vunpack.c.l.b16 %v254
      %v2810 = vunpack.c.h.b16 %v254
      %v2811 = vunpack.c.l.b16 %v255
      %v2812 = vunpack.c.h.b16 %v255
      %v2813 = vunpack.c.l.b16 %v256
      %v2814 = vunpack.c.h.b16 %v256
      %v2815 = vunpack.c.l.b16 %v257
      %v2816 = vunpack.c.h.b16 %v257
      %v2817 = vunpack.c.l.b16 %v258
      %v2818 = vunpack.c.h.b16 %v258
      %v2819 = vunpack.c.l.b16 %v259
      %v2820 = vunpack.c.h.b16 %v259
      %v2821 = vunpack.c.l.b16 %v260
      %v2822 = vunpack.c.h.b16 %v260
      %v2823 = vunpack.c.l.b16 %v261
      %v2824 = vunpack.c.h.b16 %v261
      %v2825 = vunpack.c.l.b16 %v262
      %v2826 = vunpack.c.h.b16 %v262
      %v2827 = vunpack.c.l.b16 %v263
      %v2828 = vunpack.c.h.b16 %v263
      %v2829 = vunpack.c.l.b16 %v264
      %v2830 = vunpack.c.h.b16 %v264
      %v2831 = vunpack.c.l.b16 %v265
      %v2832 = vunpack.c.h.b16 %v265
      %v2833 = vunpack.c.l.b16 %v266
      %v2834 = vunpack.c.h.b16 %v266
      %v2835 = vunpack.c.l.b16 %v267
      %v2836 = vunpack.c.h.b16 %v267
      %v2837 = vunpack.c.l.b16 %v268
      %v2838 = vunpack.c.h.b16 %v268
      %v2839 = vunpack.c.l.b16 %v269
      %v2840 = vunpack.c.h.b16 %v269
      %v2841 = vunpack.c.l.b16 %v270
      %v2842 = vunpack.c.h.b16 %v270
      %v2843 = vunpack.c.l.b16 %v271
      %v2844 = vunpack.c.h.b16 %v271
      %v2845 = vunpack.c.l.b16 %v272
      %v2846 = vunpack.c.h.b16 %v272
      %v2847 = vunpack.c.l.b16 %v273
      %v2848 = vunpack.c.h.b16 %v273
      %v2849 = vunpack.c.l.b16 %v274
      %v2850 = vunpack.c.h.b16 %v274
      %v2851 = vunpack.c.l.b16 %v275
      %v2852 = vunpack.c.h.b16 %v275
      %v2853 = vunpack.c.l.b16 %v276
      %v2854 = vunpack.c.h.b16 %v276
      %v2855 = vunpack.c.l.b16 %v277
      %v2856 = vunpack.c.h.b16 %v277
      %v2857 = vunpack.c.l.b16 %v278
      %v2858 = vunpack.c.h.b16 %v278
      %v2859 = vunpack.c.l.b16 %v279
      %v2860 = vunpack.c.h.b16 %v279
      %v2861 = vunpack.c.l.b16 %v280
      %v2862 = vunpack.c.h.b16 %v280
      %v2863 = vunpack.c.l.b16 %v281
      %v2864 = vunpack.c.h.b16 %v281
      %v2865 = vunpack.c.l.b16 %v282
      %v2866 = vunpack.c.h.b16 %v282
      %v2867 = vunpack.c.l.b16 %v283
      %v2868 = vunpack.c.h.b16 %v283
      %v2869 = vunpack.c.l.b16 %v284
      %v2870 = vunpack.c.h.b16 %v284
      %v2871 = vunpack.c.l.b16 %v285
      %v2872 = vunpack.c.h.b16 %v285
      %v2873 = vunpack.c.l.b16 %v286
      %v2874 = vunpack.c.h.b16 %v286
      %v2875 = vunpack.c.l.b16 %v287
      %v2876 = vunpack.c.h.b16 %v287
      %v2877 = vunpack.c.l.b16 %v288
      %v2878 = vunpack.c.h.b16 %v288
      %v2879 = vunpack.c.l.b16 %v289
      %v2880 = vunpack.c.h.b16 %v289
      %v2881 = vunpack.c.l.b16 %v290
      %v2882 = vunpack.c.h.b16 %v290
      %v2883 = vunpack.c.l.b16 %v291
      %v2884 = vunpack.c.h.b16 %v291
      %v2885 = vunpack.c.l.b16 %v292
      %v2886 = vunpack.c.h.b16 %v292
      %v2887 = vunpack.c.l.b16 %v293
      %v2888 = vunpack.c.h.b16 %v293
      %v2889 = vunpack.c.l.b16 %v294
      %v2890 = vunpack.c.h.b16 %v294
      %v2891 = vunpack.c.l.b16 %v295
      %v2892 = vunpack.c.h.b16 %v295
      %v2893 = vunpack.c.l.b16 %v296
      %v2894 = vunpack.c.h.b16 %v296
      %v2895 = vunpack.c.l.b16 %v297
      %v2896 = vunpack.c.h.b16 %v297
      %v2897 = vunpack.c.l.b16 %v298
      %v2898 = vunpack.c.h.b16 %v298
      %v2899 = vunpack.c.l.b16 %v299
      %v2900 = vunpack.c.h.b16 %v299
      %v2901 = vunpack.c.l.b16 %v300
      %v2902 = vunpack.c.h.b16 %v300
      %v2903 = vunpack.c.l.b16 %v301
      %v2904 = vunpack.c.h.b16 %v301
      %v2905 = vunpack.c.l.b16 %v302
      %v2906 = vunpack.c.h.b16 %v302
      %v2907 = vunpack.c.l.b16 %v303
      %v2908 = vunpack.c.h.b16 %v303
      %v2909 = vunpack.c.l.b16 %v304
      %v2910 = vunpack.c.h.b16 %v304
      %v2911 = vunpack.c.l.b16 %v305
      %v2912 = vunpack.c.h.b16 %v305
      %v2913 = vunpack.c.l.b16 %v306
      %v2914 = vunpack.c.h.b16 %v306
      %v2915 = vunpack.c.l.b16 %v307
      %v2916 = vunpack.c.h.b16 %v307
      %v2917 = vunpack.c.l.b16 %v308
      %v2918 = vunpack.c.h.b16 %v308
      %v2919 = vunpack.c.l.b16 %v309
      %v2920 = vunpack.c.h.b16 %v309
      %v2921 = vunpack.c.l.b16 %v310
      %v2922 = vunpack.c.h.b16 %v310
      %v2923 = vunpack.c.l.b16 %v311
      %v2924 = vunpack.c.h.b16 %v311
      %v2925 = vunpack.c.l.b16 %v312
      %v2926 = vunpack.c.h.b16 %v312
      %v2927 = vunpack.c.l.b16 %v313
      %v2928 = vunpack.c.h.b16 %v313
      %v2929 = vunpack.c.l.b16 %v314
      %v2930 = vunpack.c.h.b16 %v314
      %v2931 = vunpack.c.l.b16 %v315
      %v2932 = vunpack.c.h.b16 %v315
      %v2933 = vunpack.c.l.b16 %v316
      %v2934 = vunpack.c.h.b16 %v316
      %v2935 = vunpack.c.l.b16 %v317
      %v2936 = vunpack.c.h.b16 %v317
      %v2937 = vunpack.c.l.b16 %v318
      %v2938 = vunpack.c.h.b16 %v318
      %v2939 = vunpack.c.l.b16 %v319
      %v2940 = vunpack.c.h.b16 %v319
      %v2941 = vunpack.c.l.b16 %v320
      %v2942 = vunpack.c.h.b16 %v320
      %v2943 = vunpack.c.l.b16 %v321
      %v2944 = vunpack.c.h.b16 %v321
      %v2945 = vunpack.c.l.b16 %v322
      %v2946 = vunpack.c.h.b16 %v322
      %v2947 = vunpack.c.l.b16 %v323
      %v2948 = vunpack.c.h.b16 %v323
      %v2949 = vunpack.c.l.b16 %v324
      %v2950 = vunpack.c.h.b16 %v324
      %v2951 = vunpack.c.l.b16 %v325
      %v2952 = vunpack.c.h.b16 %v325
      %v2953 = vunpack.c.l.b16 %v326
      %v2954 = vunpack.c.h.b16 %v326
      %v2955 = vunpack.c.l.b16 %v327
      %v2956 = vunpack.c.h.b16 %v327
      %v2957 = vunpack.c.l.b16 %v328
      %v2958 = vunpack.c.h.b16 %v328
      %v2959 = vunpack.c.l.b16 %v329
      %v2960 = vunpack.c.h.b16 %v329
      %v2961 = vunpack.c.l.b16 %v330
      %v2962 = vunpack.c.h.b16 %v330
      %v2963 = vunpack.c.l.b16 %v331
      %v2964 = vunpack.c.h.b16 %v331
      %v2965 = vunpack.c.l.b16 %v332
      %v2966 = vunpack.c.h.b16 %v332
      %v2967 = vunpack.c.l.b16 %v333
      %v2968 = vunpack.c.h.b16 %v333
      %v2969 = vunpack.c.l.b16 %v334
      %v2970 = vunpack.c.h.b16 %v334
      %v2971 = vunpack.c.l.b16 %v335
      %v2972 = vunpack.c.h.b16 %v335
      %v2973 = vunpack.c.l.b16 %v336
      %v2974 = vunpack.c.h.b16 %v336
      %v2975 = vunpack.c.l.b16 %v337
      %v2976 = vunpack.c.h.b16 %v337
      %v2977 = vunpack.c.l.b16 %v338
      %v2978 = vunpack.c.h.b16 %v338
      %v2979 = vunpack.c.l.b16 %v339
      %v2980 = vunpack.c.h.b16 %v339
      %v2981 = vunpack.c.l.b16 %v340
      %v2982 = vunpack.c.h.b16 %v340
      %v2983 = vunpack.c.l.b16 %v341
      %v2984 = vunpack.c.h.b16 %v341
      %v2985 = vunpack.c.l.b16 %v342
      %v2986 = vunpack.c.h.b16 %v342
      %v2987 = vunpack.c.l.b16 %v343
      %v2988 = vunpack.c.h.b16 %v343
      %v2989 = vunpack.c.l.b16 %v344
      %v2990 = vunpack.c.h.b16 %v344
      %v2991 = vunpack.c.l.b16 %v345
      %v2992 = vunpack.c.h.b16 %v345
      %v2993 = vunpack.c.l.b16 %v346
      %v2994 = vunpack.c.h.b16 %v346
      %v2995 = vunpack.c.l.b16 %v347
      %v2996 = vunpack.c.h.b16 %v347
      %v2997 = vunpack.c.l.b16 %v348
      %v2998 = vunpack.c.h.b16 %v348
      %v2999 = vunpack.c.l.b16 %v349
      %v3000 = vunpack.c.h.b16 %v349
      %v3001 = vunpack.c.l.b16 %v350
      %v3002 = vunpack.c.h.b16 %v350
      %v3003 = vunpack.c.l.b16 %v351
      %v3004 = vunpack.c.h.b16 %v351
      %v3005 = vunpack.c.l.b16 %v352
      %v3006 = vunpack.c.h.b16 %v352
      %v3007 = vunpack.c.l.b16 %v353
      %v3008 = vunpack.c.h.b16 %v353
      %v3009 = vunpack.c.l.b16 %v354
      %v3010 = vunpack.c.h.b16 %v354
      %v3011 = vunpack.c.l.b16 %v355
      %v3012 = vunpack.c.h.b16 %v355
      %v3013 = vunpack.c.l.b16 %v356
      %v3014 = vunpack.c.h.b16 %v356
      %v3015 = vunpack.c.l.b16 %v357
      %v3016 = vunpack.c.h.b16 %v357
      %v3017 = vunpack.c.l.b16 %v358
      %v3018 = vunpack.c.h.b16 %v358
      %v3019 = vunpack.c.l.b16 %v359
      %v3020 = vunpack.c.h.b16 %v359
      %v3021 = vunpack.c.l.b16 %v360
      %v3022 = vunpack.c.h.b16 %v360
      %v3023 = vunpack.c.l.b16 %v361
      %v3024 = vunpack.c.h.b16 %v361
      %v3025 = vunpack.c.l.b16 %v362
      %v3026 = vunpack.c.h.b16 %v362
      %v3027 = vunpack.c.l.b16 %v363
      %v3028 = vunpack.c.h.b16 %v363
      %v3029 = vunpack.c.l.b16 %v364
      %v3030 = vunpack.c.h.b16 %v364
      %v3031 = vunpack.c.l.b16 %v365
      %v3032 = vunpack.c.h.b16 %v365
      %v3033 = vunpack.c.l.b16 %v366
      %v3034 = vunpack.c.h.b16 %v366
      %v3035 = vunpack.c.l.b16 %v367
      %v3036 = vunpack.c.h.b16 %v367
      %v3037 = vunpack.c.l.b16 %v368
      %v3038 = vunpack.c.h.b16 %v368
      %v3039 = vunpack.c.l.b16 %v369
      %v3040 = vunpack.c.h.b16 %v369
      %v3041 = vunpack.c.l.b16 %v370
      %v3042 = vunpack.c.h.b16 %v370
      %v3043 = vunpack.c.l.b16 %v371
      %v3044 = vunpack.c.h.b16 %v371
      %v3045 = vunpack.c.l.b16 %v372
      %v3046 = vunpack.c.h.b16 %v372
      %v3047 = vunpack.c.l.b16 %v373
      %v3048 = vunpack.c.h.b16 %v373
      %v3049 = vunpack.c.l.b16 %v374
      %v3050 = vunpack.c.h.b16 %v374
      %v3051 = vunpack.c.l.b16 %v375
      %v3052 = vunpack.c.h.b16 %v375
      %v3053 = vunpack.c.l.b16 %v376
      %v3054 = vunpack.c.h.b16 %v376
      %v3055 = vunpack.c.l.b16 %v377
      %v3056 = vunpack.c.h.b16 %v377
      %v3057 = vunpack.c.l.b16 %v378
      %v3058 = vunpack.c.h.b16 %v378
      %v3059 = vunpack.c.l.b16 %v379
      %v3060 = vunpack.c.h.b16 %v379
      %v3061 = vunpack.c.l.b16 %v380
      %v3062 = vunpack.c.h.b16 %v380
      %v3063 = vunpack.c.l.b16 %v381
      %v3064 = vunpack.c.h.b16 %v381
      %v3065 = vunpack.c.l.b16 %v382
      %v3066 = vunpack.c.h.b16 %v382
      %v3067 = vunpack.c.l.b16 %v383
      %v3068 = vunpack.c.h.b16 %v383
      %v3069 = vunpack.c.l.b16 %v384
      %v3070 = vunpack.c.h.b16 %v384
      %v3071 = vunpack.c.l.b16 %v385
      %v3072 = vunpack.c.h.b16 %v385
      %v3073 = vunpack.c.l.b16 %v386
      %v3074 = vunpack.c.h.b16 %v386
      %v3075 = vunpack.c.l.b16 %v387
      %v3076 = vunpack.c.h.b16 %v387
      %v3077 = vunpack.c.l.b16 %v388
      %v3078 = vunpack.c.h.b16 %v388
      %v3079 = vunpack.c.l.b16 %v389
      %v3080 = vunpack.c.h.b16 %v389
      %v3081 = vunpack.c.l.b16 %v390
      %v3082 = vunpack.c.h.b16 %v390
      %v3083 = vunpack.c.l.b16 %v391
      %v3084 = vunpack.c.h.b16 %v391
      %v3085 = vunpack.c.l.b16 %v392
      %v3086 = vunpack.c.h.b16 %v392
      %v3087 = vunpack.c.l.b16 %v393
      %v3088 = vunpack.c.h.b16 %v393
      %v3089 = vunpack.c.l.b16 %v394
      %v3090 = vunpack.c.h.b16 %v394
      %v3091 = vunpack.c.l.b16 %v395
      %v3092 = vunpack.c.h.b16 %v395
      %v3093 = vunpack.c.l.b16 %v396
      %v3094 = vunpack.c.h.b16 %v396
      %v3095 = vunpack.c.l.b16 %v397
      %v3096 = vunpack.c.h.b16 %v397
      %v3097 = vunpack.c.l.b16 %v398
      %v3098 = vunpack.c.h.b16 %v398
      %v3099 = vunpack.c.l.b16 %v399
      %v3100 = vunpack.c.h.b16 %v399
      %v3101 = vunpack.c.l.b16 %v400
      %v3102 = vunpack.c.h.b16 %v400
      %v3103 = vunpack.c.l.b16 %v401
      %v3104 = vunpack.c.h.b16 %v401
      %v3105 = vunpack.c.l.b16 %v402
      %v3106 = vunpack.c.h.b16 %v402
      %v3107 = vunpack.c.l.b16 %v403
      %v3108 = vunpack.c.h.b16 %v403
      %v3109 = vunpack.c.l.b16 %v404
      %v3110 = vunpack.c.h.b16 %v404
      %v3111 = vunpack.c.l.b16 %v405
      %v3112 = vunpack.c.h.b16 %v405
      %v3113 = vunpack.c.l.b16 %v406
      %v3114 = vunpack.c.h.b16 %v406
      %v3115 = vunpack.c.l.b16 %v407
      %v3116 = vunpack.c.h.b16 %v407
      %v3117 = vunpack.c.l.b16 %v408
      %v3118 = vunpack.c.h.b16 %v408
      %v3119 = vunpack.c.l.b16 %v409
      %v3120 = vunpack.c.h.b16 %v409
      %v3121 = vunpack.c.l.b16 %v410
      %v3122 = vunpack.c.h.b16 %v410
      %v3123 = vunpack.c.l.b16 %v411
      %v3124 = vunpack.c.h.b16 %v411
      %v3125 = vunpack.c.l.b16 %v412
      %v3126 = vunpack.c.h.b16 %v412
      %v3127 = vunpack.c.l.b16 %v413
      %v3128 = vunpack.c.h.b16 %v413
      %v3129 = vunpack.c.l.b16 %v414
      %v3130 = vunpack.c.h.b16 %v414
      %v3131 = vunpack.c.l.b16 %v415
      %v3132 = vunpack.c.h.b16 %v415
      %v3133 = vunpack.c.l.b16 %v416
      %v3134 = vunpack.c.h.b16 %v416
      %v3135 = vunpack.c.l.b16 %v417
      %v3136 = vunpack.c.h.b16 %v417
      %v3137 = vunpack.c.l.b16 %v418
      %v3138 = vunpack.c.h.b16 %v418
      %v3139 = vunpack.c.l.b16 %v419
      %v3140 = vunpack.c.h.b16 %v419
      %v3141 = vunpack.c.l.b16 %v420
      %v3142 = vunpack.c.h.b16 %v420
      %v3143 = vunpack.c.l.b16 %v421
      %v3144 = vunpack.c.h.b16 %v421
      %v3145 = vunpack.c.l.b16 %v422
      %v3146 = vunpack.c.h.b16 %v422
      %v3147 = vunpack.c.l.b16 %v423
      %v3148 = vunpack.c.h.b16 %v423
      %v3149 = vunpack.c.l.b16 %v424
      %v3150 = vunpack.c.h.b16 %v424
      %v3151 = vunpack.c.l.b16 %v425
      %v3152 = vunpack.c.h.b16 %v425
      %v3153 = vunpack.c.l.b16 %v426
      %v3154 = vunpack.c.h.b16 %v426
      %v3155 = vunpack.c.l.b16 %v427
      %v3156 = vunpack.c.h.b16 %v427
      %v3157 = vunpack.c.l.b16 %v428
      %v3158 = vunpack.c.h.b16 %v428
      %v3159 = vunpack.c.l.b16 %v429
      %v3160 = vunpack.c.h.b16 %v429
      %v3161 = vunpack.c.l.b16 %v430
      %v3162 = vunpack.c.h.b16 %v430
      %v3163 = vunpack.c.l.b16 %v431
      %v3164 = vunpack.c.h.b16 %v431
      %v3165 = vunpack.c.l.b16 %v432
      %v3166 = vunpack.c.h.b16 %v432
      %v3167 = vunpack.c.l.b16 %v433
      %v3168 = vunpack.c.h.b16 %v433
      %v3169 = vunpack.c.l.b16 %v434
      %v3170 = vunpack.c.h.b16 %v434
      %v3171 = vunpack.c.l.b16 %v435
      %v3172 = vunpack.c.h.b16 %v435
      %v3173 = vunpack.c.l.b16 %v436
      %v3174 = vunpack.c.h.b16 %v436
      %v3175 = vunpack.c.l.b16 %v437
      %v3176 = vunpack.c.h.b16 %v437
      %v3177 = vunpack.c.l.b16 %v438
      %v3178 = vunpack.c.h.b16 %v438
      %v3179 = vunpack.c.l.b16 %v439
      %v3180 = vunpack.c.h.b16 %v439
      %v3181 = vunpack.c.l.b16 %v440
      %v3182 = vunpack.c.h.b16 %v440
      %v3183 = vunpack.c.l.b16 %v441
      %v3184 = vunpack.c.h.b16 %v441
      %v3185 = vunpack.c.l.b16 %v442
      %v3186 = vunpack.c.h.b16 %v442
      %v3187 = vunpack.c.l.b16 %v443
      %v3188 = vunpack.c.h.b16 %v443
      %v3189 = vunpack.c.l.b16 %v444
      %v3190 = vunpack.c.h.b16 %v444
      %v3191 = vunpack.c.l.b16 %v445
      %v3192 = vunpack.c.h.b16 %v445
      %v3193 = vunpack.c.l.b16 %v446
      %v3194 = vunpack.c.h.b16 %v446
      %v3195 = vunpack.c.l.b16 %v447
      %v3196 = vunpack.c.h.b16 %v447
      %v3197 = vunpack.c.l.b16 %v448
      %v3198 = vunpack.c.h.b16 %v448
      %v3199 = vunpack.c.l.b16 %v449
      %v3200 = vunpack.c.h.b16 %v449
      %v3201 = vunpack.c.l.b16 %v450
      %v3202 = vunpack.c.h.b16 %v450
      %v3203 = vunpack.c.l.b16 %v451
      %v3204 = vunpack.c.h.b16 %v451
      %v3205 = vunpack.c.l.b16 %v452
      %v3206 = vunpack.c.h.b16 %v452
      %v3207 = vunpack.c.l.b16 %v453
      %v3208 = vunpack.c.h.b16 %v453
      %v3209 = vunpack.c.l.b16 %v454
      %v3210 = vunpack.c.h.b16 %v454
      %v3211 = vunpack.c.l.b16 %v455
      %v3212 = vunpack.c.h.b16 %v455
      %v3213 = vunpack.c.l.b16 %v456
      %v3214 = vunpack.c.h.b16 %v456
      %v3215 = vunpack.c.l.b16 %v457
      %v3216 = vunpack.c.h.b16 %v457
      %v3217 = vunpack.c.l.b16 %v458
      %v3218 = vunpack.c.h.b16 %v458
      %v3219 = vunpack.c.l.b16 %v459
      %v3220 = vunpack.c.h.b16 %v459
      %v3221 = vunpack.c.l.b16 %v460
      %v3222 = vunpack.c.h.b16 %v460
      %v3223 = vunpack.c.l.b16 %v461
      %v3224 = vunpack.c.h.b16 %v461
      %v3225 = vunpack.c.l.b16 %v462
      %v3226 = vunpack.c.h.b16 %v462
      %v3227 = vunpack.c.l.b16 %v463
      %v3228 = vunpack.c.h.b16 %v463
      %v3229 = vunpack.c.l.b16 %v464
      %v3230 = vunpack.c.h.b16 %v464
      %v3231 = vunpack.c.l.b16 %v465
      %v3232 = vunpack.c.h.b16 %v465
      %v3233 = vunpack.c.l.b16 %v466
      %v3234 = vunpack.c.h.b16 %v466
      %v3235 = vunpack.c.l.b16 %v467
      %v3236 = vunpack.c.h.b16 %v467
      %v3237 = vunpack.c.l.b16 %v468
      %v3238 = vunpack.c.h.b16 %v468
      %v3239 = vunpack.c.l.b16 %v469
      %v3240 = vunpack.c.h.b16 %v469
      %v3241 = vunpack.c.l.b16 %v470
      %v3242 = vunpack.c.h.b16 %v470
      %v3243 = vpack.c.b16 %v2735, %v2731
      %v3244 = vpack.c.b16 %v2736, %v2732
      %v3245 = vpack.c.b16 %v2737, %v2733
      %v3246 = vpack.c.b16 %v2738, %v2734
      %v3247 = vpack.c.b16 %v2743, %v2739
      %v3248 = vpack.c.b16 %v2744, %v2740
      %v3249 = vpack.c.b16 %v2745, %v2741
      %v3250 = vpack.c.b16 %v2746, %v2742
      %v3251 = vpack.c.b16 %v2751, %v2747
      %v3252 = vpack.c.b16 %v2752, %v2748
      %v3253 = vpack.c.b16 %v2753, %v2749
      %v3254 = vpack.c.b16 %v2754, %v2750
      %v3255 = vpack.c.b16 %v2759, %v2755
      %v3256 = vpack.c.b16 %v2760, %v2756
      %v3257 = vpack.c.b16 %v2761, %v2757
      %v3258 = vpack.c.b16 %v2762, %v2758
      %v3259 = vpack.c.b16 %v2767, %v2763
      %v3260 = vpack.c.b16 %v2768, %v2764
      %v3261 = vpack.c.b16 %v2769, %v2765
      %v3262 = vpack.c.b16 %v2770, %v2766
      %v3263 = vpack.c.b16 %v2775, %v2771
      %v3264 = vpack.c.b16 %v2776, %v2772
      %v3265 = vpack.c.b16 %v2777, %v2773
      %v3266 = vpack.c.b16 %v2778, %v2774
      %v3267 = vpack.c.b16 %v2783, %v2779
      %v3268 = vpack.c.b16 %v2784, %v2780
      %v3269 = vpack.c.b16 %v2785, %v2781
      %v3270 = vpack.c.b16 %v2786, %v2782
      %v3271 = vpack.c.b16 %v2791, %v2787
      %v3272 = vpack.c.b16 %v2792, %v2788
      %v3273 = vpack.c.b16 %v2793, %v2789
      %v3274 = vpack.c.b16 %v2794, %v2790
      %v3275 = vpack.c.b16 %v2799, %v2795
      %v3276 = vpack.c.b16 %v2800, %v2796
      %v3277 = vpack.c.b16 %v2801, %v2797
      %v3278 = vpack.c.b16 %v2802, %v2798
      %v3279 = vpack.c.b16 %v2807, %v2803
      %v3280 = vpack.c.b16 %v2808, %v2804
      %v3281 = vpack.c.b16 %v2809, %v2805
      %v3282 = vpack.c.b16 %v2810, %v2806
      %v3283 = vpack.c.b16 %v2815, %v2811
      %v3284 = vpack.c.b16 %v2816, %v2812
      %v3285 = vpack.c.b16 %v2817, %v2813
      %v3286 = vpack.c.b16 %v2818, %v2814
      %v3287 = vpack.c.b16 %v2823, %v2819
      %v3288 = vpack.c.b16 %v2824, %v2820
      %v3289 = vpack.c.b16 %v2825, %v2821
      %v3290 = vpack.c.b16 %v2826, %v2822
      %v3291 = vpack.c.b16 %v2831, %v2827
      %v3292 = vpack.c.b16 %v2832, %v2828
      %v3293 = vpack.c.b16 %v2833, %v2829
      %v3294 = vpack.c.b16 %v2834, %v2830
      %v3295 = vpack.c.b16 %v2839, %v2835
      %v3296 = vpack.c.b16 %v2840, %v2836
      %v3297 = vpack.c.b16 %v2841, %v2837
      %v3298 = vpack.c.b16 %v2842, %v2838
      %v3299 = vpack.c.b16 %v2847, %v2843
      %v3300 = vpack.c.b16 %v2848, %v2844
      %v3301 = vpack.c.b16 %v2849, %v2845
      %v3302 = vpack.c.b16 %v2850, %v2846
      %v3303 = vpack.c.b16 %v2855, %v2851
      %v3304 = vpack.c.b16 %v2856, %v2852
      %v3305 = vpack.c.b16 %v2857, %v2853
      %v3306 = vpack.c.b16 %v2858, %v2854
      %v3307 = vpack.c.b16 %v2863, %v2859
      %v3308 = vpack.c.b16 %v2864, %v2860
      %v3309 = vpack.c.b16 %v2865, %v2861
      %v3310 = vpack.c.b16 %v2866, %v2862
      %v3311 = vpack.c.b16 %v2871, %v2867
      %v3312 = vpack.c.b16 %v2872, %v2868
      %v3313 = vpack.c.b16 %v2873, %v2869
      %v3314 = vpack.c.b16 %v2874, %v2870
      %v3315 = vpack.c.b16 %v2879, %v2875
      %v3316 = vpack.c.b16 %v2880, %v2876
      %v3317 = vpack.c.b16 %v2881, %v2877
      %v3318 = vpack.c.b16 %v2882, %v2878
      %v3319 = vpack.c.b16 %v2887, %v2883
      %v3320 = vpack.c.b16 %v2888, %v2884
      %v3321 = vpack.c.b16 %v2889, %v2885
      %v3322 = vpack.c.b16 %v2890, %v2886
      %v3323 = vpack.c.b16 %v2895, %v2891
      %v3324 = vpack.c.b16 %v2896, %v2892
      %v3325 = vpack.c.b16 %v2897, %v2893
      %v3326 = vpack.c.b16 %v2898, %v2894
      %v3327 = vpack.c.b16 %v2903, %v2899
      %v3328 = vpack.c.b16 %v2904, %v2900
      %v3329 = vpack.c.b16 %v2905, %v2901
      %v3330 = vpack.c.b16 %v2906, %v2902
      %v3331 = vpack.c.b16 %v2911, %v2907
      %v3332 = vpack.c.b16 %v2912, %v2908
      %v3333 = vpack.c.b16 %v2913, %v2909
      %v3334 = vpack.c.b16 %v2914, %v2910
      %v3335 = vpack.c.b16 %v2919, %v2915
      %v3336 = vpack.c.b16 %v2920, %v2916
      %v3337 = vpack.c.b16 %v2921, %v2917
      %v3338 = vpack.c.b16 %v2922, %v2918
      %v3339 = vpack.c.b16 %v2927, %v2923
      %v3340 = vpack.c.b16 %v2928, %v2924
      %v3341 = vpack.c.b16 %v2929, %v2925
      %v3342 = vpack.c.b16 %v2930, %v2926
      %v3343 = vpack.c.b16 %v2935, %v2931
      %v3344 = vpack.c.b16 %v2936, %v2932
      %v3345 = vpack.c.b16 %v2937, %v2933
      %v3346 = vpack.c.b16 %v2938, %v2934
      %v3347 = vpack.c.b16 %v2943, %v2939
      %v3348 = vpack.c.b16 %v2944, %v2940
      %v3349 = vpack.c.b16 %v2945, %v2941
      %v3350 = vpack.c.b16 %v2946, %v2942
      %v3351 = vpack.c.b16 %v2951, %v2947
      %v3352 = vpack.c.b16 %v2952, %v2948
      %v3353 = vpack.c.b16 %v2953, %v2949
      %v3354 = vpack.c.b16 %v2954, %v2950
      %v3355 = vpack.c.b16 %v2959, %v2955
      %v3356 = vpack.c.b16 %v2960, %v2956
      %v3357 = vpack.c.b16 %v2961, %v2957
      %v3358 = vpack.c.b16 %v2962, %v2958
      %v3359 = vpack.c.b16 %v2967, %v2963
      %v3360 = vpack.c.b16 %v2968, %v2964
      %v3361 = vpack.c.b16 %v2969, %v2965
      %v3362 = vpack.c.b16 %v2970, %v2966
      %v3363 = vpack.c.b16 %v2975, %v2971
      %v3364 = vpack.c.b16 %v2976, %v2972
      %v3365 = vpack.c.b16 %v2977, %v2973
      %v3366 = vpack.c.b16 %v2978, %v2974
      %v3367 = vpack.c.b16 %v2983, %v2979
      %v3368 = vpack.c.b16 %v2984, %v2980
      %v3369 = vpack.c.b16 %v2985, %v2981
      %v3370 = vpack.c.b16 %v2986, %v2982
      %v3371 = vpack.c.b16 %v2991, %v2987
      %v3372 = vpack.c.b16 %v2992, %v2988
      %v3373 = vpack.c.b16 %v2993, %v2989
      %v3374 = vpack.c.b16 %v2994, %v2990
      %v3375 = vpack.c.b16 %v2999, %v2995
      %v3376 = vpack.c.b16 %v3000, %v2996
      %v3377 = vpack.c.b16 %v3001, %v2997
      %v3378 = vpack.c.b16 %v3002, %v2998
      %v3379 = vpack.c.b16 %v3007, %v3003
      %v3380 = vpack.c.b16 %v3008, %v3004
      %v3381 = vpack.c.b16 %v3009, %v3005
      %v3382 = vpack.c.b16 %v3010, %v3006
      %v3383 = vpack.c.b16 %v3015, %v3011
      %v3384 = vpack.c.b16 %v3016, %v3012
      %v3385 = vpack.c.b16 %v3017, %v3013
      %v3386 = vpack.c.b16 %v3018, %v3014
      %v3387 = vpack.c.b16 %v3023, %v3019
      %v3388 = vpack.c.b16 %v3024, %v3020
      %v3389 = vpack.c.b16 %v3025, %v3021
      %v3390 = vpack.c.b16 %v3026, %v3022
      %v3391 = vpack.c.b16 %v3031, %v3027
      %v3392 = vpack.c.b16 %v3032, %v3028
      %v3393 = vpack.c.b16 %v3033, %v3029
      %v3394 = vpack.c.b16 %v3034, %v3030
      %v3395 = vpack.c.b16 %v3039, %v3035
      %v3396 = vpack.c.b16 %v3040, %v3036
      %v3397 = vpack.c.b16 %v3041, %v3037
      %v3398 = vpack.c.b16 %v3042, %v3038
      %v3399 = vpack.c.b16 %v3047, %v3043
      %v3400 = vpack.c.b16 %v3048, %v3044
      %v3401 = vpack.c.b16 %v3049, %v3045
      %v3402 = vpack.c.b16 %v3050, %v3046
      %v3403 = vpack.c.b16 %v3055, %v3051
      %v3404 = vpack.c.b16 %v3056, %v3052
      %v3405 = vpack.c.b16 %v3057, %v3053
      %v3406 = vpack.c.b16 %v3058, %v3054
      %v3407 = vpack.c.b16 %v3063, %v3059
      %v3408 = vpack.c.b16 %v3064, %v3060
      %v3409 = vpack.c.b16 %v3065, %v3061
      %v3410 = vpack.c.b16 %v3066, %v3062
      %v3411 = vpack.c.b16 %v3071, %v3067
      %v3412 = vpack.c.b16 %v3072, %v3068
      %v3413 = vpack.c.b16 %v3073, %v3069
      %v3414 = vpack.c.b16 %v3074, %v3070
      %v3415 = vpack.c.b16 %v3079, %v3075
      %v3416 = vpack.c.b16 %v3080, %v3076
      %v3417 = vpack.c.b16 %v3081, %v3077
      %v3418 = vpack.c.b16 %v3082, %v3078
      %v3419 = vpack.c.b16 %v3087, %v3083
      %v3420 = vpack.c.b16 %v3088, %v3084
      %v3421 = vpack.c.b16 %v3089, %v3085
      %v3422 = vpack.c.b16 %v3090, %v3086
      %v3423 = vpack.c.b16 %v3095, %v3091
      %v3424 = vpack.c.b16 %v3096, %v3092
      %v3425 = vpack.c.b16 %v3097, %v3093
      %v3426 = vpack.c.b16 %v3098, %v3094
      %v3427 = vpack.c.b16 %v3103, %v3099
      %v3428 = vpack.c.b16 %v3104, %v3100
      %v3429 = vpack.c.b16 %v3105, %v3101
      %v3430 = vpack.c.b16 %v3106, %v3102
      %v3431 = vpack.c.b16 %v3111, %v3107
      %v3432 = vpack.c.b16 %v3112, %v3108
      %v3433 = vpack.c.b16 %v3113, %v3109
      %v3434 = vpack.c.b16 %v3114, %v3110
      %v3435 = vpack.c.b16 %v3119, %v3115
      %v3436 = vpack.c.b16 %v3120, %v3116
      %v3437 = vpack.c.b16 %v3121, %v3117
      %v3438 = vpack.c.b16 %v3122, %v3118
      %v3439 = vpack.c.b16 %v3127, %v3123
      %v3440 = vpack.c.b16 %v3128, %v3124
      %v3441 = vpack.c.b16 %v3129, %v3125
      %v3442 = vpack.c.b16 %v3130, %v3126
      %v3443 = vpack.c.b16 %v3135, %v3131
      %v3444 = vpack.c.b16 %v3136, %v3132
      %v3445 = vpack.c.b16 %v3137, %v3133
      %v3446 = vpack.c.b16 %v3138, %v3134
      %v3447 = vpack.c.b16 %v3143, %v3139
      %v3448 = vpack.c.b16 %v3144, %v3140
      %v3449 = vpack.c.b16 %v3145, %v3141
      %v3450 = vpack.c.b16 %v3146, %v3142
      %v3451 = vpack.c.b16 %v3151, %v3147
      %v3452 = vpack.c.b16 %v3152, %v3148
      %v3453 = vpack.c.b16 %v3153, %v3149
      %v3454 = vpack.c.b16 %v3154, %v3150
      %v3455 = vpack.c.b16 %v3159, %v3155
      %v3456 = vpack.c.b16 %v3160, %v3156
      %v3457 = vpack.c.b16 %v3161, %v3157
      %v3458 = vpack.c.b16 %v3162, %v3158
      %v3459 = vpack.c.b16 %v3167, %v3163
      %v3460 = vpack.c.b16 %v3168, %v3164
      %v3461 = vpack.c.b16 %v3169, %v3165
      %v3462 = vpack.c.b16 %v3170, %v3166
      %v3463 = vpack.c.b16 %v3175, %v3171
      %v3464 = vpack.c.b16 %v3176, %v3172
      %v3465 = vpack.c.b16 %v3177, %v3173
      %v3466 = vpack.c.b16 %v3178, %v3174
      %v3467 = vpack.c.b16 %v3183, %v3179
      %v3468 = vpack.c.b16 %v3184, %v3180
      %v3469 = vpack.c.b16 %v3185, %v3181
      %v3470 = vpack.c.b16 %v3186, %v3182
      %v3471 = vpack.c.b16 %v3191, %v3187
      %v3472 = vpack.c.b16 %v3192, %v3188
      %v3473 = vpack.c.b16 %v3193, %v3189
      %v3474 = vpack.c.b16 %v3194, %v3190
      %v3475 = vpack.c.b16 %v3199, %v3195
      %v3476 = vpack.c.b16 %v3200, %v3196
      %v3477 = vpack.c.b16 %v3201, %v3197
      %v3478 = vpack.c.b16 %v3202, %v3198
      %v3479 = vpack.c.b16 %v3207, %v3203
      %v3480 = vpack.c.b16 %v3208, %v3204
      %v3481 = vpack.c.b16 %v3209, %v3205
      %v3482 = vpack.c.b16 %v3210, %v3206
      %v3483 = vpack.c.b16 %v3215, %v3211
      %v3484 = vpack.c.b16 %v3216, %v3212
      %v3485 = vpack.c.b16 %v3217, %v3213
      %v3486 = vpack.c.b16 %v3218, %v3214
      %v3487 = vpack.c.b16 %v3223, %v3219
      %v3488 = vpack.c.b16 %v3224, %v3220
      %v3489 = vpack.c.b16 %v3225, %v3221
      %v3490 = vpack.c.b16 %v3226, %v3222
      %v3491 = vpack.c.b16 %v3231, %v3227
      %v3492 = vpack.c.b16 %v3232, %v3228
      %v3493 = vpack.c.b16 %v3233, %v3229
      %v3494 = vpack.c.b16 %v3234, %v3230
      %v3495 = vpack.c.b16 %v3239, %v3235
      %v3496 = vpack.c.b16 %v3240, %v3236
      %v3497 = vpack.c.b16 %v3241, %v3237
      %v3498 = vpack.c.b16 %v3242, %v3238
      %3755 = vmatpush.bf16.msra.mxu0 %v3271
      %3756 = vmatpush.bf16.msra.mxu0 %v3267
      %3757 = vmatpush.bf16.msra.mxu0 %v3263
      %3758 = vmatpush.bf16.msra.mxu0 %v3259
      %3759 = vmatpush.bf16.msra.mxu0 %v3255
      %3760 = vmatpush.bf16.msra.mxu0 %v3251
      %3761 = vmatpush.bf16.msra.mxu0 %v3247
      %3762 = vmatpush.bf16.msra.mxu0 %v3243
      %3763 = vmatmul.bf16.gmra.mxu0 %v2459
      %v3764 = vpop.f32.mrf.mxu0
      %v3765 = vadd.f32 %v2143, %v3764
      %v3766 = vpop.f32.mrf.mxu0
      %3767 = vdwg.mxu0
      %3768 = vmatpush.bf16.msra.mxu0 %v3303
      %3769 = vmatpush.bf16.msra.mxu0 %v3299
      %3770 = vmatpush.bf16.msra.mxu0 %v3295
      %3771 = vmatpush.bf16.msra.mxu0 %v3291
      %3772 = vmatpush.bf16.msra.mxu0 %v3287
      %3773 = vmatpush.bf16.msra.mxu0 %v3283
      %3774 = vmatpush.bf16.msra.mxu0 %v3279
      %3775 = vmatpush.bf16.msra.mxu0 %v3275
      %3776 = vmatmul.bf16.gmra.mxu0 %v2460
      %v3777 = vpop.f32.mrf.mxu0
      %v3778 = vadd.f32 %v3765, %v3777
      %v3779 = vpop.f32.mrf.mxu0
      %3780 = vdwg.mxu0
      %3781 = vmatpush.bf16.msra.mxu0 %v3335
      %3782 = vmatpush.bf16.msra.mxu0 %v3331
      %3783 = vmatpush.bf16.msra.mxu0 %v3327
      %3784 = vmatpush.bf16.msra.mxu0 %v3323
      %3785 = vmatpush.bf16.msra.mxu0 %v3319
      %3786 = vmatpush.bf16.msra.mxu0 %v3315
      %3787 = vmatpush.bf16.msra.mxu0 %v3311
      %3788 = vmatpush.bf16.msra.mxu0 %v3307
      %3789 = vmatmul.bf16.gmra.mxu0 %v2461
      %v3790 = vpop.f32.mrf.mxu0
      %v3791 = vadd.f32 %v3778, %v3790
      %v3792 = vpop.f32.mrf.mxu0
      %3793 = vdwg.mxu0
      %3794 = vmatpush.bf16.msra.mxu0 %v3367
      %3795 = vmatpush.bf16.msra.mxu0 %v3363
      %3796 = vmatpush.bf16.msra.mxu0 %v3359
      %3797 = vmatpush.bf16.msra.mxu0 %v3355
      %3798 = vmatpush.bf16.msra.mxu0 %v3351
      %3799 = vmatpush.bf16.msra.mxu0 %v3347
      %3800 = vmatpush.bf16.msra.mxu0 %v3343
      %3801 = vmatpush.bf16.msra.mxu0 %v3339
      %3802 = vmatmul.bf16.gmra.mxu0 %v2462
      %v3803 = vpop.f32.mrf.mxu0
      %v3804 = vadd.f32 %v3791, %v3803
      %v3805 = vpop.f32.mrf.mxu0
      %3806 = vdwg.mxu0
      %3807 = vmatpush.bf16.msra.mxu0 %v3399
      %3808 = vmatpush.bf16.msra.mxu0 %v3395
      %3809 = vmatpush.bf16.msra.mxu0 %v3391
      %3810 = vmatpush.bf16.msra.mxu0 %v3387
      %3811 = vmatpush.bf16.msra.mxu0 %v3383
      %3812 = vmatpush.bf16.msra.mxu0 %v3379
      %3813 = vmatpush.bf16.msra.mxu0 %v3375
      %3814 = vmatpush.bf16.msra.mxu0 %v3371
      %3815 = vmatmul.bf16.gmra.mxu0 %v2463
      %v3816 = vpop.f32.mrf.mxu0
      %v3817 = vadd.f32 %v3804, %v3816
      %v3818 = vpop.f32.mrf.mxu0
      %3819 = vdwg.mxu0
      %3820 = vmatpush.bf16.msra.mxu0 %v3431
      %3821 = vmatpush.bf16.msra.mxu0 %v3427
      %3822 = vmatpush.bf16.msra.mxu0 %v3423
      %3823 = vmatpush.bf16.msra.mxu0 %v3419
      %3824 = vmatpush.bf16.msra.mxu0 %v3415
      %3825 = vmatpush.bf16.msra.mxu0 %v3411
      %3826 = vmatpush.bf16.msra.mxu0 %v3407
      %3827 = vmatpush.bf16.msra.mxu0 %v3403
      %3828 = vmatmul.bf16.gmra.mxu0 %v2464
      %v3829 = vpop.f32.mrf.mxu0
      %v3830 = vadd.f32 %v3817, %v3829
      %v3831 = vpop.f32.mrf.mxu0
      %3832 = vdwg.mxu0
      %3833 = vmatpush.bf16.msra.mxu0 %v3463
      %3834 = vmatpush.bf16.msra.mxu0 %v3459
      %3835 = vmatpush.bf16.msra.mxu0 %v3455
      %3836 = vmatpush.bf16.msra.mxu0 %v3451
      %3837 = vmatpush.bf16.msra.mxu0 %v3447
      %3838 = vmatpush.bf16.msra.mxu0 %v3443
      %3839 = vmatpush.bf16.msra.mxu0 %v3439
      %3840 = vmatpush.bf16.msra.mxu0 %v3435
      %3841 = vmatmul.bf16.gmra.mxu0 %v2465
      %v3842 = vpop.f32.mrf.mxu0
      %v3843 = vadd.f32 %v3830, %v3842
      %v3844 = vpop.f32.mrf.mxu0
      %3845 = vdwg.mxu0
      %3846 = vmatpush.bf16.msra.mxu0 %v3495
      %3847 = vmatpush.bf16.msra.mxu0 %v3491
      %3848 = vmatpush.bf16.msra.mxu0 %v3487
      %3849 = vmatpush.bf16.msra.mxu0 %v3483
      %3850 = vmatpush.bf16.msra.mxu0 %v3479
      %3851 = vmatpush.bf16.msra.mxu0 %v3475
      %3852 = vmatpush.bf16.msra.mxu0 %v3471
      %3853 = vmatpush.bf16.msra.mxu0 %v3467
      %3854 = vmatmul.bf16.gmra.mxu0 %v2466
      %v3855 = vpop.f32.mrf.mxu0
      %v3856 = vadd.f32 %v3843, %v3855
      %v3857 = vpop.f32.mrf.mxu0
      %3858 = vdwg.mxu0
      %3859 = vmatpush.bf16.msra.mxu0 %v3272
      %3860 = vmatpush.bf16.msra.mxu0 %v3268
      %3861 = vmatpush.bf16.msra.mxu0 %v3264
      %3862 = vmatpush.bf16.msra.mxu0 %v3260
      %3863 = vmatpush.bf16.msra.mxu0 %v3256
      %3864 = vmatpush.bf16.msra.mxu0 %v3252
      %3865 = vmatpush.bf16.msra.mxu0 %v3248
      %3866 = vmatpush.bf16.msra.mxu0 %v3244
      %3867 = vmatmul.bf16.gmra.mxu0 %v2459
      %v3868 = vpop.f32.mrf.mxu0
      %v3869 = vadd.f32 %v2247, %v3868
      %v3870 = vpop.f32.mrf.mxu0
      %3871 = vdwg.mxu0
      %3872 = vmatpush.bf16.msra.mxu0 %v3304
      %3873 = vmatpush.bf16.msra.mxu0 %v3300
      %3874 = vmatpush.bf16.msra.mxu0 %v3296
      %3875 = vmatpush.bf16.msra.mxu0 %v3292
      %3876 = vmatpush.bf16.msra.mxu0 %v3288
      %3877 = vmatpush.bf16.msra.mxu0 %v3284
      %3878 = vmatpush.bf16.msra.mxu0 %v3280
      %3879 = vmatpush.bf16.msra.mxu0 %v3276
      %3880 = vmatmul.bf16.gmra.mxu0 %v2460
      %v3881 = vpop.f32.mrf.mxu0
      %v3882 = vadd.f32 %v3869, %v3881
      %v3883 = vpop.f32.mrf.mxu0
      %3884 = vdwg.mxu0
      %3885 = vmatpush.bf16.msra.mxu0 %v3336
      %3886 = vmatpush.bf16.msra.mxu0 %v3332
      %3887 = vmatpush.bf16.msra.mxu0 %v3328
      %3888 = vmatpush.bf16.msra.mxu0 %v3324
      %3889 = vmatpush.bf16.msra.mxu0 %v3320
      %3890 = vmatpush.bf16.msra.mxu0 %v3316
      %3891 = vmatpush.bf16.msra.mxu0 %v3312
      %3892 = vmatpush.bf16.msra.mxu0 %v3308
      %3893 = vmatmul.bf16.gmra.mxu0 %v2461
      %v3894 = vpop.f32.mrf.mxu0
      %v3895 = vadd.f32 %v3882, %v3894
      %v3896 = vpop.f32.mrf.mxu0
      %3897 = vdwg.mxu0
      %3898 = vmatpush.bf16.msra.mxu0 %v3368
      %3899 = vmatpush.bf16.msra.mxu0 %v3364
      %3900 = vmatpush.bf16.msra.mxu0 %v3360
      %3901 = vmatpush.bf16.msra.mxu0 %v3356
      %3902 = vmatpush.bf16.msra.mxu0 %v3352
      %3903 = vmatpush.bf16.msra.mxu0 %v3348
      %3904 = vmatpush.bf16.msra.mxu0 %v3344
      %3905 = vmatpush.bf16.msra.mxu0 %v3340
      %3906 = vmatmul.bf16.gmra.mxu0 %v2462
      %v3907 = vpop.f32.mrf.mxu0
      %v3908 = vadd.f32 %v3895, %v3907
      %v3909 = vpop.f32.mrf.mxu0
      %3910 = vdwg.mxu0
      %3911 = vmatpush.bf16.msra.mxu0 %v3400
      %3912 = vmatpush.bf16.msra.mxu0 %v3396
      %3913 = vmatpush.bf16.msra.mxu0 %v3392
      %3914 = vmatpush.bf16.msra.mxu0 %v3388
      %3915 = vmatpush.bf16.msra.mxu0 %v3384
      %3916 = vmatpush.bf16.msra.mxu0 %v3380
      %3917 = vmatpush.bf16.msra.mxu0 %v3376
      %3918 = vmatpush.bf16.msra.mxu0 %v3372
      %3919 = vmatmul.bf16.gmra.mxu0 %v2463
      %v3920 = vpop.f32.mrf.mxu0
      %v3921 = vadd.f32 %v3908, %v3920
      %v3922 = vpop.f32.mrf.mxu0
      %3923 = vdwg.mxu0
      %3924 = vmatpush.bf16.msra.mxu0 %v3432
      %3925 = vmatpush.bf16.msra.mxu0 %v3428
      %3926 = vmatpush.bf16.msra.mxu0 %v3424
      %3927 = vmatpush.bf16.msra.mxu0 %v3420
      %3928 = vmatpush.bf16.msra.mxu0 %v3416
      %3929 = vmatpush.bf16.msra.mxu0 %v3412
      %3930 = vmatpush.bf16.msra.mxu0 %v3408
      %3931 = vmatpush.bf16.msra.mxu0 %v3404
      %3932 = vmatmul.bf16.gmra.mxu0 %v2464
      %v3933 = vpop.f32.mrf.mxu0
      %v3934 = vadd.f32 %v3921, %v3933
      %v3935 = vpop.f32.mrf.mxu0
      %3936 = vdwg.mxu0
      %3937 = vmatpush.bf16.msra.mxu0 %v3464
      %3938 = vmatpush.bf16.msra.mxu0 %v3460
      %3939 = vmatpush.bf16.msra.mxu0 %v3456
      %3940 = vmatpush.bf16.msra.mxu0 %v3452
      %3941 = vmatpush.bf16.msra.mxu0 %v3448
      %3942 = vmatpush.bf16.msra.mxu0 %v3444
      %3943 = vmatpush.bf16.msra.mxu0 %v3440
      %3944 = vmatpush.bf16.msra.mxu0 %v3436
      %3945 = vmatmul.bf16.gmra.mxu0 %v2465
      %v3946 = vpop.f32.mrf.mxu0
      %v3947 = vadd.f32 %v3934, %v3946
      %v3948 = vpop.f32.mrf.mxu0
      %3949 = vdwg.mxu0
      %3950 = vmatpush.bf16.msra.mxu0 %v3496
      %3951 = vmatpush.bf16.msra.mxu0 %v3492
      %3952 = vmatpush.bf16.msra.mxu0 %v3488
      %3953 = vmatpush.bf16.msra.mxu0 %v3484
      %3954 = vmatpush.bf16.msra.mxu0 %v3480
      %3955 = vmatpush.bf16.msra.mxu0 %v3476
      %3956 = vmatpush.bf16.msra.mxu0 %v3472
      %3957 = vmatpush.bf16.msra.mxu0 %v3468
      %3958 = vmatmul.bf16.gmra.mxu0 %v2466
      %v3959 = vpop.f32.mrf.mxu0
      %v3960 = vadd.f32 %v3947, %v3959
      %v3961 = vpop.f32.mrf.mxu0
      %3962 = vdwg.mxu0
      %3963 = vmatpush.bf16.msra.mxu0 %v3273
      %3964 = vmatpush.bf16.msra.mxu0 %v3269
      %3965 = vmatpush.bf16.msra.mxu0 %v3265
      %3966 = vmatpush.bf16.msra.mxu0 %v3261
      %3967 = vmatpush.bf16.msra.mxu0 %v3257
      %3968 = vmatpush.bf16.msra.mxu0 %v3253
      %3969 = vmatpush.bf16.msra.mxu0 %v3249
      %3970 = vmatpush.bf16.msra.mxu0 %v3245
      %3971 = vmatmul.bf16.gmra.mxu0 %v2459
      %v3972 = vpop.f32.mrf.mxu0
      %v3973 = vadd.f32 %v2351, %v3972
      %v3974 = vpop.f32.mrf.mxu0
      %3975 = vdwg.mxu0
      %3976 = vmatpush.bf16.msra.mxu0 %v3305
      %3977 = vmatpush.bf16.msra.mxu0 %v3301
      %3978 = vmatpush.bf16.msra.mxu0 %v3297
      %3979 = vmatpush.bf16.msra.mxu0 %v3293
      %3980 = vmatpush.bf16.msra.mxu0 %v3289
      %3981 = vmatpush.bf16.msra.mxu0 %v3285
      %3982 = vmatpush.bf16.msra.mxu0 %v3281
      %3983 = vmatpush.bf16.msra.mxu0 %v3277
      %3984 = vmatmul.bf16.gmra.mxu0 %v2460
      %v3985 = vpop.f32.mrf.mxu0
      %v3986 = vadd.f32 %v3973, %v3985
      %v3987 = vpop.f32.mrf.mxu0
      %3988 = vdwg.mxu0
      %3989 = vmatpush.bf16.msra.mxu0 %v3337
      %3990 = vmatpush.bf16.msra.mxu0 %v3333
      %3991 = vmatpush.bf16.msra.mxu0 %v3329
      %3992 = vmatpush.bf16.msra.mxu0 %v3325
      %3993 = vmatpush.bf16.msra.mxu0 %v3321
      %3994 = vmatpush.bf16.msra.mxu0 %v3317
      %3995 = vmatpush.bf16.msra.mxu0 %v3313
      %3996 = vmatpush.bf16.msra.mxu0 %v3309
      %3997 = vmatmul.bf16.gmra.mxu0 %v2461
      %v3998 = vpop.f32.mrf.mxu0
      %v3999 = vadd.f32 %v3986, %v3998
      %v4000 = vpop.f32.mrf.mxu0
      %4001 = vdwg.mxu0
      %4002 = vmatpush.bf16.msra.mxu0 %v3369
      %4003 = vmatpush.bf16.msra.mxu0 %v3365
      %4004 = vmatpush.bf16.msra.mxu0 %v3361
      %4005 = vmatpush.bf16.msra.mxu0 %v3357
      %4006 = vmatpush.bf16.msra.mxu0 %v3353
      %4007 = vmatpush.bf16.msra.mxu0 %v3349
      %4008 = vmatpush.bf16.msra.mxu0 %v3345
      %4009 = vmatpush.bf16.msra.mxu0 %v3341
      %4010 = vmatmul.bf16.gmra.mxu0 %v2462
      %v4011 = vpop.f32.mrf.mxu0
      %v4012 = vadd.f32 %v3999, %v4011
      %v4013 = vpop.f32.mrf.mxu0
      %4014 = vdwg.mxu0
      %4015 = vmatpush.bf16.msra.mxu0 %v3401
      %4016 = vmatpush.bf16.msra.mxu0 %v3397
      %4017 = vmatpush.bf16.msra.mxu0 %v3393
      %4018 = vmatpush.bf16.msra.mxu0 %v3389
      %4019 = vmatpush.bf16.msra.mxu0 %v3385
      %4020 = vmatpush.bf16.msra.mxu0 %v3381
      %4021 = vmatpush.bf16.msra.mxu0 %v3377
      %4022 = vmatpush.bf16.msra.mxu0 %v3373
      %4023 = vmatmul.bf16.gmra.mxu0 %v2463
      %v4024 = vpop.f32.mrf.mxu0
      %v4025 = vadd.f32 %v4012, %v4024
      %v4026 = vpop.f32.mrf.mxu0
      %4027 = vdwg.mxu0
      %4028 = vmatpush.bf16.msra.mxu0 %v3433
      %4029 = vmatpush.bf16.msra.mxu0 %v3429
      %4030 = vmatpush.bf16.msra.mxu0 %v3425
      %4031 = vmatpush.bf16.msra.mxu0 %v3421
      %4032 = vmatpush.bf16.msra.mxu0 %v3417
      %4033 = vmatpush.bf16.msra.mxu0 %v3413
      %4034 = vmatpush.bf16.msra.mxu0 %v3409
      %4035 = vmatpush.bf16.msra.mxu0 %v3405
      %4036 = vmatmul.bf16.gmra.mxu0 %v2464
      %v4037 = vpop.f32.mrf.mxu0
      %v4038 = vadd.f32 %v4025, %v4037
      %v4039 = vpop.f32.mrf.mxu0
      %4040 = vdwg.mxu0
      %4041 = vmatpush.bf16.msra.mxu0 %v3465
      %4042 = vmatpush.bf16.msra.mxu0 %v3461
      %4043 = vmatpush.bf16.msra.mxu0 %v3457
      %4044 = vmatpush.bf16.msra.mxu0 %v3453
      %4045 = vmatpush.bf16.msra.mxu0 %v3449
      %4046 = vmatpush.bf16.msra.mxu0 %v3445
      %4047 = vmatpush.bf16.msra.mxu0 %v3441
      %4048 = vmatpush.bf16.msra.mxu0 %v3437
      %4049 = vmatmul.bf16.gmra.mxu0 %v2465
      %v4050 = vpop.f32.mrf.mxu0
      %v4051 = vadd.f32 %v4038, %v4050
      %v4052 = vpop.f32.mrf.mxu0
      %4053 = vdwg.mxu0
      %4054 = vmatpush.bf16.msra.mxu0 %v3497
      %4055 = vmatpush.bf16.msra.mxu0 %v3493
      %4056 = vmatpush.bf16.msra.mxu0 %v3489
      %4057 = vmatpush.bf16.msra.mxu0 %v3485
      %4058 = vmatpush.bf16.msra.mxu0 %v3481
      %4059 = vmatpush.bf16.msra.mxu0 %v3477
      %4060 = vmatpush.bf16.msra.mxu0 %v3473
      %4061 = vmatpush.bf16.msra.mxu0 %v3469
      %4062 = vmatmul.bf16.gmra.mxu0 %v2466
      %v4063 = vpop.f32.mrf.mxu0
      %v4064 = vadd.f32 %v4051, %v4063
      %v4065 = vpop.f32.mrf.mxu0
      %4066 = vdwg.mxu0
      %4067 = vmatpush.bf16.msra.mxu0 %v3274
      %4068 = vmatpush.bf16.msra.mxu0 %v3270
      %4069 = vmatpush.bf16.msra.mxu0 %v3266
      %4070 = vmatpush.bf16.msra.mxu0 %v3262
      %4071 = vmatpush.bf16.msra.mxu0 %v3258
      %4072 = vmatpush.bf16.msra.mxu0 %v3254
      %4073 = vmatpush.bf16.msra.mxu0 %v3250
      %4074 = vmatpush.bf16.msra.mxu0 %v3246
      %4075 = vmatmul.bf16.gmra.mxu0 %v2459
      %v4076 = vpop.f32.mrf.mxu0
      %v4077 = vadd.f32 %v2455, %v4076
      %v4078 = vpop.f32.mrf.mxu0
      %4079 = vdwg.mxu0
      %4080 = vmatpush.bf16.msra.mxu0 %v3306
      %4081 = vmatpush.bf16.msra.mxu0 %v3302
      %4082 = vmatpush.bf16.msra.mxu0 %v3298
      %4083 = vmatpush.bf16.msra.mxu0 %v3294
      %4084 = vmatpush.bf16.msra.mxu0 %v3290
      %4085 = vmatpush.bf16.msra.mxu0 %v3286
      %4086 = vmatpush.bf16.msra.mxu0 %v3282
      %4087 = vmatpush.bf16.msra.mxu0 %v3278
      %4088 = vmatmul.bf16.gmra.mxu0 %v2460
      %v4089 = vpop.f32.mrf.mxu0
      %v4090 = vadd.f32 %v4077, %v4089
      %v4091 = vpop.f32.mrf.mxu0
      %4092 = vdwg.mxu0
      %4093 = vmatpush.bf16.msra.mxu0 %v3338
      %4094 = vmatpush.bf16.msra.mxu0 %v3334
      %4095 = vmatpush.bf16.msra.mxu0 %v3330
      %4096 = vmatpush.bf16.msra.mxu0 %v3326
      %4097 = vmatpush.bf16.msra.mxu0 %v3322
      %4098 = vmatpush.bf16.msra.mxu0 %v3318
      %4099 = vmatpush.bf16.msra.mxu0 %v3314
      %4100 = vmatpush.bf16.msra.mxu0 %v3310
      %4101 = vmatmul.bf16.gmra.mxu0 %v2461
      %v4102 = vpop.f32.mrf.mxu0
      %v4103 = vadd.f32 %v4090, %v4102
      %v4104 = vpop.f32.mrf.mxu0
      %4105 = vdwg.mxu0
      %4106 = vmatpush.bf16.msra.mxu0 %v3370
      %4107 = vmatpush.bf16.msra.mxu0 %v3366
      %4108 = vmatpush.bf16.msra.mxu0 %v3362
      %4109 = vmatpush.bf16.msra.mxu0 %v3358
      %4110 = vmatpush.bf16.msra.mxu0 %v3354
      %4111 = vmatpush.bf16.msra.mxu0 %v3350
      %4112 = vmatpush.bf16.msra.mxu0 %v3346
      %4113 = vmatpush.bf16.msra.mxu0 %v3342
      %4114 = vmatmul.bf16.gmra.mxu0 %v2462
      %v4115 = vpop.f32.mrf.mxu0
      %v4116 = vadd.f32 %v4103, %v4115
      %v4117 = vpop.f32.mrf.mxu0
      %4118 = vdwg.mxu0
      %4119 = vmatpush.bf16.msra.mxu0 %v3402
      %4120 = vmatpush.bf16.msra.mxu0 %v3398
      %4121 = vmatpush.bf16.msra.mxu0 %v3394
      %4122 = vmatpush.bf16.msra.mxu0 %v3390
      %4123 = vmatpush.bf16.msra.mxu0 %v3386
      %4124 = vmatpush.bf16.msra.mxu0 %v3382
      %4125 = vmatpush.bf16.msra.mxu0 %v3378
      %4126 = vmatpush.bf16.msra.mxu0 %v3374
      %4127 = vmatmul.bf16.gmra.mxu0 %v2463
      %v4128 = vpop.f32.mrf.mxu0
      %v4129 = vadd.f32 %v4116, %v4128
      %v4130 = vpop.f32.mrf.mxu0
      %4131 = vdwg.mxu0
      %4132 = vmatpush.bf16.msra.mxu0 %v3434
      %4133 = vmatpush.bf16.msra.mxu0 %v3430
      %4134 = vmatpush.bf16.msra.mxu0 %v3426
      %4135 = vmatpush.bf16.msra.mxu0 %v3422
      %4136 = vmatpush.bf16.msra.mxu0 %v3418
      %4137 = vmatpush.bf16.msra.mxu0 %v3414
      %4138 = vmatpush.bf16.msra.mxu0 %v3410
      %4139 = vmatpush.bf16.msra.mxu0 %v3406
      %4140 = vmatmul.bf16.gmra.mxu0 %v2464
      %v4141 = vpop.f32.mrf.mxu0
      %v4142 = vadd.f32 %v4129, %v4141
      %v4143 = vpop.f32.mrf.mxu0
      %4144 = vdwg.mxu0
      %4145 = vmatpush.bf16.msra.mxu0 %v3466
      %4146 = vmatpush.bf16.msra.mxu0 %v3462
      %4147 = vmatpush.bf16.msra.mxu0 %v3458
      %4148 = vmatpush.bf16.msra.mxu0 %v3454
      %4149 = vmatpush.bf16.msra.mxu0 %v3450
      %4150 = vmatpush.bf16.msra.mxu0 %v3446
      %4151 = vmatpush.bf16.msra.mxu0 %v3442
      %4152 = vmatpush.bf16.msra.mxu0 %v3438
      %4153 = vmatmul.bf16.gmra.mxu0 %v2465
      %v4154 = vpop.f32.mrf.mxu0
      %v4155 = vadd.f32 %v4142, %v4154
      %v4156 = vpop.f32.mrf.mxu0
      %4157 = vdwg.mxu0
      %4158 = vmatpush.bf16.msra.mxu0 %v3498
      %4159 = vmatpush.bf16.msra.mxu0 %v3494
      %4160 = vmatpush.bf16.msra.mxu0 %v3490
      %4161 = vmatpush.bf16.msra.mxu0 %v3486
      %4162 = vmatpush.bf16.msra.mxu0 %v3482
      %4163 = vmatpush.bf16.msra.mxu0 %v3478
      %4164 = vmatpush.bf16.msra.mxu0 %v3474
      %4165 = vmatpush.bf16.msra.mxu0 %v3470
      %4166 = vmatmul.bf16.gmra.mxu0 %v2466
      %v4167 = vpop.f32.mrf.mxu0
      %v4168 = vadd.f32 %v4155, %v4167
      %v4169 = vpop.f32.mrf.mxu0
      %4170 = vdwg.mxu0
      %s4171 = scalar_lea.vmem %s201, 8
      %v4172 = vld [vmem:[%s4171] sm:$0xff]
      %s4173 = scalar_lea.vmem %s1, 4096
      %v4174 = vld [vmem:[%s4173] sm:$0xff]
      %v4175 = vld [vmem:[%s4173 + $0x8] sm:$0xff]
      %v4176 = vld [vmem:[%s4173 + $0x10] sm:$0xff]
      %v4177 = vld [vmem:[%s4173 + $0x18] sm:$0xff]
      %v4178 = vld [vmem:[%s4173 + $0x20] sm:$0xff]
      %v4179 = vld [vmem:[%s4173 + $0x28] sm:$0xff]
      %v4180 = vld [vmem:[%s4173 + $0x30] sm:$0xff]
      %v4181 = vld [vmem:[%s4173 + $0x38] sm:$0xff]
      %v4182 = vld [vmem:[%s4173 + $0x40] sm:$0xff]
      %v4183 = vld [vmem:[%s4173 + $0x48] sm:$0xff]
      %v4184 = vld [vmem:[%s4173 + $0x50] sm:$0xff]
      %v4185 = vld [vmem:[%s4173 + $0x58] sm:$0xff]
      %v4186 = vld [vmem:[%s4173 + $0x60] sm:$0xff]
      %v4187 = vld [vmem:[%s4173 + $0x68] sm:$0xff]
      %v4188 = vld [vmem:[%s4173 + $0x70] sm:$0xff]
      %v4189 = vld [vmem:[%s4173 + $0x78] sm:$0xff]
      %v4190 = vld [vmem:[%s4173 + $0x80] sm:$0xff]
      %v4191 = vld [vmem:[%s4173 + $0x88] sm:$0xff]
      %v4192 = vld [vmem:[%s4173 + $0x90] sm:$0xff]
      %v4193 = vld [vmem:[%s4173 + $0x98] sm:$0xff]
      %v4194 = vld [vmem:[%s4173 + $0xa0] sm:$0xff]
      %v4195 = vld [vmem:[%s4173 + $0xa8] sm:$0xff]
      %v4196 = vld [vmem:[%s4173 + $0xb0] sm:$0xff]
      %v4197 = vld [vmem:[%s4173 + $0xb8] sm:$0xff]
      %v4198 = vld [vmem:[%s4173 + $0xc0] sm:$0xff]
      %v4199 = vld [vmem:[%s4173 + $0xc8] sm:$0xff]
      %v4200 = vld [vmem:[%s4173 + $0xd0] sm:$0xff]
      %v4201 = vld [vmem:[%s4173 + $0xd8] sm:$0xff]
      %v4202 = vld [vmem:[%s4173 + $0xe0] sm:$0xff]
      %v4203 = vld [vmem:[%s4173 + $0xe8] sm:$0xff]
      %v4204 = vld [vmem:[%s4173 + $0xf0] sm:$0xff]
      %v4205 = vld [vmem:[%s4173 + $0xf8] sm:$0xff]
      %v4206 = vld [vmem:[%s4173 + $0x100] sm:$0xff]
      %v4207 = vld [vmem:[%s4173 + $0x108] sm:$0xff]
      %v4208 = vld [vmem:[%s4173 + $0x110] sm:$0xff]
      %v4209 = vld [vmem:[%s4173 + $0x118] sm:$0xff]
      %v4210 = vld [vmem:[%s4173 + $0x120] sm:$0xff]
      %v4211 = vld [vmem:[%s4173 + $0x128] sm:$0xff]
      %v4212 = vld [vmem:[%s4173 + $0x130] sm:$0xff]
      %v4213 = vld [vmem:[%s4173 + $0x138] sm:$0xff]
      %v4214 = vld [vmem:[%s4173 + $0x140] sm:$0xff]
      %v4215 = vld [vmem:[%s4173 + $0x148] sm:$0xff]
      %v4216 = vld [vmem:[%s4173 + $0x150] sm:$0xff]
      %v4217 = vld [vmem:[%s4173 + $0x158] sm:$0xff]
      %v4218 = vld [vmem:[%s4173 + $0x160] sm:$0xff]
      %v4219 = vld [vmem:[%s4173 + $0x168] sm:$0xff]
      %v4220 = vld [vmem:[%s4173 + $0x170] sm:$0xff]
      %v4221 = vld [vmem:[%s4173 + $0x178] sm:$0xff]
      %v4222 = vld [vmem:[%s4173 + $0x180] sm:$0xff]
      %v4223 = vld [vmem:[%s4173 + $0x188] sm:$0xff]
      %v4224 = vld [vmem:[%s4173 + $0x190] sm:$0xff]
      %v4225 = vld [vmem:[%s4173 + $0x198] sm:$0xff]
      %v4226 = vld [vmem:[%s4173 + $0x1a0] sm:$0xff]
      %v4227 = vld [vmem:[%s4173 + $0x1a8] sm:$0xff]
      %v4228 = vld [vmem:[%s4173 + $0x1b0] sm:$0xff]
      %v4229 = vld [vmem:[%s4173 + $0x1b8] sm:$0xff]
      %v4230 = vld [vmem:[%s4173 + $0x1c0] sm:$0xff]
      %v4231 = vld [vmem:[%s4173 + $0x1c8] sm:$0xff]
      %v4232 = vld [vmem:[%s4173 + $0x1d0] sm:$0xff]
      %v4233 = vld [vmem:[%s4173 + $0x1d8] sm:$0xff]
      %v4234 = vld [vmem:[%s4173 + $0x1e0] sm:$0xff]
      %v4235 = vld [vmem:[%s4173 + $0x1e8] sm:$0xff]
      %v4236 = vld [vmem:[%s4173 + $0x1f0] sm:$0xff]
      %v4237 = vld [vmem:[%s4173 + $0x1f8] sm:$0xff]
      %v4238 = vld [vmem:[%s4173 + $0x200] sm:$0xff]
      %v4239 = vld [vmem:[%s4173 + $0x208] sm:$0xff]
      %v4240 = vld [vmem:[%s4173 + $0x210] sm:$0xff]
      %v4241 = vld [vmem:[%s4173 + $0x218] sm:$0xff]
      %v4242 = vld [vmem:[%s4173 + $0x220] sm:$0xff]
      %v4243 = vld [vmem:[%s4173 + $0x228] sm:$0xff]
      %v4244 = vld [vmem:[%s4173 + $0x230] sm:$0xff]
      %v4245 = vld [vmem:[%s4173 + $0x238] sm:$0xff]
      %v4246 = vld [vmem:[%s4173 + $0x240] sm:$0xff]
      %v4247 = vld [vmem:[%s4173 + $0x248] sm:$0xff]
      %v4248 = vld [vmem:[%s4173 + $0x250] sm:$0xff]
      %v4249 = vld [vmem:[%s4173 + $0x258] sm:$0xff]
      %v4250 = vld [vmem:[%s4173 + $0x260] sm:$0xff]
      %v4251 = vld [vmem:[%s4173 + $0x268] sm:$0xff]
      %v4252 = vld [vmem:[%s4173 + $0x270] sm:$0xff]
      %v4253 = vld [vmem:[%s4173 + $0x278] sm:$0xff]
      %v4254 = vld [vmem:[%s4173 + $0x280] sm:$0xff]
      %v4255 = vld [vmem:[%s4173 + $0x288] sm:$0xff]
      %v4256 = vld [vmem:[%s4173 + $0x290] sm:$0xff]
      %v4257 = vld [vmem:[%s4173 + $0x298] sm:$0xff]
      %v4258 = vld [vmem:[%s4173 + $0x2a0] sm:$0xff]
      %v4259 = vld [vmem:[%s4173 + $0x2a8] sm:$0xff]
      %v4260 = vld [vmem:[%s4173 + $0x2b0] sm:$0xff]
      %v4261 = vld [vmem:[%s4173 + $0x2b8] sm:$0xff]
      %v4262 = vld [vmem:[%s4173 + $0x2c0] sm:$0xff]
      %v4263 = vld [vmem:[%s4173 + $0x2c8] sm:$0xff]
      %v4264 = vld [vmem:[%s4173 + $0x2d0] sm:$0xff]
      %v4265 = vld [vmem:[%s4173 + $0x2d8] sm:$0xff]
      %v4266 = vld [vmem:[%s4173 + $0x2e0] sm:$0xff]
      %v4267 = vld [vmem:[%s4173 + $0x2e8] sm:$0xff]
      %v4268 = vld [vmem:[%s4173 + $0x2f0] sm:$0xff]
      %v4269 = vld [vmem:[%s4173 + $0x2f8] sm:$0xff]
      %v4270 = vld [vmem:[%s4173 + $0x300] sm:$0xff]
      %v4271 = vld [vmem:[%s4173 + $0x308] sm:$0xff]
      %v4272 = vld [vmem:[%s4173 + $0x310] sm:$0xff]
      %v4273 = vld [vmem:[%s4173 + $0x318] sm:$0xff]
      %v4274 = vld [vmem:[%s4173 + $0x320] sm:$0xff]
      %v4275 = vld [vmem:[%s4173 + $0x328] sm:$0xff]
      %v4276 = vld [vmem:[%s4173 + $0x330] sm:$0xff]
      %v4277 = vld [vmem:[%s4173 + $0x338] sm:$0xff]
      %v4278 = vld [vmem:[%s4173 + $0x340] sm:$0xff]
      %v4279 = vld [vmem:[%s4173 + $0x348] sm:$0xff]
      %v4280 = vld [vmem:[%s4173 + $0x350] sm:$0xff]
      %v4281 = vld [vmem:[%s4173 + $0x358] sm:$0xff]
      %v4282 = vld [vmem:[%s4173 + $0x360] sm:$0xff]
      %v4283 = vld [vmem:[%s4173 + $0x368] sm:$0xff]
      %v4284 = vld [vmem:[%s4173 + $0x370] sm:$0xff]
      %v4285 = vld [vmem:[%s4173 + $0x378] sm:$0xff]
      %v4286 = vld [vmem:[%s4173 + $0x380] sm:$0xff]
      %v4287 = vld [vmem:[%s4173 + $0x388] sm:$0xff]
      %v4288 = vld [vmem:[%s4173 + $0x390] sm:$0xff]
      %v4289 = vld [vmem:[%s4173 + $0x398] sm:$0xff]
      %v4290 = vld [vmem:[%s4173 + $0x3a0] sm:$0xff]
      %v4291 = vld [vmem:[%s4173 + $0x3a8] sm:$0xff]
      %v4292 = vld [vmem:[%s4173 + $0x3b0] sm:$0xff]
      %v4293 = vld [vmem:[%s4173 + $0x3b8] sm:$0xff]
      %v4294 = vld [vmem:[%s4173 + $0x3c0] sm:$0xff]
      %v4295 = vld [vmem:[%s4173 + $0x3c8] sm:$0xff]
      %v4296 = vld [vmem:[%s4173 + $0x3d0] sm:$0xff]
      %v4297 = vld [vmem:[%s4173 + $0x3d8] sm:$0xff]
      %v4298 = vld [vmem:[%s4173 + $0x3e0] sm:$0xff]
      %v4299 = vld [vmem:[%s4173 + $0x3e8] sm:$0xff]
      %v4300 = vld [vmem:[%s4173 + $0x3f0] sm:$0xff]
      %v4301 = vld [vmem:[%s4173 + $0x3f8] sm:$0xff]
      %v4302 = vld [vmem:[%s4173 + $0x400] sm:$0xff]
      %v4303 = vld [vmem:[%s4173 + $0x408] sm:$0xff]
      %v4304 = vld [vmem:[%s4173 + $0x410] sm:$0xff]
      %v4305 = vld [vmem:[%s4173 + $0x418] sm:$0xff]
      %v4306 = vld [vmem:[%s4173 + $0x420] sm:$0xff]
      %v4307 = vld [vmem:[%s4173 + $0x428] sm:$0xff]
      %v4308 = vld [vmem:[%s4173 + $0x430] sm:$0xff]
      %v4309 = vld [vmem:[%s4173 + $0x438] sm:$0xff]
      %v4310 = vld [vmem:[%s4173 + $0x440] sm:$0xff]
      %v4311 = vld [vmem:[%s4173 + $0x448] sm:$0xff]
      %v4312 = vld [vmem:[%s4173 + $0x450] sm:$0xff]
      %v4313 = vld [vmem:[%s4173 + $0x458] sm:$0xff]
      %v4314 = vld [vmem:[%s4173 + $0x460] sm:$0xff]
      %v4315 = vld [vmem:[%s4173 + $0x468] sm:$0xff]
      %v4316 = vld [vmem:[%s4173 + $0x470] sm:$0xff]
      %v4317 = vld [vmem:[%s4173 + $0x478] sm:$0xff]
      %v4318 = vld [vmem:[%s4173 + $0x480] sm:$0xff]
      %v4319 = vld [vmem:[%s4173 + $0x488] sm:$0xff]
      %v4320 = vld [vmem:[%s4173 + $0x490] sm:$0xff]
      %v4321 = vld [vmem:[%s4173 + $0x498] sm:$0xff]
      %v4322 = vld [vmem:[%s4173 + $0x4a0] sm:$0xff]
      %v4323 = vld [vmem:[%s4173 + $0x4a8] sm:$0xff]
      %v4324 = vld [vmem:[%s4173 + $0x4b0] sm:$0xff]
      %v4325 = vld [vmem:[%s4173 + $0x4b8] sm:$0xff]
      %v4326 = vld [vmem:[%s4173 + $0x4c0] sm:$0xff]
      %v4327 = vld [vmem:[%s4173 + $0x4c8] sm:$0xff]
      %v4328 = vld [vmem:[%s4173 + $0x4d0] sm:$0xff]
      %v4329 = vld [vmem:[%s4173 + $0x4d8] sm:$0xff]
      %v4330 = vld [vmem:[%s4173 + $0x4e0] sm:$0xff]
      %v4331 = vld [vmem:[%s4173 + $0x4e8] sm:$0xff]
      %v4332 = vld [vmem:[%s4173 + $0x4f0] sm:$0xff]
      %v4333 = vld [vmem:[%s4173 + $0x4f8] sm:$0xff]
      %v4334 = vld [vmem:[%s4173 + $0x500] sm:$0xff]
      %v4335 = vld [vmem:[%s4173 + $0x508] sm:$0xff]
      %v4336 = vld [vmem:[%s4173 + $0x510] sm:$0xff]
      %v4337 = vld [vmem:[%s4173 + $0x518] sm:$0xff]
      %v4338 = vld [vmem:[%s4173 + $0x520] sm:$0xff]
      %v4339 = vld [vmem:[%s4173 + $0x528] sm:$0xff]
      %v4340 = vld [vmem:[%s4173 + $0x530] sm:$0xff]
      %v4341 = vld [vmem:[%s4173 + $0x538] sm:$0xff]
      %v4342 = vld [vmem:[%s4173 + $0x540] sm:$0xff]
      %v4343 = vld [vmem:[%s4173 + $0x548] sm:$0xff]
      %v4344 = vld [vmem:[%s4173 + $0x550] sm:$0xff]
      %v4345 = vld [vmem:[%s4173 + $0x558] sm:$0xff]
      %v4346 = vld [vmem:[%s4173 + $0x560] sm:$0xff]
      %v4347 = vld [vmem:[%s4173 + $0x568] sm:$0xff]
      %v4348 = vld [vmem:[%s4173 + $0x570] sm:$0xff]
      %v4349 = vld [vmem:[%s4173 + $0x578] sm:$0xff]
      %v4350 = vld [vmem:[%s4173 + $0x580] sm:$0xff]
      %v4351 = vld [vmem:[%s4173 + $0x588] sm:$0xff]
      %v4352 = vld [vmem:[%s4173 + $0x590] sm:$0xff]
      %v4353 = vld [vmem:[%s4173 + $0x598] sm:$0xff]
      %v4354 = vld [vmem:[%s4173 + $0x5a0] sm:$0xff]
      %v4355 = vld [vmem:[%s4173 + $0x5a8] sm:$0xff]
      %v4356 = vld [vmem:[%s4173 + $0x5b0] sm:$0xff]
      %v4357 = vld [vmem:[%s4173 + $0x5b8] sm:$0xff]
      %v4358 = vld [vmem:[%s4173 + $0x5c0] sm:$0xff]
      %v4359 = vld [vmem:[%s4173 + $0x5c8] sm:$0xff]
      %v4360 = vld [vmem:[%s4173 + $0x5d0] sm:$0xff]
      %v4361 = vld [vmem:[%s4173 + $0x5d8] sm:$0xff]
      %v4362 = vld [vmem:[%s4173 + $0x5e0] sm:$0xff]
      %v4363 = vld [vmem:[%s4173 + $0x5e8] sm:$0xff]
      %v4364 = vld [vmem:[%s4173 + $0x5f0] sm:$0xff]
      %v4365 = vld [vmem:[%s4173 + $0x5f8] sm:$0xff]
      %v4366 = vld [vmem:[%s4173 + $0x600] sm:$0xff]
      %v4367 = vld [vmem:[%s4173 + $0x608] sm:$0xff]
      %v4368 = vld [vmem:[%s4173 + $0x610] sm:$0xff]
      %v4369 = vld [vmem:[%s4173 + $0x618] sm:$0xff]
      %v4370 = vld [vmem:[%s4173 + $0x620] sm:$0xff]
      %v4371 = vld [vmem:[%s4173 + $0x628] sm:$0xff]
      %v4372 = vld [vmem:[%s4173 + $0x630] sm:$0xff]
      %v4373 = vld [vmem:[%s4173 + $0x638] sm:$0xff]
      %v4374 = vld [vmem:[%s4173 + $0x640] sm:$0xff]
      %v4375 = vld [vmem:[%s4173 + $0x648] sm:$0xff]
      %v4376 = vld [vmem:[%s4173 + $0x650] sm:$0xff]
      %v4377 = vld [vmem:[%s4173 + $0x658] sm:$0xff]
      %v4378 = vld [vmem:[%s4173 + $0x660] sm:$0xff]
      %v4379 = vld [vmem:[%s4173 + $0x668] sm:$0xff]
      %v4380 = vld [vmem:[%s4173 + $0x670] sm:$0xff]
      %v4381 = vld [vmem:[%s4173 + $0x678] sm:$0xff]
      %v4382 = vld [vmem:[%s4173 + $0x680] sm:$0xff]
      %v4383 = vld [vmem:[%s4173 + $0x688] sm:$0xff]
      %v4384 = vld [vmem:[%s4173 + $0x690] sm:$0xff]
      %v4385 = vld [vmem:[%s4173 + $0x698] sm:$0xff]
      %v4386 = vld [vmem:[%s4173 + $0x6a0] sm:$0xff]
      %v4387 = vld [vmem:[%s4173 + $0x6a8] sm:$0xff]
      %v4388 = vld [vmem:[%s4173 + $0x6b0] sm:$0xff]
      %v4389 = vld [vmem:[%s4173 + $0x6b8] sm:$0xff]
      %v4390 = vld [vmem:[%s4173 + $0x6c0] sm:$0xff]
      %v4391 = vld [vmem:[%s4173 + $0x6c8] sm:$0xff]
      %v4392 = vld [vmem:[%s4173 + $0x6d0] sm:$0xff]
      %v4393 = vld [vmem:[%s4173 + $0x6d8] sm:$0xff]
      %v4394 = vld [vmem:[%s4173 + $0x6e0] sm:$0xff]
      %v4395 = vld [vmem:[%s4173 + $0x6e8] sm:$0xff]
      %v4396 = vld [vmem:[%s4173 + $0x6f0] sm:$0xff]
      %v4397 = vld [vmem:[%s4173 + $0x6f8] sm:$0xff]
      %v4398 = vld [vmem:[%s4173 + $0x700] sm:$0xff]
      %v4399 = vld [vmem:[%s4173 + $0x708] sm:$0xff]
      %v4400 = vld [vmem:[%s4173 + $0x710] sm:$0xff]
      %v4401 = vld [vmem:[%s4173 + $0x718] sm:$0xff]
      %v4402 = vld [vmem:[%s4173 + $0x720] sm:$0xff]
      %v4403 = vld [vmem:[%s4173 + $0x728] sm:$0xff]
      %v4404 = vld [vmem:[%s4173 + $0x730] sm:$0xff]
      %v4405 = vld [vmem:[%s4173 + $0x738] sm:$0xff]
      %v4406 = vld [vmem:[%s4173 + $0x740] sm:$0xff]
      %v4407 = vld [vmem:[%s4173 + $0x748] sm:$0xff]
      %v4408 = vld [vmem:[%s4173 + $0x750] sm:$0xff]
      %v4409 = vld [vmem:[%s4173 + $0x758] sm:$0xff]
      %v4410 = vld [vmem:[%s4173 + $0x760] sm:$0xff]
      %v4411 = vld [vmem:[%s4173 + $0x768] sm:$0xff]
      %v4412 = vld [vmem:[%s4173 + $0x770] sm:$0xff]
      %v4413 = vld [vmem:[%s4173 + $0x778] sm:$0xff]
      %v4414 = vld [vmem:[%s4173 + $0x780] sm:$0xff]
      %v4415 = vld [vmem:[%s4173 + $0x788] sm:$0xff]
      %v4416 = vld [vmem:[%s4173 + $0x790] sm:$0xff]
      %v4417 = vld [vmem:[%s4173 + $0x798] sm:$0xff]
      %v4418 = vld [vmem:[%s4173 + $0x7a0] sm:$0xff]
      %v4419 = vld [vmem:[%s4173 + $0x7a8] sm:$0xff]
      %v4420 = vld [vmem:[%s4173 + $0x7b0] sm:$0xff]
      %v4421 = vld [vmem:[%s4173 + $0x7b8] sm:$0xff]
      %v4422 = vld [vmem:[%s4173 + $0x7c0] sm:$0xff]
      %v4423 = vld [vmem:[%s4173 + $0x7c8] sm:$0xff]
      %v4424 = vld [vmem:[%s4173 + $0x7d0] sm:$0xff]
      %v4425 = vld [vmem:[%s4173 + $0x7d8] sm:$0xff]
      %v4426 = vld [vmem:[%s4173 + $0x7e0] sm:$0xff]
      %v4427 = vld [vmem:[%s4173 + $0x7e8] sm:$0xff]
      %v4428 = vld [vmem:[%s4173 + $0x7f0] sm:$0xff]
      %v4429 = vld [vmem:[%s4173 + $0x7f8] sm:$0xff]
      %4431 = vst [vmem:[#allocation1] ss:$9 sm:$0xff] %v4172
      %v4432 = vld [vmem:[#allocation1] sm:$0xff]
      %v4433 = vld [vmem:[#allocation1 + $0x9] sm:$0xff]
      %v4434 = vld [vmem:[#allocation1 + $0x12] sm:$0xff]
      %v4435 = vld [vmem:[#allocation1 + $0x1b] sm:$0xff]
      %v4436 = vld [vmem:[#allocation1 + $0x24] sm:$0xff]
      %v4437 = vld [vmem:[#allocation1 + $0x2d] sm:$0xff]
      %v4438 = vld [vmem:[#allocation1 + $0x36] sm:$0xff]
      %v4439 = vld [vmem:[#allocation1 + $0x3f] sm:$0xff]
      %v4704 = vunpack.c.l.b16 %v4174
      %v4705 = vunpack.c.h.b16 %v4174
      %v4706 = vunpack.c.l.b16 %v4175
      %v4707 = vunpack.c.h.b16 %v4175
      %v4708 = vunpack.c.l.b16 %v4176
      %v4709 = vunpack.c.h.b16 %v4176
      %v4710 = vunpack.c.l.b16 %v4177
      %v4711 = vunpack.c.h.b16 %v4177
      %v4712 = vunpack.c.l.b16 %v4178
      %v4713 = vunpack.c.h.b16 %v4178
      %v4714 = vunpack.c.l.b16 %v4179
      %v4715 = vunpack.c.h.b16 %v4179
      %v4716 = vunpack.c.l.b16 %v4180
      %v4717 = vunpack.c.h.b16 %v4180
      %v4718 = vunpack.c.l.b16 %v4181
      %v4719 = vunpack.c.h.b16 %v4181
      %v4720 = vunpack.c.l.b16 %v4182
      %v4721 = vunpack.c.h.b16 %v4182
      %v4722 = vunpack.c.l.b16 %v4183
      %v4723 = vunpack.c.h.b16 %v4183
      %v4724 = vunpack.c.l.b16 %v4184
      %v4725 = vunpack.c.h.b16 %v4184
      %v4726 = vunpack.c.l.b16 %v4185
      %v4727 = vunpack.c.h.b16 %v4185
      %v4728 = vunpack.c.l.b16 %v4186
      %v4729 = vunpack.c.h.b16 %v4186
      %v4730 = vunpack.c.l.b16 %v4187
      %v4731 = vunpack.c.h.b16 %v4187
      %v4732 = vunpack.c.l.b16 %v4188
      %v4733 = vunpack.c.h.b16 %v4188
      %v4734 = vunpack.c.l.b16 %v4189
      %v4735 = vunpack.c.h.b16 %v4189
      %v4736 = vunpack.c.l.b16 %v4190
      %v4737 = vunpack.c.h.b16 %v4190
      %v4738 = vunpack.c.l.b16 %v4191
      %v4739 = vunpack.c.h.b16 %v4191
      %v4740 = vunpack.c.l.b16 %v4192
      %v4741 = vunpack.c.h.b16 %v4192
      %v4742 = vunpack.c.l.b16 %v4193
      %v4743 = vunpack.c.h.b16 %v4193
      %v4744 = vunpack.c.l.b16 %v4194
      %v4745 = vunpack.c.h.b16 %v4194
      %v4746 = vunpack.c.l.b16 %v4195
      %v4747 = vunpack.c.h.b16 %v4195
      %v4748 = vunpack.c.l.b16 %v4196
      %v4749 = vunpack.c.h.b16 %v4196
      %v4750 = vunpack.c.l.b16 %v4197
      %v4751 = vunpack.c.h.b16 %v4197
      %v4752 = vunpack.c.l.b16 %v4198
      %v4753 = vunpack.c.h.b16 %v4198
      %v4754 = vunpack.c.l.b16 %v4199
      %v4755 = vunpack.c.h.b16 %v4199
      %v4756 = vunpack.c.l.b16 %v4200
      %v4757 = vunpack.c.h.b16 %v4200
      %v4758 = vunpack.c.l.b16 %v4201
      %v4759 = vunpack.c.h.b16 %v4201
      %v4760 = vunpack.c.l.b16 %v4202
      %v4761 = vunpack.c.h.b16 %v4202
      %v4762 = vunpack.c.l.b16 %v4203
      %v4763 = vunpack.c.h.b16 %v4203
      %v4764 = vunpack.c.l.b16 %v4204
      %v4765 = vunpack.c.h.b16 %v4204
      %v4766 = vunpack.c.l.b16 %v4205
      %v4767 = vunpack.c.h.b16 %v4205
      %v4768 = vunpack.c.l.b16 %v4206
      %v4769 = vunpack.c.h.b16 %v4206
      %v4770 = vunpack.c.l.b16 %v4207
      %v4771 = vunpack.c.h.b16 %v4207
      %v4772 = vunpack.c.l.b16 %v4208
      %v4773 = vunpack.c.h.b16 %v4208
      %v4774 = vunpack.c.l.b16 %v4209
      %v4775 = vunpack.c.h.b16 %v4209
      %v4776 = vunpack.c.l.b16 %v4210
      %v4777 = vunpack.c.h.b16 %v4210
      %v4778 = vunpack.c.l.b16 %v4211
      %v4779 = vunpack.c.h.b16 %v4211
      %v4780 = vunpack.c.l.b16 %v4212
      %v4781 = vunpack.c.h.b16 %v4212
      %v4782 = vunpack.c.l.b16 %v4213
      %v4783 = vunpack.c.h.b16 %v4213
      %v4784 = vunpack.c.l.b16 %v4214
      %v4785 = vunpack.c.h.b16 %v4214
      %v4786 = vunpack.c.l.b16 %v4215
      %v4787 = vunpack.c.h.b16 %v4215
      %v4788 = vunpack.c.l.b16 %v4216
      %v4789 = vunpack.c.h.b16 %v4216
      %v4790 = vunpack.c.l.b16 %v4217
      %v4791 = vunpack.c.h.b16 %v4217
      %v4792 = vunpack.c.l.b16 %v4218
      %v4793 = vunpack.c.h.b16 %v4218
      %v4794 = vunpack.c.l.b16 %v4219
      %v4795 = vunpack.c.h.b16 %v4219
      %v4796 = vunpack.c.l.b16 %v4220
      %v4797 = vunpack.c.h.b16 %v4220
      %v4798 = vunpack.c.l.b16 %v4221
      %v4799 = vunpack.c.h.b16 %v4221
      %v4800 = vunpack.c.l.b16 %v4222
      %v4801 = vunpack.c.h.b16 %v4222
      %v4802 = vunpack.c.l.b16 %v4223
      %v4803 = vunpack.c.h.b16 %v4223
      %v4804 = vunpack.c.l.b16 %v4224
      %v4805 = vunpack.c.h.b16 %v4224
      %v4806 = vunpack.c.l.b16 %v4225
      %v4807 = vunpack.c.h.b16 %v4225
      %v4808 = vunpack.c.l.b16 %v4226
      %v4809 = vunpack.c.h.b16 %v4226
      %v4810 = vunpack.c.l.b16 %v4227
      %v4811 = vunpack.c.h.b16 %v4227
      %v4812 = vunpack.c.l.b16 %v4228
      %v4813 = vunpack.c.h.b16 %v4228
      %v4814 = vunpack.c.l.b16 %v4229
      %v4815 = vunpack.c.h.b16 %v4229
      %v4816 = vunpack.c.l.b16 %v4230
      %v4817 = vunpack.c.h.b16 %v4230
      %v4818 = vunpack.c.l.b16 %v4231
      %v4819 = vunpack.c.h.b16 %v4231
      %v4820 = vunpack.c.l.b16 %v4232
      %v4821 = vunpack.c.h.b16 %v4232
      %v4822 = vunpack.c.l.b16 %v4233
      %v4823 = vunpack.c.h.b16 %v4233
      %v4824 = vunpack.c.l.b16 %v4234
      %v4825 = vunpack.c.h.b16 %v4234
      %v4826 = vunpack.c.l.b16 %v4235
      %v4827 = vunpack.c.h.b16 %v4235
      %v4828 = vunpack.c.l.b16 %v4236
      %v4829 = vunpack.c.h.b16 %v4236
      %v4830 = vunpack.c.l.b16 %v4237
      %v4831 = vunpack.c.h.b16 %v4237
      %v4832 = vunpack.c.l.b16 %v4238
      %v4833 = vunpack.c.h.b16 %v4238
      %v4834 = vunpack.c.l.b16 %v4239
      %v4835 = vunpack.c.h.b16 %v4239
      %v4836 = vunpack.c.l.b16 %v4240
      %v4837 = vunpack.c.h.b16 %v4240
      %v4838 = vunpack.c.l.b16 %v4241
      %v4839 = vunpack.c.h.b16 %v4241
      %v4840 = vunpack.c.l.b16 %v4242
      %v4841 = vunpack.c.h.b16 %v4242
      %v4842 = vunpack.c.l.b16 %v4243
      %v4843 = vunpack.c.h.b16 %v4243
      %v4844 = vunpack.c.l.b16 %v4244
      %v4845 = vunpack.c.h.b16 %v4244
      %v4846 = vunpack.c.l.b16 %v4245
      %v4847 = vunpack.c.h.b16 %v4245
      %v4848 = vunpack.c.l.b16 %v4246
      %v4849 = vunpack.c.h.b16 %v4246
      %v4850 = vunpack.c.l.b16 %v4247
      %v4851 = vunpack.c.h.b16 %v4247
      %v4852 = vunpack.c.l.b16 %v4248
      %v4853 = vunpack.c.h.b16 %v4248
      %v4854 = vunpack.c.l.b16 %v4249
      %v4855 = vunpack.c.h.b16 %v4249
      %v4856 = vunpack.c.l.b16 %v4250
      %v4857 = vunpack.c.h.b16 %v4250
      %v4858 = vunpack.c.l.b16 %v4251
      %v4859 = vunpack.c.h.b16 %v4251
      %v4860 = vunpack.c.l.b16 %v4252
      %v4861 = vunpack.c.h.b16 %v4252
      %v4862 = vunpack.c.l.b16 %v4253
      %v4863 = vunpack.c.h.b16 %v4253
      %v4864 = vunpack.c.l.b16 %v4254
      %v4865 = vunpack.c.h.b16 %v4254
      %v4866 = vunpack.c.l.b16 %v4255
      %v4867 = vunpack.c.h.b16 %v4255
      %v4868 = vunpack.c.l.b16 %v4256
      %v4869 = vunpack.c.h.b16 %v4256
      %v4870 = vunpack.c.l.b16 %v4257
      %v4871 = vunpack.c.h.b16 %v4257
      %v4872 = vunpack.c.l.b16 %v4258
      %v4873 = vunpack.c.h.b16 %v4258
      %v4874 = vunpack.c.l.b16 %v4259
      %v4875 = vunpack.c.h.b16 %v4259
      %v4876 = vunpack.c.l.b16 %v4260
      %v4877 = vunpack.c.h.b16 %v4260
      %v4878 = vunpack.c.l.b16 %v4261
      %v4879 = vunpack.c.h.b16 %v4261
      %v4880 = vunpack.c.l.b16 %v4262
      %v4881 = vunpack.c.h.b16 %v4262
      %v4882 = vunpack.c.l.b16 %v4263
      %v4883 = vunpack.c.h.b16 %v4263
      %v4884 = vunpack.c.l.b16 %v4264
      %v4885 = vunpack.c.h.b16 %v4264
      %v4886 = vunpack.c.l.b16 %v4265
      %v4887 = vunpack.c.h.b16 %v4265
      %v4888 = vunpack.c.l.b16 %v4266
      %v4889 = vunpack.c.h.b16 %v4266
      %v4890 = vunpack.c.l.b16 %v4267
      %v4891 = vunpack.c.h.b16 %v4267
      %v4892 = vunpack.c.l.b16 %v4268
      %v4893 = vunpack.c.h.b16 %v4268
      %v4894 = vunpack.c.l.b16 %v4269
      %v4895 = vunpack.c.h.b16 %v4269
      %v4896 = vunpack.c.l.b16 %v4270
      %v4897 = vunpack.c.h.b16 %v4270
      %v4898 = vunpack.c.l.b16 %v4271
      %v4899 = vunpack.c.h.b16 %v4271
      %v4900 = vunpack.c.l.b16 %v4272
      %v4901 = vunpack.c.h.b16 %v4272
      %v4902 = vunpack.c.l.b16 %v4273
      %v4903 = vunpack.c.h.b16 %v4273
      %v4904 = vunpack.c.l.b16 %v4274
      %v4905 = vunpack.c.h.b16 %v4274
      %v4906 = vunpack.c.l.b16 %v4275
      %v4907 = vunpack.c.h.b16 %v4275
      %v4908 = vunpack.c.l.b16 %v4276
      %v4909 = vunpack.c.h.b16 %v4276
      %v4910 = vunpack.c.l.b16 %v4277
      %v4911 = vunpack.c.h.b16 %v4277
      %v4912 = vunpack.c.l.b16 %v4278
      %v4913 = vunpack.c.h.b16 %v4278
      %v4914 = vunpack.c.l.b16 %v4279
      %v4915 = vunpack.c.h.b16 %v4279
      %v4916 = vunpack.c.l.b16 %v4280
      %v4917 = vunpack.c.h.b16 %v4280
      %v4918 = vunpack.c.l.b16 %v4281
      %v4919 = vunpack.c.h.b16 %v4281
      %v4920 = vunpack.c.l.b16 %v4282
      %v4921 = vunpack.c.h.b16 %v4282
      %v4922 = vunpack.c.l.b16 %v4283
      %v4923 = vunpack.c.h.b16 %v4283
      %v4924 = vunpack.c.l.b16 %v4284
      %v4925 = vunpack.c.h.b16 %v4284
      %v4926 = vunpack.c.l.b16 %v4285
      %v4927 = vunpack.c.h.b16 %v4285
      %v4928 = vunpack.c.l.b16 %v4286
      %v4929 = vunpack.c.h.b16 %v4286
      %v4930 = vunpack.c.l.b16 %v4287
      %v4931 = vunpack.c.h.b16 %v4287
      %v4932 = vunpack.c.l.b16 %v4288
      %v4933 = vunpack.c.h.b16 %v4288
      %v4934 = vunpack.c.l.b16 %v4289
      %v4935 = vunpack.c.h.b16 %v4289
      %v4936 = vunpack.c.l.b16 %v4290
      %v4937 = vunpack.c.h.b16 %v4290
      %v4938 = vunpack.c.l.b16 %v4291
      %v4939 = vunpack.c.h.b16 %v4291
      %v4940 = vunpack.c.l.b16 %v4292
      %v4941 = vunpack.c.h.b16 %v4292
      %v4942 = vunpack.c.l.b16 %v4293
      %v4943 = vunpack.c.h.b16 %v4293
      %v4944 = vunpack.c.l.b16 %v4294
      %v4945 = vunpack.c.h.b16 %v4294
      %v4946 = vunpack.c.l.b16 %v4295
      %v4947 = vunpack.c.h.b16 %v4295
      %v4948 = vunpack.c.l.b16 %v4296
      %v4949 = vunpack.c.h.b16 %v4296
      %v4950 = vunpack.c.l.b16 %v4297
      %v4951 = vunpack.c.h.b16 %v4297
      %v4952 = vunpack.c.l.b16 %v4298
      %v4953 = vunpack.c.h.b16 %v4298
      %v4954 = vunpack.c.l.b16 %v4299
      %v4955 = vunpack.c.h.b16 %v4299
      %v4956 = vunpack.c.l.b16 %v4300
      %v4957 = vunpack.c.h.b16 %v4300
      %v4958 = vunpack.c.l.b16 %v4301
      %v4959 = vunpack.c.h.b16 %v4301
      %v4960 = vunpack.c.l.b16 %v4302
      %v4961 = vunpack.c.h.b16 %v4302
      %v4962 = vunpack.c.l.b16 %v4303
      %v4963 = vunpack.c.h.b16 %v4303
      %v4964 = vunpack.c.l.b16 %v4304
      %v4965 = vunpack.c.h.b16 %v4304
      %v4966 = vunpack.c.l.b16 %v4305
      %v4967 = vunpack.c.h.b16 %v4305
      %v4968 = vunpack.c.l.b16 %v4306
      %v4969 = vunpack.c.h.b16 %v4306
      %v4970 = vunpack.c.l.b16 %v4307
      %v4971 = vunpack.c.h.b16 %v4307
      %v4972 = vunpack.c.l.b16 %v4308
      %v4973 = vunpack.c.h.b16 %v4308
      %v4974 = vunpack.c.l.b16 %v4309
      %v4975 = vunpack.c.h.b16 %v4309
      %v4976 = vunpack.c.l.b16 %v4310
      %v4977 = vunpack.c.h.b16 %v4310
      %v4978 = vunpack.c.l.b16 %v4311
      %v4979 = vunpack.c.h.b16 %v4311
      %v4980 = vunpack.c.l.b16 %v4312
      %v4981 = vunpack.c.h.b16 %v4312
      %v4982 = vunpack.c.l.b16 %v4313
      %v4983 = vunpack.c.h.b16 %v4313
      %v4984 = vunpack.c.l.b16 %v4314
      %v4985 = vunpack.c.h.b16 %v4314
      %v4986 = vunpack.c.l.b16 %v4315
      %v4987 = vunpack.c.h.b16 %v4315
      %v4988 = vunpack.c.l.b16 %v4316
      %v4989 = vunpack.c.h.b16 %v4316
      %v4990 = vunpack.c.l.b16 %v4317
      %v4991 = vunpack.c.h.b16 %v4317
      %v4992 = vunpack.c.l.b16 %v4318
      %v4993 = vunpack.c.h.b16 %v4318
      %v4994 = vunpack.c.l.b16 %v4319
      %v4995 = vunpack.c.h.b16 %v4319
      %v4996 = vunpack.c.l.b16 %v4320
      %v4997 = vunpack.c.h.b16 %v4320
      %v4998 = vunpack.c.l.b16 %v4321
      %v4999 = vunpack.c.h.b16 %v4321
      %v5000 = vunpack.c.l.b16 %v4322
      %v5001 = vunpack.c.h.b16 %v4322
      %v5002 = vunpack.c.l.b16 %v4323
      %v5003 = vunpack.c.h.b16 %v4323
      %v5004 = vunpack.c.l.b16 %v4324
      %v5005 = vunpack.c.h.b16 %v4324
      %v5006 = vunpack.c.l.b16 %v4325
      %v5007 = vunpack.c.h.b16 %v4325
      %v5008 = vunpack.c.l.b16 %v4326
      %v5009 = vunpack.c.h.b16 %v4326
      %v5010 = vunpack.c.l.b16 %v4327
      %v5011 = vunpack.c.h.b16 %v4327
      %v5012 = vunpack.c.l.b16 %v4328
      %v5013 = vunpack.c.h.b16 %v4328
      %v5014 = vunpack.c.l.b16 %v4329
      %v5015 = vunpack.c.h.b16 %v4329
      %v5016 = vunpack.c.l.b16 %v4330
      %v5017 = vunpack.c.h.b16 %v4330
      %v5018 = vunpack.c.l.b16 %v4331
      %v5019 = vunpack.c.h.b16 %v4331
      %v5020 = vunpack.c.l.b16 %v4332
      %v5021 = vunpack.c.h.b16 %v4332
      %v5022 = vunpack.c.l.b16 %v4333
      %v5023 = vunpack.c.h.b16 %v4333
      %v5024 = vunpack.c.l.b16 %v4334
      %v5025 = vunpack.c.h.b16 %v4334
      %v5026 = vunpack.c.l.b16 %v4335
      %v5027 = vunpack.c.h.b16 %v4335
      %v5028 = vunpack.c.l.b16 %v4336
      %v5029 = vunpack.c.h.b16 %v4336
      %v5030 = vunpack.c.l.b16 %v4337
      %v5031 = vunpack.c.h.b16 %v4337
      %v5032 = vunpack.c.l.b16 %v4338
      %v5033 = vunpack.c.h.b16 %v4338
      %v5034 = vunpack.c.l.b16 %v4339
      %v5035 = vunpack.c.h.b16 %v4339
      %v5036 = vunpack.c.l.b16 %v4340
      %v5037 = vunpack.c.h.b16 %v4340
      %v5038 = vunpack.c.l.b16 %v4341
      %v5039 = vunpack.c.h.b16 %v4341
      %v5040 = vunpack.c.l.b16 %v4342
      %v5041 = vunpack.c.h.b16 %v4342
      %v5042 = vunpack.c.l.b16 %v4343
      %v5043 = vunpack.c.h.b16 %v4343
      %v5044 = vunpack.c.l.b16 %v4344
      %v5045 = vunpack.c.h.b16 %v4344
      %v5046 = vunpack.c.l.b16 %v4345
      %v5047 = vunpack.c.h.b16 %v4345
      %v5048 = vunpack.c.l.b16 %v4346
      %v5049 = vunpack.c.h.b16 %v4346
      %v5050 = vunpack.c.l.b16 %v4347
      %v5051 = vunpack.c.h.b16 %v4347
      %v5052 = vunpack.c.l.b16 %v4348
      %v5053 = vunpack.c.h.b16 %v4348
      %v5054 = vunpack.c.l.b16 %v4349
      %v5055 = vunpack.c.h.b16 %v4349
      %v5056 = vunpack.c.l.b16 %v4350
      %v5057 = vunpack.c.h.b16 %v4350
      %v5058 = vunpack.c.l.b16 %v4351
      %v5059 = vunpack.c.h.b16 %v4351
      %v5060 = vunpack.c.l.b16 %v4352
      %v5061 = vunpack.c.h.b16 %v4352
      %v5062 = vunpack.c.l.b16 %v4353
      %v5063 = vunpack.c.h.b16 %v4353
      %v5064 = vunpack.c.l.b16 %v4354
      %v5065 = vunpack.c.h.b16 %v4354
      %v5066 = vunpack.c.l.b16 %v4355
      %v5067 = vunpack.c.h.b16 %v4355
      %v5068 = vunpack.c.l.b16 %v4356
      %v5069 = vunpack.c.h.b16 %v4356
      %v5070 = vunpack.c.l.b16 %v4357
      %v5071 = vunpack.c.h.b16 %v4357
      %v5072 = vunpack.c.l.b16 %v4358
      %v5073 = vunpack.c.h.b16 %v4358
      %v5074 = vunpack.c.l.b16 %v4359
      %v5075 = vunpack.c.h.b16 %v4359
      %v5076 = vunpack.c.l.b16 %v4360
      %v5077 = vunpack.c.h.b16 %v4360
      %v5078 = vunpack.c.l.b16 %v4361
      %v5079 = vunpack.c.h.b16 %v4361
      %v5080 = vunpack.c.l.b16 %v4362
      %v5081 = vunpack.c.h.b16 %v4362
      %v5082 = vunpack.c.l.b16 %v4363
      %v5083 = vunpack.c.h.b16 %v4363
      %v5084 = vunpack.c.l.b16 %v4364
      %v5085 = vunpack.c.h.b16 %v4364
      %v5086 = vunpack.c.l.b16 %v4365
      %v5087 = vunpack.c.h.b16 %v4365
      %v5088 = vunpack.c.l.b16 %v4366
      %v5089 = vunpack.c.h.b16 %v4366
      %v5090 = vunpack.c.l.b16 %v4367
      %v5091 = vunpack.c.h.b16 %v4367
      %v5092 = vunpack.c.l.b16 %v4368
      %v5093 = vunpack.c.h.b16 %v4368
      %v5094 = vunpack.c.l.b16 %v4369
      %v5095 = vunpack.c.h.b16 %v4369
      %v5096 = vunpack.c.l.b16 %v4370
      %v5097 = vunpack.c.h.b16 %v4370
      %v5098 = vunpack.c.l.b16 %v4371
      %v5099 = vunpack.c.h.b16 %v4371
      %v5100 = vunpack.c.l.b16 %v4372
      %v5101 = vunpack.c.h.b16 %v4372
      %v5102 = vunpack.c.l.b16 %v4373
      %v5103 = vunpack.c.h.b16 %v4373
      %v5104 = vunpack.c.l.b16 %v4374
      %v5105 = vunpack.c.h.b16 %v4374
      %v5106 = vunpack.c.l.b16 %v4375
      %v5107 = vunpack.c.h.b16 %v4375
      %v5108 = vunpack.c.l.b16 %v4376
      %v5109 = vunpack.c.h.b16 %v4376
      %v5110 = vunpack.c.l.b16 %v4377
      %v5111 = vunpack.c.h.b16 %v4377
      %v5112 = vunpack.c.l.b16 %v4378
      %v5113 = vunpack.c.h.b16 %v4378
      %v5114 = vunpack.c.l.b16 %v4379
      %v5115 = vunpack.c.h.b16 %v4379
      %v5116 = vunpack.c.l.b16 %v4380
      %v5117 = vunpack.c.h.b16 %v4380
      %v5118 = vunpack.c.l.b16 %v4381
      %v5119 = vunpack.c.h.b16 %v4381
      %v5120 = vunpack.c.l.b16 %v4382
      %v5121 = vunpack.c.h.b16 %v4382
      %v5122 = vunpack.c.l.b16 %v4383
      %v5123 = vunpack.c.h.b16 %v4383
      %v5124 = vunpack.c.l.b16 %v4384
      %v5125 = vunpack.c.h.b16 %v4384
      %v5126 = vunpack.c.l.b16 %v4385
      %v5127 = vunpack.c.h.b16 %v4385
      %v5128 = vunpack.c.l.b16 %v4386
      %v5129 = vunpack.c.h.b16 %v4386
      %v5130 = vunpack.c.l.b16 %v4387
      %v5131 = vunpack.c.h.b16 %v4387
      %v5132 = vunpack.c.l.b16 %v4388
      %v5133 = vunpack.c.h.b16 %v4388
      %v5134 = vunpack.c.l.b16 %v4389
      %v5135 = vunpack.c.h.b16 %v4389
      %v5136 = vunpack.c.l.b16 %v4390
      %v5137 = vunpack.c.h.b16 %v4390
      %v5138 = vunpack.c.l.b16 %v4391
      %v5139 = vunpack.c.h.b16 %v4391
      %v5140 = vunpack.c.l.b16 %v4392
      %v5141 = vunpack.c.h.b16 %v4392
      %v5142 = vunpack.c.l.b16 %v4393
      %v5143 = vunpack.c.h.b16 %v4393
      %v5144 = vunpack.c.l.b16 %v4394
      %v5145 = vunpack.c.h.b16 %v4394
      %v5146 = vunpack.c.l.b16 %v4395
      %v5147 = vunpack.c.h.b16 %v4395
      %v5148 = vunpack.c.l.b16 %v4396
      %v5149 = vunpack.c.h.b16 %v4396
      %v5150 = vunpack.c.l.b16 %v4397
      %v5151 = vunpack.c.h.b16 %v4397
      %v5152 = vunpack.c.l.b16 %v4398
      %v5153 = vunpack.c.h.b16 %v4398
      %v5154 = vunpack.c.l.b16 %v4399
      %v5155 = vunpack.c.h.b16 %v4399
      %v5156 = vunpack.c.l.b16 %v4400
      %v5157 = vunpack.c.h.b16 %v4400
      %v5158 = vunpack.c.l.b16 %v4401
      %v5159 = vunpack.c.h.b16 %v4401
      %v5160 = vunpack.c.l.b16 %v4402
      %v5161 = vunpack.c.h.b16 %v4402
      %v5162 = vunpack.c.l.b16 %v4403
      %v5163 = vunpack.c.h.b16 %v4403
      %v5164 = vunpack.c.l.b16 %v4404
      %v5165 = vunpack.c.h.b16 %v4404
      %v5166 = vunpack.c.l.b16 %v4405
      %v5167 = vunpack.c.h.b16 %v4405
      %v5168 = vunpack.c.l.b16 %v4406
      %v5169 = vunpack.c.h.b16 %v4406
      %v5170 = vunpack.c.l.b16 %v4407
      %v5171 = vunpack.c.h.b16 %v4407
      %v5172 = vunpack.c.l.b16 %v4408
      %v5173 = vunpack.c.h.b16 %v4408
      %v5174 = vunpack.c.l.b16 %v4409
      %v5175 = vunpack.c.h.b16 %v4409
      %v5176 = vunpack.c.l.b16 %v4410
      %v5177 = vunpack.c.h.b16 %v4410
      %v5178 = vunpack.c.l.b16 %v4411
      %v5179 = vunpack.c.h.b16 %v4411
      %v5180 = vunpack.c.l.b16 %v4412
      %v5181 = vunpack.c.h.b16 %v4412
      %v5182 = vunpack.c.l.b16 %v4413
      %v5183 = vunpack.c.h.b16 %v4413
      %v5184 = vunpack.c.l.b16 %v4414
      %v5185 = vunpack.c.h.b16 %v4414
      %v5186 = vunpack.c.l.b16 %v4415
      %v5187 = vunpack.c.h.b16 %v4415
      %v5188 = vunpack.c.l.b16 %v4416
      %v5189 = vunpack.c.h.b16 %v4416
      %v5190 = vunpack.c.l.b16 %v4417
      %v5191 = vunpack.c.h.b16 %v4417
      %v5192 = vunpack.c.l.b16 %v4418
      %v5193 = vunpack.c.h.b16 %v4418
      %v5194 = vunpack.c.l.b16 %v4419
      %v5195 = vunpack.c.h.b16 %v4419
      %v5196 = vunpack.c.l.b16 %v4420
      %v5197 = vunpack.c.h.b16 %v4420
      %v5198 = vunpack.c.l.b16 %v4421
      %v5199 = vunpack.c.h.b16 %v4421
      %v5200 = vunpack.c.l.b16 %v4422
      %v5201 = vunpack.c.h.b16 %v4422
      %v5202 = vunpack.c.l.b16 %v4423
      %v5203 = vunpack.c.h.b16 %v4423
      %v5204 = vunpack.c.l.b16 %v4424
      %v5205 = vunpack.c.h.b16 %v4424
      %v5206 = vunpack.c.l.b16 %v4425
      %v5207 = vunpack.c.h.b16 %v4425
      %v5208 = vunpack.c.l.b16 %v4426
      %v5209 = vunpack.c.h.b16 %v4426
      %v5210 = vunpack.c.l.b16 %v4427
      %v5211 = vunpack.c.h.b16 %v4427
      %v5212 = vunpack.c.l.b16 %v4428
      %v5213 = vunpack.c.h.b16 %v4428
      %v5214 = vunpack.c.l.b16 %v4429
      %v5215 = vunpack.c.h.b16 %v4429
      %v5216 = vpack.c.b16 %v4708, %v4704
      %v5217 = vpack.c.b16 %v4709, %v4705
      %v5218 = vpack.c.b16 %v4710, %v4706
      %v5219 = vpack.c.b16 %v4711, %v4707
      %v5220 = vpack.c.b16 %v4716, %v4712
      %v5221 = vpack.c.b16 %v4717, %v4713
      %v5222 = vpack.c.b16 %v4718, %v4714
      %v5223 = vpack.c.b16 %v4719, %v4715
      %v5224 = vpack.c.b16 %v4724, %v4720
      %v5225 = vpack.c.b16 %v4725, %v4721
      %v5226 = vpack.c.b16 %v4726, %v4722
      %v5227 = vpack.c.b16 %v4727, %v4723
      %v5228 = vpack.c.b16 %v4732, %v4728
      %v5229 = vpack.c.b16 %v4733, %v4729
      %v5230 = vpack.c.b16 %v4734, %v4730
      %v5231 = vpack.c.b16 %v4735, %v4731
      %v5232 = vpack.c.b16 %v4740, %v4736
      %v5233 = vpack.c.b16 %v4741, %v4737
      %v5234 = vpack.c.b16 %v4742, %v4738
      %v5235 = vpack.c.b16 %v4743, %v4739
      %v5236 = vpack.c.b16 %v4748, %v4744
      %v5237 = vpack.c.b16 %v4749, %v4745
      %v5238 = vpack.c.b16 %v4750, %v4746
      %v5239 = vpack.c.b16 %v4751, %v4747
      %v5240 = vpack.c.b16 %v4756, %v4752
      %v5241 = vpack.c.b16 %v4757, %v4753
      %v5242 = vpack.c.b16 %v4758, %v4754
      %v5243 = vpack.c.b16 %v4759, %v4755
      %v5244 = vpack.c.b16 %v4764, %v4760
      %v5245 = vpack.c.b16 %v4765, %v4761
      %v5246 = vpack.c.b16 %v4766, %v4762
      %v5247 = vpack.c.b16 %v4767, %v4763
      %v5248 = vpack.c.b16 %v4772, %v4768
      %v5249 = vpack.c.b16 %v4773, %v4769
      %v5250 = vpack.c.b16 %v4774, %v4770
      %v5251 = vpack.c.b16 %v4775, %v4771
      %v5252 = vpack.c.b16 %v4780, %v4776
      %v5253 = vpack.c.b16 %v4781, %v4777
      %v5254 = vpack.c.b16 %v4782, %v4778
      %v5255 = vpack.c.b16 %v4783, %v4779
      %v5256 = vpack.c.b16 %v4788, %v4784
      %v5257 = vpack.c.b16 %v4789, %v4785
      %v5258 = vpack.c.b16 %v4790, %v4786
      %v5259 = vpack.c.b16 %v4791, %v4787
      %v5260 = vpack.c.b16 %v4796, %v4792
      %v5261 = vpack.c.b16 %v4797, %v4793
      %v5262 = vpack.c.b16 %v4798, %v4794
      %v5263 = vpack.c.b16 %v4799, %v4795
      %v5264 = vpack.c.b16 %v4804, %v4800
      %v5265 = vpack.c.b16 %v4805, %v4801
      %v5266 = vpack.c.b16 %v4806, %v4802
      %v5267 = vpack.c.b16 %v4807, %v4803
      %v5268 = vpack.c.b16 %v4812, %v4808
      %v5269 = vpack.c.b16 %v4813, %v4809
      %v5270 = vpack.c.b16 %v4814, %v4810
      %v5271 = vpack.c.b16 %v4815, %v4811
      %v5272 = vpack.c.b16 %v4820, %v4816
      %v5273 = vpack.c.b16 %v4821, %v4817
      %v5274 = vpack.c.b16 %v4822, %v4818
      %v5275 = vpack.c.b16 %v4823, %v4819
      %v5276 = vpack.c.b16 %v4828, %v4824
      %v5277 = vpack.c.b16 %v4829, %v4825
      %v5278 = vpack.c.b16 %v4830, %v4826
      %v5279 = vpack.c.b16 %v4831, %v4827
      %v5280 = vpack.c.b16 %v4836, %v4832
      %v5281 = vpack.c.b16 %v4837, %v4833
      %v5282 = vpack.c.b16 %v4838, %v4834
      %v5283 = vpack.c.b16 %v4839, %v4835
      %v5284 = vpack.c.b16 %v4844, %v4840
      %v5285 = vpack.c.b16 %v4845, %v4841
      %v5286 = vpack.c.b16 %v4846, %v4842
      %v5287 = vpack.c.b16 %v4847, %v4843
      %v5288 = vpack.c.b16 %v4852, %v4848
      %v5289 = vpack.c.b16 %v4853, %v4849
      %v5290 = vpack.c.b16 %v4854, %v4850
      %v5291 = vpack.c.b16 %v4855, %v4851
      %v5292 = vpack.c.b16 %v4860, %v4856
      %v5293 = vpack.c.b16 %v4861, %v4857
      %v5294 = vpack.c.b16 %v4862, %v4858
      %v5295 = vpack.c.b16 %v4863, %v4859
      %v5296 = vpack.c.b16 %v4868, %v4864
      %v5297 = vpack.c.b16 %v4869, %v4865
      %v5298 = vpack.c.b16 %v4870, %v4866
      %v5299 = vpack.c.b16 %v4871, %v4867
      %v5300 = vpack.c.b16 %v4876, %v4872
      %v5301 = vpack.c.b16 %v4877, %v4873
      %v5302 = vpack.c.b16 %v4878, %v4874
      %v5303 = vpack.c.b16 %v4879, %v4875
      %v5304 = vpack.c.b16 %v4884, %v4880
      %v5305 = vpack.c.b16 %v4885, %v4881
      %v5306 = vpack.c.b16 %v4886, %v4882
      %v5307 = vpack.c.b16 %v4887, %v4883
      %v5308 = vpack.c.b16 %v4892, %v4888
      %v5309 = vpack.c.b16 %v4893, %v4889
      %v5310 = vpack.c.b16 %v4894, %v4890
      %v5311 = vpack.c.b16 %v4895, %v4891
      %v5312 = vpack.c.b16 %v4900, %v4896
      %v5313 = vpack.c.b16 %v4901, %v4897
      %v5314 = vpack.c.b16 %v4902, %v4898
      %v5315 = vpack.c.b16 %v4903, %v4899
      %v5316 = vpack.c.b16 %v4908, %v4904
      %v5317 = vpack.c.b16 %v4909, %v4905
      %v5318 = vpack.c.b16 %v4910, %v4906
      %v5319 = vpack.c.b16 %v4911, %v4907
      %v5320 = vpack.c.b16 %v4916, %v4912
      %v5321 = vpack.c.b16 %v4917, %v4913
      %v5322 = vpack.c.b16 %v4918, %v4914
      %v5323 = vpack.c.b16 %v4919, %v4915
      %v5324 = vpack.c.b16 %v4924, %v4920
      %v5325 = vpack.c.b16 %v4925, %v4921
      %v5326 = vpack.c.b16 %v4926, %v4922
      %v5327 = vpack.c.b16 %v4927, %v4923
      %v5328 = vpack.c.b16 %v4932, %v4928
      %v5329 = vpack.c.b16 %v4933, %v4929
      %v5330 = vpack.c.b16 %v4934, %v4930
      %v5331 = vpack.c.b16 %v4935, %v4931
      %v5332 = vpack.c.b16 %v4940, %v4936
      %v5333 = vpack.c.b16 %v4941, %v4937
      %v5334 = vpack.c.b16 %v4942, %v4938
      %v5335 = vpack.c.b16 %v4943, %v4939
      %v5336 = vpack.c.b16 %v4948, %v4944
      %v5337 = vpack.c.b16 %v4949, %v4945
      %v5338 = vpack.c.b16 %v4950, %v4946
      %v5339 = vpack.c.b16 %v4951, %v4947
      %v5340 = vpack.c.b16 %v4956, %v4952
      %v5341 = vpack.c.b16 %v4957, %v4953
      %v5342 = vpack.c.b16 %v4958, %v4954
      %v5343 = vpack.c.b16 %v4959, %v4955
      %v5344 = vpack.c.b16 %v4964, %v4960
      %v5345 = vpack.c.b16 %v4965, %v4961
      %v5346 = vpack.c.b16 %v4966, %v4962
      %v5347 = vpack.c.b16 %v4967, %v4963
      %v5348 = vpack.c.b16 %v4972, %v4968
      %v5349 = vpack.c.b16 %v4973, %v4969
      %v5350 = vpack.c.b16 %v4974, %v4970
      %v5351 = vpack.c.b16 %v4975, %v4971
      %v5352 = vpack.c.b16 %v4980, %v4976
      %v5353 = vpack.c.b16 %v4981, %v4977
      %v5354 = vpack.c.b16 %v4982, %v4978
      %v5355 = vpack.c.b16 %v4983, %v4979
      %v5356 = vpack.c.b16 %v4988, %v4984
      %v5357 = vpack.c.b16 %v4989, %v4985
      %v5358 = vpack.c.b16 %v4990, %v4986
      %v5359 = vpack.c.b16 %v4991, %v4987
      %v5360 = vpack.c.b16 %v4996, %v4992
      %v5361 = vpack.c.b16 %v4997, %v4993
      %v5362 = vpack.c.b16 %v4998, %v4994
      %v5363 = vpack.c.b16 %v4999, %v4995
      %v5364 = vpack.c.b16 %v5004, %v5000
      %v5365 = vpack.c.b16 %v5005, %v5001
      %v5366 = vpack.c.b16 %v5006, %v5002
      %v5367 = vpack.c.b16 %v5007, %v5003
      %v5368 = vpack.c.b16 %v5012, %v5008
      %v5369 = vpack.c.b16 %v5013, %v5009
      %v5370 = vpack.c.b16 %v5014, %v5010
      %v5371 = vpack.c.b16 %v5015, %v5011
      %v5372 = vpack.c.b16 %v5020, %v5016
      %v5373 = vpack.c.b16 %v5021, %v5017
      %v5374 = vpack.c.b16 %v5022, %v5018
      %v5375 = vpack.c.b16 %v5023, %v5019
      %v5376 = vpack.c.b16 %v5028, %v5024
      %v5377 = vpack.c.b16 %v5029, %v5025
      %v5378 = vpack.c.b16 %v5030, %v5026
      %v5379 = vpack.c.b16 %v5031, %v5027
      %v5380 = vpack.c.b16 %v5036, %v5032
      %v5381 = vpack.c.b16 %v5037, %v5033
      %v5382 = vpack.c.b16 %v5038, %v5034
      %v5383 = vpack.c.b16 %v5039, %v5035
      %v5384 = vpack.c.b16 %v5044, %v5040
      %v5385 = vpack.c.b16 %v5045, %v5041
      %v5386 = vpack.c.b16 %v5046, %v5042
      %v5387 = vpack.c.b16 %v5047, %v5043
      %v5388 = vpack.c.b16 %v5052, %v5048
      %v5389 = vpack.c.b16 %v5053, %v5049
      %v5390 = vpack.c.b16 %v5054, %v5050
      %v5391 = vpack.c.b16 %v5055, %v5051
      %v5392 = vpack.c.b16 %v5060, %v5056
      %v5393 = vpack.c.b16 %v5061, %v5057
      %v5394 = vpack.c.b16 %v5062, %v5058
      %v5395 = vpack.c.b16 %v5063, %v5059
      %v5396 = vpack.c.b16 %v5068, %v5064
      %v5397 = vpack.c.b16 %v5069, %v5065
      %v5398 = vpack.c.b16 %v5070, %v5066
      %v5399 = vpack.c.b16 %v5071, %v5067
      %v5400 = vpack.c.b16 %v5076, %v5072
      %v5401 = vpack.c.b16 %v5077, %v5073
      %v5402 = vpack.c.b16 %v5078, %v5074
      %v5403 = vpack.c.b16 %v5079, %v5075
      %v5404 = vpack.c.b16 %v5084, %v5080
      %v5405 = vpack.c.b16 %v5085, %v5081
      %v5406 = vpack.c.b16 %v5086, %v5082
      %v5407 = vpack.c.b16 %v5087, %v5083
      %v5408 = vpack.c.b16 %v5092, %v5088
      %v5409 = vpack.c.b16 %v5093, %v5089
      %v5410 = vpack.c.b16 %v5094, %v5090
      %v5411 = vpack.c.b16 %v5095, %v5091
      %v5412 = vpack.c.b16 %v5100, %v5096
      %v5413 = vpack.c.b16 %v5101, %v5097
      %v5414 = vpack.c.b16 %v5102, %v5098
      %v5415 = vpack.c.b16 %v5103, %v5099
      %v5416 = vpack.c.b16 %v5108, %v5104
      %v5417 = vpack.c.b16 %v5109, %v5105
      %v5418 = vpack.c.b16 %v5110, %v5106
      %v5419 = vpack.c.b16 %v5111, %v5107
      %v5420 = vpack.c.b16 %v5116, %v5112
      %v5421 = vpack.c.b16 %v5117, %v5113
      %v5422 = vpack.c.b16 %v5118, %v5114
      %v5423 = vpack.c.b16 %v5119, %v5115
      %v5424 = vpack.c.b16 %v5124, %v5120
      %v5425 = vpack.c.b16 %v5125, %v5121
      %v5426 = vpack.c.b16 %v5126, %v5122
      %v5427 = vpack.c.b16 %v5127, %v5123
      %v5428 = vpack.c.b16 %v5132, %v5128
      %v5429 = vpack.c.b16 %v5133, %v5129
      %v5430 = vpack.c.b16 %v5134, %v5130
      %v5431 = vpack.c.b16 %v5135, %v5131
      %v5432 = vpack.c.b16 %v5140, %v5136
      %v5433 = vpack.c.b16 %v5141, %v5137
      %v5434 = vpack.c.b16 %v5142, %v5138
      %v5435 = vpack.c.b16 %v5143, %v5139
      %v5436 = vpack.c.b16 %v5148, %v5144
      %v5437 = vpack.c.b16 %v5149, %v5145
      %v5438 = vpack.c.b16 %v5150, %v5146
      %v5439 = vpack.c.b16 %v5151, %v5147
      %v5440 = vpack.c.b16 %v5156, %v5152
      %v5441 = vpack.c.b16 %v5157, %v5153
      %v5442 = vpack.c.b16 %v5158, %v5154
      %v5443 = vpack.c.b16 %v5159, %v5155
      %v5444 = vpack.c.b16 %v5164, %v5160
      %v5445 = vpack.c.b16 %v5165, %v5161
      %v5446 = vpack.c.b16 %v5166, %v5162
      %v5447 = vpack.c.b16 %v5167, %v5163
      %v5448 = vpack.c.b16 %v5172, %v5168
      %v5449 = vpack.c.b16 %v5173, %v5169
      %v5450 = vpack.c.b16 %v5174, %v5170
      %v5451 = vpack.c.b16 %v5175, %v5171
      %v5452 = vpack.c.b16 %v5180, %v5176
      %v5453 = vpack.c.b16 %v5181, %v5177
      %v5454 = vpack.c.b16 %v5182, %v5178
      %v5455 = vpack.c.b16 %v5183, %v5179
      %v5456 = vpack.c.b16 %v5188, %v5184
      %v5457 = vpack.c.b16 %v5189, %v5185
      %v5458 = vpack.c.b16 %v5190, %v5186
      %v5459 = vpack.c.b16 %v5191, %v5187
      %v5460 = vpack.c.b16 %v5196, %v5192
      %v5461 = vpack.c.b16 %v5197, %v5193
      %v5462 = vpack.c.b16 %v5198, %v5194
      %v5463 = vpack.c.b16 %v5199, %v5195
      %v5464 = vpack.c.b16 %v5204, %v5200
      %v5465 = vpack.c.b16 %v5205, %v5201
      %v5466 = vpack.c.b16 %v5206, %v5202
      %v5467 = vpack.c.b16 %v5207, %v5203
      %v5468 = vpack.c.b16 %v5212, %v5208
      %v5469 = vpack.c.b16 %v5213, %v5209
      %v5470 = vpack.c.b16 %v5214, %v5210
      %v5471 = vpack.c.b16 %v5215, %v5211
      %5728 = vmatpush.bf16.msra.mxu0 %v5244
      %5729 = vmatpush.bf16.msra.mxu0 %v5240
      %5730 = vmatpush.bf16.msra.mxu0 %v5236
      %5731 = vmatpush.bf16.msra.mxu0 %v5232
      %5732 = vmatpush.bf16.msra.mxu0 %v5228
      %5733 = vmatpush.bf16.msra.mxu0 %v5224
      %5734 = vmatpush.bf16.msra.mxu0 %v5220
      %5735 = vmatpush.bf16.msra.mxu0 %v5216
      %5736 = vmatmul.bf16.gmra.mxu0 %v4432
      %v5737 = vpop.f32.mrf.mxu0
      %v5738 = vadd.f32 0.0, %v5737
      %v5739 = vpop.f32.mrf.mxu0
      %5740 = vdwg.mxu0
      %5741 = vmatpush.bf16.msra.mxu0 %v5276
      %5742 = vmatpush.bf16.msra.mxu0 %v5272
      %5743 = vmatpush.bf16.msra.mxu0 %v5268
      %5744 = vmatpush.bf16.msra.mxu0 %v5264
      %5745 = vmatpush.bf16.msra.mxu0 %v5260
      %5746 = vmatpush.bf16.msra.mxu0 %v5256
      %5747 = vmatpush.bf16.msra.mxu0 %v5252
      %5748 = vmatpush.bf16.msra.mxu0 %v5248
      %5749 = vmatmul.bf16.gmra.mxu0 %v4433
      %v5750 = vpop.f32.mrf.mxu0
      %v5751 = vadd.f32 %v5738, %v5750
      %v5752 = vpop.f32.mrf.mxu0
      %5753 = vdwg.mxu0
      %5754 = vmatpush.bf16.msra.mxu0 %v5308
      %5755 = vmatpush.bf16.msra.mxu0 %v5304
      %5756 = vmatpush.bf16.msra.mxu0 %v5300
      %5757 = vmatpush.bf16.msra.mxu0 %v5296
      %5758 = vmatpush.bf16.msra.mxu0 %v5292
      %5759 = vmatpush.bf16.msra.mxu0 %v5288
      %5760 = vmatpush.bf16.msra.mxu0 %v5284
      %5761 = vmatpush.bf16.msra.mxu0 %v5280
      %5762 = vmatmul.bf16.gmra.mxu0 %v4434
      %v5763 = vpop.f32.mrf.mxu0
      %v5764 = vadd.f32 %v5751, %v5763
      %v5765 = vpop.f32.mrf.mxu0
      %5766 = vdwg.mxu0
      %5767 = vmatpush.bf16.msra.mxu0 %v5340
      %5768 = vmatpush.bf16.msra.mxu0 %v5336
      %5769 = vmatpush.bf16.msra.mxu0 %v5332
      %5770 = vmatpush.bf16.msra.mxu0 %v5328
      %5771 = vmatpush.bf16.msra.mxu0 %v5324
      %5772 = vmatpush.bf16.msra.mxu0 %v5320
      %5773 = vmatpush.bf16.msra.mxu0 %v5316
      %5774 = vmatpush.bf16.msra.mxu0 %v5312
      %5775 = vmatmul.bf16.gmra.mxu0 %v4435
      %v5776 = vpop.f32.mrf.mxu0
      %v5777 = vadd.f32 %v5764, %v5776
      %v5778 = vpop.f32.mrf.mxu0
      %5779 = vdwg.mxu0
      %5780 = vmatpush.bf16.msra.mxu0 %v5372
      %5781 = vmatpush.bf16.msra.mxu0 %v5368
      %5782 = vmatpush.bf16.msra.mxu0 %v5364
      %5783 = vmatpush.bf16.msra.mxu0 %v5360
      %5784 = vmatpush.bf16.msra.mxu0 %v5356
      %5785 = vmatpush.bf16.msra.mxu0 %v5352
      %5786 = vmatpush.bf16.msra.mxu0 %v5348
      %5787 = vmatpush.bf16.msra.mxu0 %v5344
      %5788 = vmatmul.bf16.gmra.mxu0 %v4436
      %v5789 = vpop.f32.mrf.mxu0
      %v5790 = vadd.f32 %v5777, %v5789
      %v5791 = vpop.f32.mrf.mxu0
      %5792 = vdwg.mxu0
      %5793 = vmatpush.bf16.msra.mxu0 %v5404
      %5794 = vmatpush.bf16.msra.mxu0 %v5400
      %5795 = vmatpush.bf16.msra.mxu0 %v5396
      %5796 = vmatpush.bf16.msra.mxu0 %v5392
      %5797 = vmatpush.bf16.msra.mxu0 %v5388
      %5798 = vmatpush.bf16.msra.mxu0 %v5384
      %5799 = vmatpush.bf16.msra.mxu0 %v5380
      %5800 = vmatpush.bf16.msra.mxu0 %v5376
      %5801 = vmatmul.bf16.gmra.mxu0 %v4437
      %v5802 = vpop.f32.mrf.mxu0
      %v5803 = vadd.f32 %v5790, %v5802
      %v5804 = vpop.f32.mrf.mxu0
      %5805 = vdwg.mxu0
      %5806 = vmatpush.bf16.msra.mxu0 %v5436
      %5807 = vmatpush.bf16.msra.mxu0 %v5432
      %5808 = vmatpush.bf16.msra.mxu0 %v5428
      %5809 = vmatpush.bf16.msra.mxu0 %v5424
      %5810 = vmatpush.bf16.msra.mxu0 %v5420
      %5811 = vmatpush.bf16.msra.mxu0 %v5416
      %5812 = vmatpush.bf16.msra.mxu0 %v5412
      %5813 = vmatpush.bf16.msra.mxu0 %v5408
      %5814 = vmatmul.bf16.gmra.mxu0 %v4438
      %v5815 = vpop.f32.mrf.mxu0
      %v5816 = vadd.f32 %v5803, %v5815
      %v5817 = vpop.f32.mrf.mxu0
      %5818 = vdwg.mxu0
      %5819 = vmatpush.bf16.msra.mxu0 %v5468
      %5820 = vmatpush.bf16.msra.mxu0 %v5464
      %5821 = vmatpush.bf16.msra.mxu0 %v5460
      %5822 = vmatpush.bf16.msra.mxu0 %v5456
      %5823 = vmatpush.bf16.msra.mxu0 %v5452
      %5824 = vmatpush.bf16.msra.mxu0 %v5448
      %5825 = vmatpush.bf16.msra.mxu0 %v5444
      %5826 = vmatpush.bf16.msra.mxu0 %v5440
      %5827 = vmatmul.bf16.gmra.mxu0 %v4439
      %v5828 = vpop.f32.mrf.mxu0
      %v5829 = vadd.f32 %v5816, %v5828
      %v5830 = vpop.f32.mrf.mxu0
      %5831 = vdwg.mxu0
      %5832 = vmatpush.bf16.msra.mxu0 %v5245
      %5833 = vmatpush.bf16.msra.mxu0 %v5241
      %5834 = vmatpush.bf16.msra.mxu0 %v5237
      %5835 = vmatpush.bf16.msra.mxu0 %v5233
      %5836 = vmatpush.bf16.msra.mxu0 %v5229
      %5837 = vmatpush.bf16.msra.mxu0 %v5225
      %5838 = vmatpush.bf16.msra.mxu0 %v5221
      %5839 = vmatpush.bf16.msra.mxu0 %v5217
      %5840 = vmatmul.bf16.gmra.mxu0 %v4432
      %v5841 = vpop.f32.mrf.mxu0
      %v5842 = vadd.f32 0.0, %v5841
      %v5843 = vpop.f32.mrf.mxu0
      %5844 = vdwg.mxu0
      %5845 = vmatpush.bf16.msra.mxu0 %v5277
      %5846 = vmatpush.bf16.msra.mxu0 %v5273
      %5847 = vmatpush.bf16.msra.mxu0 %v5269
      %5848 = vmatpush.bf16.msra.mxu0 %v5265
      %5849 = vmatpush.bf16.msra.mxu0 %v5261
      %5850 = vmatpush.bf16.msra.mxu0 %v5257
      %5851 = vmatpush.bf16.msra.mxu0 %v5253
      %5852 = vmatpush.bf16.msra.mxu0 %v5249
      %5853 = vmatmul.bf16.gmra.mxu0 %v4433
      %v5854 = vpop.f32.mrf.mxu0
      %v5855 = vadd.f32 %v5842, %v5854
      %v5856 = vpop.f32.mrf.mxu0
      %5857 = vdwg.mxu0
      %5858 = vmatpush.bf16.msra.mxu0 %v5309
      %5859 = vmatpush.bf16.msra.mxu0 %v5305
      %5860 = vmatpush.bf16.msra.mxu0 %v5301
      %5861 = vmatpush.bf16.msra.mxu0 %v5297
      %5862 = vmatpush.bf16.msra.mxu0 %v5293
      %5863 = vmatpush.bf16.msra.mxu0 %v5289
      %5864 = vmatpush.bf16.msra.mxu0 %v5285
      %5865 = vmatpush.bf16.msra.mxu0 %v5281
      %5866 = vmatmul.bf16.gmra.mxu0 %v4434
      %v5867 = vpop.f32.mrf.mxu0
      %v5868 = vadd.f32 %v5855, %v5867
      %v5869 = vpop.f32.mrf.mxu0
      %5870 = vdwg.mxu0
      %5871 = vmatpush.bf16.msra.mxu0 %v5341
      %5872 = vmatpush.bf16.msra.mxu0 %v5337
      %5873 = vmatpush.bf16.msra.mxu0 %v5333
      %5874 = vmatpush.bf16.msra.mxu0 %v5329
      %5875 = vmatpush.bf16.msra.mxu0 %v5325
      %5876 = vmatpush.bf16.msra.mxu0 %v5321
      %5877 = vmatpush.bf16.msra.mxu0 %v5317
      %5878 = vmatpush.bf16.msra.mxu0 %v5313
      %5879 = vmatmul.bf16.gmra.mxu0 %v4435
      %v5880 = vpop.f32.mrf.mxu0
      %v5881 = vadd.f32 %v5868, %v5880
      %v5882 = vpop.f32.mrf.mxu0
      %5883 = vdwg.mxu0
      %5884 = vmatpush.bf16.msra.mxu0 %v5373
      %5885 = vmatpush.bf16.msra.mxu0 %v5369
      %5886 = vmatpush.bf16.msra.mxu0 %v5365
      %5887 = vmatpush.bf16.msra.mxu0 %v5361
      %5888 = vmatpush.bf16.msra.mxu0 %v5357
      %5889 = vmatpush.bf16.msra.mxu0 %v5353
      %5890 = vmatpush.bf16.msra.mxu0 %v5349
      %5891 = vmatpush.bf16.msra.mxu0 %v5345
      %5892 = vmatmul.bf16.gmra.mxu0 %v4436
      %v5893 = vpop.f32.mrf.mxu0
      %v5894 = vadd.f32 %v5881, %v5893
      %v5895 = vpop.f32.mrf.mxu0
      %5896 = vdwg.mxu0
      %5897 = vmatpush.bf16.msra.mxu0 %v5405
      %5898 = vmatpush.bf16.msra.mxu0 %v5401
      %5899 = vmatpush.bf16.msra.mxu0 %v5397
      %5900 = vmatpush.bf16.msra.mxu0 %v5393
      %5901 = vmatpush.bf16.msra.mxu0 %v5389
      %5902 = vmatpush.bf16.msra.mxu0 %v5385
      %5903 = vmatpush.bf16.msra.mxu0 %v5381
      %5904 = vmatpush.bf16.msra.mxu0 %v5377
      %5905 = vmatmul.bf16.gmra.mxu0 %v4437
      %v5906 = vpop.f32.mrf.mxu0
      %v5907 = vadd.f32 %v5894, %v5906
      %v5908 = vpop.f32.mrf.mxu0
      %5909 = vdwg.mxu0
      %5910 = vmatpush.bf16.msra.mxu0 %v5437
      %5911 = vmatpush.bf16.msra.mxu0 %v5433
      %5912 = vmatpush.bf16.msra.mxu0 %v5429
      %5913 = vmatpush.bf16.msra.mxu0 %v5425
      %5914 = vmatpush.bf16.msra.mxu0 %v5421
      %5915 = vmatpush.bf16.msra.mxu0 %v5417
      %5916 = vmatpush.bf16.msra.mxu0 %v5413
      %5917 = vmatpush.bf16.msra.mxu0 %v5409
      %5918 = vmatmul.bf16.gmra.mxu0 %v4438
      %v5919 = vpop.f32.mrf.mxu0
      %v5920 = vadd.f32 %v5907, %v5919
      %v5921 = vpop.f32.mrf.mxu0
      %5922 = vdwg.mxu0
      %5923 = vmatpush.bf16.msra.mxu0 %v5469
      %5924 = vmatpush.bf16.msra.mxu0 %v5465
      %5925 = vmatpush.bf16.msra.mxu0 %v5461
      %5926 = vmatpush.bf16.msra.mxu0 %v5457
      %5927 = vmatpush.bf16.msra.mxu0 %v5453
      %5928 = vmatpush.bf16.msra.mxu0 %v5449
      %5929 = vmatpush.bf16.msra.mxu0 %v5445
      %5930 = vmatpush.bf16.msra.mxu0 %v5441
      %5931 = vmatmul.bf16.gmra.mxu0 %v4439
      %v5932 = vpop.f32.mrf.mxu0
      %v5933 = vadd.f32 %v5920, %v5932
      %v5934 = vpop.f32.mrf.mxu0
      %5935 = vdwg.mxu0
      %5936 = vmatpush.bf16.msra.mxu0 %v5246
      %5937 = vmatpush.bf16.msra.mxu0 %v5242
      %5938 = vmatpush.bf16.msra.mxu0 %v5238
      %5939 = vmatpush.bf16.msra.mxu0 %v5234
      %5940 = vmatpush.bf16.msra.mxu0 %v5230
      %5941 = vmatpush.bf16.msra.mxu0 %v5226
      %5942 = vmatpush.bf16.msra.mxu0 %v5222
      %5943 = vmatpush.bf16.msra.mxu0 %v5218
      %5944 = vmatmul.bf16.gmra.mxu0 %v4432
      %v5945 = vpop.f32.mrf.mxu0
      %v5946 = vadd.f32 0.0, %v5945
      %v5947 = vpop.f32.mrf.mxu0
      %5948 = vdwg.mxu0
      %5949 = vmatpush.bf16.msra.mxu0 %v5278
      %5950 = vmatpush.bf16.msra.mxu0 %v5274
      %5951 = vmatpush.bf16.msra.mxu0 %v5270
      %5952 = vmatpush.bf16.msra.mxu0 %v5266
      %5953 = vmatpush.bf16.msra.mxu0 %v5262
      %5954 = vmatpush.bf16.msra.mxu0 %v5258
      %5955 = vmatpush.bf16.msra.mxu0 %v5254
      %5956 = vmatpush.bf16.msra.mxu0 %v5250
      %5957 = vmatmul.bf16.gmra.mxu0 %v4433
      %v5958 = vpop.f32.mrf.mxu0
      %v5959 = vadd.f32 %v5946, %v5958
      %v5960 = vpop.f32.mrf.mxu0
      %5961 = vdwg.mxu0
      %5962 = vmatpush.bf16.msra.mxu0 %v5310
      %5963 = vmatpush.bf16.msra.mxu0 %v5306
      %5964 = vmatpush.bf16.msra.mxu0 %v5302
      %5965 = vmatpush.bf16.msra.mxu0 %v5298
      %5966 = vmatpush.bf16.msra.mxu0 %v5294
      %5967 = vmatpush.bf16.msra.mxu0 %v5290
      %5968 = vmatpush.bf16.msra.mxu0 %v5286
      %5969 = vmatpush.bf16.msra.mxu0 %v5282
      %5970 = vmatmul.bf16.gmra.mxu0 %v4434
      %v5971 = vpop.f32.mrf.mxu0
      %v5972 = vadd.f32 %v5959, %v5971
      %v5973 = vpop.f32.mrf.mxu0
      %5974 = vdwg.mxu0
      %5975 = vmatpush.bf16.msra.mxu0 %v5342
      %5976 = vmatpush.bf16.msra.mxu0 %v5338
      %5977 = vmatpush.bf16.msra.mxu0 %v5334
      %5978 = vmatpush.bf16.msra.mxu0 %v5330
      %5979 = vmatpush.bf16.msra.mxu0 %v5326
      %5980 = vmatpush.bf16.msra.mxu0 %v5322
      %5981 = vmatpush.bf16.msra.mxu0 %v5318
      %5982 = vmatpush.bf16.msra.mxu0 %v5314
      %5983 = vmatmul.bf16.gmra.mxu0 %v4435
      %v5984 = vpop.f32.mrf.mxu0
      %v5985 = vadd.f32 %v5972, %v5984
      %v5986 = vpop.f32.mrf.mxu0
      %5987 = vdwg.mxu0
      %5988 = vmatpush.bf16.msra.mxu0 %v5374
      %5989 = vmatpush.bf16.msra.mxu0 %v5370
      %5990 = vmatpush.bf16.msra.mxu0 %v5366
      %5991 = vmatpush.bf16.msra.mxu0 %v5362
      %5992 = vmatpush.bf16.msra.mxu0 %v5358
      %5993 = vmatpush.bf16.msra.mxu0 %v5354
      %5994 = vmatpush.bf16.msra.mxu0 %v5350
      %5995 = vmatpush.bf16.msra.mxu0 %v5346
      %5996 = vmatmul.bf16.gmra.mxu0 %v4436
      %v5997 = vpop.f32.mrf.mxu0
      %v5998 = vadd.f32 %v5985, %v5997
      %v5999 = vpop.f32.mrf.mxu0
      %6000 = vdwg.mxu0
      %6001 = vmatpush.bf16.msra.mxu0 %v5406
      %6002 = vmatpush.bf16.msra.mxu0 %v5402
      %6003 = vmatpush.bf16.msra.mxu0 %v5398
      %6004 = vmatpush.bf16.msra.mxu0 %v5394
      %6005 = vmatpush.bf16.msra.mxu0 %v5390
      %6006 = vmatpush.bf16.msra.mxu0 %v5386
      %6007 = vmatpush.bf16.msra.mxu0 %v5382
      %6008 = vmatpush.bf16.msra.mxu0 %v5378
      %6009 = vmatmul.bf16.gmra.mxu0 %v4437
      %v6010 = vpop.f32.mrf.mxu0
      %v6011 = vadd.f32 %v5998, %v6010
      %v6012 = vpop.f32.mrf.mxu0
      %6013 = vdwg.mxu0
      %6014 = vmatpush.bf16.msra.mxu0 %v5438
      %6015 = vmatpush.bf16.msra.mxu0 %v5434
      %6016 = vmatpush.bf16.msra.mxu0 %v5430
      %6017 = vmatpush.bf16.msra.mxu0 %v5426
      %6018 = vmatpush.bf16.msra.mxu0 %v5422
      %6019 = vmatpush.bf16.msra.mxu0 %v5418
      %6020 = vmatpush.bf16.msra.mxu0 %v5414
      %6021 = vmatpush.bf16.msra.mxu0 %v5410
      %6022 = vmatmul.bf16.gmra.mxu0 %v4438
      %v6023 = vpop.f32.mrf.mxu0
      %v6024 = vadd.f32 %v6011, %v6023
      %v6025 = vpop.f32.mrf.mxu0
      %6026 = vdwg.mxu0
      %6027 = vmatpush.bf16.msra.mxu0 %v5470
      %6028 = vmatpush.bf16.msra.mxu0 %v5466
      %6029 = vmatpush.bf16.msra.mxu0 %v5462
      %6030 = vmatpush.bf16.msra.mxu0 %v5458
      %6031 = vmatpush.bf16.msra.mxu0 %v5454
      %6032 = vmatpush.bf16.msra.mxu0 %v5450
      %6033 = vmatpush.bf16.msra.mxu0 %v5446
      %6034 = vmatpush.bf16.msra.mxu0 %v5442
      %6035 = vmatmul.bf16.gmra.mxu0 %v4439
      %v6036 = vpop.f32.mrf.mxu0
      %v6037 = vadd.f32 %v6024, %v6036
      %v6038 = vpop.f32.mrf.mxu0
      %6039 = vdwg.mxu0
      %6040 = vmatpush.bf16.msra.mxu0 %v5247
      %6041 = vmatpush.bf16.msra.mxu0 %v5243
      %6042 = vmatpush.bf16.msra.mxu0 %v5239
      %6043 = vmatpush.bf16.msra.mxu0 %v5235
      %6044 = vmatpush.bf16.msra.mxu0 %v5231
      %6045 = vmatpush.bf16.msra.mxu0 %v5227
      %6046 = vmatpush.bf16.msra.mxu0 %v5223
      %6047 = vmatpush.bf16.msra.mxu0 %v5219
      %6048 = vmatmul.bf16.gmra.mxu0 %v4432
      %v6049 = vpop.f32.mrf.mxu0
      %v6050 = vadd.f32 0.0, %v6049
      %v6051 = vpop.f32.mrf.mxu0
      %6052 = vdwg.mxu0
      %6053 = vmatpush.bf16.msra.mxu0 %v5279
      %6054 = vmatpush.bf16.msra.mxu0 %v5275
      %6055 = vmatpush.bf16.msra.mxu0 %v5271
      %6056 = vmatpush.bf16.msra.mxu0 %v5267
      %6057 = vmatpush.bf16.msra.mxu0 %v5263
      %6058 = vmatpush.bf16.msra.mxu0 %v5259
      %6059 = vmatpush.bf16.msra.mxu0 %v5255
      %6060 = vmatpush.bf16.msra.mxu0 %v5251
      %6061 = vmatmul.bf16.gmra.mxu0 %v4433
      %v6062 = vpop.f32.mrf.mxu0
      %v6063 = vadd.f32 %v6050, %v6062
      %v6064 = vpop.f32.mrf.mxu0
      %6065 = vdwg.mxu0
      %6066 = vmatpush.bf16.msra.mxu0 %v5311
      %6067 = vmatpush.bf16.msra.mxu0 %v5307
      %6068 = vmatpush.bf16.msra.mxu0 %v5303
      %6069 = vmatpush.bf16.msra.mxu0 %v5299
      %6070 = vmatpush.bf16.msra.mxu0 %v5295
      %6071 = vmatpush.bf16.msra.mxu0 %v5291
      %6072 = vmatpush.bf16.msra.mxu0 %v5287
      %6073 = vmatpush.bf16.msra.mxu0 %v5283
      %6074 = vmatmul.bf16.gmra.mxu0 %v4434
      %v6075 = vpop.f32.mrf.mxu0
      %v6076 = vadd.f32 %v6063, %v6075
      %v6077 = vpop.f32.mrf.mxu0
      %6078 = vdwg.mxu0
      %6079 = vmatpush.bf16.msra.mxu0 %v5343
      %6080 = vmatpush.bf16.msra.mxu0 %v5339
      %6081 = vmatpush.bf16.msra.mxu0 %v5335
      %6082 = vmatpush.bf16.msra.mxu0 %v5331
      %6083 = vmatpush.bf16.msra.mxu0 %v5327
      %6084 = vmatpush.bf16.msra.mxu0 %v5323
      %6085 = vmatpush.bf16.msra.mxu0 %v5319
      %6086 = vmatpush.bf16.msra.mxu0 %v5315
      %6087 = vmatmul.bf16.gmra.mxu0 %v4435
      %v6088 = vpop.f32.mrf.mxu0
      %v6089 = vadd.f32 %v6076, %v6088
      %v6090 = vpop.f32.mrf.mxu0
      %6091 = vdwg.mxu0
      %6092 = vmatpush.bf16.msra.mxu0 %v5375
      %6093 = vmatpush.bf16.msra.mxu0 %v5371
      %6094 = vmatpush.bf16.msra.mxu0 %v5367
      %6095 = vmatpush.bf16.msra.mxu0 %v5363
      %6096 = vmatpush.bf16.msra.mxu0 %v5359
      %6097 = vmatpush.bf16.msra.mxu0 %v5355
      %6098 = vmatpush.bf16.msra.mxu0 %v5351
      %6099 = vmatpush.bf16.msra.mxu0 %v5347
      %6100 = vmatmul.bf16.gmra.mxu0 %v4436
      %v6101 = vpop.f32.mrf.mxu0
      %v6102 = vadd.f32 %v6089, %v6101
      %v6103 = vpop.f32.mrf.mxu0
      %6104 = vdwg.mxu0
      %6105 = vmatpush.bf16.msra.mxu0 %v5407
      %6106 = vmatpush.bf16.msra.mxu0 %v5403
      %6107 = vmatpush.bf16.msra.mxu0 %v5399
      %6108 = vmatpush.bf16.msra.mxu0 %v5395
      %6109 = vmatpush.bf16.msra.mxu0 %v5391
      %6110 = vmatpush.bf16.msra.mxu0 %v5387
      %6111 = vmatpush.bf16.msra.mxu0 %v5383
      %6112 = vmatpush.bf16.msra.mxu0 %v5379
      %6113 = vmatmul.bf16.gmra.mxu0 %v4437
      %v6114 = vpop.f32.mrf.mxu0
      %v6115 = vadd.f32 %v6102, %v6114
      %v6116 = vpop.f32.mrf.mxu0
      %6117 = vdwg.mxu0
      %6118 = vmatpush.bf16.msra.mxu0 %v5439
      %6119 = vmatpush.bf16.msra.mxu0 %v5435
      %6120 = vmatpush.bf16.msra.mxu0 %v5431
      %6121 = vmatpush.bf16.msra.mxu0 %v5427
      %6122 = vmatpush.bf16.msra.mxu0 %v5423
      %6123 = vmatpush.bf16.msra.mxu0 %v5419
      %6124 = vmatpush.bf16.msra.mxu0 %v5415
      %6125 = vmatpush.bf16.msra.mxu0 %v5411
      %6126 = vmatmul.bf16.gmra.mxu0 %v4438
      %v6127 = vpop.f32.mrf.mxu0
      %v6128 = vadd.f32 %v6115, %v6127
      %v6129 = vpop.f32.mrf.mxu0
      %6130 = vdwg.mxu0
      %6131 = vmatpush.bf16.msra.mxu0 %v5471
      %6132 = vmatpush.bf16.msra.mxu0 %v5467
      %6133 = vmatpush.bf16.msra.mxu0 %v5463
      %6134 = vmatpush.bf16.msra.mxu0 %v5459
      %6135 = vmatpush.bf16.msra.mxu0 %v5455
      %6136 = vmatpush.bf16.msra.mxu0 %v5451
      %6137 = vmatpush.bf16.msra.mxu0 %v5447
      %6138 = vmatpush.bf16.msra.mxu0 %v5443
      %6139 = vmatmul.bf16.gmra.mxu0 %v4439
      %v6140 = vpop.f32.mrf.mxu0
      %v6141 = vadd.f32 %v6128, %v6140
      %v6142 = vpop.f32.mrf.mxu0
      %6143 = vdwg.mxu0
      %v6144 = vadd.f32 %v3856, %v5829
      %v6145 = vadd.f32 %v3960, %v5933
      %v6146 = vadd.f32 %v4064, %v6037
      %v6147 = vadd.f32 %v4168, %v6141
      %v6148 = vld [vmem:[%s4171] sm:$0xff]
      %s6149 = scalar_lea.vmem %s1, 6144
      %v6150 = vld [vmem:[%s6149] sm:$0xff]
      %v6151 = vld [vmem:[%s6149 + $0x8] sm:$0xff]
      %v6152 = vld [vmem:[%s6149 + $0x10] sm:$0xff]
      %v6153 = vld [vmem:[%s6149 + $0x18] sm:$0xff]
      %v6154 = vld [vmem:[%s6149 + $0x20] sm:$0xff]
      %v6155 = vld [vmem:[%s6149 + $0x28] sm:$0xff]
      %v6156 = vld [vmem:[%s6149 + $0x30] sm:$0xff]
      %v6157 = vld [vmem:[%s6149 + $0x38] sm:$0xff]
      %v6158 = vld [vmem:[%s6149 + $0x40] sm:$0xff]
      %v6159 = vld [vmem:[%s6149 + $0x48] sm:$0xff]
      %v6160 = vld [vmem:[%s6149 + $0x50] sm:$0xff]
      %v6161 = vld [vmem:[%s6149 + $0x58] sm:$0xff]
      %v6162 = vld [vmem:[%s6149 + $0x60] sm:$0xff]
      %v6163 = vld [vmem:[%s6149 + $0x68] sm:$0xff]
      %v6164 = vld [vmem:[%s6149 + $0x70] sm:$0xff]
      %v6165 = vld [vmem:[%s6149 + $0x78] sm:$0xff]
      %v6166 = vld [vmem:[%s6149 + $0x80] sm:$0xff]
      %v6167 = vld [vmem:[%s6149 + $0x88] sm:$0xff]
      %v6168 = vld [vmem:[%s6149 + $0x90] sm:$0xff]
      %v6169 = vld [vmem:[%s6149 + $0x98] sm:$0xff]
      %v6170 = vld [vmem:[%s6149 + $0xa0] sm:$0xff]
      %v6171 = vld [vmem:[%s6149 + $0xa8] sm:$0xff]
      %v6172 = vld [vmem:[%s6149 + $0xb0] sm:$0xff]
      %v6173 = vld [vmem:[%s6149 + $0xb8] sm:$0xff]
      %v6174 = vld [vmem:[%s6149 + $0xc0] sm:$0xff]
      %v6175 = vld [vmem:[%s6149 + $0xc8] sm:$0xff]
      %v6176 = vld [vmem:[%s6149 + $0xd0] sm:$0xff]
      %v6177 = vld [vmem:[%s6149 + $0xd8] sm:$0xff]
      %v6178 = vld [vmem:[%s6149 + $0xe0] sm:$0xff]
      %v6179 = vld [vmem:[%s6149 + $0xe8] sm:$0xff]
      %v6180 = vld [vmem:[%s6149 + $0xf0] sm:$0xff]
      %v6181 = vld [vmem:[%s6149 + $0xf8] sm:$0xff]
      %v6182 = vld [vmem:[%s6149 + $0x100] sm:$0xff]
      %v6183 = vld [vmem:[%s6149 + $0x108] sm:$0xff]
      %v6184 = vld [vmem:[%s6149 + $0x110] sm:$0xff]
      %v6185 = vld [vmem:[%s6149 + $0x118] sm:$0xff]
      %v6186 = vld [vmem:[%s6149 + $0x120] sm:$0xff]
      %v6187 = vld [vmem:[%s6149 + $0x128] sm:$0xff]
      %v6188 = vld [vmem:[%s6149 + $0x130] sm:$0xff]
      %v6189 = vld [vmem:[%s6149 + $0x138] sm:$0xff]
      %v6190 = vld [vmem:[%s6149 + $0x140] sm:$0xff]
      %v6191 = vld [vmem:[%s6149 + $0x148] sm:$0xff]
      %v6192 = vld [vmem:[%s6149 + $0x150] sm:$0xff]
      %v6193 = vld [vmem:[%s6149 + $0x158] sm:$0xff]
      %v6194 = vld [vmem:[%s6149 + $0x160] sm:$0xff]
      %v6195 = vld [vmem:[%s6149 + $0x168] sm:$0xff]
      %v6196 = vld [vmem:[%s6149 + $0x170] sm:$0xff]
      %v6197 = vld [vmem:[%s6149 + $0x178] sm:$0xff]
      %v6198 = vld [vmem:[%s6149 + $0x180] sm:$0xff]
      %v6199 = vld [vmem:[%s6149 + $0x188] sm:$0xff]
      %v6200 = vld [vmem:[%s6149 + $0x190] sm:$0xff]
      %v6201 = vld [vmem:[%s6149 + $0x198] sm:$0xff]
      %v6202 = vld [vmem:[%s6149 + $0x1a0] sm:$0xff]
      %v6203 = vld [vmem:[%s6149 + $0x1a8] sm:$0xff]
      %v6204 = vld [vmem:[%s6149 + $0x1b0] sm:$0xff]
      %v6205 = vld [vmem:[%s6149 + $0x1b8] sm:$0xff]
      %v6206 = vld [vmem:[%s6149 + $0x1c0] sm:$0xff]
      %v6207 = vld [vmem:[%s6149 + $0x1c8] sm:$0xff]
      %v6208 = vld [vmem:[%s6149 + $0x1d0] sm:$0xff]
      %v6209 = vld [vmem:[%s6149 + $0x1d8] sm:$0xff]
      %v6210 = vld [vmem:[%s6149 + $0x1e0] sm:$0xff]
      %v6211 = vld [vmem:[%s6149 + $0x1e8] sm:$0xff]
      %v6212 = vld [vmem:[%s6149 + $0x1f0] sm:$0xff]
      %v6213 = vld [vmem:[%s6149 + $0x1f8] sm:$0xff]
      %v6214 = vld [vmem:[%s6149 + $0x200] sm:$0xff]
      %v6215 = vld [vmem:[%s6149 + $0x208] sm:$0xff]
      %v6216 = vld [vmem:[%s6149 + $0x210] sm:$0xff]
      %v6217 = vld [vmem:[%s6149 + $0x218] sm:$0xff]
      %v6218 = vld [vmem:[%s6149 + $0x220] sm:$0xff]
      %v6219 = vld [vmem:[%s6149 + $0x228] sm:$0xff]
      %v6220 = vld [vmem:[%s6149 + $0x230] sm:$0xff]
      %v6221 = vld [vmem:[%s6149 + $0x238] sm:$0xff]
      %v6222 = vld [vmem:[%s6149 + $0x240] sm:$0xff]
      %v6223 = vld [vmem:[%s6149 + $0x248] sm:$0xff]
      %v6224 = vld [vmem:[%s6149 + $0x250] sm:$0xff]
      %v6225 = vld [vmem:[%s6149 + $0x258] sm:$0xff]
      %v6226 = vld [vmem:[%s6149 + $0x260] sm:$0xff]
      %v6227 = vld [vmem:[%s6149 + $0x268] sm:$0xff]
      %v6228 = vld [vmem:[%s6149 + $0x270] sm:$0xff]
      %v6229 = vld [vmem:[%s6149 + $0x278] sm:$0xff]
      %v6230 = vld [vmem:[%s6149 + $0x280] sm:$0xff]
      %v6231 = vld [vmem:[%s6149 + $0x288] sm:$0xff]
      %v6232 = vld [vmem:[%s6149 + $0x290] sm:$0xff]
      %v6233 = vld [vmem:[%s6149 + $0x298] sm:$0xff]
      %v6234 = vld [vmem:[%s6149 + $0x2a0] sm:$0xff]
      %v6235 = vld [vmem:[%s6149 + $0x2a8] sm:$0xff]
      %v6236 = vld [vmem:[%s6149 + $0x2b0] sm:$0xff]
      %v6237 = vld [vmem:[%s6149 + $0x2b8] sm:$0xff]
      %v6238 = vld [vmem:[%s6149 + $0x2c0] sm:$0xff]
      %v6239 = vld [vmem:[%s6149 + $0x2c8] sm:$0xff]
      %v6240 = vld [vmem:[%s6149 + $0x2d0] sm:$0xff]
      %v6241 = vld [vmem:[%s6149 + $0x2d8] sm:$0xff]
      %v6242 = vld [vmem:[%s6149 + $0x2e0] sm:$0xff]
      %v6243 = vld [vmem:[%s6149 + $0x2e8] sm:$0xff]
      %v6244 = vld [vmem:[%s6149 + $0x2f0] sm:$0xff]
      %v6245 = vld [vmem:[%s6149 + $0x2f8] sm:$0xff]
      %v6246 = vld [vmem:[%s6149 + $0x300] sm:$0xff]
      %v6247 = vld [vmem:[%s6149 + $0x308] sm:$0xff]
      %v6248 = vld [vmem:[%s6149 + $0x310] sm:$0xff]
      %v6249 = vld [vmem:[%s6149 + $0x318] sm:$0xff]
      %v6250 = vld [vmem:[%s6149 + $0x320] sm:$0xff]
      %v6251 = vld [vmem:[%s6149 + $0x328] sm:$0xff]
      %v6252 = vld [vmem:[%s6149 + $0x330] sm:$0xff]
      %v6253 = vld [vmem:[%s6149 + $0x338] sm:$0xff]
      %v6254 = vld [vmem:[%s6149 + $0x340] sm:$0xff]
      %v6255 = vld [vmem:[%s6149 + $0x348] sm:$0xff]
      %v6256 = vld [vmem:[%s6149 + $0x350] sm:$0xff]
      %v6257 = vld [vmem:[%s6149 + $0x358] sm:$0xff]
      %v6258 = vld [vmem:[%s6149 + $0x360] sm:$0xff]
      %v6259 = vld [vmem:[%s6149 + $0x368] sm:$0xff]
      %v6260 = vld [vmem:[%s6149 + $0x370] sm:$0xff]
      %v6261 = vld [vmem:[%s6149 + $0x378] sm:$0xff]
      %v6262 = vld [vmem:[%s6149 + $0x380] sm:$0xff]
      %v6263 = vld [vmem:[%s6149 + $0x388] sm:$0xff]
      %v6264 = vld [vmem:[%s6149 + $0x390] sm:$0xff]
      %v6265 = vld [vmem:[%s6149 + $0x398] sm:$0xff]
      %v6266 = vld [vmem:[%s6149 + $0x3a0] sm:$0xff]
      %v6267 = vld [vmem:[%s6149 + $0x3a8] sm:$0xff]
      %v6268 = vld [vmem:[%s6149 + $0x3b0] sm:$0xff]
      %v6269 = vld [vmem:[%s6149 + $0x3b8] sm:$0xff]
      %v6270 = vld [vmem:[%s6149 + $0x3c0] sm:$0xff]
      %v6271 = vld [vmem:[%s6149 + $0x3c8] sm:$0xff]
      %v6272 = vld [vmem:[%s6149 + $0x3d0] sm:$0xff]
      %v6273 = vld [vmem:[%s6149 + $0x3d8] sm:$0xff]
      %v6274 = vld [vmem:[%s6149 + $0x3e0] sm:$0xff]
      %v6275 = vld [vmem:[%s6149 + $0x3e8] sm:$0xff]
      %v6276 = vld [vmem:[%s6149 + $0x3f0] sm:$0xff]
      %v6277 = vld [vmem:[%s6149 + $0x3f8] sm:$0xff]
      %v6278 = vld [vmem:[%s6149 + $0x400] sm:$0xff]
      %v6279 = vld [vmem:[%s6149 + $0x408] sm:$0xff]
      %v6280 = vld [vmem:[%s6149 + $0x410] sm:$0xff]
      %v6281 = vld [vmem:[%s6149 + $0x418] sm:$0xff]
      %v6282 = vld [vmem:[%s6149 + $0x420] sm:$0xff]
      %v6283 = vld [vmem:[%s6149 + $0x428] sm:$0xff]
      %v6284 = vld [vmem:[%s6149 + $0x430] sm:$0xff]
      %v6285 = vld [vmem:[%s6149 + $0x438] sm:$0xff]
      %v6286 = vld [vmem:[%s6149 + $0x440] sm:$0xff]
      %v6287 = vld [vmem:[%s6149 + $0x448] sm:$0xff]
      %v6288 = vld [vmem:[%s6149 + $0x450] sm:$0xff]
      %v6289 = vld [vmem:[%s6149 + $0x458] sm:$0xff]
      %v6290 = vld [vmem:[%s6149 + $0x460] sm:$0xff]
      %v6291 = vld [vmem:[%s6149 + $0x468] sm:$0xff]
      %v6292 = vld [vmem:[%s6149 + $0x470] sm:$0xff]
      %v6293 = vld [vmem:[%s6149 + $0x478] sm:$0xff]
      %v6294 = vld [vmem:[%s6149 + $0x480] sm:$0xff]
      %v6295 = vld [vmem:[%s6149 + $0x488] sm:$0xff]
      %v6296 = vld [vmem:[%s6149 + $0x490] sm:$0xff]
      %v6297 = vld [vmem:[%s6149 + $0x498] sm:$0xff]
      %v6298 = vld [vmem:[%s6149 + $0x4a0] sm:$0xff]
      %v6299 = vld [vmem:[%s6149 + $0x4a8] sm:$0xff]
      %v6300 = vld [vmem:[%s6149 + $0x4b0] sm:$0xff]
      %v6301 = vld [vmem:[%s6149 + $0x4b8] sm:$0xff]
      %v6302 = vld [vmem:[%s6149 + $0x4c0] sm:$0xff]
      %v6303 = vld [vmem:[%s6149 + $0x4c8] sm:$0xff]
      %v6304 = vld [vmem:[%s6149 + $0x4d0] sm:$0xff]
      %v6305 = vld [vmem:[%s6149 + $0x4d8] sm:$0xff]
      %v6306 = vld [vmem:[%s6149 + $0x4e0] sm:$0xff]
      %v6307 = vld [vmem:[%s6149 + $0x4e8] sm:$0xff]
      %v6308 = vld [vmem:[%s6149 + $0x4f0] sm:$0xff]
      %v6309 = vld [vmem:[%s6149 + $0x4f8] sm:$0xff]
      %v6310 = vld [vmem:[%s6149 + $0x500] sm:$0xff]
      %v6311 = vld [vmem:[%s6149 + $0x508] sm:$0xff]
      %v6312 = vld [vmem:[%s6149 + $0x510] sm:$0xff]
      %v6313 = vld [vmem:[%s6149 + $0x518] sm:$0xff]
      %v6314 = vld [vmem:[%s6149 + $0x520] sm:$0xff]
      %v6315 = vld [vmem:[%s6149 + $0x528] sm:$0xff]
      %v6316 = vld [vmem:[%s6149 + $0x530] sm:$0xff]
      %v6317 = vld [vmem:[%s6149 + $0x538] sm:$0xff]
      %v6318 = vld [vmem:[%s6149 + $0x540] sm:$0xff]
      %v6319 = vld [vmem:[%s6149 + $0x548] sm:$0xff]
      %v6320 = vld [vmem:[%s6149 + $0x550] sm:$0xff]
      %v6321 = vld [vmem:[%s6149 + $0x558] sm:$0xff]
      %v6322 = vld [vmem:[%s6149 + $0x560] sm:$0xff]
      %v6323 = vld [vmem:[%s6149 + $0x568] sm:$0xff]
      %v6324 = vld [vmem:[%s6149 + $0x570] sm:$0xff]
      %v6325 = vld [vmem:[%s6149 + $0x578] sm:$0xff]
      %v6326 = vld [vmem:[%s6149 + $0x580] sm:$0xff]
      %v6327 = vld [vmem:[%s6149 + $0x588] sm:$0xff]
      %v6328 = vld [vmem:[%s6149 + $0x590] sm:$0xff]
      %v6329 = vld [vmem:[%s6149 + $0x598] sm:$0xff]
      %v6330 = vld [vmem:[%s6149 + $0x5a0] sm:$0xff]
      %v6331 = vld [vmem:[%s6149 + $0x5a8] sm:$0xff]
      %v6332 = vld [vmem:[%s6149 + $0x5b0] sm:$0xff]
      %v6333 = vld [vmem:[%s6149 + $0x5b8] sm:$0xff]
      %v6334 = vld [vmem:[%s6149 + $0x5c0] sm:$0xff]
      %v6335 = vld [vmem:[%s6149 + $0x5c8] sm:$0xff]
      %v6336 = vld [vmem:[%s6149 + $0x5d0] sm:$0xff]
      %v6337 = vld [vmem:[%s6149 + $0x5d8] sm:$0xff]
      %v6338 = vld [vmem:[%s6149 + $0x5e0] sm:$0xff]
      %v6339 = vld [vmem:[%s6149 + $0x5e8] sm:$0xff]
      %v6340 = vld [vmem:[%s6149 + $0x5f0] sm:$0xff]
      %v6341 = vld [vmem:[%s6149 + $0x5f8] sm:$0xff]
      %v6342 = vld [vmem:[%s6149 + $0x600] sm:$0xff]
      %v6343 = vld [vmem:[%s6149 + $0x608] sm:$0xff]
      %v6344 = vld [vmem:[%s6149 + $0x610] sm:$0xff]
      %v6345 = vld [vmem:[%s6149 + $0x618] sm:$0xff]
      %v6346 = vld [vmem:[%s6149 + $0x620] sm:$0xff]
      %v6347 = vld [vmem:[%s6149 + $0x628] sm:$0xff]
      %v6348 = vld [vmem:[%s6149 + $0x630] sm:$0xff]
      %v6349 = vld [vmem:[%s6149 + $0x638] sm:$0xff]
      %v6350 = vld [vmem:[%s6149 + $0x640] sm:$0xff]
      %v6351 = vld [vmem:[%s6149 + $0x648] sm:$0xff]
      %v6352 = vld [vmem:[%s6149 + $0x650] sm:$0xff]
      %v6353 = vld [vmem:[%s6149 + $0x658] sm:$0xff]
      %v6354 = vld [vmem:[%s6149 + $0x660] sm:$0xff]
      %v6355 = vld [vmem:[%s6149 + $0x668] sm:$0xff]
      %v6356 = vld [vmem:[%s6149 + $0x670] sm:$0xff]
      %v6357 = vld [vmem:[%s6149 + $0x678] sm:$0xff]
      %v6358 = vld [vmem:[%s6149 + $0x680] sm:$0xff]
      %v6359 = vld [vmem:[%s6149 + $0x688] sm:$0xff]
      %v6360 = vld [vmem:[%s6149 + $0x690] sm:$0xff]
      %v6361 = vld [vmem:[%s6149 + $0x698] sm:$0xff]
      %v6362 = vld [vmem:[%s6149 + $0x6a0] sm:$0xff]
      %v6363 = vld [vmem:[%s6149 + $0x6a8] sm:$0xff]
      %v6364 = vld [vmem:[%s6149 + $0x6b0] sm:$0xff]
      %v6365 = vld [vmem:[%s6149 + $0x6b8] sm:$0xff]
      %v6366 = vld [vmem:[%s6149 + $0x6c0] sm:$0xff]
      %v6367 = vld [vmem:[%s6149 + $0x6c8] sm:$0xff]
      %v6368 = vld [vmem:[%s6149 + $0x6d0] sm:$0xff]
      %v6369 = vld [vmem:[%s6149 + $0x6d8] sm:$0xff]
      %v6370 = vld [vmem:[%s6149 + $0x6e0] sm:$0xff]
      %v6371 = vld [vmem:[%s6149 + $0x6e8] sm:$0xff]
      %v6372 = vld [vmem:[%s6149 + $0x6f0] sm:$0xff]
      %v6373 = vld [vmem:[%s6149 + $0x6f8] sm:$0xff]
      %v6374 = vld [vmem:[%s6149 + $0x700] sm:$0xff]
      %v6375 = vld [vmem:[%s6149 + $0x708] sm:$0xff]
      %v6376 = vld [vmem:[%s6149 + $0x710] sm:$0xff]
      %v6377 = vld [vmem:[%s6149 + $0x718] sm:$0xff]
      %v6378 = vld [vmem:[%s6149 + $0x720] sm:$0xff]
      %v6379 = vld [vmem:[%s6149 + $0x728] sm:$0xff]
      %v6380 = vld [vmem:[%s6149 + $0x730] sm:$0xff]
      %v6381 = vld [vmem:[%s6149 + $0x738] sm:$0xff]
      %v6382 = vld [vmem:[%s6149 + $0x740] sm:$0xff]
      %v6383 = vld [vmem:[%s6149 + $0x748] sm:$0xff]
      %v6384 = vld [vmem:[%s6149 + $0x750] sm:$0xff]
      %v6385 = vld [vmem:[%s6149 + $0x758] sm:$0xff]
      %v6386 = vld [vmem:[%s6149 + $0x760] sm:$0xff]
      %v6387 = vld [vmem:[%s6149 + $0x768] sm:$0xff]
      %v6388 = vld [vmem:[%s6149 + $0x770] sm:$0xff]
      %v6389 = vld [vmem:[%s6149 + $0x778] sm:$0xff]
      %v6390 = vld [vmem:[%s6149 + $0x780] sm:$0xff]
      %v6391 = vld [vmem:[%s6149 + $0x788] sm:$0xff]
      %v6392 = vld [vmem:[%s6149 + $0x790] sm:$0xff]
      %v6393 = vld [vmem:[%s6149 + $0x798] sm:$0xff]
      %v6394 = vld [vmem:[%s6149 + $0x7a0] sm:$0xff]
      %v6395 = vld [vmem:[%s6149 + $0x7a8] sm:$0xff]
      %v6396 = vld [vmem:[%s6149 + $0x7b0] sm:$0xff]
      %v6397 = vld [vmem:[%s6149 + $0x7b8] sm:$0xff]
      %v6398 = vld [vmem:[%s6149 + $0x7c0] sm:$0xff]
      %v6399 = vld [vmem:[%s6149 + $0x7c8] sm:$0xff]
      %v6400 = vld [vmem:[%s6149 + $0x7d0] sm:$0xff]
      %v6401 = vld [vmem:[%s6149 + $0x7d8] sm:$0xff]
      %v6402 = vld [vmem:[%s6149 + $0x7e0] sm:$0xff]
      %v6403 = vld [vmem:[%s6149 + $0x7e8] sm:$0xff]
      %v6404 = vld [vmem:[%s6149 + $0x7f0] sm:$0xff]
      %v6405 = vld [vmem:[%s6149 + $0x7f8] sm:$0xff]
      %6407 = vst [vmem:[#allocation1] ss:$9 sm:$0xff] %v6148
      %v6408 = vld [vmem:[#allocation1] sm:$0xff]
      %v6409 = vld [vmem:[#allocation1 + $0x9] sm:$0xff]
      %v6410 = vld [vmem:[#allocation1 + $0x12] sm:$0xff]
      %v6411 = vld [vmem:[#allocation1 + $0x1b] sm:$0xff]
      %v6412 = vld [vmem:[#allocation1 + $0x24] sm:$0xff]
      %v6413 = vld [vmem:[#allocation1 + $0x2d] sm:$0xff]
      %v6414 = vld [vmem:[#allocation1 + $0x36] sm:$0xff]
      %v6415 = vld [vmem:[#allocation1 + $0x3f] sm:$0xff]
      %v6416 = vshrl.u32 %v6408, 16
      %v6418 = vshrl.u32 %v6409, 16
      %v6420 = vshrl.u32 %v6410, 16
      %v6422 = vshrl.u32 %v6411, 16
      %v6424 = vshrl.u32 %v6412, 16
      %v6426 = vshrl.u32 %v6413, 16
      %v6428 = vshrl.u32 %v6414, 16
      %v6430 = vshrl.u32 %v6415, 16
      %v6696 = vunpack.c.l.b16 %v6150
      %v6697 = vunpack.c.h.b16 %v6150
      %v6698 = vunpack.c.l.b16 %v6151
      %v6699 = vunpack.c.h.b16 %v6151
      %v6700 = vunpack.c.l.b16 %v6152
      %v6701 = vunpack.c.h.b16 %v6152
      %v6702 = vunpack.c.l.b16 %v6153
      %v6703 = vunpack.c.h.b16 %v6153
      %v6704 = vunpack.c.l.b16 %v6154
      %v6705 = vunpack.c.h.b16 %v6154
      %v6706 = vunpack.c.l.b16 %v6155
      %v6707 = vunpack.c.h.b16 %v6155
      %v6708 = vunpack.c.l.b16 %v6156
      %v6709 = vunpack.c.h.b16 %v6156
      %v6710 = vunpack.c.l.b16 %v6157
      %v6711 = vunpack.c.h.b16 %v6157
      %v6712 = vunpack.c.l.b16 %v6158
      %v6713 = vunpack.c.h.b16 %v6158
      %v6714 = vunpack.c.l.b16 %v6159
      %v6715 = vunpack.c.h.b16 %v6159
      %v6716 = vunpack.c.l.b16 %v6160
      %v6717 = vunpack.c.h.b16 %v6160
      %v6718 = vunpack.c.l.b16 %v6161
      %v6719 = vunpack.c.h.b16 %v6161
      %v6720 = vunpack.c.l.b16 %v6162
      %v6721 = vunpack.c.h.b16 %v6162
      %v6722 = vunpack.c.l.b16 %v6163
      %v6723 = vunpack.c.h.b16 %v6163
      %v6724 = vunpack.c.l.b16 %v6164
      %v6725 = vunpack.c.h.b16 %v6164
      %v6726 = vunpack.c.l.b16 %v6165
      %v6727 = vunpack.c.h.b16 %v6165
      %v6728 = vunpack.c.l.b16 %v6166
      %v6729 = vunpack.c.h.b16 %v6166
      %v6730 = vunpack.c.l.b16 %v6167
      %v6731 = vunpack.c.h.b16 %v6167
      %v6732 = vunpack.c.l.b16 %v6168
      %v6733 = vunpack.c.h.b16 %v6168
      %v6734 = vunpack.c.l.b16 %v6169
      %v6735 = vunpack.c.h.b16 %v6169
      %v6736 = vunpack.c.l.b16 %v6170
      %v6737 = vunpack.c.h.b16 %v6170
      %v6738 = vunpack.c.l.b16 %v6171
      %v6739 = vunpack.c.h.b16 %v6171
      %v6740 = vunpack.c.l.b16 %v6172
      %v6741 = vunpack.c.h.b16 %v6172
      %v6742 = vunpack.c.l.b16 %v6173
      %v6743 = vunpack.c.h.b16 %v6173
      %v6744 = vunpack.c.l.b16 %v6174
      %v6745 = vunpack.c.h.b16 %v6174
      %v6746 = vunpack.c.l.b16 %v6175
      %v6747 = vunpack.c.h.b16 %v6175
      %v6748 = vunpack.c.l.b16 %v6176
      %v6749 = vunpack.c.h.b16 %v6176
      %v6750 = vunpack.c.l.b16 %v6177
      %v6751 = vunpack.c.h.b16 %v6177
      %v6752 = vunpack.c.l.b16 %v6178
      %v6753 = vunpack.c.h.b16 %v6178
      %v6754 = vunpack.c.l.b16 %v6179
      %v6755 = vunpack.c.h.b16 %v6179
      %v6756 = vunpack.c.l.b16 %v6180
      %v6757 = vunpack.c.h.b16 %v6180
      %v6758 = vunpack.c.l.b16 %v6181
      %v6759 = vunpack.c.h.b16 %v6181
      %v6760 = vunpack.c.l.b16 %v6182
      %v6761 = vunpack.c.h.b16 %v6182
      %v6762 = vunpack.c.l.b16 %v6183
      %v6763 = vunpack.c.h.b16 %v6183
      %v6764 = vunpack.c.l.b16 %v6184
      %v6765 = vunpack.c.h.b16 %v6184
      %v6766 = vunpack.c.l.b16 %v6185
      %v6767 = vunpack.c.h.b16 %v6185
      %v6768 = vunpack.c.l.b16 %v6186
      %v6769 = vunpack.c.h.b16 %v6186
      %v6770 = vunpack.c.l.b16 %v6187
      %v6771 = vunpack.c.h.b16 %v6187
      %v6772 = vunpack.c.l.b16 %v6188
      %v6773 = vunpack.c.h.b16 %v6188
      %v6774 = vunpack.c.l.b16 %v6189
      %v6775 = vunpack.c.h.b16 %v6189
      %v6776 = vunpack.c.l.b16 %v6190
      %v6777 = vunpack.c.h.b16 %v6190
      %v6778 = vunpack.c.l.b16 %v6191
      %v6779 = vunpack.c.h.b16 %v6191
      %v6780 = vunpack.c.l.b16 %v6192
      %v6781 = vunpack.c.h.b16 %v6192
      %v6782 = vunpack.c.l.b16 %v6193
      %v6783 = vunpack.c.h.b16 %v6193
      %v6784 = vunpack.c.l.b16 %v6194
      %v6785 = vunpack.c.h.b16 %v6194
      %v6786 = vunpack.c.l.b16 %v6195
      %v6787 = vunpack.c.h.b16 %v6195
      %v6788 = vunpack.c.l.b16 %v6196
      %v6789 = vunpack.c.h.b16 %v6196
      %v6790 = vunpack.c.l.b16 %v6197
      %v6791 = vunpack.c.h.b16 %v6197
      %v6792 = vunpack.c.l.b16 %v6198
      %v6793 = vunpack.c.h.b16 %v6198
      %v6794 = vunpack.c.l.b16 %v6199
      %v6795 = vunpack.c.h.b16 %v6199
      %v6796 = vunpack.c.l.b16 %v6200
      %v6797 = vunpack.c.h.b16 %v6200
      %v6798 = vunpack.c.l.b16 %v6201
      %v6799 = vunpack.c.h.b16 %v6201
      %v6800 = vunpack.c.l.b16 %v6202
      %v6801 = vunpack.c.h.b16 %v6202
      %v6802 = vunpack.c.l.b16 %v6203
      %v6803 = vunpack.c.h.b16 %v6203
      %v6804 = vunpack.c.l.b16 %v6204
      %v6805 = vunpack.c.h.b16 %v6204
      %v6806 = vunpack.c.l.b16 %v6205
      %v6807 = vunpack.c.h.b16 %v6205
      %v6808 = vunpack.c.l.b16 %v6206
      %v6809 = vunpack.c.h.b16 %v6206
      %v6810 = vunpack.c.l.b16 %v6207
      %v6811 = vunpack.c.h.b16 %v6207
      %v6812 = vunpack.c.l.b16 %v6208
      %v6813 = vunpack.c.h.b16 %v6208
      %v6814 = vunpack.c.l.b16 %v6209
      %v6815 = vunpack.c.h.b16 %v6209
      %v6816 = vunpack.c.l.b16 %v6210
      %v6817 = vunpack.c.h.b16 %v6210
      %v6818 = vunpack.c.l.b16 %v6211
      %v6819 = vunpack.c.h.b16 %v6211
      %v6820 = vunpack.c.l.b16 %v6212
      %v6821 = vunpack.c.h.b16 %v6212
      %v6822 = vunpack.c.l.b16 %v6213
      %v6823 = vunpack.c.h.b16 %v6213
      %v6824 = vunpack.c.l.b16 %v6214
      %v6825 = vunpack.c.h.b16 %v6214
      %v6826 = vunpack.c.l.b16 %v6215
      %v6827 = vunpack.c.h.b16 %v6215
      %v6828 = vunpack.c.l.b16 %v6216
      %v6829 = vunpack.c.h.b16 %v6216
      %v6830 = vunpack.c.l.b16 %v6217
      %v6831 = vunpack.c.h.b16 %v6217
      %v6832 = vunpack.c.l.b16 %v6218
      %v6833 = vunpack.c.h.b16 %v6218
      %v6834 = vunpack.c.l.b16 %v6219
      %v6835 = vunpack.c.h.b16 %v6219
      %v6836 = vunpack.c.l.b16 %v6220
      %v6837 = vunpack.c.h.b16 %v6220
      %v6838 = vunpack.c.l.b16 %v6221
      %v6839 = vunpack.c.h.b16 %v6221
      %v6840 = vunpack.c.l.b16 %v6222
      %v6841 = vunpack.c.h.b16 %v6222
      %v6842 = vunpack.c.l.b16 %v6223
      %v6843 = vunpack.c.h.b16 %v6223
      %v6844 = vunpack.c.l.b16 %v6224
      %v6845 = vunpack.c.h.b16 %v6224
      %v6846 = vunpack.c.l.b16 %v6225
      %v6847 = vunpack.c.h.b16 %v6225
      %v6848 = vunpack.c.l.b16 %v6226
      %v6849 = vunpack.c.h.b16 %v6226
      %v6850 = vunpack.c.l.b16 %v6227
      %v6851 = vunpack.c.h.b16 %v6227
      %v6852 = vunpack.c.l.b16 %v6228
      %v6853 = vunpack.c.h.b16 %v6228
      %v6854 = vunpack.c.l.b16 %v6229
      %v6855 = vunpack.c.h.b16 %v6229
      %v6856 = vunpack.c.l.b16 %v6230
      %v6857 = vunpack.c.h.b16 %v6230
      %v6858 = vunpack.c.l.b16 %v6231
      %v6859 = vunpack.c.h.b16 %v6231
      %v6860 = vunpack.c.l.b16 %v6232
      %v6861 = vunpack.c.h.b16 %v6232
      %v6862 = vunpack.c.l.b16 %v6233
      %v6863 = vunpack.c.h.b16 %v6233
      %v6864 = vunpack.c.l.b16 %v6234
      %v6865 = vunpack.c.h.b16 %v6234
      %v6866 = vunpack.c.l.b16 %v6235
      %v6867 = vunpack.c.h.b16 %v6235
      %v6868 = vunpack.c.l.b16 %v6236
      %v6869 = vunpack.c.h.b16 %v6236
      %v6870 = vunpack.c.l.b16 %v6237
      %v6871 = vunpack.c.h.b16 %v6237
      %v6872 = vunpack.c.l.b16 %v6238
      %v6873 = vunpack.c.h.b16 %v6238
      %v6874 = vunpack.c.l.b16 %v6239
      %v6875 = vunpack.c.h.b16 %v6239
      %v6876 = vunpack.c.l.b16 %v6240
      %v6877 = vunpack.c.h.b16 %v6240
      %v6878 = vunpack.c.l.b16 %v6241
      %v6879 = vunpack.c.h.b16 %v6241
      %v6880 = vunpack.c.l.b16 %v6242
      %v6881 = vunpack.c.h.b16 %v6242
      %v6882 = vunpack.c.l.b16 %v6243
      %v6883 = vunpack.c.h.b16 %v6243
      %v6884 = vunpack.c.l.b16 %v6244
      %v6885 = vunpack.c.h.b16 %v6244
      %v6886 = vunpack.c.l.b16 %v6245
      %v6887 = vunpack.c.h.b16 %v6245
      %v6888 = vunpack.c.l.b16 %v6246
      %v6889 = vunpack.c.h.b16 %v6246
      %v6890 = vunpack.c.l.b16 %v6247
      %v6891 = vunpack.c.h.b16 %v6247
      %v6892 = vunpack.c.l.b16 %v6248
      %v6893 = vunpack.c.h.b16 %v6248
      %v6894 = vunpack.c.l.b16 %v6249
      %v6895 = vunpack.c.h.b16 %v6249
      %v6896 = vunpack.c.l.b16 %v6250
      %v6897 = vunpack.c.h.b16 %v6250
      %v6898 = vunpack.c.l.b16 %v6251
      %v6899 = vunpack.c.h.b16 %v6251
      %v6900 = vunpack.c.l.b16 %v6252
      %v6901 = vunpack.c.h.b16 %v6252
      %v6902 = vunpack.c.l.b16 %v6253
      %v6903 = vunpack.c.h.b16 %v6253
      %v6904 = vunpack.c.l.b16 %v6254
      %v6905 = vunpack.c.h.b16 %v6254
      %v6906 = vunpack.c.l.b16 %v6255
      %v6907 = vunpack.c.h.b16 %v6255
      %v6908 = vunpack.c.l.b16 %v6256
      %v6909 = vunpack.c.h.b16 %v6256
      %v6910 = vunpack.c.l.b16 %v6257
      %v6911 = vunpack.c.h.b16 %v6257
      %v6912 = vunpack.c.l.b16 %v6258
      %v6913 = vunpack.c.h.b16 %v6258
      %v6914 = vunpack.c.l.b16 %v6259
      %v6915 = vunpack.c.h.b16 %v6259
      %v6916 = vunpack.c.l.b16 %v6260
      %v6917 = vunpack.c.h.b16 %v6260
      %v6918 = vunpack.c.l.b16 %v6261
      %v6919 = vunpack.c.h.b16 %v6261
      %v6920 = vunpack.c.l.b16 %v6262
      %v6921 = vunpack.c.h.b16 %v6262
      %v6922 = vunpack.c.l.b16 %v6263
      %v6923 = vunpack.c.h.b16 %v6263
      %v6924 = vunpack.c.l.b16 %v6264
      %v6925 = vunpack.c.h.b16 %v6264
      %v6926 = vunpack.c.l.b16 %v6265
      %v6927 = vunpack.c.h.b16 %v6265
      %v6928 = vunpack.c.l.b16 %v6266
      %v6929 = vunpack.c.h.b16 %v6266
      %v6930 = vunpack.c.l.b16 %v6267
      %v6931 = vunpack.c.h.b16 %v6267
      %v6932 = vunpack.c.l.b16 %v6268
      %v6933 = vunpack.c.h.b16 %v6268
      %v6934 = vunpack.c.l.b16 %v6269
      %v6935 = vunpack.c.h.b16 %v6269
      %v6936 = vunpack.c.l.b16 %v6270
      %v6937 = vunpack.c.h.b16 %v6270
      %v6938 = vunpack.c.l.b16 %v6271
      %v6939 = vunpack.c.h.b16 %v6271
      %v6940 = vunpack.c.l.b16 %v6272
      %v6941 = vunpack.c.h.b16 %v6272
      %v6942 = vunpack.c.l.b16 %v6273
      %v6943 = vunpack.c.h.b16 %v6273
      %v6944 = vunpack.c.l.b16 %v6274
      %v6945 = vunpack.c.h.b16 %v6274
      %v6946 = vunpack.c.l.b16 %v6275
      %v6947 = vunpack.c.h.b16 %v6275
      %v6948 = vunpack.c.l.b16 %v6276
      %v6949 = vunpack.c.h.b16 %v6276
      %v6950 = vunpack.c.l.b16 %v6277
      %v6951 = vunpack.c.h.b16 %v6277
      %v6952 = vunpack.c.l.b16 %v6278
      %v6953 = vunpack.c.h.b16 %v6278
      %v6954 = vunpack.c.l.b16 %v6279
      %v6955 = vunpack.c.h.b16 %v6279
      %v6956 = vunpack.c.l.b16 %v6280
      %v6957 = vunpack.c.h.b16 %v6280
      %v6958 = vunpack.c.l.b16 %v6281
      %v6959 = vunpack.c.h.b16 %v6281
      %v6960 = vunpack.c.l.b16 %v6282
      %v6961 = vunpack.c.h.b16 %v6282
      %v6962 = vunpack.c.l.b16 %v6283
      %v6963 = vunpack.c.h.b16 %v6283
      %v6964 = vunpack.c.l.b16 %v6284
      %v6965 = vunpack.c.h.b16 %v6284
      %v6966 = vunpack.c.l.b16 %v6285
      %v6967 = vunpack.c.h.b16 %v6285
      %v6968 = vunpack.c.l.b16 %v6286
      %v6969 = vunpack.c.h.b16 %v6286
      %v6970 = vunpack.c.l.b16 %v6287
      %v6971 = vunpack.c.h.b16 %v6287
      %v6972 = vunpack.c.l.b16 %v6288
      %v6973 = vunpack.c.h.b16 %v6288
      %v6974 = vunpack.c.l.b16 %v6289
      %v6975 = vunpack.c.h.b16 %v6289
      %v6976 = vunpack.c.l.b16 %v6290
      %v6977 = vunpack.c.h.b16 %v6290
      %v6978 = vunpack.c.l.b16 %v6291
      %v6979 = vunpack.c.h.b16 %v6291
      %v6980 = vunpack.c.l.b16 %v6292
      %v6981 = vunpack.c.h.b16 %v6292
      %v6982 = vunpack.c.l.b16 %v6293
      %v6983 = vunpack.c.h.b16 %v6293
      %v6984 = vunpack.c.l.b16 %v6294
      %v6985 = vunpack.c.h.b16 %v6294
      %v6986 = vunpack.c.l.b16 %v6295
      %v6987 = vunpack.c.h.b16 %v6295
      %v6988 = vunpack.c.l.b16 %v6296
      %v6989 = vunpack.c.h.b16 %v6296
      %v6990 = vunpack.c.l.b16 %v6297
      %v6991 = vunpack.c.h.b16 %v6297
      %v6992 = vunpack.c.l.b16 %v6298
      %v6993 = vunpack.c.h.b16 %v6298
      %v6994 = vunpack.c.l.b16 %v6299
      %v6995 = vunpack.c.h.b16 %v6299
      %v6996 = vunpack.c.l.b16 %v6300
      %v6997 = vunpack.c.h.b16 %v6300
      %v6998 = vunpack.c.l.b16 %v6301
      %v6999 = vunpack.c.h.b16 %v6301
      %v7000 = vunpack.c.l.b16 %v6302
      %v7001 = vunpack.c.h.b16 %v6302
      %v7002 = vunpack.c.l.b16 %v6303
      %v7003 = vunpack.c.h.b16 %v6303
      %v7004 = vunpack.c.l.b16 %v6304
      %v7005 = vunpack.c.h.b16 %v6304
      %v7006 = vunpack.c.l.b16 %v6305
      %v7007 = vunpack.c.h.b16 %v6305
      %v7008 = vunpack.c.l.b16 %v6306
      %v7009 = vunpack.c.h.b16 %v6306
      %v7010 = vunpack.c.l.b16 %v6307
      %v7011 = vunpack.c.h.b16 %v6307
      %v7012 = vunpack.c.l.b16 %v6308
      %v7013 = vunpack.c.h.b16 %v6308
      %v7014 = vunpack.c.l.b16 %v6309
      %v7015 = vunpack.c.h.b16 %v6309
      %v7016 = vunpack.c.l.b16 %v6310
      %v7017 = vunpack.c.h.b16 %v6310
      %v7018 = vunpack.c.l.b16 %v6311
      %v7019 = vunpack.c.h.b16 %v6311
      %v7020 = vunpack.c.l.b16 %v6312
      %v7021 = vunpack.c.h.b16 %v6312
      %v7022 = vunpack.c.l.b16 %v6313
      %v7023 = vunpack.c.h.b16 %v6313
      %v7024 = vunpack.c.l.b16 %v6314
      %v7025 = vunpack.c.h.b16 %v6314
      %v7026 = vunpack.c.l.b16 %v6315
      %v7027 = vunpack.c.h.b16 %v6315
      %v7028 = vunpack.c.l.b16 %v6316
      %v7029 = vunpack.c.h.b16 %v6316
      %v7030 = vunpack.c.l.b16 %v6317
      %v7031 = vunpack.c.h.b16 %v6317
      %v7032 = vunpack.c.l.b16 %v6318
      %v7033 = vunpack.c.h.b16 %v6318
      %v7034 = vunpack.c.l.b16 %v6319
      %v7035 = vunpack.c.h.b16 %v6319
      %v7036 = vunpack.c.l.b16 %v6320
      %v7037 = vunpack.c.h.b16 %v6320
      %v7038 = vunpack.c.l.b16 %v6321
      %v7039 = vunpack.c.h.b16 %v6321
      %v7040 = vunpack.c.l.b16 %v6322
      %v7041 = vunpack.c.h.b16 %v6322
      %v7042 = vunpack.c.l.b16 %v6323
      %v7043 = vunpack.c.h.b16 %v6323
      %v7044 = vunpack.c.l.b16 %v6324
      %v7045 = vunpack.c.h.b16 %v6324
      %v7046 = vunpack.c.l.b16 %v6325
      %v7047 = vunpack.c.h.b16 %v6325
      %v7048 = vunpack.c.l.b16 %v6326
      %v7049 = vunpack.c.h.b16 %v6326
      %v7050 = vunpack.c.l.b16 %v6327
      %v7051 = vunpack.c.h.b16 %v6327
      %v7052 = vunpack.c.l.b16 %v6328
      %v7053 = vunpack.c.h.b16 %v6328
      %v7054 = vunpack.c.l.b16 %v6329
      %v7055 = vunpack.c.h.b16 %v6329
      %v7056 = vunpack.c.l.b16 %v6330
      %v7057 = vunpack.c.h.b16 %v6330
      %v7058 = vunpack.c.l.b16 %v6331
      %v7059 = vunpack.c.h.b16 %v6331
      %v7060 = vunpack.c.l.b16 %v6332
      %v7061 = vunpack.c.h.b16 %v6332
      %v7062 = vunpack.c.l.b16 %v6333
      %v7063 = vunpack.c.h.b16 %v6333
      %v7064 = vunpack.c.l.b16 %v6334
      %v7065 = vunpack.c.h.b16 %v6334
      %v7066 = vunpack.c.l.b16 %v6335
      %v7067 = vunpack.c.h.b16 %v6335
      %v7068 = vunpack.c.l.b16 %v6336
      %v7069 = vunpack.c.h.b16 %v6336
      %v7070 = vunpack.c.l.b16 %v6337
      %v7071 = vunpack.c.h.b16 %v6337
      %v7072 = vunpack.c.l.b16 %v6338
      %v7073 = vunpack.c.h.b16 %v6338
      %v7074 = vunpack.c.l.b16 %v6339
      %v7075 = vunpack.c.h.b16 %v6339
      %v7076 = vunpack.c.l.b16 %v6340
      %v7077 = vunpack.c.h.b16 %v6340
      %v7078 = vunpack.c.l.b16 %v6341
      %v7079 = vunpack.c.h.b16 %v6341
      %v7080 = vunpack.c.l.b16 %v6342
      %v7081 = vunpack.c.h.b16 %v6342
      %v7082 = vunpack.c.l.b16 %v6343
      %v7083 = vunpack.c.h.b16 %v6343
      %v7084 = vunpack.c.l.b16 %v6344
      %v7085 = vunpack.c.h.b16 %v6344
      %v7086 = vunpack.c.l.b16 %v6345
      %v7087 = vunpack.c.h.b16 %v6345
      %v7088 = vunpack.c.l.b16 %v6346
      %v7089 = vunpack.c.h.b16 %v6346
      %v7090 = vunpack.c.l.b16 %v6347
      %v7091 = vunpack.c.h.b16 %v6347
      %v7092 = vunpack.c.l.b16 %v6348
      %v7093 = vunpack.c.h.b16 %v6348
      %v7094 = vunpack.c.l.b16 %v6349
      %v7095 = vunpack.c.h.b16 %v6349
      %v7096 = vunpack.c.l.b16 %v6350
      %v7097 = vunpack.c.h.b16 %v6350
      %v7098 = vunpack.c.l.b16 %v6351
      %v7099 = vunpack.c.h.b16 %v6351
      %v7100 = vunpack.c.l.b16 %v6352
      %v7101 = vunpack.c.h.b16 %v6352
      %v7102 = vunpack.c.l.b16 %v6353
      %v7103 = vunpack.c.h.b16 %v6353
      %v7104 = vunpack.c.l.b16 %v6354
      %v7105 = vunpack.c.h.b16 %v6354
      %v7106 = vunpack.c.l.b16 %v6355
      %v7107 = vunpack.c.h.b16 %v6355
      %v7108 = vunpack.c.l.b16 %v6356
      %v7109 = vunpack.c.h.b16 %v6356
      %v7110 = vunpack.c.l.b16 %v6357
      %v7111 = vunpack.c.h.b16 %v6357
      %v7112 = vunpack.c.l.b16 %v6358
      %v7113 = vunpack.c.h.b16 %v6358
      %v7114 = vunpack.c.l.b16 %v6359
      %v7115 = vunpack.c.h.b16 %v6359
      %v7116 = vunpack.c.l.b16 %v6360
      %v7117 = vunpack.c.h.b16 %v6360
      %v7118 = vunpack.c.l.b16 %v6361
      %v7119 = vunpack.c.h.b16 %v6361
      %v7120 = vunpack.c.l.b16 %v6362
      %v7121 = vunpack.c.h.b16 %v6362
      %v7122 = vunpack.c.l.b16 %v6363
      %v7123 = vunpack.c.h.b16 %v6363
      %v7124 = vunpack.c.l.b16 %v6364
      %v7125 = vunpack.c.h.b16 %v6364
      %v7126 = vunpack.c.l.b16 %v6365
      %v7127 = vunpack.c.h.b16 %v6365
      %v7128 = vunpack.c.l.b16 %v6366
      %v7129 = vunpack.c.h.b16 %v6366
      %v7130 = vunpack.c.l.b16 %v6367
      %v7131 = vunpack.c.h.b16 %v6367
      %v7132 = vunpack.c.l.b16 %v6368
      %v7133 = vunpack.c.h.b16 %v6368
      %v7134 = vunpack.c.l.b16 %v6369
      %v7135 = vunpack.c.h.b16 %v6369
      %v7136 = vunpack.c.l.b16 %v6370
      %v7137 = vunpack.c.h.b16 %v6370
      %v7138 = vunpack.c.l.b16 %v6371
      %v7139 = vunpack.c.h.b16 %v6371
      %v7140 = vunpack.c.l.b16 %v6372
      %v7141 = vunpack.c.h.b16 %v6372
      %v7142 = vunpack.c.l.b16 %v6373
      %v7143 = vunpack.c.h.b16 %v6373
      %v7144 = vunpack.c.l.b16 %v6374
      %v7145 = vunpack.c.h.b16 %v6374
      %v7146 = vunpack.c.l.b16 %v6375
      %v7147 = vunpack.c.h.b16 %v6375
      %v7148 = vunpack.c.l.b16 %v6376
      %v7149 = vunpack.c.h.b16 %v6376
      %v7150 = vunpack.c.l.b16 %v6377
      %v7151 = vunpack.c.h.b16 %v6377
      %v7152 = vunpack.c.l.b16 %v6378
      %v7153 = vunpack.c.h.b16 %v6378
      %v7154 = vunpack.c.l.b16 %v6379
      %v7155 = vunpack.c.h.b16 %v6379
      %v7156 = vunpack.c.l.b16 %v6380
      %v7157 = vunpack.c.h.b16 %v6380
      %v7158 = vunpack.c.l.b16 %v6381
      %v7159 = vunpack.c.h.b16 %v6381
      %v7160 = vunpack.c.l.b16 %v6382
      %v7161 = vunpack.c.h.b16 %v6382
      %v7162 = vunpack.c.l.b16 %v6383
      %v7163 = vunpack.c.h.b16 %v6383
      %v7164 = vunpack.c.l.b16 %v6384
      %v7165 = vunpack.c.h.b16 %v6384
      %v7166 = vunpack.c.l.b16 %v6385
      %v7167 = vunpack.c.h.b16 %v6385
      %v7168 = vunpack.c.l.b16 %v6386
      %v7169 = vunpack.c.h.b16 %v6386
      %v7170 = vunpack.c.l.b16 %v6387
      %v7171 = vunpack.c.h.b16 %v6387
      %v7172 = vunpack.c.l.b16 %v6388
      %v7173 = vunpack.c.h.b16 %v6388
      %v7174 = vunpack.c.l.b16 %v6389
      %v7175 = vunpack.c.h.b16 %v6389
      %v7176 = vunpack.c.l.b16 %v6390
      %v7177 = vunpack.c.h.b16 %v6390
      %v7178 = vunpack.c.l.b16 %v6391
      %v7179 = vunpack.c.h.b16 %v6391
      %v7180 = vunpack.c.l.b16 %v6392
      %v7181 = vunpack.c.h.b16 %v6392
      %v7182 = vunpack.c.l.b16 %v6393
      %v7183 = vunpack.c.h.b16 %v6393
      %v7184 = vunpack.c.l.b16 %v6394
      %v7185 = vunpack.c.h.b16 %v6394
      %v7186 = vunpack.c.l.b16 %v6395
      %v7187 = vunpack.c.h.b16 %v6395
      %v7188 = vunpack.c.l.b16 %v6396
      %v7189 = vunpack.c.h.b16 %v6396
      %v7190 = vunpack.c.l.b16 %v6397
      %v7191 = vunpack.c.h.b16 %v6397
      %v7192 = vunpack.c.l.b16 %v6398
      %v7193 = vunpack.c.h.b16 %v6398
      %v7194 = vunpack.c.l.b16 %v6399
      %v7195 = vunpack.c.h.b16 %v6399
      %v7196 = vunpack.c.l.b16 %v6400
      %v7197 = vunpack.c.h.b16 %v6400
      %v7198 = vunpack.c.l.b16 %v6401
      %v7199 = vunpack.c.h.b16 %v6401
      %v7200 = vunpack.c.l.b16 %v6402
      %v7201 = vunpack.c.h.b16 %v6402
      %v7202 = vunpack.c.l.b16 %v6403
      %v7203 = vunpack.c.h.b16 %v6403
      %v7204 = vunpack.c.l.b16 %v6404
      %v7205 = vunpack.c.h.b16 %v6404
      %v7206 = vunpack.c.l.b16 %v6405
      %v7207 = vunpack.c.h.b16 %v6405
      %v7208 = vpack.c.b16 %v6700, %v6696
      %v7209 = vpack.c.b16 %v6701, %v6697
      %v7210 = vpack.c.b16 %v6702, %v6698
      %v7211 = vpack.c.b16 %v6703, %v6699
      %v7212 = vpack.c.b16 %v6708, %v6704
      %v7213 = vpack.c.b16 %v6709, %v6705
      %v7214 = vpack.c.b16 %v6710, %v6706
      %v7215 = vpack.c.b16 %v6711, %v6707
      %v7216 = vpack.c.b16 %v6716, %v6712
      %v7217 = vpack.c.b16 %v6717, %v6713
      %v7218 = vpack.c.b16 %v6718, %v6714
      %v7219 = vpack.c.b16 %v6719, %v6715
      %v7220 = vpack.c.b16 %v6724, %v6720
      %v7221 = vpack.c.b16 %v6725, %v6721
      %v7222 = vpack.c.b16 %v6726, %v6722
      %v7223 = vpack.c.b16 %v6727, %v6723
      %v7224 = vpack.c.b16 %v6732, %v6728
      %v7225 = vpack.c.b16 %v6733, %v6729
      %v7226 = vpack.c.b16 %v6734, %v6730
      %v7227 = vpack.c.b16 %v6735, %v6731
      %v7228 = vpack.c.b16 %v6740, %v6736
      %v7229 = vpack.c.b16 %v6741, %v6737
      %v7230 = vpack.c.b16 %v6742, %v6738
      %v7231 = vpack.c.b16 %v6743, %v6739
      %v7232 = vpack.c.b16 %v6748, %v6744
      %v7233 = vpack.c.b16 %v6749, %v6745
      %v7234 = vpack.c.b16 %v6750, %v6746
      %v7235 = vpack.c.b16 %v6751, %v6747
      %v7236 = vpack.c.b16 %v6756, %v6752
      %v7237 = vpack.c.b16 %v6757, %v6753
      %v7238 = vpack.c.b16 %v6758, %v6754
      %v7239 = vpack.c.b16 %v6759, %v6755
      %v7240 = vpack.c.b16 %v6764, %v6760
      %v7241 = vpack.c.b16 %v6765, %v6761
      %v7242 = vpack.c.b16 %v6766, %v6762
      %v7243 = vpack.c.b16 %v6767, %v6763
      %v7244 = vpack.c.b16 %v6772, %v6768
      %v7245 = vpack.c.b16 %v6773, %v6769
      %v7246 = vpack.c.b16 %v6774, %v6770
      %v7247 = vpack.c.b16 %v6775, %v6771
      %v7248 = vpack.c.b16 %v6780, %v6776
      %v7249 = vpack.c.b16 %v6781, %v6777
      %v7250 = vpack.c.b16 %v6782, %v6778
      %v7251 = vpack.c.b16 %v6783, %v6779
      %v7252 = vpack.c.b16 %v6788, %v6784
      %v7253 = vpack.c.b16 %v6789, %v6785
      %v7254 = vpack.c.b16 %v6790, %v6786
      %v7255 = vpack.c.b16 %v6791, %v6787
      %v7256 = vpack.c.b16 %v6796, %v6792
      %v7257 = vpack.c.b16 %v6797, %v6793
      %v7258 = vpack.c.b16 %v6798, %v6794
      %v7259 = vpack.c.b16 %v6799, %v6795
      %v7260 = vpack.c.b16 %v6804, %v6800
      %v7261 = vpack.c.b16 %v6805, %v6801
      %v7262 = vpack.c.b16 %v6806, %v6802
      %v7263 = vpack.c.b16 %v6807, %v6803
      %v7264 = vpack.c.b16 %v6812, %v6808
      %v7265 = vpack.c.b16 %v6813, %v6809
      %v7266 = vpack.c.b16 %v6814, %v6810
      %v7267 = vpack.c.b16 %v6815, %v6811
      %v7268 = vpack.c.b16 %v6820, %v6816
      %v7269 = vpack.c.b16 %v6821, %v6817
      %v7270 = vpack.c.b16 %v6822, %v6818
      %v7271 = vpack.c.b16 %v6823, %v6819
      %v7272 = vpack.c.b16 %v6828, %v6824
      %v7273 = vpack.c.b16 %v6829, %v6825
      %v7274 = vpack.c.b16 %v6830, %v6826
      %v7275 = vpack.c.b16 %v6831, %v6827
      %v7276 = vpack.c.b16 %v6836, %v6832
      %v7277 = vpack.c.b16 %v6837, %v6833
      %v7278 = vpack.c.b16 %v6838, %v6834
      %v7279 = vpack.c.b16 %v6839, %v6835
      %v7280 = vpack.c.b16 %v6844, %v6840
      %v7281 = vpack.c.b16 %v6845, %v6841
      %v7282 = vpack.c.b16 %v6846, %v6842
      %v7283 = vpack.c.b16 %v6847, %v6843
      %v7284 = vpack.c.b16 %v6852, %v6848
      %v7285 = vpack.c.b16 %v6853, %v6849
      %v7286 = vpack.c.b16 %v6854, %v6850
      %v7287 = vpack.c.b16 %v6855, %v6851
      %v7288 = vpack.c.b16 %v6860, %v6856
      %v7289 = vpack.c.b16 %v6861, %v6857
      %v7290 = vpack.c.b16 %v6862, %v6858
      %v7291 = vpack.c.b16 %v6863, %v6859
      %v7292 = vpack.c.b16 %v6868, %v6864
      %v7293 = vpack.c.b16 %v6869, %v6865
      %v7294 = vpack.c.b16 %v6870, %v6866
      %v7295 = vpack.c.b16 %v6871, %v6867
      %v7296 = vpack.c.b16 %v6876, %v6872
      %v7297 = vpack.c.b16 %v6877, %v6873
      %v7298 = vpack.c.b16 %v6878, %v6874
      %v7299 = vpack.c.b16 %v6879, %v6875
      %v7300 = vpack.c.b16 %v6884, %v6880
      %v7301 = vpack.c.b16 %v6885, %v6881
      %v7302 = vpack.c.b16 %v6886, %v6882
      %v7303 = vpack.c.b16 %v6887, %v6883
      %v7304 = vpack.c.b16 %v6892, %v6888
      %v7305 = vpack.c.b16 %v6893, %v6889
      %v7306 = vpack.c.b16 %v6894, %v6890
      %v7307 = vpack.c.b16 %v6895, %v6891
      %v7308 = vpack.c.b16 %v6900, %v6896
      %v7309 = vpack.c.b16 %v6901, %v6897
      %v7310 = vpack.c.b16 %v6902, %v6898
      %v7311 = vpack.c.b16 %v6903, %v6899
      %v7312 = vpack.c.b16 %v6908, %v6904
      %v7313 = vpack.c.b16 %v6909, %v6905
      %v7314 = vpack.c.b16 %v6910, %v6906
      %v7315 = vpack.c.b16 %v6911, %v6907
      %v7316 = vpack.c.b16 %v6916, %v6912
      %v7317 = vpack.c.b16 %v6917, %v6913
      %v7318 = vpack.c.b16 %v6918, %v6914
      %v7319 = vpack.c.b16 %v6919, %v6915
      %v7320 = vpack.c.b16 %v6924, %v6920
      %v7321 = vpack.c.b16 %v6925, %v6921
      %v7322 = vpack.c.b16 %v6926, %v6922
      %v7323 = vpack.c.b16 %v6927, %v6923
      %v7324 = vpack.c.b16 %v6932, %v6928
      %v7325 = vpack.c.b16 %v6933, %v6929
      %v7326 = vpack.c.b16 %v6934, %v6930
      %v7327 = vpack.c.b16 %v6935, %v6931
      %v7328 = vpack.c.b16 %v6940, %v6936
      %v7329 = vpack.c.b16 %v6941, %v6937
      %v7330 = vpack.c.b16 %v6942, %v6938
      %v7331 = vpack.c.b16 %v6943, %v6939
      %v7332 = vpack.c.b16 %v6948, %v6944
      %v7333 = vpack.c.b16 %v6949, %v6945
      %v7334 = vpack.c.b16 %v6950, %v6946
      %v7335 = vpack.c.b16 %v6951, %v6947
      %v7336 = vpack.c.b16 %v6956, %v6952
      %v7337 = vpack.c.b16 %v6957, %v6953
      %v7338 = vpack.c.b16 %v6958, %v6954
      %v7339 = vpack.c.b16 %v6959, %v6955
      %v7340 = vpack.c.b16 %v6964, %v6960
      %v7341 = vpack.c.b16 %v6965, %v6961
      %v7342 = vpack.c.b16 %v6966, %v6962
      %v7343 = vpack.c.b16 %v6967, %v6963
      %v7344 = vpack.c.b16 %v6972, %v6968
      %v7345 = vpack.c.b16 %v6973, %v6969
      %v7346 = vpack.c.b16 %v6974, %v6970
      %v7347 = vpack.c.b16 %v6975, %v6971
      %v7348 = vpack.c.b16 %v6980, %v6976
      %v7349 = vpack.c.b16 %v6981, %v6977
      %v7350 = vpack.c.b16 %v6982, %v6978
      %v7351 = vpack.c.b16 %v6983, %v6979
      %v7352 = vpack.c.b16 %v6988, %v6984
      %v7353 = vpack.c.b16 %v6989, %v6985
      %v7354 = vpack.c.b16 %v6990, %v6986
      %v7355 = vpack.c.b16 %v6991, %v6987
      %v7356 = vpack.c.b16 %v6996, %v6992
      %v7357 = vpack.c.b16 %v6997, %v6993
      %v7358 = vpack.c.b16 %v6998, %v6994
      %v7359 = vpack.c.b16 %v6999, %v6995
      %v7360 = vpack.c.b16 %v7004, %v7000
      %v7361 = vpack.c.b16 %v7005, %v7001
      %v7362 = vpack.c.b16 %v7006, %v7002
      %v7363 = vpack.c.b16 %v7007, %v7003
      %v7364 = vpack.c.b16 %v7012, %v7008
      %v7365 = vpack.c.b16 %v7013, %v7009
      %v7366 = vpack.c.b16 %v7014, %v7010
      %v7367 = vpack.c.b16 %v7015, %v7011
      %v7368 = vpack.c.b16 %v7020, %v7016
      %v7369 = vpack.c.b16 %v7021, %v7017
      %v7370 = vpack.c.b16 %v7022, %v7018
      %v7371 = vpack.c.b16 %v7023, %v7019
      %v7372 = vpack.c.b16 %v7028, %v7024
      %v7373 = vpack.c.b16 %v7029, %v7025
      %v7374 = vpack.c.b16 %v7030, %v7026
      %v7375 = vpack.c.b16 %v7031, %v7027
      %v7376 = vpack.c.b16 %v7036, %v7032
      %v7377 = vpack.c.b16 %v7037, %v7033
      %v7378 = vpack.c.b16 %v7038, %v7034
      %v7379 = vpack.c.b16 %v7039, %v7035
      %v7380 = vpack.c.b16 %v7044, %v7040
      %v7381 = vpack.c.b16 %v7045, %v7041
      %v7382 = vpack.c.b16 %v7046, %v7042
      %v7383 = vpack.c.b16 %v7047, %v7043
      %v7384 = vpack.c.b16 %v7052, %v7048
      %v7385 = vpack.c.b16 %v7053, %v7049
      %v7386 = vpack.c.b16 %v7054, %v7050
      %v7387 = vpack.c.b16 %v7055, %v7051
      %v7388 = vpack.c.b16 %v7060, %v7056
      %v7389 = vpack.c.b16 %v7061, %v7057
      %v7390 = vpack.c.b16 %v7062, %v7058
      %v7391 = vpack.c.b16 %v7063, %v7059
      %v7392 = vpack.c.b16 %v7068, %v7064
      %v7393 = vpack.c.b16 %v7069, %v7065
      %v7394 = vpack.c.b16 %v7070, %v7066
      %v7395 = vpack.c.b16 %v7071, %v7067
      %v7396 = vpack.c.b16 %v7076, %v7072
      %v7397 = vpack.c.b16 %v7077, %v7073
      %v7398 = vpack.c.b16 %v7078, %v7074
      %v7399 = vpack.c.b16 %v7079, %v7075
      %v7400 = vpack.c.b16 %v7084, %v7080
      %v7401 = vpack.c.b16 %v7085, %v7081
      %v7402 = vpack.c.b16 %v7086, %v7082
      %v7403 = vpack.c.b16 %v7087, %v7083
      %v7404 = vpack.c.b16 %v7092, %v7088
      %v7405 = vpack.c.b16 %v7093, %v7089
      %v7406 = vpack.c.b16 %v7094, %v7090
      %v7407 = vpack.c.b16 %v7095, %v7091
      %v7408 = vpack.c.b16 %v7100, %v7096
      %v7409 = vpack.c.b16 %v7101, %v7097
      %v7410 = vpack.c.b16 %v7102, %v7098
      %v7411 = vpack.c.b16 %v7103, %v7099
      %v7412 = vpack.c.b16 %v7108, %v7104
      %v7413 = vpack.c.b16 %v7109, %v7105
      %v7414 = vpack.c.b16 %v7110, %v7106
      %v7415 = vpack.c.b16 %v7111, %v7107
      %v7416 = vpack.c.b16 %v7116, %v7112
      %v7417 = vpack.c.b16 %v7117, %v7113
      %v7418 = vpack.c.b16 %v7118, %v7114
      %v7419 = vpack.c.b16 %v7119, %v7115
      %v7420 = vpack.c.b16 %v7124, %v7120
      %v7421 = vpack.c.b16 %v7125, %v7121
      %v7422 = vpack.c.b16 %v7126, %v7122
      %v7423 = vpack.c.b16 %v7127, %v7123
      %v7424 = vpack.c.b16 %v7132, %v7128
      %v7425 = vpack.c.b16 %v7133, %v7129
      %v7426 = vpack.c.b16 %v7134, %v7130
      %v7427 = vpack.c.b16 %v7135, %v7131
      %v7428 = vpack.c.b16 %v7140, %v7136
      %v7429 = vpack.c.b16 %v7141, %v7137
      %v7430 = vpack.c.b16 %v7142, %v7138
      %v7431 = vpack.c.b16 %v7143, %v7139
      %v7432 = vpack.c.b16 %v7148, %v7144
      %v7433 = vpack.c.b16 %v7149, %v7145
      %v7434 = vpack.c.b16 %v7150, %v7146
      %v7435 = vpack.c.b16 %v7151, %v7147
      %v7436 = vpack.c.b16 %v7156, %v7152
      %v7437 = vpack.c.b16 %v7157, %v7153
      %v7438 = vpack.c.b16 %v7158, %v7154
      %v7439 = vpack.c.b16 %v7159, %v7155
      %v7440 = vpack.c.b16 %v7164, %v7160
      %v7441 = vpack.c.b16 %v7165, %v7161
      %v7442 = vpack.c.b16 %v7166, %v7162
      %v7443 = vpack.c.b16 %v7167, %v7163
      %v7444 = vpack.c.b16 %v7172, %v7168
      %v7445 = vpack.c.b16 %v7173, %v7169
      %v7446 = vpack.c.b16 %v7174, %v7170
      %v7447 = vpack.c.b16 %v7175, %v7171
      %v7448 = vpack.c.b16 %v7180, %v7176
      %v7449 = vpack.c.b16 %v7181, %v7177
      %v7450 = vpack.c.b16 %v7182, %v7178
      %v7451 = vpack.c.b16 %v7183, %v7179
      %v7452 = vpack.c.b16 %v7188, %v7184
      %v7453 = vpack.c.b16 %v7189, %v7185
      %v7454 = vpack.c.b16 %v7190, %v7186
      %v7455 = vpack.c.b16 %v7191, %v7187
      %v7456 = vpack.c.b16 %v7196, %v7192
      %v7457 = vpack.c.b16 %v7197, %v7193
      %v7458 = vpack.c.b16 %v7198, %v7194
      %v7459 = vpack.c.b16 %v7199, %v7195
      %v7460 = vpack.c.b16 %v7204, %v7200
      %v7461 = vpack.c.b16 %v7205, %v7201
      %v7462 = vpack.c.b16 %v7206, %v7202
      %v7463 = vpack.c.b16 %v7207, %v7203
      %7720 = vmatpush.bf16.msra.mxu0 %v7236
      %7721 = vmatpush.bf16.msra.mxu0 %v7232
      %7722 = vmatpush.bf16.msra.mxu0 %v7228
      %7723 = vmatpush.bf16.msra.mxu0 %v7224
      %7724 = vmatpush.bf16.msra.mxu0 %v7220
      %7725 = vmatpush.bf16.msra.mxu0 %v7216
      %7726 = vmatpush.bf16.msra.mxu0 %v7212
      %7727 = vmatpush.bf16.msra.mxu0 %v7208
      %7728 = vmatmul.bf16.gmra.mxu0 %v6416
      %v7729 = vpop.f32.mrf.mxu0
      %v7730 = vadd.f32 0.0, %v7729
      %v7731 = vpop.f32.mrf.mxu0
      %7732 = vdwg.mxu0
      %7733 = vmatpush.bf16.msra.mxu0 %v7268
      %7734 = vmatpush.bf16.msra.mxu0 %v7264
      %7735 = vmatpush.bf16.msra.mxu0 %v7260
      %7736 = vmatpush.bf16.msra.mxu0 %v7256
      %7737 = vmatpush.bf16.msra.mxu0 %v7252
      %7738 = vmatpush.bf16.msra.mxu0 %v7248
      %7739 = vmatpush.bf16.msra.mxu0 %v7244
      %7740 = vmatpush.bf16.msra.mxu0 %v7240
      %7741 = vmatmul.bf16.gmra.mxu0 %v6418
      %v7742 = vpop.f32.mrf.mxu0
      %v7743 = vadd.f32 %v7730, %v7742
      %v7744 = vpop.f32.mrf.mxu0
      %7745 = vdwg.mxu0
      %7746 = vmatpush.bf16.msra.mxu0 %v7300
      %7747 = vmatpush.bf16.msra.mxu0 %v7296
      %7748 = vmatpush.bf16.msra.mxu0 %v7292
      %7749 = vmatpush.bf16.msra.mxu0 %v7288
      %7750 = vmatpush.bf16.msra.mxu0 %v7284
      %7751 = vmatpush.bf16.msra.mxu0 %v7280
      %7752 = vmatpush.bf16.msra.mxu0 %v7276
      %7753 = vmatpush.bf16.msra.mxu0 %v7272
      %7754 = vmatmul.bf16.gmra.mxu0 %v6420
      %v7755 = vpop.f32.mrf.mxu0
      %v7756 = vadd.f32 %v7743, %v7755
      %v7757 = vpop.f32.mrf.mxu0
      %7758 = vdwg.mxu0
      %7759 = vmatpush.bf16.msra.mxu0 %v7332
      %7760 = vmatpush.bf16.msra.mxu0 %v7328
      %7761 = vmatpush.bf16.msra.mxu0 %v7324
      %7762 = vmatpush.bf16.msra.mxu0 %v7320
      %7763 = vmatpush.bf16.msra.mxu0 %v7316
      %7764 = vmatpush.bf16.msra.mxu0 %v7312
      %7765 = vmatpush.bf16.msra.mxu0 %v7308
      %7766 = vmatpush.bf16.msra.mxu0 %v7304
      %7767 = vmatmul.bf16.gmra.mxu0 %v6422
      %v7768 = vpop.f32.mrf.mxu0
      %v7769 = vadd.f32 %v7756, %v7768
      %v7770 = vpop.f32.mrf.mxu0
      %7771 = vdwg.mxu0
      %7772 = vmatpush.bf16.msra.mxu0 %v7364
      %7773 = vmatpush.bf16.msra.mxu0 %v7360
      %7774 = vmatpush.bf16.msra.mxu0 %v7356
      %7775 = vmatpush.bf16.msra.mxu0 %v7352
      %7776 = vmatpush.bf16.msra.mxu0 %v7348
      %7777 = vmatpush.bf16.msra.mxu0 %v7344
      %7778 = vmatpush.bf16.msra.mxu0 %v7340
      %7779 = vmatpush.bf16.msra.mxu0 %v7336
      %7780 = vmatmul.bf16.gmra.mxu0 %v6424
      %v7781 = vpop.f32.mrf.mxu0
      %v7782 = vadd.f32 %v7769, %v7781
      %v7783 = vpop.f32.mrf.mxu0
      %7784 = vdwg.mxu0
      %7785 = vmatpush.bf16.msra.mxu0 %v7396
      %7786 = vmatpush.bf16.msra.mxu0 %v7392
      %7787 = vmatpush.bf16.msra.mxu0 %v7388
      %7788 = vmatpush.bf16.msra.mxu0 %v7384
      %7789 = vmatpush.bf16.msra.mxu0 %v7380
      %7790 = vmatpush.bf16.msra.mxu0 %v7376
      %7791 = vmatpush.bf16.msra.mxu0 %v7372
      %7792 = vmatpush.bf16.msra.mxu0 %v7368
      %7793 = vmatmul.bf16.gmra.mxu0 %v6426
      %v7794 = vpop.f32.mrf.mxu0
      %v7795 = vadd.f32 %v7782, %v7794
      %v7796 = vpop.f32.mrf.mxu0
      %7797 = vdwg.mxu0
      %7798 = vmatpush.bf16.msra.mxu0 %v7428
      %7799 = vmatpush.bf16.msra.mxu0 %v7424
      %7800 = vmatpush.bf16.msra.mxu0 %v7420
      %7801 = vmatpush.bf16.msra.mxu0 %v7416
      %7802 = vmatpush.bf16.msra.mxu0 %v7412
      %7803 = vmatpush.bf16.msra.mxu0 %v7408
      %7804 = vmatpush.bf16.msra.mxu0 %v7404
      %7805 = vmatpush.bf16.msra.mxu0 %v7400
      %7806 = vmatmul.bf16.gmra.mxu0 %v6428
      %v7807 = vpop.f32.mrf.mxu0
      %v7808 = vadd.f32 %v7795, %v7807
      %v7809 = vpop.f32.mrf.mxu0
      %7810 = vdwg.mxu0
      %7811 = vmatpush.bf16.msra.mxu0 %v7460
      %7812 = vmatpush.bf16.msra.mxu0 %v7456
      %7813 = vmatpush.bf16.msra.mxu0 %v7452
      %7814 = vmatpush.bf16.msra.mxu0 %v7448
      %7815 = vmatpush.bf16.msra.mxu0 %v7444
      %7816 = vmatpush.bf16.msra.mxu0 %v7440
      %7817 = vmatpush.bf16.msra.mxu0 %v7436
      %7818 = vmatpush.bf16.msra.mxu0 %v7432
      %7819 = vmatmul.bf16.gmra.mxu0 %v6430
      %v7820 = vpop.f32.mrf.mxu0
      %v7821 = vadd.f32 %v7808, %v7820
      %v7822 = vpop.f32.mrf.mxu0
      %7823 = vdwg.mxu0
      %7824 = vmatpush.bf16.msra.mxu0 %v7237
      %7825 = vmatpush.bf16.msra.mxu0 %v7233
      %7826 = vmatpush.bf16.msra.mxu0 %v7229
      %7827 = vmatpush.bf16.msra.mxu0 %v7225
      %7828 = vmatpush.bf16.msra.mxu0 %v7221
      %7829 = vmatpush.bf16.msra.mxu0 %v7217
      %7830 = vmatpush.bf16.msra.mxu0 %v7213
      %7831 = vmatpush.bf16.msra.mxu0 %v7209
      %7832 = vmatmul.bf16.gmra.mxu0 %v6416
      %v7833 = vpop.f32.mrf.mxu0
      %v7834 = vadd.f32 0.0, %v7833
      %v7835 = vpop.f32.mrf.mxu0
      %7836 = vdwg.mxu0
      %7837 = vmatpush.bf16.msra.mxu0 %v7269
      %7838 = vmatpush.bf16.msra.mxu0 %v7265
      %7839 = vmatpush.bf16.msra.mxu0 %v7261
      %7840 = vmatpush.bf16.msra.mxu0 %v7257
      %7841 = vmatpush.bf16.msra.mxu0 %v7253
      %7842 = vmatpush.bf16.msra.mxu0 %v7249
      %7843 = vmatpush.bf16.msra.mxu0 %v7245
      %7844 = vmatpush.bf16.msra.mxu0 %v7241
      %7845 = vmatmul.bf16.gmra.mxu0 %v6418
      %v7846 = vpop.f32.mrf.mxu0
      %v7847 = vadd.f32 %v7834, %v7846
      %v7848 = vpop.f32.mrf.mxu0
      %7849 = vdwg.mxu0
      %7850 = vmatpush.bf16.msra.mxu0 %v7301
      %7851 = vmatpush.bf16.msra.mxu0 %v7297
      %7852 = vmatpush.bf16.msra.mxu0 %v7293
      %7853 = vmatpush.bf16.msra.mxu0 %v7289
      %7854 = vmatpush.bf16.msra.mxu0 %v7285
      %7855 = vmatpush.bf16.msra.mxu0 %v7281
      %7856 = vmatpush.bf16.msra.mxu0 %v7277
      %7857 = vmatpush.bf16.msra.mxu0 %v7273
      %7858 = vmatmul.bf16.gmra.mxu0 %v6420
      %v7859 = vpop.f32.mrf.mxu0
      %v7860 = vadd.f32 %v7847, %v7859
      %v7861 = vpop.f32.mrf.mxu0
      %7862 = vdwg.mxu0
      %7863 = vmatpush.bf16.msra.mxu0 %v7333
      %7864 = vmatpush.bf16.msra.mxu0 %v7329
      %7865 = vmatpush.bf16.msra.mxu0 %v7325
      %7866 = vmatpush.bf16.msra.mxu0 %v7321
      %7867 = vmatpush.bf16.msra.mxu0 %v7317
      %7868 = vmatpush.bf16.msra.mxu0 %v7313
      %7869 = vmatpush.bf16.msra.mxu0 %v7309
      %7870 = vmatpush.bf16.msra.mxu0 %v7305
      %7871 = vmatmul.bf16.gmra.mxu0 %v6422
      %v7872 = vpop.f32.mrf.mxu0
      %v7873 = vadd.f32 %v7860, %v7872
      %v7874 = vpop.f32.mrf.mxu0
      %7875 = vdwg.mxu0
      %7876 = vmatpush.bf16.msra.mxu0 %v7365
      %7877 = vmatpush.bf16.msra.mxu0 %v7361
      %7878 = vmatpush.bf16.msra.mxu0 %v7357
      %7879 = vmatpush.bf16.msra.mxu0 %v7353
      %7880 = vmatpush.bf16.msra.mxu0 %v7349
      %7881 = vmatpush.bf16.msra.mxu0 %v7345
      %7882 = vmatpush.bf16.msra.mxu0 %v7341
      %7883 = vmatpush.bf16.msra.mxu0 %v7337
      %7884 = vmatmul.bf16.gmra.mxu0 %v6424
      %v7885 = vpop.f32.mrf.mxu0
      %v7886 = vadd.f32 %v7873, %v7885
      %v7887 = vpop.f32.mrf.mxu0
      %7888 = vdwg.mxu0
      %7889 = vmatpush.bf16.msra.mxu0 %v7397
      %7890 = vmatpush.bf16.msra.mxu0 %v7393
      %7891 = vmatpush.bf16.msra.mxu0 %v7389
      %7892 = vmatpush.bf16.msra.mxu0 %v7385
      %7893 = vmatpush.bf16.msra.mxu0 %v7381
      %7894 = vmatpush.bf16.msra.mxu0 %v7377
      %7895 = vmatpush.bf16.msra.mxu0 %v7373
      %7896 = vmatpush.bf16.msra.mxu0 %v7369
      %7897 = vmatmul.bf16.gmra.mxu0 %v6426
      %v7898 = vpop.f32.mrf.mxu0
      %v7899 = vadd.f32 %v7886, %v7898
      %v7900 = vpop.f32.mrf.mxu0
      %7901 = vdwg.mxu0
      %7902 = vmatpush.bf16.msra.mxu0 %v7429
      %7903 = vmatpush.bf16.msra.mxu0 %v7425
      %7904 = vmatpush.bf16.msra.mxu0 %v7421
      %7905 = vmatpush.bf16.msra.mxu0 %v7417
      %7906 = vmatpush.bf16.msra.mxu0 %v7413
      %7907 = vmatpush.bf16.msra.mxu0 %v7409
      %7908 = vmatpush.bf16.msra.mxu0 %v7405
      %7909 = vmatpush.bf16.msra.mxu0 %v7401
      %7910 = vmatmul.bf16.gmra.mxu0 %v6428
      %v7911 = vpop.f32.mrf.mxu0
      %v7912 = vadd.f32 %v7899, %v7911
      %v7913 = vpop.f32.mrf.mxu0
      %7914 = vdwg.mxu0
      %7915 = vmatpush.bf16.msra.mxu0 %v7461
      %7916 = vmatpush.bf16.msra.mxu0 %v7457
      %7917 = vmatpush.bf16.msra.mxu0 %v7453
      %7918 = vmatpush.bf16.msra.mxu0 %v7449
      %7919 = vmatpush.bf16.msra.mxu0 %v7445
      %7920 = vmatpush.bf16.msra.mxu0 %v7441
      %7921 = vmatpush.bf16.msra.mxu0 %v7437
      %7922 = vmatpush.bf16.msra.mxu0 %v7433
      %7923 = vmatmul.bf16.gmra.mxu0 %v6430
      %v7924 = vpop.f32.mrf.mxu0
      %v7925 = vadd.f32 %v7912, %v7924
      %v7926 = vpop.f32.mrf.mxu0
      %7927 = vdwg.mxu0
      %7928 = vmatpush.bf16.msra.mxu0 %v7238
      %7929 = vmatpush.bf16.msra.mxu0 %v7234
      %7930 = vmatpush.bf16.msra.mxu0 %v7230
      %7931 = vmatpush.bf16.msra.mxu0 %v7226
      %7932 = vmatpush.bf16.msra.mxu0 %v7222
      %7933 = vmatpush.bf16.msra.mxu0 %v7218
      %7934 = vmatpush.bf16.msra.mxu0 %v7214
      %7935 = vmatpush.bf16.msra.mxu0 %v7210
      %7936 = vmatmul.bf16.gmra.mxu0 %v6416
      %v7937 = vpop.f32.mrf.mxu0
      %v7938 = vadd.f32 0.0, %v7937
      %v7939 = vpop.f32.mrf.mxu0
      %7940 = vdwg.mxu0
      %7941 = vmatpush.bf16.msra.mxu0 %v7270
      %7942 = vmatpush.bf16.msra.mxu0 %v7266
      %7943 = vmatpush.bf16.msra.mxu0 %v7262
      %7944 = vmatpush.bf16.msra.mxu0 %v7258
      %7945 = vmatpush.bf16.msra.mxu0 %v7254
      %7946 = vmatpush.bf16.msra.mxu0 %v7250
      %7947 = vmatpush.bf16.msra.mxu0 %v7246
      %7948 = vmatpush.bf16.msra.mxu0 %v7242
      %7949 = vmatmul.bf16.gmra.mxu0 %v6418
      %v7950 = vpop.f32.mrf.mxu0
      %v7951 = vadd.f32 %v7938, %v7950
      %v7952 = vpop.f32.mrf.mxu0
      %7953 = vdwg.mxu0
      %7954 = vmatpush.bf16.msra.mxu0 %v7302
      %7955 = vmatpush.bf16.msra.mxu0 %v7298
      %7956 = vmatpush.bf16.msra.mxu0 %v7294
      %7957 = vmatpush.bf16.msra.mxu0 %v7290
      %7958 = vmatpush.bf16.msra.mxu0 %v7286
      %7959 = vmatpush.bf16.msra.mxu0 %v7282
      %7960 = vmatpush.bf16.msra.mxu0 %v7278
      %7961 = vmatpush.bf16.msra.mxu0 %v7274
      %7962 = vmatmul.bf16.gmra.mxu0 %v6420
      %v7963 = vpop.f32.mrf.mxu0
      %v7964 = vadd.f32 %v7951, %v7963
      %v7965 = vpop.f32.mrf.mxu0
      %7966 = vdwg.mxu0
      %7967 = vmatpush.bf16.msra.mxu0 %v7334
      %7968 = vmatpush.bf16.msra.mxu0 %v7330
      %7969 = vmatpush.bf16.msra.mxu0 %v7326
      %7970 = vmatpush.bf16.msra.mxu0 %v7322
      %7971 = vmatpush.bf16.msra.mxu0 %v7318
      %7972 = vmatpush.bf16.msra.mxu0 %v7314
      %7973 = vmatpush.bf16.msra.mxu0 %v7310
      %7974 = vmatpush.bf16.msra.mxu0 %v7306
      %7975 = vmatmul.bf16.gmra.mxu0 %v6422
      %v7976 = vpop.f32.mrf.mxu0
      %v7977 = vadd.f32 %v7964, %v7976
      %v7978 = vpop.f32.mrf.mxu0
      %7979 = vdwg.mxu0
      %7980 = vmatpush.bf16.msra.mxu0 %v7366
      %7981 = vmatpush.bf16.msra.mxu0 %v7362
      %7982 = vmatpush.bf16.msra.mxu0 %v7358
      %7983 = vmatpush.bf16.msra.mxu0 %v7354
      %7984 = vmatpush.bf16.msra.mxu0 %v7350
      %7985 = vmatpush.bf16.msra.mxu0 %v7346
      %7986 = vmatpush.bf16.msra.mxu0 %v7342
      %7987 = vmatpush.bf16.msra.mxu0 %v7338
      %7988 = vmatmul.bf16.gmra.mxu0 %v6424
      %v7989 = vpop.f32.mrf.mxu0
      %v7990 = vadd.f32 %v7977, %v7989
      %v7991 = vpop.f32.mrf.mxu0
      %7992 = vdwg.mxu0
      %7993 = vmatpush.bf16.msra.mxu0 %v7398
      %7994 = vmatpush.bf16.msra.mxu0 %v7394
      %7995 = vmatpush.bf16.msra.mxu0 %v7390
      %7996 = vmatpush.bf16.msra.mxu0 %v7386
      %7997 = vmatpush.bf16.msra.mxu0 %v7382
      %7998 = vmatpush.bf16.msra.mxu0 %v7378
      %7999 = vmatpush.bf16.msra.mxu0 %v7374
      %8000 = vmatpush.bf16.msra.mxu0 %v7370
      %8001 = vmatmul.bf16.gmra.mxu0 %v6426
      %v8002 = vpop.f32.mrf.mxu0
      %v8003 = vadd.f32 %v7990, %v8002
      %v8004 = vpop.f32.mrf.mxu0
      %8005 = vdwg.mxu0
      %8006 = vmatpush.bf16.msra.mxu0 %v7430
      %8007 = vmatpush.bf16.msra.mxu0 %v7426
      %8008 = vmatpush.bf16.msra.mxu0 %v7422
      %8009 = vmatpush.bf16.msra.mxu0 %v7418
      %8010 = vmatpush.bf16.msra.mxu0 %v7414
      %8011 = vmatpush.bf16.msra.mxu0 %v7410
      %8012 = vmatpush.bf16.msra.mxu0 %v7406
      %8013 = vmatpush.bf16.msra.mxu0 %v7402
      %8014 = vmatmul.bf16.gmra.mxu0 %v6428
      %v8015 = vpop.f32.mrf.mxu0
      %v8016 = vadd.f32 %v8003, %v8015
      %v8017 = vpop.f32.mrf.mxu0
      %8018 = vdwg.mxu0
      %8019 = vmatpush.bf16.msra.mxu0 %v7462
      %8020 = vmatpush.bf16.msra.mxu0 %v7458
      %8021 = vmatpush.bf16.msra.mxu0 %v7454
      %8022 = vmatpush.bf16.msra.mxu0 %v7450
      %8023 = vmatpush.bf16.msra.mxu0 %v7446
      %8024 = vmatpush.bf16.msra.mxu0 %v7442
      %8025 = vmatpush.bf16.msra.mxu0 %v7438
      %8026 = vmatpush.bf16.msra.mxu0 %v7434
      %8027 = vmatmul.bf16.gmra.mxu0 %v6430
      %v8028 = vpop.f32.mrf.mxu0
      %v8029 = vadd.f32 %v8016, %v8028
      %v8030 = vpop.f32.mrf.mxu0
      %8031 = vdwg.mxu0
      %8032 = vmatpush.bf16.msra.mxu0 %v7239
      %8033 = vmatpush.bf16.msra.mxu0 %v7235
      %8034 = vmatpush.bf16.msra.mxu0 %v7231
      %8035 = vmatpush.bf16.msra.mxu0 %v7227
      %8036 = vmatpush.bf16.msra.mxu0 %v7223
      %8037 = vmatpush.bf16.msra.mxu0 %v7219
      %8038 = vmatpush.bf16.msra.mxu0 %v7215
      %8039 = vmatpush.bf16.msra.mxu0 %v7211
      %8040 = vmatmul.bf16.gmra.mxu0 %v6416
      %v8041 = vpop.f32.mrf.mxu0
      %v8042 = vadd.f32 0.0, %v8041
      %v8043 = vpop.f32.mrf.mxu0
      %8044 = vdwg.mxu0
      %8045 = vmatpush.bf16.msra.mxu0 %v7271
      %8046 = vmatpush.bf16.msra.mxu0 %v7267
      %8047 = vmatpush.bf16.msra.mxu0 %v7263
      %8048 = vmatpush.bf16.msra.mxu0 %v7259
      %8049 = vmatpush.bf16.msra.mxu0 %v7255
      %8050 = vmatpush.bf16.msra.mxu0 %v7251
      %8051 = vmatpush.bf16.msra.mxu0 %v7247
      %8052 = vmatpush.bf16.msra.mxu0 %v7243
      %8053 = vmatmul.bf16.gmra.mxu0 %v6418
      %v8054 = vpop.f32.mrf.mxu0
      %v8055 = vadd.f32 %v8042, %v8054
      %v8056 = vpop.f32.mrf.mxu0
      %8057 = vdwg.mxu0
      %8058 = vmatpush.bf16.msra.mxu0 %v7303
      %8059 = vmatpush.bf16.msra.mxu0 %v7299
      %8060 = vmatpush.bf16.msra.mxu0 %v7295
      %8061 = vmatpush.bf16.msra.mxu0 %v7291
      %8062 = vmatpush.bf16.msra.mxu0 %v7287
      %8063 = vmatpush.bf16.msra.mxu0 %v7283
      %8064 = vmatpush.bf16.msra.mxu0 %v7279
      %8065 = vmatpush.bf16.msra.mxu0 %v7275
      %8066 = vmatmul.bf16.gmra.mxu0 %v6420
      %v8067 = vpop.f32.mrf.mxu0
      %v8068 = vadd.f32 %v8055, %v8067
      %v8069 = vpop.f32.mrf.mxu0
      %8070 = vdwg.mxu0
      %8071 = vmatpush.bf16.msra.mxu0 %v7335
      %8072 = vmatpush.bf16.msra.mxu0 %v7331
      %8073 = vmatpush.bf16.msra.mxu0 %v7327
      %8074 = vmatpush.bf16.msra.mxu0 %v7323
      %8075 = vmatpush.bf16.msra.mxu0 %v7319
      %8076 = vmatpush.bf16.msra.mxu0 %v7315
      %8077 = vmatpush.bf16.msra.mxu0 %v7311
      %8078 = vmatpush.bf16.msra.mxu0 %v7307
      %8079 = vmatmul.bf16.gmra.mxu0 %v6422
      %v8080 = vpop.f32.mrf.mxu0
      %v8081 = vadd.f32 %v8068, %v8080
      %v8082 = vpop.f32.mrf.mxu0
      %8083 = vdwg.mxu0
      %8084 = vmatpush.bf16.msra.mxu0 %v7367
      %8085 = vmatpush.bf16.msra.mxu0 %v7363
      %8086 = vmatpush.bf16.msra.mxu0 %v7359
      %8087 = vmatpush.bf16.msra.mxu0 %v7355
      %8088 = vmatpush.bf16.msra.mxu0 %v7351
      %8089 = vmatpush.bf16.msra.mxu0 %v7347
      %8090 = vmatpush.bf16.msra.mxu0 %v7343
      %8091 = vmatpush.bf16.msra.mxu0 %v7339
      %8092 = vmatmul.bf16.gmra.mxu0 %v6424
      %v8093 = vpop.f32.mrf.mxu0
      %v8094 = vadd.f32 %v8081, %v8093
      %v8095 = vpop.f32.mrf.mxu0
      %8096 = vdwg.mxu0
      %8097 = vmatpush.bf16.msra.mxu0 %v7399
      %8098 = vmatpush.bf16.msra.mxu0 %v7395
      %8099 = vmatpush.bf16.msra.mxu0 %v7391
      %8100 = vmatpush.bf16.msra.mxu0 %v7387
      %8101 = vmatpush.bf16.msra.mxu0 %v7383
      %8102 = vmatpush.bf16.msra.mxu0 %v7379
      %8103 = vmatpush.bf16.msra.mxu0 %v7375
      %8104 = vmatpush.bf16.msra.mxu0 %v7371
      %8105 = vmatmul.bf16.gmra.mxu0 %v6426
      %v8106 = vpop.f32.mrf.mxu0
      %v8107 = vadd.f32 %v8094, %v8106
      %v8108 = vpop.f32.mrf.mxu0
      %8109 = vdwg.mxu0
      %8110 = vmatpush.bf16.msra.mxu0 %v7431
      %8111 = vmatpush.bf16.msra.mxu0 %v7427
      %8112 = vmatpush.bf16.msra.mxu0 %v7423
      %8113 = vmatpush.bf16.msra.mxu0 %v7419
      %8114 = vmatpush.bf16.msra.mxu0 %v7415
      %8115 = vmatpush.bf16.msra.mxu0 %v7411
      %8116 = vmatpush.bf16.msra.mxu0 %v7407
      %8117 = vmatpush.bf16.msra.mxu0 %v7403
      %8118 = vmatmul.bf16.gmra.mxu0 %v6428
      %v8119 = vpop.f32.mrf.mxu0
      %v8120 = vadd.f32 %v8107, %v8119
      %v8121 = vpop.f32.mrf.mxu0
      %8122 = vdwg.mxu0
      %8123 = vmatpush.bf16.msra.mxu0 %v7463
      %8124 = vmatpush.bf16.msra.mxu0 %v7459
      %8125 = vmatpush.bf16.msra.mxu0 %v7455
      %8126 = vmatpush.bf16.msra.mxu0 %v7451
      %8127 = vmatpush.bf16.msra.mxu0 %v7447
      %8128 = vmatpush.bf16.msra.mxu0 %v7443
      %8129 = vmatpush.bf16.msra.mxu0 %v7439
      %8130 = vmatpush.bf16.msra.mxu0 %v7435
      %8131 = vmatmul.bf16.gmra.mxu0 %v6430
      %v8132 = vpop.f32.mrf.mxu0
      %v8133 = vadd.f32 %v8120, %v8132
      %v8134 = vpop.f32.mrf.mxu0
      %8135 = vdwg.mxu0
      %v8136 = vadd.f32 %v6144, %v7821
      %v8137 = vadd.f32 %v6145, %v7925
      %v8138 = vadd.f32 %v6146, %v8029
      %v8139 = vadd.f32 %v6147, %v8133
      %v8144 = vrot.slane %v8137, 7
      %v8145 = vrot.slane %v8138, 6
      %v8146 = vrot.slane %v8139, 5
      %vm8147 = vcmask 1040384
      %v8148 = vsel %vm8147, %v8136, %v8144
      %vm8149 = vcmask 1042434
      %v8150 = vsel %vm8149, %v8145, %v8146
      %vm8151 = vcmask 1041408
      %v8152 = vsel %vm8151, %v8148, %v8150
      %v8154 = vlaneseq
      %vm8155 = vcmp.ge.s32.totalorder %v8154, 0
      %vm8156 = vcmp.lt.s32.totalorder %v8154, 512
      %vm8157 = vmand %vm8155, %vm8156
      %8158 = vst.msk [vmem:[%s205] sm:$0xf] %vm8157, %v8152
      %v8159 = vadd.f32 %v8136, 0.0
      %v8160 = vadd.f32 %v8137, 0.0
      %v8161 = vadd.f32 %v8138, 0.0
      %v8162 = vadd.f32 %v8139, 0.0
      %v8167 = vrot.slane %v8160, 7
      %v8168 = vrot.slane %v8161, 6
      %v8169 = vrot.slane %v8162, 5
      %v8170 = vsel %vm8147, %v8159, %v8167
      %v8171 = vsel %vm8149, %v8168, %v8169
      %v8172 = vsel %vm8151, %v8170, %v8171
      %8174 = vst.msk [vmem:[%s209] sm:$0xf] %vm8157, %v8172
      %v8175 = vmul.f32 %v8136, %v8136
      %v8176 = vmul.f32 %v8137, %v8137
      %v8177 = vmul.f32 %v8138, %v8138
      %v8178 = vmul.f32 %v8139, %v8139
      %v8179 = vadd.f32 %v8175, 0.0
      %v8180 = vadd.f32 %v8176, 0.0
      %v8181 = vadd.f32 %v8177, 0.0
      %v8182 = vadd.f32 %v8178, 0.0
      %v8187 = vrot.slane %v8180, 7
      %v8188 = vrot.slane %v8181, 6
      %v8189 = vrot.slane %v8182, 5
      %v8190 = vsel %vm8147, %v8179, %v8187
      %v8191 = vsel %vm8149, %v8188, %v8189
      %v8192 = vsel %vm8151, %v8190, %v8191
      %8194 = vst.msk [vmem:[%s213] sm:$0xf] %vm8157, %v8192
      %p8195 = scmp.lt.s32.totalorder %s16, 1
      %s8196 = scalar_select %p8195, %s16, 1
      %s8197 = smul.addr %s8196, 4
      %s8198 = scalar_lea.vmem %s2, %s8197
      %p8199 = scmp.lt.s32.totalorder %s16, 1
      %s8200 = scalar_select %p8199, %s16, 1
      %s8201 = smul.addr %s8200, 4
      %s8202 = scalar_lea.vmem %s3, %s8201
      %p8203 = scmp.lt.s32.totalorder %s16, 1
      %s8204 = scalar_select %p8203, %s16, 1
      %s8205 = smul.addr %s8204, 4
      %s8206 = scalar_lea.vmem %s4, %s8205
      // Predicated region
      $region29: #{patchgan_forward.12} parent=27 // pred_check
        %p8207 = pneg %p81
      $region30: #{patchgan_forward.12} parent=27 // pred_check_branch
        %8209 = sbr.rel (%p8207) target = $region32
      $region31: #{patchgan_forward.12} parent=27 // pred_region
        _
      $region32: #{patchgan_forward.12} parent=27 // pred_fallthru
        _
      // Predicated region
      $region33: #{patchgan_forward.12} parent=27 // pred_check
        %p8210 = pneg %p107
      $region34: #{patchgan_forward.12} parent=27 // pred_check_branch
        %8212 = sbr.rel (%p8210) target = $region36
      $region35: #{patchgan_forward.12} parent=27 // pred_region
        _
      $region36: #{patchgan_forward.12} parent=27 // pred_fallthru
        _
      // Predicated region
      $region37: #{patchgan_forward.12} parent=27 // pred_check
        %p8213 = pneg %p133
      $region38: #{patchgan_forward.12} parent=27 // pred_check_branch
        %8215 = sbr.rel (%p8213) target = $region40
      $region39: #{patchgan_forward.12} parent=27 // pred_region
        _
      $region40: #{patchgan_forward.12} parent=27 // pred_fallthru
        _
    $region28: #{patchgan_forward.12} parent=5 // pred_fallthru
      _
    %p8216 = scmp.le.s32.totalorder 2, %s11
    // Predicated region
    $region41: #{patchgan_forward.12} parent=5 // pred_check
      %p8217 = pneg %p8216
    $region42: #{patchgan_forward.12} parent=5 // pred_check_branch
      %8219 = sbr.rel (%p8217) target = $region44
    $region43: #{patchgan_forward.12} parent=5 // pred_region
      %s8220 = ssub.s32 %s11, 2
      // Predicated region
      $region45: #{patchgan_forward.12} parent=43 // pred_check
        %p8221 = pneg %p87
      $region46: #{patchgan_forward.12} parent=43 // pred_check_branch
        %8223 = sbr.rel (%p8221) target = $region48
      $region47: #{patchgan_forward.12} parent=43 // pred_region
        %p8224 = scmp.lt.s32.totalorder %s17, 1
        %s8225 = scalar_select %p8224, %s17, 1
        %s8226 = smul.addr %s8225, 4
        %s8227 = scalar_lea.vmem %s2, %s8226
      $region48: #{patchgan_forward.12} parent=43 // pred_fallthru
        _
      // Predicated region
      $region49: #{patchgan_forward.12} parent=43 // pred_check
        %p8228 = pneg %p113
      $region50: #{patchgan_forward.12} parent=43 // pred_check_branch
        %8230 = sbr.rel (%p8228) target = $region52
      $region51: #{patchgan_forward.12} parent=43 // pred_region
        %p8231 = scmp.lt.s32.totalorder %s17, 1
        %s8232 = scalar_select %p8231, %s17, 1
        %s8233 = smul.addr %s8232, 4
        %s8234 = scalar_lea.vmem %s3, %s8233
      $region52: #{patchgan_forward.12} parent=43 // pred_fallthru
        _
      // Predicated region
      $region53: #{patchgan_forward.12} parent=43 // pred_check
        %p8235 = pneg %p139
      $region54: #{patchgan_forward.12} parent=43 // pred_check_branch
        %8237 = sbr.rel (%p8235) target = $region56
      $region55: #{patchgan_forward.12} parent=43 // pred_region
        %p8238 = scmp.lt.s32.totalorder %s17, 1
        %s8239 = scalar_select %p8238, %s17, 1
        %s8240 = smul.addr %s8239, 4
        %s8241 = scalar_lea.vmem %s4, %s8240
      $region56: #{patchgan_forward.12} parent=43 // pred_fallthru
        _
    $region44: #{patchgan_forward.12} parent=5 // pred_fallthru
      _
  $region6: #{patchgan_forward.12} parent=0 // loop_footer
    %s15 = sadd.s32 1, %s11
  $region7: #{patchgan_forward.12} parent=0 // loop_footer_branch
    %10 = sbr.rel target = $region3
  $region8: #{patchgan_forward.12} parent=0 // loop_exit
    _

</llo_original>
